<compile_context>
chip_gen: v7x
topology: tpu7x:2x2x1
jax: 0.10.0
libtpu: 0.0.40
codegen_flags: <defaults>
</compile_context>

<pallas_src>
import math
import functools

import jax
import jax.numpy as jnp
from jax.experimental import pallas as pl
from jax.experimental.pallas import tpu as pltpu

# ----------------------------------------------------------------------------
# Hyper-parameters (the PyTorch file leaves EMBEDDING_DIM etc. as globals; we
# pick small, consistent values).
# ----------------------------------------------------------------------------
EMBEDDING_DIM = 32
NUM_HEADS = 4
NUM_DECODERS = 2
FF_DIM = 64
DROPOUT_RATE = 0.1          # identity at inference
VOCAB_SIZE = 64             # toy tokenizer vocab (62 words + <unk> + <pad>)
VOCAB_PAD = 128             # lane-dense padded vocab for the output projection

HEAD_DIM = EMBEDDING_DIM // NUM_HEADS
LN_EPS = 1e-5
NEG_INF = -1e30             # finite "minus infinity" for the causal mask

# canonical ordering of the stacked per-layer parameter arrays
LAYER_PARAM_KEYS = (
    "sa_wqkv", "sa_bqkv", "sa_wo", "sa_bo", "n1_w", "n1_b",
    "ca_wq", "ca_bq", "ca_wkv", "ca_bkv", "ca_wo", "ca_bo", "n2_w", "n2_b",
    "ff_w1", "ff_b1", "ff_w2", "ff_b2", "n3_w", "n3_b",
)


# ----------------------------------------------------------------------------
# Small helpers (used inside the kernel; operate on traced values)
# ----------------------------------------------------------------------------
def _full_spec(shape):
    """BlockSpec covering the whole array (grid has a single point)."""
    return pl.BlockSpec(shape, lambda i, _n=len(shape): (0,) * _n)


def _layer_norm(x, w, b):
    mu = jnp.mean(x, axis=-1, keepdims=True)
    var = jnp.mean((x - mu) ** 2, axis=-1, keepdims=True)
    return (x - mu) * jax.lax.rsqrt(var + LN_EPS) * w + b


def _mha(q, k, v, wo, bo, mask, batch, s_q, s_kv):
    """Multi-head attention on already-projected q/k/v.

    q: [B*Sq, D], k/v: [B*Skv, D]. Per head we run one batched-over-B
    dot_general for scores and one for PV; head outputs are folded into the
    output projection (sum_h o_h @ Wo_rows_h) so no narrow column stores or
    scratch assembly is needed — all stores stay lane-dense.
    """
    scale = 1.0 / math.sqrt(HEAD_DIM)
    q3 = q.reshape(batch, s_q, EMBEDDING_DIM)
    k3 = k.reshape(batch, s_kv, EMBEDDING_DIM)
    v3 = v.reshape(batch, s_kv, EMBEDDING_DIM)

    attn = None
    for h in range(NUM_HEADS):
        c = h * HEAD_DIM
        qh = q3[:, :, c:c + HEAD_DIM]                      # [B, Sq, dh]
        kh = k3[:, :, c:c + HEAD_DIM]                      # [B, Skv, dh]
        vh = v3[:, :, c:c + HEAD_DIM]                      # [B, Skv, dh]
        # scores: [B, Sq, Skv]  (batched q @ k^T, NT dimension numbers)
        s = jax.lax.dot_general(
            qh, kh, (((2,), (2,)), ((0,), (0,))),
            preferred_element_type=jnp.float32) * scale
        if mask is not None:
            s = s + mask                                   # [Sq,Skv] -> [B,Sq,Skv]
        m = jnp.max(s, axis=-1, keepdims=True)
        p = jnp.exp(s - m)
        denom = jnp.sum(p, axis=-1, keepdims=True)
        # [B, Sq, dh]  (batched p @ v, NN dimension numbers)
        o = jax.lax.dot_general(
            p, vh, (((2,), (1,)), ((0,), (0,))),
            preferred_element_type=jnp.float32)
        # normalize AFTER PV (smaller operand) with the approximate EUP recip
        o = o * pl.reciprocal(denom, approx=True)
        o2d = o.reshape(batch * s_q, HEAD_DIM)
        contrib = jnp.dot(o2d, wo[c:c + HEAD_DIM, :],
                          preferred_element_type=jnp.float32)
        attn = contrib if attn is None else attn + contrib
    return attn + bo


def _decoder_layer(x, mem, mask, p, batch, s_tgt, s_mem):
    """One post-norm nn.TransformerDecoderLayer (self-attn, cross-attn, FFN)."""
    (sa_wqkv, sa_bqkv, sa_wo, sa_bo, n1_w, n1_b,
     ca_wq, ca_bq, ca_wkv, ca_bkv, ca_wo, ca_bo, n2_w, n2_b,
     ff_w1, ff_b1, ff_w2, ff_b2, n3_w, n3_b) = p
    D = EMBEDDING_DIM

    # ---- masked self-attention (fused QKV) + residual + LayerNorm ----
    qkv = jnp.dot(x, sa_wqkv, preferred_element_type=jnp.float32) + sa_bqkv
    sa = _mha(qkv[:, 0:D], qkv[:, D:2 * D], qkv[:, 2 * D:3 * D],
              sa_wo, sa_bo, mask, batch, s_tgt, s_tgt)
    x = _layer_norm(x + sa, n1_w, n1_b)

    # ---- cross-attention over memory (fused KV) + residual + LayerNorm ----
    q = jnp.dot(x, ca_wq, preferred_element_type=jnp.float32) + ca_bq
    kv = jnp.dot(mem, ca_wkv, preferred_element_type=jnp.float32) + ca_bkv
    ca = _mha(q, kv[:, 0:D], kv[:, D:2 * D],
              ca_wo, ca_bo, None, batch, s_tgt, s_mem)
    x = _layer_norm(x + ca, n2_w, n2_b)

    # ---- feed-forward (ReLU) + residual + LayerNorm ----
    h = jnp.maximum(
        jnp.dot(x, ff_w1, preferred_element_type=jnp.float32) + ff_b1, 0.0)
    ff = jnp.dot(h, ff_w2, preferred_element_type=jnp.float32) + ff_b2
    x = _layer_norm(x + ff, n3_w, n3_b)
    return x


# ----------------------------------------------------------------------------
# The single fused Pallas kernel: all decoder layers + vocab projection
# ----------------------------------------------------------------------------
def fused_forward_kernel(*refs, batch, s_tgt, s_mem, num_layers):
    n_lp = len(LAYER_PARAM_KEYS)
    tgt_ref, mem_ref = refs[0], refs[1]
    lp = dict(zip(LAYER_PARAM_KEYS, refs[2:2 + n_lp]))   # stacked [L, ...] refs
    out_w_ref = refs[2 + n_lp]
    out_b_ref = refs[3 + n_lp]
    out_ref = refs[4 + n_lp]

    x = tgt_ref[...]            # [B*St, D]  (stays resident in VMEM throughout)
    mem = mem_ref[...]          # [B*Sm, D]

    # causal mask built in-kernel (finite negative instead of -inf)
    row = jax.lax.broadcasted_iota(jnp.int32, (s_tgt, s_tgt), 0)
    col = jax.lax.broadcasted_iota(jnp.int32, (s_tgt, s_tgt), 1)
    mask = jnp.where(col > row, jnp.float32(NEG_INF), jnp.float32(0.0))

    for li in range(num_layers):
        p = tuple(lp[k][li] for k in LAYER_PARAM_KEYS)   # static layer slice
        x = _decoder_layer(x, mem, mask, p, batch, s_tgt, s_mem)

    # final dropout(identity) + hidden_layer projection (lane-dense padded)
    out_ref[...] = (jnp.dot(x, out_w_ref[...],
                            preferred_element_type=jnp.float32)
                    + out_b_ref[...])


# ----------------------------------------------------------------------------
# Glue (plain JAX): embedding lookup, positional encoding
# ----------------------------------------------------------------------------
def positional_encoding(x, context_size):
    _, seq_len, dim = x.shape
    position = jnp.arange(context_size, dtype=jnp.float32)[:, None]
    div_term = jnp.exp(jnp.arange(0, dim, 2, dtype=jnp.float32)
                       * (-math.log(10000.0) / dim))
    pe = jnp.zeros((context_size, dim), jnp.float32)
    pe = pe.at[:, 0::2].set(jnp.sin(position * div_term))
    pe = pe.at[:, 1::2].set(jnp.cos(position * div_term))
    pe = pe[:seq_len][None, :, :]
    return x + pe


def init_params(key):
    keys = iter(jax.random.split(key, 128))

    def w(shape, scale=0.02):
        return scale * jax.random.normal(next(keys), shape, dtype=jnp.float32)

    zeros = lambda s: jnp.zeros(s, jnp.float32)
    ones = lambda s: jnp.ones(s, jnp.float32)

    D, F, V, L = EMBEDDING_DIM, FF_DIM, VOCAB_SIZE, NUM_DECODERS

    def stack_w(shape, scale=0.02):
        return jnp.stack([w(shape, scale) for _ in range(L)])

    layers = {
        # fused self-attention QKV (weights stored [in, out]: x @ W)
        "sa_wqkv": stack_w((D, 3 * D)), "sa_bqkv": zeros((L, 1, 3 * D)),
        "sa_wo": stack_w((D, D)), "sa_bo": zeros((L, 1, D)),
        "n1_w": ones((L, 1, D)), "n1_b": zeros((L, 1, D)),
        # cross-attention: separate Q, fused KV
        "ca_wq": stack_w((D, D)), "ca_bq": zeros((L, 1, D)),
        "ca_wkv": stack_w((D, 2 * D)), "ca_bkv": zeros((L, 1, 2 * D)),
        "ca_wo": stack_w((D, D)), "ca_bo": zeros((L, 1, D)),
        "n2_w": ones((L, 1, D)), "n2_b": zeros((L, 1, D)),
        # feed-forward + norm3
        "ff_w1": stack_w((D, F)), "ff_b1": zeros((L, 1, F)),
        "ff_w2": stack_w((F, D)), "ff_b2": zeros((L, 1, D)),
        "n3_w": ones((L, 1, D)), "n3_b": zeros((L, 1, D)),
    }
    # vocab projection padded to 128 lanes (extra columns are zero weight/bias)
    out_w = jnp.zeros((D, VOCAB_PAD), jnp.float32).at[:, :V].set(w((D, V)))
    return {
        "embedding": w((V, D), scale=1.0),
        "layers": layers,
        "out_w": out_w,
        "out_b": zeros((1, VOCAB_PAD)),
    }


@jax.jit
def story_transformer_forward(params, input_ids, target_ids):
    emb = params["embedding"]

    # memory path: embedding -> dropout(identity) -> positional encoding
    x_in = jnp.take(emb, input_ids, axis=0)                 # [B, Sm, D]
    x_in = positional_encoding(x_in, input_ids.shape[1])

    # target path
    x_tg = jnp.take(emb, target_ids, axis=0)                # [B, St, D]
    x_tg = positional_encoding(x_tg, target_ids.shape[1])

    batch, s_tgt, dim = x_tg.shape
    s_mem = x_in.shape[1]

    mem2d = x_in.reshape(batch * s_mem, dim)
    tgt2d = x_tg.reshape(batch * s_tgt, dim)

    ins = ([tgt2d, mem2d]
           + [params["layers"][k] for k in LAYER_PARAM_KEYS]
           + [params["out_w"], params["out_b"]])

    kernel = functools.partial(fused_forward_kernel,
                               batch=batch, s_tgt=s_tgt, s_mem=s_mem,
                               num_layers=NUM_DECODERS)

    # TODO(synk): get_attention_weights=True path (returning attention maps)
    # is not implemented; only the logits path is reproduced.
    # TODO(synk): if batch*seq / d_model scale up, switch to a row-tiled grid
    # over B*S with dimension_semantics=("parallel",) (megacore) and set
    # vmem_limit_bytes explicitly instead of whole-array residency.
    out2d = pl.pallas_call(
        kernel,
        out_shape=jax.ShapeDtypeStruct((batch * s_tgt, VOCAB_PAD), jnp.float32),
        grid=(1,),
        in_specs=[_full_spec(a.shape) for a in ins],
        out_specs=_full_spec((batch * s_tgt, VOCAB_PAD)),
        compiler_params=pltpu.CompilerParams(
            dimension_semantics=("arbitrary",)),
    )(*ins)

    logits = out2d[:, :VOCAB_SIZE]
    return logits.reshape(batch, s_tgt, VOCAB_SIZE)


if __name__ == "__main__":
    root = jax.random.PRNGKey(0)
    k_params, k_in, k_tgt = jax.random.split(root, 3)

    params = init_params(k_params)

    B, S = 2, 8
    input_ids = jax.random.randint(k_in, (B, S), 0, VOCAB_SIZE, dtype=jnp.int32)
    target_ids = jax.random.randint(k_tgt, (B, S), 0, VOCAB_SIZE,
                                    dtype=jnp.int32)

    logits = story_transformer_forward(params, input_ids, target_ids)
    jax.block_until_ready(logits)

    assert logits.shape == (B, S, VOCAB_SIZE)
    assert bool(jnp.all(jnp.isfinite(logits)))
    print("KERNEL_OK")
</pallas_src>

<mosaic_0001>
module attributes {stable_mosaic.version = 11 : i64} {
  func.func @fused_forward_kernel(%arg0: i32, %arg1: memref<16x32xf32, #tpu.memory_space<vmem>>, %arg2: memref<16x32xf32, #tpu.memory_space<vmem>>, %arg3: memref<2x32x96xf32, #tpu.memory_space<vmem>>, %arg4: memref<2x1x96xf32, #tpu.memory_space<vmem>>, %arg5: memref<2x32x32xf32, #tpu.memory_space<vmem>>, %arg6: memref<2x1x32xf32, #tpu.memory_space<vmem>>, %arg7: memref<2x1x32xf32, #tpu.memory_space<vmem>>, %arg8: memref<2x1x32xf32, #tpu.memory_space<vmem>>, %arg9: memref<2x32x32xf32, #tpu.memory_space<vmem>>, %arg10: memref<2x1x32xf32, #tpu.memory_space<vmem>>, %arg11: memref<2x32x64xf32, #tpu.memory_space<vmem>>, %arg12: memref<2x1x64xf32, #tpu.memory_space<vmem>>, %arg13: memref<2x32x32xf32, #tpu.memory_space<vmem>>, %arg14: memref<2x1x32xf32, #tpu.memory_space<vmem>>, %arg15: memref<2x1x32xf32, #tpu.memory_space<vmem>>, %arg16: memref<2x1x32xf32, #tpu.memory_space<vmem>>, %arg17: memref<2x32x64xf32, #tpu.memory_space<vmem>>, %arg18: memref<2x1x64xf32, #tpu.memory_space<vmem>>, %arg19: memref<2x64x32xf32, #tpu.memory_space<vmem>>, %arg20: memref<2x1x32xf32, #tpu.memory_space<vmem>>, %arg21: memref<2x1x32xf32, #tpu.memory_space<vmem>>, %arg22: memref<2x1x32xf32, #tpu.memory_space<vmem>>, %arg23: memref<32x128xf32, #tpu.memory_space<vmem>>, %arg24: memref<1x128xf32, #tpu.memory_space<vmem>>, %arg25: memref<16x128xf32, #tpu.memory_space<vmem>>) attributes {dimension_semantics = [#tpu.dimension_semantics<arbitrary>], iteration_bounds = array<i64: 1>, scalar_prefetch = 0 : i64, scratch_operands = 0 : i64, tpu.core_type = #tpu.core_type<tc>, window_params = [{pipeline_mode = #tpu.pipeline_mode<synchronous>, transform_indices = @transform_0, window_bounds = array<i64: 16, 32>}, {pipeline_mode = #tpu.pipeline_mode<synchronous>, transform_indices = @transform_1, window_bounds = array<i64: 16, 32>}, {pipeline_mode = #tpu.pipeline_mode<synchronous>, transform_indices = @transform_2, window_bounds = array<i64: 2, 32, 96>}, {pipeline_mode = #tpu.pipeline_mode<synchronous>, transform_indices = @transform_3, window_bounds = array<i64: 2, 1, 96>}, {pipeline_mode = #tpu.pipeline_mode<synchronous>, transform_indices = @transform_4, window_bounds = array<i64: 2, 32, 32>}, {pipeline_mode = #tpu.pipeline_mode<synchronous>, transform_indices = @transform_5, window_bounds = array<i64: 2, 1, 32>}, {pipeline_mode = #tpu.pipeline_mode<synchronous>, transform_indices = @transform_6, window_bounds = array<i64: 2, 1, 32>}, {pipeline_mode = #tpu.pipeline_mode<synchronous>, transform_indices = @transform_7, window_bounds = array<i64: 2, 1, 32>}, {pipeline_mode = #tpu.pipeline_mode<synchronous>, transform_indices = @transform_8, window_bounds = array<i64: 2, 32, 32>}, {pipeline_mode = #tpu.pipeline_mode<synchronous>, transform_indices = @transform_9, window_bounds = array<i64: 2, 1, 32>}, {pipeline_mode = #tpu.pipeline_mode<synchronous>, transform_indices = @transform_10, window_bounds = array<i64: 2, 32, 64>}, {pipeline_mode = #tpu.pipeline_mode<synchronous>, transform_indices = @transform_11, window_bounds = array<i64: 2, 1, 64>}, {pipeline_mode = #tpu.pipeline_mode<synchronous>, transform_indices = @transform_12, window_bounds = array<i64: 2, 32, 32>}, {pipeline_mode = #tpu.pipeline_mode<synchronous>, transform_indices = @transform_13, window_bounds = array<i64: 2, 1, 32>}, {pipeline_mode = #tpu.pipeline_mode<synchronous>, transform_indices = @transform_14, window_bounds = array<i64: 2, 1, 32>}, {pipeline_mode = #tpu.pipeline_mode<synchronous>, transform_indices = @transform_15, window_bounds = array<i64: 2, 1, 32>}, {pipeline_mode = #tpu.pipeline_mode<synchronous>, transform_indices = @transform_16, window_bounds = array<i64: 2, 32, 64>}, {pipeline_mode = #tpu.pipeline_mode<synchronous>, transform_indices = @transform_17, window_bounds = array<i64: 2, 1, 64>}, {pipeline_mode = #tpu.pipeline_mode<synchronous>, transform_indices = @transform_18, window_bounds = array<i64: 2, 64, 32>}, {pipeline_mode = #tpu.pipeline_mode<synchronous>, transform_indices = @transform_19, window_bounds = array<i64: 2, 1, 32>}, {pipeline_mode = #tpu.pipeline_mode<synchronous>, transform_indices = @transform_20, window_bounds = array<i64: 2, 1, 32>}, {pipeline_mode = #tpu.pipeline_mode<synchronous>, transform_indices = @transform_21, window_bounds = array<i64: 2, 1, 32>}, {pipeline_mode = #tpu.pipeline_mode<synchronous>, transform_indices = @transform_22, window_bounds = array<i64: 32, 128>}, {pipeline_mode = #tpu.pipeline_mode<synchronous>, transform_indices = @transform_23, window_bounds = array<i64: 1, 128>}, {pipeline_mode = #tpu.pipeline_mode<synchronous>, transform_indices = @transform_24, window_bounds = array<i64: 16, 128>}]} {
    %c0 = arith.constant 0 : index
    %c0_0 = arith.constant 0 : index
    %0 = vector.load %arg1[%c0, %c0_0] : memref<16x32xf32, #tpu.memory_space<vmem>>, vector<16x32xf32>
    %c0_1 = arith.constant 0 : index
    %c0_2 = arith.constant 0 : index
    %1 = vector.load %arg2[%c0_1, %c0_2] : memref<16x32xf32, #tpu.memory_space<vmem>>, vector<16x32xf32>
    %2 = tpu.iota {dimensions = array<i32: 0>} : vector<8x8xi32>
    %3 = tpu.iota {dimensions = array<i32: 1>} : vector<8x8xi32>
    %4 = arith.cmpi sgt, %3, %2 : vector<8x8xi32>
    %cst = arith.constant -1.000000e+30 : f32
    %cst_3 = arith.constant 0.000000e+00 : f32
    %5 = vector.broadcast %cst : f32 to vector<8x8xf32>
    %6 = vector.broadcast %cst_3 : f32 to vector<8x8xf32>
    %7 = arith.select %4, %5, %6 : vector<8x8xi1>, vector<8x8xf32>
    %c0_4 = arith.constant 0 : index
    %c0_5 = arith.constant 0 : index
    %c0_6 = arith.constant 0 : index
    %8 = vector.load %arg3[%c0_4, %c0_5, %c0_6] : memref<2x32x96xf32, #tpu.memory_space<vmem>>, vector<1x32x96xf32>
    %9 = vector.shape_cast %8 : vector<1x32x96xf32> to vector<32x96xf32>
    %c0_7 = arith.constant 0 : index
    %c0_8 = arith.constant 0 : index
    %c0_9 = arith.constant 0 : index
    %10 = vector.load %arg4[%c0_7, %c0_8, %c0_9] : memref<2x1x96xf32, #tpu.memory_space<vmem>>, vector<1x1x96xf32>
    %11 = vector.shape_cast %10 : vector<1x1x96xf32> to vector<1x96xf32>
    %c0_10 = arith.constant 0 : index
    %c0_11 = arith.constant 0 : index
    %c0_12 = arith.constant 0 : index
    %12 = vector.load %arg5[%c0_10, %c0_11, %c0_12] : memref<2x32x32xf32, #tpu.memory_space<vmem>>, vector<1x32x32xf32>
    %13 = vector.shape_cast %12 : vector<1x32x32xf32> to vector<32x32xf32>
    %c0_13 = arith.constant 0 : index
    %c0_14 = arith.constant 0 : index
    %c0_15 = arith.constant 0 : index
    %14 = vector.load %arg6[%c0_13, %c0_14, %c0_15] : memref<2x1x32xf32, #tpu.memory_space<vmem>>, vector<1x1x32xf32>
    %15 = vector.shape_cast %14 : vector<1x1x32xf32> to vector<1x32xf32>
    %c0_16 = arith.constant 0 : index
    %c0_17 = arith.constant 0 : index
    %c0_18 = arith.constant 0 : index
    %16 = vector.load %arg7[%c0_16, %c0_17, %c0_18] : memref<2x1x32xf32, #tpu.memory_space<vmem>>, vector<1x1x32xf32>
    %17 = vector.shape_cast %16 : vector<1x1x32xf32> to vector<1x32xf32>
    %c0_19 = arith.constant 0 : index
    %c0_20 = arith.constant 0 : index
    %c0_21 = arith.constant 0 : index
    %18 = vector.load %arg8[%c0_19, %c0_20, %c0_21] : memref<2x1x32xf32, #tpu.memory_space<vmem>>, vector<1x1x32xf32>
    %19 = vector.shape_cast %18 : vector<1x1x32xf32> to vector<1x32xf32>
    %c0_22 = arith.constant 0 : index
    %c0_23 = arith.constant 0 : index
    %c0_24 = arith.constant 0 : index
    %20 = vector.load %arg9[%c0_22, %c0_23, %c0_24] : memref<2x32x32xf32, #tpu.memory_space<vmem>>, vector<1x32x32xf32>
    %21 = vector.shape_cast %20 : vector<1x32x32xf32> to vector<32x32xf32>
    %c0_25 = arith.constant 0 : index
    %c0_26 = arith.constant 0 : index
    %c0_27 = arith.constant 0 : index
    %22 = vector.load %arg10[%c0_25, %c0_26, %c0_27] : memref<2x1x32xf32, #tpu.memory_space<vmem>>, vector<1x1x32xf32>
    %23 = vector.shape_cast %22 : vector<1x1x32xf32> to vector<1x32xf32>
    %c0_28 = arith.constant 0 : index
    %c0_29 = arith.constant 0 : index
    %c0_30 = arith.constant 0 : index
    %24 = vector.load %arg11[%c0_28, %c0_29, %c0_30] : memref<2x32x64xf32, #tpu.memory_space<vmem>>, vector<1x32x64xf32>
    %25 = vector.shape_cast %24 : vector<1x32x64xf32> to vector<32x64xf32>
    %c0_31 = arith.constant 0 : index
    %c0_32 = arith.constant 0 : index
    %c0_33 = arith.constant 0 : index
    %26 = vector.load %arg12[%c0_31, %c0_32, %c0_33] : memref<2x1x64xf32, #tpu.memory_space<vmem>>, vector<1x1x64xf32>
    %27 = vector.shape_cast %26 : vector<1x1x64xf32> to vector<1x64xf32>
    %c0_34 = arith.constant 0 : index
    %c0_35 = arith.constant 0 : index
    %c0_36 = arith.constant 0 : index
    %28 = vector.load %arg13[%c0_34, %c0_35, %c0_36] : memref<2x32x32xf32, #tpu.memory_space<vmem>>, vector<1x32x32xf32>
    %29 = vector.shape_cast %28 : vector<1x32x32xf32> to vector<32x32xf32>
    %c0_37 = arith.constant 0 : index
    %c0_38 = arith.constant 0 : index
    %c0_39 = arith.constant 0 : index
    %30 = vector.load %arg14[%c0_37, %c0_38, %c0_39] : memref<2x1x32xf32, #tpu.memory_space<vmem>>, vector<1x1x32xf32>
    %31 = vector.shape_cast %30 : vector<1x1x32xf32> to vector<1x32xf32>
    %c0_40 = arith.constant 0 : index
    %c0_41 = arith.constant 0 : index
    %c0_42 = arith.constant 0 : index
    %32 = vector.load %arg15[%c0_40, %c0_41, %c0_42] : memref<2x1x32xf32, #tpu.memory_space<vmem>>, vector<1x1x32xf32>
    %33 = vector.shape_cast %32 : vector<1x1x32xf32> to vector<1x32xf32>
    %c0_43 = arith.constant 0 : index
    %c0_44 = arith.constant 0 : index
    %c0_45 = arith.constant 0 : index
    %34 = vector.load %arg16[%c0_43, %c0_44, %c0_45] : memref<2x1x32xf32, #tpu.memory_space<vmem>>, vector<1x1x32xf32>
    %35 = vector.shape_cast %34 : vector<1x1x32xf32> to vector<1x32xf32>
    %c0_46 = arith.constant 0 : index
    %c0_47 = arith.constant 0 : index
    %c0_48 = arith.constant 0 : index
    %36 = vector.load %arg17[%c0_46, %c0_47, %c0_48] : memref<2x32x64xf32, #tpu.memory_space<vmem>>, vector<1x32x64xf32>
    %37 = vector.shape_cast %36 : vector<1x32x64xf32> to vector<32x64xf32>
    %c0_49 = arith.constant 0 : index
    %c0_50 = arith.constant 0 : index
    %c0_51 = arith.constant 0 : index
    %38 = vector.load %arg18[%c0_49, %c0_50, %c0_51] : memref<2x1x64xf32, #tpu.memory_space<vmem>>, vector<1x1x64xf32>
    %39 = vector.shape_cast %38 : vector<1x1x64xf32> to vector<1x64xf32>
    %c0_52 = arith.constant 0 : index
    %c0_53 = arith.constant 0 : index
    %c0_54 = arith.constant 0 : index
    %40 = vector.load %arg19[%c0_52, %c0_53, %c0_54] : memref<2x64x32xf32, #tpu.memory_space<vmem>>, vector<1x64x32xf32>
    %41 = vector.shape_cast %40 : vector<1x64x32xf32> to vector<64x32xf32>
    %c0_55 = arith.constant 0 : index
    %c0_56 = arith.constant 0 : index
    %c0_57 = arith.constant 0 : index
    %42 = vector.load %arg20[%c0_55, %c0_56, %c0_57] : memref<2x1x32xf32, #tpu.memory_space<vmem>>, vector<1x1x32xf32>
    %43 = vector.shape_cast %42 : vector<1x1x32xf32> to vector<1x32xf32>
    %c0_58 = arith.constant 0 : index
    %c0_59 = arith.constant 0 : index
    %c0_60 = arith.constant 0 : index
    %44 = vector.load %arg21[%c0_58, %c0_59, %c0_60] : memref<2x1x32xf32, #tpu.memory_space<vmem>>, vector<1x1x32xf32>
    %45 = vector.shape_cast %44 : vector<1x1x32xf32> to vector<1x32xf32>
    %c0_61 = arith.constant 0 : index
    %c0_62 = arith.constant 0 : index
    %c0_63 = arith.constant 0 : index
    %46 = vector.load %arg22[%c0_61, %c0_62, %c0_63] : memref<2x1x32xf32, #tpu.memory_space<vmem>>, vector<1x1x32xf32>
    %47 = vector.shape_cast %46 : vector<1x1x32xf32> to vector<1x32xf32>
    %cst_64 = arith.constant dense<0.000000e+00> : vector<16x96xf32>
    %48 = tpu.matmul %0, %9, %cst_64 {dimension_numbers = #tpu.dot_dimension_numbers<[1], [0], [0], [1], [0, 0, 1, 1], [], []>} : vector<16x32xf32>, vector<32x96xf32>, vector<16x96xf32> -> vector<16x96xf32>
    %49 = vector.broadcast %11 : vector<1x96xf32> to vector<16x96xf32>
    %50 = arith.addf %48, %49 : vector<16x96xf32>
    %51 = vector.extract_strided_slice %50 {offsets = [0, 0], sizes = [16, 32], strides = [1, 1]} : vector<16x96xf32> to vector<16x32xf32>
    %52 = vector.extract_strided_slice %50 {offsets = [0, 32], sizes = [16, 32], strides = [1, 1]} : vector<16x96xf32> to vector<16x32xf32>
    %53 = vector.extract_strided_slice %50 {offsets = [0, 64], sizes = [16, 32], strides = [1, 1]} : vector<16x96xf32> to vector<16x32xf32>
    %54 = vector.shape_cast %51 : vector<16x32xf32> to vector<2x8x32xf32>
    %55 = vector.shape_cast %52 : vector<16x32xf32> to vector<2x8x32xf32>
    %56 = vector.shape_cast %53 : vector<16x32xf32> to vector<2x8x32xf32>
    %57 = vector.extract_strided_slice %54 {offsets = [0, 0, 0], sizes = [2, 8, 8], strides = [1, 1, 1]} : vector<2x8x32xf32> to vector<2x8x8xf32>
    %58 = vector.extract_strided_slice %55 {offsets = [0, 0, 0], sizes = [2, 8, 8], strides = [1, 1, 1]} : vector<2x8x32xf32> to vector<2x8x8xf32>
    %59 = vector.extract_strided_slice %56 {offsets = [0, 0, 0], sizes = [2, 8, 8], strides = [1, 1, 1]} : vector<2x8x32xf32> to vector<2x8x8xf32>
    %cst_65 = arith.constant dense<0.000000e+00> : vector<2x8x8xf32>
    %60 = tpu.matmul %57, %58, %cst_65 {dimension_numbers = #tpu.dot_dimension_numbers<[2], [2], [1], [1], [0, 0, 0, 1, 1, 1], [0], [0]>} : vector<2x8x8xf32>, vector<2x8x8xf32>, vector<2x8x8xf32> -> vector<2x8x8xf32>
    %cst_66 = arith.constant 0.353553385 : f32
    %61 = vector.broadcast %cst_66 : f32 to vector<2x8x8xf32>
    %62 = arith.mulf %60, %61 : vector<2x8x8xf32>
    %63 = vector.shape_cast %7 : vector<8x8xf32> to vector<1x8x8xf32>
    %64 = vector.broadcast %63 : vector<1x8x8xf32> to vector<2x8x8xf32>
    %65 = arith.addf %62, %64 : vector<2x8x8xf32>
    %cst_67 = arith.constant dense<0xFF800000> : vector<2x8xf32>
    %66 = vector.multi_reduction <maximumf>, %65, %cst_67 [2] : vector<2x8x8xf32> to vector<2x8xf32>
    %67 = vector.shape_cast %66 : vector<2x8xf32> to vector<2x8x1xf32>
    %68 = vector.broadcast %67 : vector<2x8x1xf32> to vector<2x8x8xf32>
    %69 = arith.subf %65, %68 : vector<2x8x8xf32>
    %70 = math.exp %69 : vector<2x8x8xf32>
    %cst_68 = arith.constant dense<0.000000e+00> : vector<2x8xf32>
    %71 = vector.multi_reduction <add>, %70, %cst_68 [2] : vector<2x8x8xf32> to vector<2x8xf32>
    %72 = vector.shape_cast %71 : vector<2x8xf32> to vector<2x8x1xf32>
    %cst_69 = arith.constant dense<0.000000e+00> : vector<2x8x8xf32>
    %73 = tpu.matmul %70, %59, %cst_69 {dimension_numbers = #tpu.dot_dimension_numbers<[2], [1], [1], [2], [0, 0, 0, 1, 1, 2], [0], [0]>} : vector<2x8x8xf32>, vector<2x8x8xf32>, vector<2x8x8xf32> -> vector<2x8x8xf32>
    %74 = tpu.reciprocal %72 {approx = true} : vector<2x8x1xf32> -> vector<2x8x1xf32>
    %75 = vector.broadcast %74 : vector<2x8x1xf32> to vector<2x8x8xf32>
    %76 = arith.mulf %73, %75 : vector<2x8x8xf32>
    %77 = vector.shape_cast %76 : vector<2x8x8xf32> to vector<16x8xf32>
    %78 = vector.extract_strided_slice %13 {offsets = [0, 0], sizes = [8, 32], strides = [1, 1]} : vector<32x32xf32> to vector<8x32xf32>
    %cst_70 = arith.constant dense<0.000000e+00> : vector<16x32xf32>
    %79 = tpu.matmul %77, %78, %cst_70 {dimension_numbers = #tpu.dot_dimension_numbers<[1], [0], [0], [1], [0, 0, 1, 1], [], []>} : vector<16x8xf32>, vector<8x32xf32>, vector<16x32xf32> -> vector<16x32xf32>
    %80 = vector.extract_strided_slice %54 {offsets = [0, 0, 8], sizes = [2, 8, 8], strides = [1, 1, 1]} : vector<2x8x32xf32> to vector<2x8x8xf32>
    %81 = vector.extract_strided_slice %55 {offsets = [0, 0, 8], sizes = [2, 8, 8], strides = [1, 1, 1]} : vector<2x8x32xf32> to vector<2x8x8xf32>
    %82 = vector.extract_strided_slice %56 {offsets = [0, 0, 8], sizes = [2, 8, 8], strides = [1, 1, 1]} : vector<2x8x32xf32> to vector<2x8x8xf32>
    %cst_71 = arith.constant dense<0.000000e+00> : vector<2x8x8xf32>
    %83 = tpu.matmul %80, %81, %cst_71 {dimension_numbers = #tpu.dot_dimension_numbers<[2], [2], [1], [1], [0, 0, 0, 1, 1, 1], [0], [0]>} : vector<2x8x8xf32>, vector<2x8x8xf32>, vector<2x8x8xf32> -> vector<2x8x8xf32>
    %cst_72 = arith.constant 0.353553385 : f32
    %84 = vector.broadcast %cst_72 : f32 to vector<2x8x8xf32>
    %85 = arith.mulf %83, %84 : vector<2x8x8xf32>
    %86 = vector.shape_cast %7 : vector<8x8xf32> to vector<1x8x8xf32>
    %87 = vector.broadcast %86 : vector<1x8x8xf32> to vector<2x8x8xf32>
    %88 = arith.addf %85, %87 : vector<2x8x8xf32>
    %cst_73 = arith.constant dense<0xFF800000> : vector<2x8xf32>
    %89 = vector.multi_reduction <maximumf>, %88, %cst_73 [2] : vector<2x8x8xf32> to vector<2x8xf32>
    %90 = vector.shape_cast %89 : vector<2x8xf32> to vector<2x8x1xf32>
    %91 = vector.broadcast %90 : vector<2x8x1xf32> to vector<2x8x8xf32>
    %92 = arith.subf %88, %91 : vector<2x8x8xf32>
    %93 = math.exp %92 : vector<2x8x8xf32>
    %cst_74 = arith.constant dense<0.000000e+00> : vector<2x8xf32>
    %94 = vector.multi_reduction <add>, %93, %cst_74 [2] : vector<2x8x8xf32> to vector<2x8xf32>
    %95 = vector.shape_cast %94 : vector<2x8xf32> to vector<2x8x1xf32>
    %cst_75 = arith.constant dense<0.000000e+00> : vector<2x8x8xf32>
    %96 = tpu.matmul %93, %82, %cst_75 {dimension_numbers = #tpu.dot_dimension_numbers<[2], [1], [1], [2], [0, 0, 0, 1, 1, 2], [0], [0]>} : vector<2x8x8xf32>, vector<2x8x8xf32>, vector<2x8x8xf32> -> vector<2x8x8xf32>
    %97 = tpu.reciprocal %95 {approx = true} : vector<2x8x1xf32> -> vector<2x8x1xf32>
    %98 = vector.broadcast %97 : vector<2x8x1xf32> to vector<2x8x8xf32>
    %99 = arith.mulf %96, %98 : vector<2x8x8xf32>
    %100 = vector.shape_cast %99 : vector<2x8x8xf32> to vector<16x8xf32>
    %101 = vector.extract_strided_slice %13 {offsets = [8, 0], sizes = [8, 32], strides = [1, 1]} : vector<32x32xf32> to vector<8x32xf32>
    %cst_76 = arith.constant dense<0.000000e+00> : vector<16x32xf32>
    %102 = tpu.matmul %100, %101, %cst_76 {dimension_numbers = #tpu.dot_dimension_numbers<[1], [0], [0], [1], [0, 0, 1, 1], [], []>} : vector<16x8xf32>, vector<8x32xf32>, vector<16x32xf32> -> vector<16x32xf32>
    %103 = arith.addf %79, %102 : vector<16x32xf32>
    %104 = vector.extract_strided_slice %54 {offsets = [0, 0, 16], sizes = [2, 8, 8], strides = [1, 1, 1]} : vector<2x8x32xf32> to vector<2x8x8xf32>
    %105 = vector.extract_strided_slice %55 {offsets = [0, 0, 16], sizes = [2, 8, 8], strides = [1, 1, 1]} : vector<2x8x32xf32> to vector<2x8x8xf32>
    %106 = vector.extract_strided_slice %56 {offsets = [0, 0, 16], sizes = [2, 8, 8], strides = [1, 1, 1]} : vector<2x8x32xf32> to vector<2x8x8xf32>
    %cst_77 = arith.constant dense<0.000000e+00> : vector<2x8x8xf32>
    %107 = tpu.matmul %104, %105, %cst_77 {dimension_numbers = #tpu.dot_dimension_numbers<[2], [2], [1], [1], [0, 0, 0, 1, 1, 1], [0], [0]>} : vector<2x8x8xf32>, vector<2x8x8xf32>, vector<2x8x8xf32> -> vector<2x8x8xf32>
    %cst_78 = arith.constant 0.353553385 : f32
    %108 = vector.broadcast %cst_78 : f32 to vector<2x8x8xf32>
    %109 = arith.mulf %107, %108 : vector<2x8x8xf32>
    %110 = vector.shape_cast %7 : vector<8x8xf32> to vector<1x8x8xf32>
    %111 = vector.broadcast %110 : vector<1x8x8xf32> to vector<2x8x8xf32>
    %112 = arith.addf %109, %111 : vector<2x8x8xf32>
    %cst_79 = arith.constant dense<0xFF800000> : vector<2x8xf32>
    %113 = vector.multi_reduction <maximumf>, %112, %cst_79 [2] : vector<2x8x8xf32> to vector<2x8xf32>
    %114 = vector.shape_cast %113 : vector<2x8xf32> to vector<2x8x1xf32>
    %115 = vector.broadcast %114 : vector<2x8x1xf32> to vector<2x8x8xf32>
    %116 = arith.subf %112, %115 : vector<2x8x8xf32>
    %117 = math.exp %116 : vector<2x8x8xf32>
    %cst_80 = arith.constant dense<0.000000e+00> : vector<2x8xf32>
    %118 = vector.multi_reduction <add>, %117, %cst_80 [2] : vector<2x8x8xf32> to vector<2x8xf32>
    %119 = vector.shape_cast %118 : vector<2x8xf32> to vector<2x8x1xf32>
    %cst_81 = arith.constant dense<0.000000e+00> : vector<2x8x8xf32>
    %120 = tpu.matmul %117, %106, %cst_81 {dimension_numbers = #tpu.dot_dimension_numbers<[2], [1], [1], [2], [0, 0, 0, 1, 1, 2], [0], [0]>} : vector<2x8x8xf32>, vector<2x8x8xf32>, vector<2x8x8xf32> -> vector<2x8x8xf32>
    %121 = tpu.reciprocal %119 {approx = true} : vector<2x8x1xf32> -> vector<2x8x1xf32>
    %122 = vector.broadcast %121 : vector<2x8x1xf32> to vector<2x8x8xf32>
    %123 = arith.mulf %120, %122 : vector<2x8x8xf32>
    %124 = vector.shape_cast %123 : vector<2x8x8xf32> to vector<16x8xf32>
    %125 = vector.extract_strided_slice %13 {offsets = [16, 0], sizes = [8, 32], strides = [1, 1]} : vector<32x32xf32> to vector<8x32xf32>
    %cst_82 = arith.constant dense<0.000000e+00> : vector<16x32xf32>
    %126 = tpu.matmul %124, %125, %cst_82 {dimension_numbers = #tpu.dot_dimension_numbers<[1], [0], [0], [1], [0, 0, 1, 1], [], []>} : vector<16x8xf32>, vector<8x32xf32>, vector<16x32xf32> -> vector<16x32xf32>
    %127 = arith.addf %103, %126 : vector<16x32xf32>
    %128 = vector.extract_strided_slice %54 {offsets = [0, 0, 24], sizes = [2, 8, 8], strides = [1, 1, 1]} : vector<2x8x32xf32> to vector<2x8x8xf32>
    %129 = vector.extract_strided_slice %55 {offsets = [0, 0, 24], sizes = [2, 8, 8], strides = [1, 1, 1]} : vector<2x8x32xf32> to vector<2x8x8xf32>
    %130 = vector.extract_strided_slice %56 {offsets = [0, 0, 24], sizes = [2, 8, 8], strides = [1, 1, 1]} : vector<2x8x32xf32> to vector<2x8x8xf32>
    %cst_83 = arith.constant dense<0.000000e+00> : vector<2x8x8xf32>
    %131 = tpu.matmul %128, %129, %cst_83 {dimension_numbers = #tpu.dot_dimension_numbers<[2], [2], [1], [1], [0, 0, 0, 1, 1, 1], [0], [0]>} : vector<2x8x8xf32>, vector<2x8x8xf32>, vector<2x8x8xf32> -> vector<2x8x8xf32>
    %cst_84 = arith.constant 0.353553385 : f32
    %132 = vector.broadcast %cst_84 : f32 to vector<2x8x8xf32>
    %133 = arith.mulf %131, %132 : vector<2x8x8xf32>
    %134 = vector.shape_cast %7 : vector<8x8xf32> to vector<1x8x8xf32>
    %135 = vector.broadcast %134 : vector<1x8x8xf32> to vector<2x8x8xf32>
    %136 = arith.addf %133, %135 : vector<2x8x8xf32>
    %cst_85 = arith.constant dense<0xFF800000> : vector<2x8xf32>
    %137 = vector.multi_reduction <maximumf>, %136, %cst_85 [2] : vector<2x8x8xf32> to vector<2x8xf32>
    %138 = vector.shape_cast %137 : vector<2x8xf32> to vector<2x8x1xf32>
    %139 = vector.broadcast %138 : vector<2x8x1xf32> to vector<2x8x8xf32>
    %140 = arith.subf %136, %139 : vector<2x8x8xf32>
    %141 = math.exp %140 : vector<2x8x8xf32>
    %cst_86 = arith.constant dense<0.000000e+00> : vector<2x8xf32>
    %142 = vector.multi_reduction <add>, %141, %cst_86 [2] : vector<2x8x8xf32> to vector<2x8xf32>
    %143 = vector.shape_cast %142 : vector<2x8xf32> to vector<2x8x1xf32>
    %cst_87 = arith.constant dense<0.000000e+00> : vector<2x8x8xf32>
    %144 = tpu.matmul %141, %130, %cst_87 {dimension_numbers = #tpu.dot_dimension_numbers<[2], [1], [1], [2], [0, 0, 0, 1, 1, 2], [0], [0]>} : vector<2x8x8xf32>, vector<2x8x8xf32>, vector<2x8x8xf32> -> vector<2x8x8xf32>
    %145 = tpu.reciprocal %143 {approx = true} : vector<2x8x1xf32> -> vector<2x8x1xf32>
    %146 = vector.broadcast %145 : vector<2x8x1xf32> to vector<2x8x8xf32>
    %147 = arith.mulf %144, %146 : vector<2x8x8xf32>
    %148 = vector.shape_cast %147 : vector<2x8x8xf32> to vector<16x8xf32>
    %149 = vector.extract_strided_slice %13 {offsets = [24, 0], sizes = [8, 32], strides = [1, 1]} : vector<32x32xf32> to vector<8x32xf32>
    %cst_88 = arith.constant dense<0.000000e+00> : vector<16x32xf32>
    %150 = tpu.matmul %148, %149, %cst_88 {dimension_numbers = #tpu.dot_dimension_numbers<[1], [0], [0], [1], [0, 0, 1, 1], [], []>} : vector<16x8xf32>, vector<8x32xf32>, vector<16x32xf32> -> vector<16x32xf32>
    %151 = arith.addf %127, %150 : vector<16x32xf32>
    %152 = vector.broadcast %15 : vector<1x32xf32> to vector<16x32xf32>
    %153 = arith.addf %151, %152 : vector<16x32xf32>
    %154 = arith.addf %0, %153 : vector<16x32xf32>
    %cst_89 = arith.constant dense<0.000000e+00> : vector<16xf32>
    %155 = vector.multi_reduction <add>, %154, %cst_89 [1] : vector<16x32xf32> to vector<16xf32>
    %156 = vector.shape_cast %155 : vector<16xf32> to vector<16x1xf32>
    %cst_90 = arith.constant 3.200000e+01 : f32
    %157 = vector.broadcast %cst_90 : f32 to vector<16x1xf32>
    %158 = arith.divf %156, %157 : vector<16x1xf32>
    %159 = vector.broadcast %158 : vector<16x1xf32> to vector<16x32xf32>
    %160 = arith.subf %154, %159 : vector<16x32xf32>
    %161 = arith.mulf %160, %160 : vector<16x32xf32>
    %cst_91 = arith.constant dense<0.000000e+00> : vector<16xf32>
    %162 = vector.multi_reduction <add>, %161, %cst_91 [1] : vector<16x32xf32> to vector<16xf32>
    %163 = vector.shape_cast %162 : vector<16xf32> to vector<16x1xf32>
    %cst_92 = arith.constant 3.200000e+01 : f32
    %164 = vector.broadcast %cst_92 : f32 to vector<16x1xf32>
    %165 = arith.divf %163, %164 : vector<16x1xf32>
    %166 = vector.broadcast %158 : vector<16x1xf32> to vector<16x32xf32>
    %167 = arith.subf %154, %166 : vector<16x32xf32>
    %cst_93 = arith.constant 9.99999974E-6 : f32
    %168 = vector.broadcast %cst_93 : f32 to vector<16x1xf32>
    %169 = arith.addf %165, %168 : vector<16x1xf32>
    %170 = math.rsqrt %169 : vector<16x1xf32>
    %171 = vector.broadcast %170 : vector<16x1xf32> to vector<16x32xf32>
    %172 = arith.mulf %167, %171 : vector<16x32xf32>
    %173 = vector.broadcast %17 : vector<1x32xf32> to vector<16x32xf32>
    %174 = arith.mulf %172, %173 : vector<16x32xf32>
    %175 = vector.broadcast %19 : vector<1x32xf32> to vector<16x32xf32>
    %176 = arith.addf %174, %175 : vector<16x32xf32>
    %cst_94 = arith.constant dense<0.000000e+00> : vector<16x32xf32>
    %177 = tpu.matmul %176, %21, %cst_94 {dimension_numbers = #tpu.dot_dimension_numbers<[1], [0], [0], [1], [0, 0, 1, 1], [], []>} : vector<16x32xf32>, vector<32x32xf32>, vector<16x32xf32> -> vector<16x32xf32>
    %178 = vector.broadcast %23 : vector<1x32xf32> to vector<16x32xf32>
    %179 = arith.addf %177, %178 : vector<16x32xf32>
    %cst_95 = arith.constant dense<0.000000e+00> : vector<16x64xf32>
    %180 = tpu.matmul %1, %25, %cst_95 {dimension_numbers = #tpu.dot_dimension_numbers<[1], [0], [0], [1], [0, 0, 1, 1], [], []>} : vector<16x32xf32>, vector<32x64xf32>, vector<16x64xf32> -> vector<16x64xf32>
    %181 = vector.broadcast %27 : vector<1x64xf32> to vector<16x64xf32>
    %182 = arith.addf %180, %181 : vector<16x64xf32>
    %183 = vector.extract_strided_slice %182 {offsets = [0, 0], sizes = [16, 32], strides = [1, 1]} : vector<16x64xf32> to vector<16x32xf32>
    %184 = vector.extract_strided_slice %182 {offsets = [0, 32], sizes = [16, 32], strides = [1, 1]} : vector<16x64xf32> to vector<16x32xf32>
    %185 = vector.shape_cast %179 : vector<16x32xf32> to vector<2x8x32xf32>
    %186 = vector.shape_cast %183 : vector<16x32xf32> to vector<2x8x32xf32>
    %187 = vector.shape_cast %184 : vector<16x32xf32> to vector<2x8x32xf32>
    %188 = vector.extract_strided_slice %185 {offsets = [0, 0, 0], sizes = [2, 8, 8], strides = [1, 1, 1]} : vector<2x8x32xf32> to vector<2x8x8xf32>
    %189 = vector.extract_strided_slice %186 {offsets = [0, 0, 0], sizes = [2, 8, 8], strides = [1, 1, 1]} : vector<2x8x32xf32> to vector<2x8x8xf32>
    %190 = vector.extract_strided_slice %187 {offsets = [0, 0, 0], sizes = [2, 8, 8], strides = [1, 1, 1]} : vector<2x8x32xf32> to vector<2x8x8xf32>
    %cst_96 = arith.constant dense<0.000000e+00> : vector<2x8x8xf32>
    %191 = tpu.matmul %188, %189, %cst_96 {dimension_numbers = #tpu.dot_dimension_numbers<[2], [2], [1], [1], [0, 0, 0, 1, 1, 1], [0], [0]>} : vector<2x8x8xf32>, vector<2x8x8xf32>, vector<2x8x8xf32> -> vector<2x8x8xf32>
    %cst_97 = arith.constant 0.353553385 : f32
    %192 = vector.broadcast %cst_97 : f32 to vector<2x8x8xf32>
    %193 = arith.mulf %191, %192 : vector<2x8x8xf32>
    %cst_98 = arith.constant dense<0xFF800000> : vector<2x8xf32>
    %194 = vector.multi_reduction <maximumf>, %193, %cst_98 [2] : vector<2x8x8xf32> to vector<2x8xf32>
    %195 = vector.shape_cast %194 : vector<2x8xf32> to vector<2x8x1xf32>
    %196 = vector.broadcast %195 : vector<2x8x1xf32> to vector<2x8x8xf32>
    %197 = arith.subf %193, %196 : vector<2x8x8xf32>
    %198 = math.exp %197 : vector<2x8x8xf32>
    %cst_99 = arith.constant dense<0.000000e+00> : vector<2x8xf32>
    %199 = vector.multi_reduction <add>, %198, %cst_99 [2] : vector<2x8x8xf32> to vector<2x8xf32>
    %200 = vector.shape_cast %199 : vector<2x8xf32> to vector<2x8x1xf32>
    %cst_100 = arith.constant dense<0.000000e+00> : vector<2x8x8xf32>
    %201 = tpu.matmul %198, %190, %cst_100 {dimension_numbers = #tpu.dot_dimension_numbers<[2], [1], [1], [2], [0, 0, 0, 1, 1, 2], [0], [0]>} : vector<2x8x8xf32>, vector<2x8x8xf32>, vector<2x8x8xf32> -> vector<2x8x8xf32>
    %202 = tpu.reciprocal %200 {approx = true} : vector<2x8x1xf32> -> vector<2x8x1xf32>
    %203 = vector.broadcast %202 : vector<2x8x1xf32> to vector<2x8x8xf32>
    %204 = arith.mulf %201, %203 : vector<2x8x8xf32>
    %205 = vector.shape_cast %204 : vector<2x8x8xf32> to vector<16x8xf32>
    %206 = vector.extract_strided_slice %29 {offsets = [0, 0], sizes = [8, 32], strides = [1, 1]} : vector<32x32xf32> to vector<8x32xf32>
    %cst_101 = arith.constant dense<0.000000e+00> : vector<16x32xf32>
    %207 = tpu.matmul %205, %206, %cst_101 {dimension_numbers = #tpu.dot_dimension_numbers<[1], [0], [0], [1], [0, 0, 1, 1], [], []>} : vector<16x8xf32>, vector<8x32xf32>, vector<16x32xf32> -> vector<16x32xf32>
    %208 = vector.extract_strided_slice %185 {offsets = [0, 0, 8], sizes = [2, 8, 8], strides = [1, 1, 1]} : vector<2x8x32xf32> to vector<2x8x8xf32>
    %209 = vector.extract_strided_slice %186 {offsets = [0, 0, 8], sizes = [2, 8, 8], strides = [1, 1, 1]} : vector<2x8x32xf32> to vector<2x8x8xf32>
    %210 = vector.extract_strided_slice %187 {offsets = [0, 0, 8], sizes = [2, 8, 8], strides = [1, 1, 1]} : vector<2x8x32xf32> to vector<2x8x8xf32>
    %cst_102 = arith.constant dense<0.000000e+00> : vector<2x8x8xf32>
    %211 = tpu.matmul %208, %209, %cst_102 {dimension_numbers = #tpu.dot_dimension_numbers<[2], [2], [1], [1], [0, 0, 0, 1, 1, 1], [0], [0]>} : vector<2x8x8xf32>, vector<2x8x8xf32>, vector<2x8x8xf32> -> vector<2x8x8xf32>
    %cst_103 = arith.constant 0.353553385 : f32
    %212 = vector.broadcast %cst_103 : f32 to vector<2x8x8xf32>
    %213 = arith.mulf %211, %212 : vector<2x8x8xf32>
    %cst_104 = arith.constant dense<0xFF800000> : vector<2x8xf32>
    %214 = vector.multi_reduction <maximumf>, %213, %cst_104 [2] : vector<2x8x8xf32> to vector<2x8xf32>
    %215 = vector.shape_cast %214 : vector<2x8xf32> to vector<2x8x1xf32>
    %216 = vector.broadcast %215 : vector<2x8x1xf32> to vector<2x8x8xf32>
    %217 = arith.subf %213, %216 : vector<2x8x8xf32>
    %218 = math.exp %217 : vector<2x8x8xf32>
    %cst_105 = arith.constant dense<0.000000e+00> : vector<2x8xf32>
    %219 = vector.multi_reduction <add>, %218, %cst_105 [2] : vector<2x8x8xf32> to vector<2x8xf32>
    %220 = vector.shape_cast %219 : vector<2x8xf32> to vector<2x8x1xf32>
    %cst_106 = arith.constant dense<0.000000e+00> : vector<2x8x8xf32>
    %221 = tpu.matmul %218, %210, %cst_106 {dimension_numbers = #tpu.dot_dimension_numbers<[2], [1], [1], [2], [0, 0, 0, 1, 1, 2], [0], [0]>} : vector<2x8x8xf32>, vector<2x8x8xf32>, vector<2x8x8xf32> -> vector<2x8x8xf32>
    %222 = tpu.reciprocal %220 {approx = true} : vector<2x8x1xf32> -> vector<2x8x1xf32>
    %223 = vector.broadcast %222 : vector<2x8x1xf32> to vector<2x8x8xf32>
    %224 = arith.mulf %221, %223 : vector<2x8x8xf32>
    %225 = vector.shape_cast %224 : vector<2x8x8xf32> to vector<16x8xf32>
    %226 = vector.extract_strided_slice %29 {offsets = [8, 0], sizes = [8, 32], strides = [1, 1]} : vector<32x32xf32> to vector<8x32xf32>
    %cst_107 = arith.constant dense<0.000000e+00> : vector<16x32xf32>
    %227 = tpu.matmul %225, %226, %cst_107 {dimension_numbers = #tpu.dot_dimension_numbers<[1], [0], [0], [1], [0, 0, 1, 1], [], []>} : vector<16x8xf32>, vector<8x32xf32>, vector<16x32xf32> -> vector<16x32xf32>
    %228 = arith.addf %207, %227 : vector<16x32xf32>
    %229 = vector.extract_strided_slice %185 {offsets = [0, 0, 16], sizes = [2, 8, 8], strides = [1, 1, 1]} : vector<2x8x32xf32> to vector<2x8x8xf32>
    %230 = vector.extract_strided_slice %186 {offsets = [0, 0, 16], sizes = [2, 8, 8], strides = [1, 1, 1]} : vector<2x8x32xf32> to vector<2x8x8xf32>
    %231 = vector.extract_strided_slice %187 {offsets = [0, 0, 16], sizes = [2, 8, 8], strides = [1, 1, 1]} : vector<2x8x32xf32> to vector<2x8x8xf32>
    %cst_108 = arith.constant dense<0.000000e+00> : vector<2x8x8xf32>
    %232 = tpu.matmul %229, %230, %cst_108 {dimension_numbers = #tpu.dot_dimension_numbers<[2], [2], [1], [1], [0, 0, 0, 1, 1, 1], [0], [0]>} : vector<2x8x8xf32>, vector<2x8x8xf32>, vector<2x8x8xf32> -> vector<2x8x8xf32>
    %cst_109 = arith.constant 0.353553385 : f32
    %233 = vector.broadcast %cst_109 : f32 to vector<2x8x8xf32>
    %234 = arith.mulf %232, %233 : vector<2x8x8xf32>
    %cst_110 = arith.constant dense<0xFF800000> : vector<2x8xf32>
    %235 = vector.multi_reduction <maximumf>, %234, %cst_110 [2] : vector<2x8x8xf32> to vector<2x8xf32>
    %236 = vector.shape_cast %235 : vector<2x8xf32> to vector<2x8x1xf32>
    %237 = vector.broadcast %236 : vector<2x8x1xf32> to vector<2x8x8xf32>
    %238 = arith.subf %234, %237 : vector<2x8x8xf32>
    %239 = math.exp %238 : vector<2x8x8xf32>
    %cst_111 = arith.constant dense<0.000000e+00> : vector<2x8xf32>
    %240 = vector.multi_reduction <add>, %239, %cst_111 [2] : vector<2x8x8xf32> to vector<2x8xf32>
    %241 = vector.shape_cast %240 : vector<2x8xf32> to vector<2x8x1xf32>
    %cst_112 = arith.constant dense<0.000000e+00> : vector<2x8x8xf32>
    %242 = tpu.matmul %239, %231, %cst_112 {dimension_numbers = #tpu.dot_dimension_numbers<[2], [1], [1], [2], [0, 0, 0, 1, 1, 2], [0], [0]>} : vector<2x8x8xf32>, vector<2x8x8xf32>, vector<2x8x8xf32> -> vector<2x8x8xf32>
    %243 = tpu.reciprocal %241 {approx = true} : vector<2x8x1xf32> -> vector<2x8x1xf32>
    %244 = vector.broadcast %243 : vector<2x8x1xf32> to vector<2x8x8xf32>
    %245 = arith.mulf %242, %244 : vector<2x8x8xf32>
    %246 = vector.shape_cast %245 : vector<2x8x8xf32> to vector<16x8xf32>
    %247 = vector.extract_strided_slice %29 {offsets = [16, 0], sizes = [8, 32], strides = [1, 1]} : vector<32x32xf32> to vector<8x32xf32>
    %cst_113 = arith.constant dense<0.000000e+00> : vector<16x32xf32>
    %248 = tpu.matmul %246, %247, %cst_113 {dimension_numbers = #tpu.dot_dimension_numbers<[1], [0], [0], [1], [0, 0, 1, 1], [], []>} : vector<16x8xf32>, vector<8x32xf32>, vector<16x32xf32> -> vector<16x32xf32>
    %249 = arith.addf %228, %248 : vector<16x32xf32>
    %250 = vector.extract_strided_slice %185 {offsets = [0, 0, 24], sizes = [2, 8, 8], strides = [1, 1, 1]} : vector<2x8x32xf32> to vector<2x8x8xf32>
    %251 = vector.extract_strided_slice %186 {offsets = [0, 0, 24], sizes = [2, 8, 8], strides = [1, 1, 1]} : vector<2x8x32xf32> to vector<2x8x8xf32>
    %252 = vector.extract_strided_slice %187 {offsets = [0, 0, 24], sizes = [2, 8, 8], strides = [1, 1, 1]} : vector<2x8x32xf32> to vector<2x8x8xf32>
    %cst_114 = arith.constant dense<0.000000e+00> : vector<2x8x8xf32>
    %253 = tpu.matmul %250, %251, %cst_114 {dimension_numbers = #tpu.dot_dimension_numbers<[2], [2], [1], [1], [0, 0, 0, 1, 1, 1], [0], [0]>} : vector<2x8x8xf32>, vector<2x8x8xf32>, vector<2x8x8xf32> -> vector<2x8x8xf32>
    %cst_115 = arith.constant 0.353553385 : f32
    %254 = vector.broadcast %cst_115 : f32 to vector<2x8x8xf32>
    %255 = arith.mulf %253, %254 : vector<2x8x8xf32>
    %cst_116 = arith.constant dense<0xFF800000> : vector<2x8xf32>
    %256 = vector.multi_reduction <maximumf>, %255, %cst_116 [2] : vector<2x8x8xf32> to vector<2x8xf32>
    %257 = vector.shape_cast %256 : vector<2x8xf32> to vector<2x8x1xf32>
    %258 = vector.broadcast %257 : vector<2x8x1xf32> to vector<2x8x8xf32>
    %259 = arith.subf %255, %258 : vector<2x8x8xf32>
    %260 = math.exp %259 : vector<2x8x8xf32>
    %cst_117 = arith.constant dense<0.000000e+00> : vector<2x8xf32>
    %261 = vector.multi_reduction <add>, %260, %cst_117 [2] : vector<2x8x8xf32> to vector<2x8xf32>
    %262 = vector.shape_cast %261 : vector<2x8xf32> to vector<2x8x1xf32>
    %cst_118 = arith.constant dense<0.000000e+00> : vector<2x8x8xf32>
    %263 = tpu.matmul %260, %252, %cst_118 {dimension_numbers = #tpu.dot_dimension_numbers<[2], [1], [1], [2], [0, 0, 0, 1, 1, 2], [0], [0]>} : vector<2x8x8xf32>, vector<2x8x8xf32>, vector<2x8x8xf32> -> vector<2x8x8xf32>
    %264 = tpu.reciprocal %262 {approx = true} : vector<2x8x1xf32> -> vector<2x8x1xf32>
    %265 = vector.broadcast %264 : vector<2x8x1xf32> to vector<2x8x8xf32>
    %266 = arith.mulf %263, %265 : vector<2x8x8xf32>
    %267 = vector.shape_cast %266 : vector<2x8x8xf32> to vector<16x8xf32>
    %268 = vector.extract_strided_slice %29 {offsets = [24, 0], sizes = [8, 32], strides = [1, 1]} : vector<32x32xf32> to vector<8x32xf32>
    %cst_119 = arith.constant dense<0.000000e+00> : vector<16x32xf32>
    %269 = tpu.matmul %267, %268, %cst_119 {dimension_numbers = #tpu.dot_dimension_numbers<[1], [0], [0], [1], [0, 0, 1, 1], [], []>} : vector<16x8xf32>, vector<8x32xf32>, vector<16x32xf32> -> vector<16x32xf32>
    %270 = arith.addf %249, %269 : vector<16x32xf32>
    %271 = vector.broadcast %31 : vector<1x32xf32> to vector<16x32xf32>
    %272 = arith.addf %270, %271 : vector<16x32xf32>
    %273 = arith.addf %176, %272 : vector<16x32xf32>
    %cst_120 = arith.constant dense<0.000000e+00> : vector<16xf32>
    %274 = vector.multi_reduction <add>, %273, %cst_120 [1] : vector<16x32xf32> to vector<16xf32>
    %275 = vector.shape_cast %274 : vector<16xf32> to vector<16x1xf32>
    %cst_121 = arith.constant 3.200000e+01 : f32
    %276 = vector.broadcast %cst_121 : f32 to vector<16x1xf32>
    %277 = arith.divf %275, %276 : vector<16x1xf32>
    %278 = vector.broadcast %277 : vector<16x1xf32> to vector<16x32xf32>
    %279 = arith.subf %273, %278 : vector<16x32xf32>
    %280 = arith.mulf %279, %279 : vector<16x32xf32>
    %cst_122 = arith.constant dense<0.000000e+00> : vector<16xf32>
    %281 = vector.multi_reduction <add>, %280, %cst_122 [1] : vector<16x32xf32> to vector<16xf32>
    %282 = vector.shape_cast %281 : vector<16xf32> to vector<16x1xf32>
    %cst_123 = arith.constant 3.200000e+01 : f32
    %283 = vector.broadcast %cst_123 : f32 to vector<16x1xf32>
    %284 = arith.divf %282, %283 : vector<16x1xf32>
    %285 = vector.broadcast %277 : vector<16x1xf32> to vector<16x32xf32>
    %286 = arith.subf %273, %285 : vector<16x32xf32>
    %cst_124 = arith.constant 9.99999974E-6 : f32
    %287 = vector.broadcast %cst_124 : f32 to vector<16x1xf32>
    %288 = arith.addf %284, %287 : vector<16x1xf32>
    %289 = math.rsqrt %288 : vector<16x1xf32>
    %290 = vector.broadcast %289 : vector<16x1xf32> to vector<16x32xf32>
    %291 = arith.mulf %286, %290 : vector<16x32xf32>
    %292 = vector.broadcast %33 : vector<1x32xf32> to vector<16x32xf32>
    %293 = arith.mulf %291, %292 : vector<16x32xf32>
    %294 = vector.broadcast %35 : vector<1x32xf32> to vector<16x32xf32>
    %295 = arith.addf %293, %294 : vector<16x32xf32>
    %cst_125 = arith.constant dense<0.000000e+00> : vector<16x64xf32>
    %296 = tpu.matmul %295, %37, %cst_125 {dimension_numbers = #tpu.dot_dimension_numbers<[1], [0], [0], [1], [0, 0, 1, 1], [], []>} : vector<16x32xf32>, vector<32x64xf32>, vector<16x64xf32> -> vector<16x64xf32>
    %297 = vector.broadcast %39 : vector<1x64xf32> to vector<16x64xf32>
    %298 = arith.addf %296, %297 : vector<16x64xf32>
    %cst_126 = arith.constant 0.000000e+00 : f32
    %299 = vector.broadcast %cst_126 : f32 to vector<16x64xf32>
    %300 = arith.maximumf %298, %299 : vector<16x64xf32>
    %cst_127 = arith.constant dense<0.000000e+00> : vector<16x32xf32>
    %301 = tpu.matmul %300, %41, %cst_127 {dimension_numbers = #tpu.dot_dimension_numbers<[1], [0], [0], [1], [0, 0, 1, 1], [], []>} : vector<16x64xf32>, vector<64x32xf32>, vector<16x32xf32> -> vector<16x32xf32>
    %302 = vector.broadcast %43 : vector<1x32xf32> to vector<16x32xf32>
    %303 = arith.addf %301, %302 : vector<16x32xf32>
    %304 = arith.addf %295, %303 : vector<16x32xf32>
    %cst_128 = arith.constant dense<0.000000e+00> : vector<16xf32>
    %305 = vector.multi_reduction <add>, %304, %cst_128 [1] : vector<16x32xf32> to vector<16xf32>
    %306 = vector.shape_cast %305 : vector<16xf32> to vector<16x1xf32>
    %cst_129 = arith.constant 3.200000e+01 : f32
    %307 = vector.broadcast %cst_129 : f32 to vector<16x1xf32>
    %308 = arith.divf %306, %307 : vector<16x1xf32>
    %309 = vector.broadcast %308 : vector<16x1xf32> to vector<16x32xf32>
    %310 = arith.subf %304, %309 : vector<16x32xf32>
    %311 = arith.mulf %310, %310 : vector<16x32xf32>
    %cst_130 = arith.constant dense<0.000000e+00> : vector<16xf32>
    %312 = vector.multi_reduction <add>, %311, %cst_130 [1] : vector<16x32xf32> to vector<16xf32>
    %313 = vector.shape_cast %312 : vector<16xf32> to vector<16x1xf32>
    %cst_131 = arith.constant 3.200000e+01 : f32
    %314 = vector.broadcast %cst_131 : f32 to vector<16x1xf32>
    %315 = arith.divf %313, %314 : vector<16x1xf32>
    %316 = vector.broadcast %308 : vector<16x1xf32> to vector<16x32xf32>
    %317 = arith.subf %304, %316 : vector<16x32xf32>
    %cst_132 = arith.constant 9.99999974E-6 : f32
    %318 = vector.broadcast %cst_132 : f32 to vector<16x1xf32>
    %319 = arith.addf %315, %318 : vector<16x1xf32>
    %320 = math.rsqrt %319 : vector<16x1xf32>
    %321 = vector.broadcast %320 : vector<16x1xf32> to vector<16x32xf32>
    %322 = arith.mulf %317, %321 : vector<16x32xf32>
    %323 = vector.broadcast %45 : vector<1x32xf32> to vector<16x32xf32>
    %324 = arith.mulf %322, %323 : vector<16x32xf32>
    %325 = vector.broadcast %47 : vector<1x32xf32> to vector<16x32xf32>
    %326 = arith.addf %324, %325 : vector<16x32xf32>
    %c1 = arith.constant 1 : index
    %c0_133 = arith.constant 0 : index
    %c0_134 = arith.constant 0 : index
    %327 = vector.load %arg3[%c1, %c0_133, %c0_134] : memref<2x32x96xf32, #tpu.memory_space<vmem>>, vector<1x32x96xf32>
    %328 = vector.shape_cast %327 : vector<1x32x96xf32> to vector<32x96xf32>
    %c1_135 = arith.constant 1 : index
    %c0_136 = arith.constant 0 : index
    %c0_137 = arith.constant 0 : index
    %329 = vector.load %arg4[%c1_135, %c0_136, %c0_137] : memref<2x1x96xf32, #tpu.memory_space<vmem>>, vector<1x1x96xf32>
    %330 = vector.shape_cast %329 : vector<1x1x96xf32> to vector<1x96xf32>
    %c1_138 = arith.constant 1 : index
    %c0_139 = arith.constant 0 : index
    %c0_140 = arith.constant 0 : index
    %331 = vector.load %arg5[%c1_138, %c0_139, %c0_140] : memref<2x32x32xf32, #tpu.memory_space<vmem>>, vector<1x32x32xf32>
    %332 = vector.shape_cast %331 : vector<1x32x32xf32> to vector<32x32xf32>
    %c1_141 = arith.constant 1 : index
    %c0_142 = arith.constant 0 : index
    %c0_143 = arith.constant 0 : index
    %333 = vector.load %arg6[%c1_141, %c0_142, %c0_143] : memref<2x1x32xf32, #tpu.memory_space<vmem>>, vector<1x1x32xf32>
    %334 = vector.shape_cast %333 : vector<1x1x32xf32> to vector<1x32xf32>
    %c1_144 = arith.constant 1 : index
    %c0_145 = arith.constant 0 : index
    %c0_146 = arith.constant 0 : index
    %335 = vector.load %arg7[%c1_144, %c0_145, %c0_146] : memref<2x1x32xf32, #tpu.memory_space<vmem>>, vector<1x1x32xf32>
    %336 = vector.shape_cast %335 : vector<1x1x32xf32> to vector<1x32xf32>
    %c1_147 = arith.constant 1 : index
    %c0_148 = arith.constant 0 : index
    %c0_149 = arith.constant 0 : index
    %337 = vector.load %arg8[%c1_147, %c0_148, %c0_149] : memref<2x1x32xf32, #tpu.memory_space<vmem>>, vector<1x1x32xf32>
    %338 = vector.shape_cast %337 : vector<1x1x32xf32> to vector<1x32xf32>
    %c1_150 = arith.constant 1 : index
    %c0_151 = arith.constant 0 : index
    %c0_152 = arith.constant 0 : index
    %339 = vector.load %arg9[%c1_150, %c0_151, %c0_152] : memref<2x32x32xf32, #tpu.memory_space<vmem>>, vector<1x32x32xf32>
    %340 = vector.shape_cast %339 : vector<1x32x32xf32> to vector<32x32xf32>
    %c1_153 = arith.constant 1 : index
    %c0_154 = arith.constant 0 : index
    %c0_155 = arith.constant 0 : index
    %341 = vector.load %arg10[%c1_153, %c0_154, %c0_155] : memref<2x1x32xf32, #tpu.memory_space<vmem>>, vector<1x1x32xf32>
    %342 = vector.shape_cast %341 : vector<1x1x32xf32> to vector<1x32xf32>
    %c1_156 = arith.constant 1 : index
    %c0_157 = arith.constant 0 : index
    %c0_158 = arith.constant 0 : index
    %343 = vector.load %arg11[%c1_156, %c0_157, %c0_158] : memref<2x32x64xf32, #tpu.memory_space<vmem>>, vector<1x32x64xf32>
    %344 = vector.shape_cast %343 : vector<1x32x64xf32> to vector<32x64xf32>
    %c1_159 = arith.constant 1 : index
    %c0_160 = arith.constant 0 : index
    %c0_161 = arith.constant 0 : index
    %345 = vector.load %arg12[%c1_159, %c0_160, %c0_161] : memref<2x1x64xf32, #tpu.memory_space<vmem>>, vector<1x1x64xf32>
    %346 = vector.shape_cast %345 : vector<1x1x64xf32> to vector<1x64xf32>
    %c1_162 = arith.constant 1 : index
    %c0_163 = arith.constant 0 : index
    %c0_164 = arith.constant 0 : index
    %347 = vector.load %arg13[%c1_162, %c0_163, %c0_164] : memref<2x32x32xf32, #tpu.memory_space<vmem>>, vector<1x32x32xf32>
    %348 = vector.shape_cast %347 : vector<1x32x32xf32> to vector<32x32xf32>
    %c1_165 = arith.constant 1 : index
    %c0_166 = arith.constant 0 : index
    %c0_167 = arith.constant 0 : index
    %349 = vector.load %arg14[%c1_165, %c0_166, %c0_167] : memref<2x1x32xf32, #tpu.memory_space<vmem>>, vector<1x1x32xf32>
    %350 = vector.shape_cast %349 : vector<1x1x32xf32> to vector<1x32xf32>
    %c1_168 = arith.constant 1 : index
    %c0_169 = arith.constant 0 : index
    %c0_170 = arith.constant 0 : index
    %351 = vector.load %arg15[%c1_168, %c0_169, %c0_170] : memref<2x1x32xf32, #tpu.memory_space<vmem>>, vector<1x1x32xf32>
    %352 = vector.shape_cast %351 : vector<1x1x32xf32> to vector<1x32xf32>
    %c1_171 = arith.constant 1 : index
    %c0_172 = arith.constant 0 : index
    %c0_173 = arith.constant 0 : index
    %353 = vector.load %arg16[%c1_171, %c0_172, %c0_173] : memref<2x1x32xf32, #tpu.memory_space<vmem>>, vector<1x1x32xf32>
    %354 = vector.shape_cast %353 : vector<1x1x32xf32> to vector<1x32xf32>
    %c1_174 = arith.constant 1 : index
    %c0_175 = arith.constant 0 : index
    %c0_176 = arith.constant 0 : index
    %355 = vector.load %arg17[%c1_174, %c0_175, %c0_176] : memref<2x32x64xf32, #tpu.memory_space<vmem>>, vector<1x32x64xf32>
    %356 = vector.shape_cast %355 : vector<1x32x64xf32> to vector<32x64xf32>
    %c1_177 = arith.constant 1 : index
    %c0_178 = arith.constant 0 : index
    %c0_179 = arith.constant 0 : index
    %357 = vector.load %arg18[%c1_177, %c0_178, %c0_179] : memref<2x1x64xf32, #tpu.memory_space<vmem>>, vector<1x1x64xf32>
    %358 = vector.shape_cast %357 : vector<1x1x64xf32> to vector<1x64xf32>
    %c1_180 = arith.constant 1 : index
    %c0_181 = arith.constant 0 : index
    %c0_182 = arith.constant 0 : index
    %359 = vector.load %arg19[%c1_180, %c0_181, %c0_182] : memref<2x64x32xf32, #tpu.memory_space<vmem>>, vector<1x64x32xf32>
    %360 = vector.shape_cast %359 : vector<1x64x32xf32> to vector<64x32xf32>
    %c1_183 = arith.constant 1 : index
    %c0_184 = arith.constant 0 : index
    %c0_185 = arith.constant 0 : index
    %361 = vector.load %arg20[%c1_183, %c0_184, %c0_185] : memref<2x1x32xf32, #tpu.memory_space<vmem>>, vector<1x1x32xf32>
    %362 = vector.shape_cast %361 : vector<1x1x32xf32> to vector<1x32xf32>
    %c1_186 = arith.constant 1 : index
    %c0_187 = arith.constant 0 : index
    %c0_188 = arith.constant 0 : index
    %363 = vector.load %arg21[%c1_186, %c0_187, %c0_188] : memref<2x1x32xf32, #tpu.memory_space<vmem>>, vector<1x1x32xf32>
    %364 = vector.shape_cast %363 : vector<1x1x32xf32> to vector<1x32xf32>
    %c1_189 = arith.constant 1 : index
    %c0_190 = arith.constant 0 : index
    %c0_191 = arith.constant 0 : index
    %365 = vector.load %arg22[%c1_189, %c0_190, %c0_191] : memref<2x1x32xf32, #tpu.memory_space<vmem>>, vector<1x1x32xf32>
    %366 = vector.shape_cast %365 : vector<1x1x32xf32> to vector<1x32xf32>
    %cst_192 = arith.constant dense<0.000000e+00> : vector<16x96xf32>
    %367 = tpu.matmul %326, %328, %cst_192 {dimension_numbers = #tpu.dot_dimension_numbers<[1], [0], [0], [1], [0, 0, 1, 1], [], []>} : vector<16x32xf32>, vector<32x96xf32>, vector<16x96xf32> -> vector<16x96xf32>
    %368 = vector.broadcast %330 : vector<1x96xf32> to vector<16x96xf32>
    %369 = arith.addf %367, %368 : vector<16x96xf32>
    %370 = vector.extract_strided_slice %369 {offsets = [0, 0], sizes = [16, 32], strides = [1, 1]} : vector<16x96xf32> to vector<16x32xf32>
    %371 = vector.extract_strided_slice %369 {offsets = [0, 32], sizes = [16, 32], strides = [1, 1]} : vector<16x96xf32> to vector<16x32xf32>
    %372 = vector.extract_strided_slice %369 {offsets = [0, 64], sizes = [16, 32], strides = [1, 1]} : vector<16x96xf32> to vector<16x32xf32>
    %373 = vector.shape_cast %370 : vector<16x32xf32> to vector<2x8x32xf32>
    %374 = vector.shape_cast %371 : vector<16x32xf32> to vector<2x8x32xf32>
    %375 = vector.shape_cast %372 : vector<16x32xf32> to vector<2x8x32xf32>
    %376 = vector.extract_strided_slice %373 {offsets = [0, 0, 0], sizes = [2, 8, 8], strides = [1, 1, 1]} : vector<2x8x32xf32> to vector<2x8x8xf32>
    %377 = vector.extract_strided_slice %374 {offsets = [0, 0, 0], sizes = [2, 8, 8], strides = [1, 1, 1]} : vector<2x8x32xf32> to vector<2x8x8xf32>
    %378 = vector.extract_strided_slice %375 {offsets = [0, 0, 0], sizes = [2, 8, 8], strides = [1, 1, 1]} : vector<2x8x32xf32> to vector<2x8x8xf32>
    %cst_193 = arith.constant dense<0.000000e+00> : vector<2x8x8xf32>
    %379 = tpu.matmul %376, %377, %cst_193 {dimension_numbers = #tpu.dot_dimension_numbers<[2], [2], [1], [1], [0, 0, 0, 1, 1, 1], [0], [0]>} : vector<2x8x8xf32>, vector<2x8x8xf32>, vector<2x8x8xf32> -> vector<2x8x8xf32>
    %cst_194 = arith.constant 0.353553385 : f32
    %380 = vector.broadcast %cst_194 : f32 to vector<2x8x8xf32>
    %381 = arith.mulf %379, %380 : vector<2x8x8xf32>
    %382 = vector.shape_cast %7 : vector<8x8xf32> to vector<1x8x8xf32>
    %383 = vector.broadcast %382 : vector<1x8x8xf32> to vector<2x8x8xf32>
    %384 = arith.addf %381, %383 : vector<2x8x8xf32>
    %cst_195 = arith.constant dense<0xFF800000> : vector<2x8xf32>
    %385 = vector.multi_reduction <maximumf>, %384, %cst_195 [2] : vector<2x8x8xf32> to vector<2x8xf32>
    %386 = vector.shape_cast %385 : vector<2x8xf32> to vector<2x8x1xf32>
    %387 = vector.broadcast %386 : vector<2x8x1xf32> to vector<2x8x8xf32>
    %388 = arith.subf %384, %387 : vector<2x8x8xf32>
    %389 = math.exp %388 : vector<2x8x8xf32>
    %cst_196 = arith.constant dense<0.000000e+00> : vector<2x8xf32>
    %390 = vector.multi_reduction <add>, %389, %cst_196 [2] : vector<2x8x8xf32> to vector<2x8xf32>
    %391 = vector.shape_cast %390 : vector<2x8xf32> to vector<2x8x1xf32>
    %cst_197 = arith.constant dense<0.000000e+00> : vector<2x8x8xf32>
    %392 = tpu.matmul %389, %378, %cst_197 {dimension_numbers = #tpu.dot_dimension_numbers<[2], [1], [1], [2], [0, 0, 0, 1, 1, 2], [0], [0]>} : vector<2x8x8xf32>, vector<2x8x8xf32>, vector<2x8x8xf32> -> vector<2x8x8xf32>
    %393 = tpu.reciprocal %391 {approx = true} : vector<2x8x1xf32> -> vector<2x8x1xf32>
    %394 = vector.broadcast %393 : vector<2x8x1xf32> to vector<2x8x8xf32>
    %395 = arith.mulf %392, %394 : vector<2x8x8xf32>
    %396 = vector.shape_cast %395 : vector<2x8x8xf32> to vector<16x8xf32>
    %397 = vector.extract_strided_slice %332 {offsets = [0, 0], sizes = [8, 32], strides = [1, 1]} : vector<32x32xf32> to vector<8x32xf32>
    %cst_198 = arith.constant dense<0.000000e+00> : vector<16x32xf32>
    %398 = tpu.matmul %396, %397, %cst_198 {dimension_numbers = #tpu.dot_dimension_numbers<[1], [0], [0], [1], [0, 0, 1, 1], [], []>} : vector<16x8xf32>, vector<8x32xf32>, vector<16x32xf32> -> vector<16x32xf32>
    %399 = vector.extract_strided_slice %373 {offsets = [0, 0, 8], sizes = [2, 8, 8], strides = [1, 1, 1]} : vector<2x8x32xf32> to vector<2x8x8xf32>
    %400 = vector.extract_strided_slice %374 {offsets = [0, 0, 8], sizes = [2, 8, 8], strides = [1, 1, 1]} : vector<2x8x32xf32> to vector<2x8x8xf32>
    %401 = vector.extract_strided_slice %375 {offsets = [0, 0, 8], sizes = [2, 8, 8], strides = [1, 1, 1]} : vector<2x8x32xf32> to vector<2x8x8xf32>
    %cst_199 = arith.constant dense<0.000000e+00> : vector<2x8x8xf32>
    %402 = tpu.matmul %399, %400, %cst_199 {dimension_numbers = #tpu.dot_dimension_numbers<[2], [2], [1], [1], [0, 0, 0, 1, 1, 1], [0], [0]>} : vector<2x8x8xf32>, vector<2x8x8xf32>, vector<2x8x8xf32> -> vector<2x8x8xf32>
    %cst_200 = arith.constant 0.353553385 : f32
    %403 = vector.broadcast %cst_200 : f32 to vector<2x8x8xf32>
    %404 = arith.mulf %402, %403 : vector<2x8x8xf32>
    %405 = vector.shape_cast %7 : vector<8x8xf32> to vector<1x8x8xf32>
    %406 = vector.broadcast %405 : vector<1x8x8xf32> to vector<2x8x8xf32>
    %407 = arith.addf %404, %406 : vector<2x8x8xf32>
    %cst_201 = arith.constant dense<0xFF800000> : vector<2x8xf32>
    %408 = vector.multi_reduction <maximumf>, %407, %cst_201 [2] : vector<2x8x8xf32> to vector<2x8xf32>
    %409 = vector.shape_cast %408 : vector<2x8xf32> to vector<2x8x1xf32>
    %410 = vector.broadcast %409 : vector<2x8x1xf32> to vector<2x8x8xf32>
    %411 = arith.subf %407, %410 : vector<2x8x8xf32>
    %412 = math.exp %411 : vector<2x8x8xf32>
    %cst_202 = arith.constant dense<0.000000e+00> : vector<2x8xf32>
    %413 = vector.multi_reduction <add>, %412, %cst_202 [2] : vector<2x8x8xf32> to vector<2x8xf32>
    %414 = vector.shape_cast %413 : vector<2x8xf32> to vector<2x8x1xf32>
    %cst_203 = arith.constant dense<0.000000e+00> : vector<2x8x8xf32>
    %415 = tpu.matmul %412, %401, %cst_203 {dimension_numbers = #tpu.dot_dimension_numbers<[2], [1], [1], [2], [0, 0, 0, 1, 1, 2], [0], [0]>} : vector<2x8x8xf32>, vector<2x8x8xf32>, vector<2x8x8xf32> -> vector<2x8x8xf32>
    %416 = tpu.reciprocal %414 {approx = true} : vector<2x8x1xf32> -> vector<2x8x1xf32>
    %417 = vector.broadcast %416 : vector<2x8x1xf32> to vector<2x8x8xf32>
    %418 = arith.mulf %415, %417 : vector<2x8x8xf32>
    %419 = vector.shape_cast %418 : vector<2x8x8xf32> to vector<16x8xf32>
    %420 = vector.extract_strided_slice %332 {offsets = [8, 0], sizes = [8, 32], strides = [1, 1]} : vector<32x32xf32> to vector<8x32xf32>
    %cst_204 = arith.constant dense<0.000000e+00> : vector<16x32xf32>
    %421 = tpu.matmul %419, %420, %cst_204 {dimension_numbers = #tpu.dot_dimension_numbers<[1], [0], [0], [1], [0, 0, 1, 1], [], []>} : vector<16x8xf32>, vector<8x32xf32>, vector<16x32xf32> -> vector<16x32xf32>
    %422 = arith.addf %398, %421 : vector<16x32xf32>
    %423 = vector.extract_strided_slice %373 {offsets = [0, 0, 16], sizes = [2, 8, 8], strides = [1, 1, 1]} : vector<2x8x32xf32> to vector<2x8x8xf32>
    %424 = vector.extract_strided_slice %374 {offsets = [0, 0, 16], sizes = [2, 8, 8], strides = [1, 1, 1]} : vector<2x8x32xf32> to vector<2x8x8xf32>
    %425 = vector.extract_strided_slice %375 {offsets = [0, 0, 16], sizes = [2, 8, 8], strides = [1, 1, 1]} : vector<2x8x32xf32> to vector<2x8x8xf32>
    %cst_205 = arith.constant dense<0.000000e+00> : vector<2x8x8xf32>
    %426 = tpu.matmul %423, %424, %cst_205 {dimension_numbers = #tpu.dot_dimension_numbers<[2], [2], [1], [1], [0, 0, 0, 1, 1, 1], [0], [0]>} : vector<2x8x8xf32>, vector<2x8x8xf32>, vector<2x8x8xf32> -> vector<2x8x8xf32>
    %cst_206 = arith.constant 0.353553385 : f32
    %427 = vector.broadcast %cst_206 : f32 to vector<2x8x8xf32>
    %428 = arith.mulf %426, %427 : vector<2x8x8xf32>
    %429 = vector.shape_cast %7 : vector<8x8xf32> to vector<1x8x8xf32>
    %430 = vector.broadcast %429 : vector<1x8x8xf32> to vector<2x8x8xf32>
    %431 = arith.addf %428, %430 : vector<2x8x8xf32>
    %cst_207 = arith.constant dense<0xFF800000> : vector<2x8xf32>
    %432 = vector.multi_reduction <maximumf>, %431, %cst_207 [2] : vector<2x8x8xf32> to vector<2x8xf32>
    %433 = vector.shape_cast %432 : vector<2x8xf32> to vector<2x8x1xf32>
    %434 = vector.broadcast %433 : vector<2x8x1xf32> to vector<2x8x8xf32>
    %435 = arith.subf %431, %434 : vector<2x8x8xf32>
    %436 = math.exp %435 : vector<2x8x8xf32>
    %cst_208 = arith.constant dense<0.000000e+00> : vector<2x8xf32>
    %437 = vector.multi_reduction <add>, %436, %cst_208 [2] : vector<2x8x8xf32> to vector<2x8xf32>
    %438 = vector.shape_cast %437 : vector<2x8xf32> to vector<2x8x1xf32>
    %cst_209 = arith.constant dense<0.000000e+00> : vector<2x8x8xf32>
    %439 = tpu.matmul %436, %425, %cst_209 {dimension_numbers = #tpu.dot_dimension_numbers<[2], [1], [1], [2], [0, 0, 0, 1, 1, 2], [0], [0]>} : vector<2x8x8xf32>, vector<2x8x8xf32>, vector<2x8x8xf32> -> vector<2x8x8xf32>
    %440 = tpu.reciprocal %438 {approx = true} : vector<2x8x1xf32> -> vector<2x8x1xf32>
    %441 = vector.broadcast %440 : vector<2x8x1xf32> to vector<2x8x8xf32>
    %442 = arith.mulf %439, %441 : vector<2x8x8xf32>
    %443 = vector.shape_cast %442 : vector<2x8x8xf32> to vector<16x8xf32>
    %444 = vector.extract_strided_slice %332 {offsets = [16, 0], sizes = [8, 32], strides = [1, 1]} : vector<32x32xf32> to vector<8x32xf32>
    %cst_210 = arith.constant dense<0.000000e+00> : vector<16x32xf32>
    %445 = tpu.matmul %443, %444, %cst_210 {dimension_numbers = #tpu.dot_dimension_numbers<[1], [0], [0], [1], [0, 0, 1, 1], [], []>} : vector<16x8xf32>, vector<8x32xf32>, vector<16x32xf32> -> vector<16x32xf32>
    %446 = arith.addf %422, %445 : vector<16x32xf32>
    %447 = vector.extract_strided_slice %373 {offsets = [0, 0, 24], sizes = [2, 8, 8], strides = [1, 1, 1]} : vector<2x8x32xf32> to vector<2x8x8xf32>
    %448 = vector.extract_strided_slice %374 {offsets = [0, 0, 24], sizes = [2, 8, 8], strides = [1, 1, 1]} : vector<2x8x32xf32> to vector<2x8x8xf32>
    %449 = vector.extract_strided_slice %375 {offsets = [0, 0, 24], sizes = [2, 8, 8], strides = [1, 1, 1]} : vector<2x8x32xf32> to vector<2x8x8xf32>
    %cst_211 = arith.constant dense<0.000000e+00> : vector<2x8x8xf32>
    %450 = tpu.matmul %447, %448, %cst_211 {dimension_numbers = #tpu.dot_dimension_numbers<[2], [2], [1], [1], [0, 0, 0, 1, 1, 1], [0], [0]>} : vector<2x8x8xf32>, vector<2x8x8xf32>, vector<2x8x8xf32> -> vector<2x8x8xf32>
    %cst_212 = arith.constant 0.353553385 : f32
    %451 = vector.broadcast %cst_212 : f32 to vector<2x8x8xf32>
    %452 = arith.mulf %450, %451 : vector<2x8x8xf32>
    %453 = vector.shape_cast %7 : vector<8x8xf32> to vector<1x8x8xf32>
    %454 = vector.broadcast %453 : vector<1x8x8xf32> to vector<2x8x8xf32>
    %455 = arith.addf %452, %454 : vector<2x8x8xf32>
    %cst_213 = arith.constant dense<0xFF800000> : vector<2x8xf32>
    %456 = vector.multi_reduction <maximumf>, %455, %cst_213 [2] : vector<2x8x8xf32> to vector<2x8xf32>
    %457 = vector.shape_cast %456 : vector<2x8xf32> to vector<2x8x1xf32>
    %458 = vector.broadcast %457 : vector<2x8x1xf32> to vector<2x8x8xf32>
    %459 = arith.subf %455, %458 : vector<2x8x8xf32>
    %460 = math.exp %459 : vector<2x8x8xf32>
    %cst_214 = arith.constant dense<0.000000e+00> : vector<2x8xf32>
    %461 = vector.multi_reduction <add>, %460, %cst_214 [2] : vector<2x8x8xf32> to vector<2x8xf32>
    %462 = vector.shape_cast %461 : vector<2x8xf32> to vector<2x8x1xf32>
    %cst_215 = arith.constant dense<0.000000e+00> : vector<2x8x8xf32>
    %463 = tpu.matmul %460, %449, %cst_215 {dimension_numbers = #tpu.dot_dimension_numbers<[2], [1], [1], [2], [0, 0, 0, 1, 1, 2], [0], [0]>} : vector<2x8x8xf32>, vector<2x8x8xf32>, vector<2x8x8xf32> -> vector<2x8x8xf32>
    %464 = tpu.reciprocal %462 {approx = true} : vector<2x8x1xf32> -> vector<2x8x1xf32>
    %465 = vector.broadcast %464 : vector<2x8x1xf32> to vector<2x8x8xf32>
    %466 = arith.mulf %463, %465 : vector<2x8x8xf32>
    %467 = vector.shape_cast %466 : vector<2x8x8xf32> to vector<16x8xf32>
    %468 = vector.extract_strided_slice %332 {offsets = [24, 0], sizes = [8, 32], strides = [1, 1]} : vector<32x32xf32> to vector<8x32xf32>
    %cst_216 = arith.constant dense<0.000000e+00> : vector<16x32xf32>
    %469 = tpu.matmul %467, %468, %cst_216 {dimension_numbers = #tpu.dot_dimension_numbers<[1], [0], [0], [1], [0, 0, 1, 1], [], []>} : vector<16x8xf32>, vector<8x32xf32>, vector<16x32xf32> -> vector<16x32xf32>
    %470 = arith.addf %446, %469 : vector<16x32xf32>
    %471 = vector.broadcast %334 : vector<1x32xf32> to vector<16x32xf32>
    %472 = arith.addf %470, %471 : vector<16x32xf32>
    %473 = arith.addf %326, %472 : vector<16x32xf32>
    %cst_217 = arith.constant dense<0.000000e+00> : vector<16xf32>
    %474 = vector.multi_reduction <add>, %473, %cst_217 [1] : vector<16x32xf32> to vector<16xf32>
    %475 = vector.shape_cast %474 : vector<16xf32> to vector<16x1xf32>
    %cst_218 = arith.constant 3.200000e+01 : f32
    %476 = vector.broadcast %cst_218 : f32 to vector<16x1xf32>
    %477 = arith.divf %475, %476 : vector<16x1xf32>
    %478 = vector.broadcast %477 : vector<16x1xf32> to vector<16x32xf32>
    %479 = arith.subf %473, %478 : vector<16x32xf32>
    %480 = arith.mulf %479, %479 : vector<16x32xf32>
    %cst_219 = arith.constant dense<0.000000e+00> : vector<16xf32>
    %481 = vector.multi_reduction <add>, %480, %cst_219 [1] : vector<16x32xf32> to vector<16xf32>
    %482 = vector.shape_cast %481 : vector<16xf32> to vector<16x1xf32>
    %cst_220 = arith.constant 3.200000e+01 : f32
    %483 = vector.broadcast %cst_220 : f32 to vector<16x1xf32>
    %484 = arith.divf %482, %483 : vector<16x1xf32>
    %485 = vector.broadcast %477 : vector<16x1xf32> to vector<16x32xf32>
    %486 = arith.subf %473, %485 : vector<16x32xf32>
    %cst_221 = arith.constant 9.99999974E-6 : f32
    %487 = vector.broadcast %cst_221 : f32 to vector<16x1xf32>
    %488 = arith.addf %484, %487 : vector<16x1xf32>
    %489 = math.rsqrt %488 : vector<16x1xf32>
    %490 = vector.broadcast %489 : vector<16x1xf32> to vector<16x32xf32>
    %491 = arith.mulf %486, %490 : vector<16x32xf32>
    %492 = vector.broadcast %336 : vector<1x32xf32> to vector<16x32xf32>
    %493 = arith.mulf %491, %492 : vector<16x32xf32>
    %494 = vector.broadcast %338 : vector<1x32xf32> to vector<16x32xf32>
    %495 = arith.addf %493, %494 : vector<16x32xf32>
    %cst_222 = arith.constant dense<0.000000e+00> : vector<16x32xf32>
    %496 = tpu.matmul %495, %340, %cst_222 {dimension_numbers = #tpu.dot_dimension_numbers<[1], [0], [0], [1], [0, 0, 1, 1], [], []>} : vector<16x32xf32>, vector<32x32xf32>, vector<16x32xf32> -> vector<16x32xf32>
    %497 = vector.broadcast %342 : vector<1x32xf32> to vector<16x32xf32>
    %498 = arith.addf %496, %497 : vector<16x32xf32>
    %cst_223 = arith.constant dense<0.000000e+00> : vector<16x64xf32>
    %499 = tpu.matmul %1, %344, %cst_223 {dimension_numbers = #tpu.dot_dimension_numbers<[1], [0], [0], [1], [0, 0, 1, 1], [], []>} : vector<16x32xf32>, vector<32x64xf32>, vector<16x64xf32> -> vector<16x64xf32>
    %500 = vector.broadcast %346 : vector<1x64xf32> to vector<16x64xf32>
    %501 = arith.addf %499, %500 : vector<16x64xf32>
    %502 = vector.extract_strided_slice %501 {offsets = [0, 0], sizes = [16, 32], strides = [1, 1]} : vector<16x64xf32> to vector<16x32xf32>
    %503 = vector.extract_strided_slice %501 {offsets = [0, 32], sizes = [16, 32], strides = [1, 1]} : vector<16x64xf32> to vector<16x32xf32>
    %504 = vector.shape_cast %498 : vector<16x32xf32> to vector<2x8x32xf32>
    %505 = vector.shape_cast %502 : vector<16x32xf32> to vector<2x8x32xf32>
    %506 = vector.shape_cast %503 : vector<16x32xf32> to vector<2x8x32xf32>
    %507 = vector.extract_strided_slice %504 {offsets = [0, 0, 0], sizes = [2, 8, 8], strides = [1, 1, 1]} : vector<2x8x32xf32> to vector<2x8x8xf32>
    %508 = vector.extract_strided_slice %505 {offsets = [0, 0, 0], sizes = [2, 8, 8], strides = [1, 1, 1]} : vector<2x8x32xf32> to vector<2x8x8xf32>
    %509 = vector.extract_strided_slice %506 {offsets = [0, 0, 0], sizes = [2, 8, 8], strides = [1, 1, 1]} : vector<2x8x32xf32> to vector<2x8x8xf32>
    %cst_224 = arith.constant dense<0.000000e+00> : vector<2x8x8xf32>
    %510 = tpu.matmul %507, %508, %cst_224 {dimension_numbers = #tpu.dot_dimension_numbers<[2], [2], [1], [1], [0, 0, 0, 1, 1, 1], [0], [0]>} : vector<2x8x8xf32>, vector<2x8x8xf32>, vector<2x8x8xf32> -> vector<2x8x8xf32>
    %cst_225 = arith.constant 0.353553385 : f32
    %511 = vector.broadcast %cst_225 : f32 to vector<2x8x8xf32>
    %512 = arith.mulf %510, %511 : vector<2x8x8xf32>
    %cst_226 = arith.constant dense<0xFF800000> : vector<2x8xf32>
    %513 = vector.multi_reduction <maximumf>, %512, %cst_226 [2] : vector<2x8x8xf32> to vector<2x8xf32>
    %514 = vector.shape_cast %513 : vector<2x8xf32> to vector<2x8x1xf32>
    %515 = vector.broadcast %514 : vector<2x8x1xf32> to vector<2x8x8xf32>
    %516 = arith.subf %512, %515 : vector<2x8x8xf32>
    %517 = math.exp %516 : vector<2x8x8xf32>
    %cst_227 = arith.constant dense<0.000000e+00> : vector<2x8xf32>
    %518 = vector.multi_reduction <add>, %517, %cst_227 [2] : vector<2x8x8xf32> to vector<2x8xf32>
    %519 = vector.shape_cast %518 : vector<2x8xf32> to vector<2x8x1xf32>
    %cst_228 = arith.constant dense<0.000000e+00> : vector<2x8x8xf32>
    %520 = tpu.matmul %517, %509, %cst_228 {dimension_numbers = #tpu.dot_dimension_numbers<[2], [1], [1], [2], [0, 0, 0, 1, 1, 2], [0], [0]>} : vector<2x8x8xf32>, vector<2x8x8xf32>, vector<2x8x8xf32> -> vector<2x8x8xf32>
    %521 = tpu.reciprocal %519 {approx = true} : vector<2x8x1xf32> -> vector<2x8x1xf32>
    %522 = vector.broadcast %521 : vector<2x8x1xf32> to vector<2x8x8xf32>
    %523 = arith.mulf %520, %522 : vector<2x8x8xf32>
    %524 = vector.shape_cast %523 : vector<2x8x8xf32> to vector<16x8xf32>
    %525 = vector.extract_strided_slice %348 {offsets = [0, 0], sizes = [8, 32], strides = [1, 1]} : vector<32x32xf32> to vector<8x32xf32>
    %cst_229 = arith.constant dense<0.000000e+00> : vector<16x32xf32>
    %526 = tpu.matmul %524, %525, %cst_229 {dimension_numbers = #tpu.dot_dimension_numbers<[1], [0], [0], [1], [0, 0, 1, 1], [], []>} : vector<16x8xf32>, vector<8x32xf32>, vector<16x32xf32> -> vector<16x32xf32>
    %527 = vector.extract_strided_slice %504 {offsets = [0, 0, 8], sizes = [2, 8, 8], strides = [1, 1, 1]} : vector<2x8x32xf32> to vector<2x8x8xf32>
    %528 = vector.extract_strided_slice %505 {offsets = [0, 0, 8], sizes = [2, 8, 8], strides = [1, 1, 1]} : vector<2x8x32xf32> to vector<2x8x8xf32>
    %529 = vector.extract_strided_slice %506 {offsets = [0, 0, 8], sizes = [2, 8, 8], strides = [1, 1, 1]} : vector<2x8x32xf32> to vector<2x8x8xf32>
    %cst_230 = arith.constant dense<0.000000e+00> : vector<2x8x8xf32>
    %530 = tpu.matmul %527, %528, %cst_230 {dimension_numbers = #tpu.dot_dimension_numbers<[2], [2], [1], [1], [0, 0, 0, 1, 1, 1], [0], [0]>} : vector<2x8x8xf32>, vector<2x8x8xf32>, vector<2x8x8xf32> -> vector<2x8x8xf32>
    %cst_231 = arith.constant 0.353553385 : f32
    %531 = vector.broadcast %cst_231 : f32 to vector<2x8x8xf32>
    %532 = arith.mulf %530, %531 : vector<2x8x8xf32>
    %cst_232 = arith.constant dense<0xFF800000> : vector<2x8xf32>
    %533 = vector.multi_reduction <maximumf>, %532, %cst_232 [2] : vector<2x8x8xf32> to vector<2x8xf32>
    %534 = vector.shape_cast %533 : vector<2x8xf32> to vector<2x8x1xf32>
    %535 = vector.broadcast %534 : vector<2x8x1xf32> to vector<2x8x8xf32>
    %536 = arith.subf %532, %535 : vector<2x8x8xf32>
    %537 = math.exp %536 : vector<2x8x8xf32>
    %cst_233 = arith.constant dense<0.000000e+00> : vector<2x8xf32>
    %538 = vector.multi_reduction <add>, %537, %cst_233 [2] : vector<2x8x8xf32> to vector<2x8xf32>
    %539 = vector.shape_cast %538 : vector<2x8xf32> to vector<2x8x1xf32>
    %cst_234 = arith.constant dense<0.000000e+00> : vector<2x8x8xf32>
    %540 = tpu.matmul %537, %529, %cst_234 {dimension_numbers = #tpu.dot_dimension_numbers<[2], [1], [1], [2], [0, 0, 0, 1, 1, 2], [0], [0]>} : vector<2x8x8xf32>, vector<2x8x8xf32>, vector<2x8x8xf32> -> vector<2x8x8xf32>
    %541 = tpu.reciprocal %539 {approx = true} : vector<2x8x1xf32> -> vector<2x8x1xf32>
    %542 = vector.broadcast %541 : vector<2x8x1xf32> to vector<2x8x8xf32>
    %543 = arith.mulf %540, %542 : vector<2x8x8xf32>
    %544 = vector.shape_cast %543 : vector<2x8x8xf32> to vector<16x8xf32>
    %545 = vector.extract_strided_slice %348 {offsets = [8, 0], sizes = [8, 32], strides = [1, 1]} : vector<32x32xf32> to vector<8x32xf32>
    %cst_235 = arith.constant dense<0.000000e+00> : vector<16x32xf32>
    %546 = tpu.matmul %544, %545, %cst_235 {dimension_numbers = #tpu.dot_dimension_numbers<[1], [0], [0], [1], [0, 0, 1, 1], [], []>} : vector<16x8xf32>, vector<8x32xf32>, vector<16x32xf32> -> vector<16x32xf32>
    %547 = arith.addf %526, %546 : vector<16x32xf32>
    %548 = vector.extract_strided_slice %504 {offsets = [0, 0, 16], sizes = [2, 8, 8], strides = [1, 1, 1]} : vector<2x8x32xf32> to vector<2x8x8xf32>
    %549 = vector.extract_strided_slice %505 {offsets = [0, 0, 16], sizes = [2, 8, 8], strides = [1, 1, 1]} : vector<2x8x32xf32> to vector<2x8x8xf32>
    %550 = vector.extract_strided_slice %506 {offsets = [0, 0, 16], sizes = [2, 8, 8], strides = [1, 1, 1]} : vector<2x8x32xf32> to vector<2x8x8xf32>
    %cst_236 = arith.constant dense<0.000000e+00> : vector<2x8x8xf32>
    %551 = tpu.matmul %548, %549, %cst_236 {dimension_numbers = #tpu.dot_dimension_numbers<[2], [2], [1], [1], [0, 0, 0, 1, 1, 1], [0], [0]>} : vector<2x8x8xf32>, vector<2x8x8xf32>, vector<2x8x8xf32> -> vector<2x8x8xf32>
    %cst_237 = arith.constant 0.353553385 : f32
    %552 = vector.broadcast %cst_237 : f32 to vector<2x8x8xf32>
    %553 = arith.mulf %551, %552 : vector<2x8x8xf32>
    %cst_238 = arith.constant dense<0xFF800000> : vector<2x8xf32>
    %554 = vector.multi_reduction <maximumf>, %553, %cst_238 [2] : vector<2x8x8xf32> to vector<2x8xf32>
    %555 = vector.shape_cast %554 : vector<2x8xf32> to vector<2x8x1xf32>
    %556 = vector.broadcast %555 : vector<2x8x1xf32> to vector<2x8x8xf32>
    %557 = arith.subf %553, %556 : vector<2x8x8xf32>
    %558 = math.exp %557 : vector<2x8x8xf32>
    %cst_239 = arith.constant dense<0.000000e+00> : vector<2x8xf32>
    %559 = vector.multi_reduction <add>, %558, %cst_239 [2] : vector<2x8x8xf32> to vector<2x8xf32>
    %560 = vector.shape_cast %559 : vector<2x8xf32> to vector<2x8x1xf32>
    %cst_240 = arith.constant dense<0.000000e+00> : vector<2x8x8xf32>
    %561 = tpu.matmul %558, %550, %cst_240 {dimension_numbers = #tpu.dot_dimension_numbers<[2], [1], [1], [2], [0, 0, 0, 1, 1, 2], [0], [0]>} : vector<2x8x8xf32>, vector<2x8x8xf32>, vector<2x8x8xf32> -> vector<2x8x8xf32>
    %562 = tpu.reciprocal %560 {approx = true} : vector<2x8x1xf32> -> vector<2x8x1xf32>
    %563 = vector.broadcast %562 : vector<2x8x1xf32> to vector<2x8x8xf32>
    %564 = arith.mulf %561, %563 : vector<2x8x8xf32>
    %565 = vector.shape_cast %564 : vector<2x8x8xf32> to vector<16x8xf32>
    %566 = vector.extract_strided_slice %348 {offsets = [16, 0], sizes = [8, 32], strides = [1, 1]} : vector<32x32xf32> to vector<8x32xf32>
    %cst_241 = arith.constant dense<0.000000e+00> : vector<16x32xf32>
    %567 = tpu.matmul %565, %566, %cst_241 {dimension_numbers = #tpu.dot_dimension_numbers<[1], [0], [0], [1], [0, 0, 1, 1], [], []>} : vector<16x8xf32>, vector<8x32xf32>, vector<16x32xf32> -> vector<16x32xf32>
    %568 = arith.addf %547, %567 : vector<16x32xf32>
    %569 = vector.extract_strided_slice %504 {offsets = [0, 0, 24], sizes = [2, 8, 8], strides = [1, 1, 1]} : vector<2x8x32xf32> to vector<2x8x8xf32>
    %570 = vector.extract_strided_slice %505 {offsets = [0, 0, 24], sizes = [2, 8, 8], strides = [1, 1, 1]} : vector<2x8x32xf32> to vector<2x8x8xf32>
    %571 = vector.extract_strided_slice %506 {offsets = [0, 0, 24], sizes = [2, 8, 8], strides = [1, 1, 1]} : vector<2x8x32xf32> to vector<2x8x8xf32>
    %cst_242 = arith.constant dense<0.000000e+00> : vector<2x8x8xf32>
    %572 = tpu.matmul %569, %570, %cst_242 {dimension_numbers = #tpu.dot_dimension_numbers<[2], [2], [1], [1], [0, 0, 0, 1, 1, 1], [0], [0]>} : vector<2x8x8xf32>, vector<2x8x8xf32>, vector<2x8x8xf32> -> vector<2x8x8xf32>
    %cst_243 = arith.constant 0.353553385 : f32
    %573 = vector.broadcast %cst_243 : f32 to vector<2x8x8xf32>
    %574 = arith.mulf %572, %573 : vector<2x8x8xf32>
    %cst_244 = arith.constant dense<0xFF800000> : vector<2x8xf32>
    %575 = vector.multi_reduction <maximumf>, %574, %cst_244 [2] : vector<2x8x8xf32> to vector<2x8xf32>
    %576 = vector.shape_cast %575 : vector<2x8xf32> to vector<2x8x1xf32>
    %577 = vector.broadcast %576 : vector<2x8x1xf32> to vector<2x8x8xf32>
    %578 = arith.subf %574, %577 : vector<2x8x8xf32>
    %579 = math.exp %578 : vector<2x8x8xf32>
    %cst_245 = arith.constant dense<0.000000e+00> : vector<2x8xf32>
    %580 = vector.multi_reduction <add>, %579, %cst_245 [2] : vector<2x8x8xf32> to vector<2x8xf32>
    %581 = vector.shape_cast %580 : vector<2x8xf32> to vector<2x8x1xf32>
    %cst_246 = arith.constant dense<0.000000e+00> : vector<2x8x8xf32>
    %582 = tpu.matmul %579, %571, %cst_246 {dimension_numbers = #tpu.dot_dimension_numbers<[2], [1], [1], [2], [0, 0, 0, 1, 1, 2], [0], [0]>} : vector<2x8x8xf32>, vector<2x8x8xf32>, vector<2x8x8xf32> -> vector<2x8x8xf32>
    %583 = tpu.reciprocal %581 {approx = true} : vector<2x8x1xf32> -> vector<2x8x1xf32>
    %584 = vector.broadcast %583 : vector<2x8x1xf32> to vector<2x8x8xf32>
    %585 = arith.mulf %582, %584 : vector<2x8x8xf32>
    %586 = vector.shape_cast %585 : vector<2x8x8xf32> to vector<16x8xf32>
    %587 = vector.extract_strided_slice %348 {offsets = [24, 0], sizes = [8, 32], strides = [1, 1]} : vector<32x32xf32> to vector<8x32xf32>
    %cst_247 = arith.constant dense<0.000000e+00> : vector<16x32xf32>
    %588 = tpu.matmul %586, %587, %cst_247 {dimension_numbers = #tpu.dot_dimension_numbers<[1], [0], [0], [1], [0, 0, 1, 1], [], []>} : vector<16x8xf32>, vector<8x32xf32>, vector<16x32xf32> -> vector<16x32xf32>
    %589 = arith.addf %568, %588 : vector<16x32xf32>
    %590 = vector.broadcast %350 : vector<1x32xf32> to vector<16x32xf32>
    %591 = arith.addf %589, %590 : vector<16x32xf32>
    %592 = arith.addf %495, %591 : vector<16x32xf32>
    %cst_248 = arith.constant dense<0.000000e+00> : vector<16xf32>
    %593 = vector.multi_reduction <add>, %592, %cst_248 [1] : vector<16x32xf32> to vector<16xf32>
    %594 = vector.shape_cast %593 : vector<16xf32> to vector<16x1xf32>
    %cst_249 = arith.constant 3.200000e+01 : f32
    %595 = vector.broadcast %cst_249 : f32 to vector<16x1xf32>
    %596 = arith.divf %594, %595 : vector<16x1xf32>
    %597 = vector.broadcast %596 : vector<16x1xf32> to vector<16x32xf32>
    %598 = arith.subf %592, %597 : vector<16x32xf32>
    %599 = arith.mulf %598, %598 : vector<16x32xf32>
    %cst_250 = arith.constant dense<0.000000e+00> : vector<16xf32>
    %600 = vector.multi_reduction <add>, %599, %cst_250 [1] : vector<16x32xf32> to vector<16xf32>
    %601 = vector.shape_cast %600 : vector<16xf32> to vector<16x1xf32>
    %cst_251 = arith.constant 3.200000e+01 : f32
    %602 = vector.broadcast %cst_251 : f32 to vector<16x1xf32>
    %603 = arith.divf %601, %602 : vector<16x1xf32>
    %604 = vector.broadcast %596 : vector<16x1xf32> to vector<16x32xf32>
    %605 = arith.subf %592, %604 : vector<16x32xf32>
    %cst_252 = arith.constant 9.99999974E-6 : f32
    %606 = vector.broadcast %cst_252 : f32 to vector<16x1xf32>
    %607 = arith.addf %603, %606 : vector<16x1xf32>
    %608 = math.rsqrt %607 : vector<16x1xf32>
    %609 = vector.broadcast %608 : vector<16x1xf32> to vector<16x32xf32>
    %610 = arith.mulf %605, %609 : vector<16x32xf32>
    %611 = vector.broadcast %352 : vector<1x32xf32> to vector<16x32xf32>
    %612 = arith.mulf %610, %611 : vector<16x32xf32>
    %613 = vector.broadcast %354 : vector<1x32xf32> to vector<16x32xf32>
    %614 = arith.addf %612, %613 : vector<16x32xf32>
    %cst_253 = arith.constant dense<0.000000e+00> : vector<16x64xf32>
    %615 = tpu.matmul %614, %356, %cst_253 {dimension_numbers = #tpu.dot_dimension_numbers<[1], [0], [0], [1], [0, 0, 1, 1], [], []>} : vector<16x32xf32>, vector<32x64xf32>, vector<16x64xf32> -> vector<16x64xf32>
    %616 = vector.broadcast %358 : vector<1x64xf32> to vector<16x64xf32>
    %617 = arith.addf %615, %616 : vector<16x64xf32>
    %cst_254 = arith.constant 0.000000e+00 : f32
    %618 = vector.broadcast %cst_254 : f32 to vector<16x64xf32>
    %619 = arith.maximumf %617, %618 : vector<16x64xf32>
    %cst_255 = arith.constant dense<0.000000e+00> : vector<16x32xf32>
    %620 = tpu.matmul %619, %360, %cst_255 {dimension_numbers = #tpu.dot_dimension_numbers<[1], [0], [0], [1], [0, 0, 1, 1], [], []>} : vector<16x64xf32>, vector<64x32xf32>, vector<16x32xf32> -> vector<16x32xf32>
    %621 = vector.broadcast %362 : vector<1x32xf32> to vector<16x32xf32>
    %622 = arith.addf %620, %621 : vector<16x32xf32>
    %623 = arith.addf %614, %622 : vector<16x32xf32>
    %cst_256 = arith.constant dense<0.000000e+00> : vector<16xf32>
    %624 = vector.multi_reduction <add>, %623, %cst_256 [1] : vector<16x32xf32> to vector<16xf32>
    %625 = vector.shape_cast %624 : vector<16xf32> to vector<16x1xf32>
    %cst_257 = arith.constant 3.200000e+01 : f32
    %626 = vector.broadcast %cst_257 : f32 to vector<16x1xf32>
    %627 = arith.divf %625, %626 : vector<16x1xf32>
    %628 = vector.broadcast %627 : vector<16x1xf32> to vector<16x32xf32>
    %629 = arith.subf %623, %628 : vector<16x32xf32>
    %630 = arith.mulf %629, %629 : vector<16x32xf32>
    %cst_258 = arith.constant dense<0.000000e+00> : vector<16xf32>
    %631 = vector.multi_reduction <add>, %630, %cst_258 [1] : vector<16x32xf32> to vector<16xf32>
    %632 = vector.shape_cast %631 : vector<16xf32> to vector<16x1xf32>
    %cst_259 = arith.constant 3.200000e+01 : f32
    %633 = vector.broadcast %cst_259 : f32 to vector<16x1xf32>
    %634 = arith.divf %632, %633 : vector<16x1xf32>
    %635 = vector.broadcast %627 : vector<16x1xf32> to vector<16x32xf32>
    %636 = arith.subf %623, %635 : vector<16x32xf32>
    %cst_260 = arith.constant 9.99999974E-6 : f32
    %637 = vector.broadcast %cst_260 : f32 to vector<16x1xf32>
    %638 = arith.addf %634, %637 : vector<16x1xf32>
    %639 = math.rsqrt %638 : vector<16x1xf32>
    %640 = vector.broadcast %639 : vector<16x1xf32> to vector<16x32xf32>
    %641 = arith.mulf %636, %640 : vector<16x32xf32>
    %642 = vector.broadcast %364 : vector<1x32xf32> to vector<16x32xf32>
    %643 = arith.mulf %641, %642 : vector<16x32xf32>
    %644 = vector.broadcast %366 : vector<1x32xf32> to vector<16x32xf32>
    %645 = arith.addf %643, %644 : vector<16x32xf32>
    %c0_261 = arith.constant 0 : index
    %c0_262 = arith.constant 0 : index
    %646 = vector.load %arg23[%c0_261, %c0_262] : memref<32x128xf32, #tpu.memory_space<vmem>>, vector<32x128xf32>
    %cst_263 = arith.constant dense<0.000000e+00> : vector<16x128xf32>
    %647 = tpu.matmul %645, %646, %cst_263 {dimension_numbers = #tpu.dot_dimension_numbers<[1], [0], [0], [1], [0, 0, 1, 1], [], []>} : vector<16x32xf32>, vector<32x128xf32>, vector<16x128xf32> -> vector<16x128xf32>
    %c0_264 = arith.constant 0 : index
    %c0_265 = arith.constant 0 : index
    %648 = vector.load %arg24[%c0_264, %c0_265] : memref<1x128xf32, #tpu.memory_space<vmem>>, vector<1x128xf32>
    %649 = vector.broadcast %648 : vector<1x128xf32> to vector<16x128xf32>
    %650 = arith.addf %647, %649 : vector<16x128xf32>
    %c0_266 = arith.constant 0 : index
    %c0_267 = arith.constant 0 : index
    %651 = vector.load %arg25[%c0_266, %c0_267] : memref<16x128xf32, #tpu.memory_space<vmem>>, vector<16x128xf32>
    tpu.vector_store %arg25[%c0_266, %c0_267], %650 {strides = array<i32>} : memref<16x128xf32, #tpu.memory_space<vmem>>, vector<16x128xf32>,
    return
  }
  func.func @transform_0(%arg0: i32) -> (i32, i32) {
    %c0_i32 = arith.constant 0 : i32
    %c0_i32_0 = arith.constant 0 : i32
    %c0_i32_1 = arith.constant 0 : i32
    return %c0_i32, %c0_i32_0 : i32, i32
  }
  func.func @transform_1(%arg0: i32) -> (i32, i32) {
    %c0_i32 = arith.constant 0 : i32
    %c0_i32_0 = arith.constant 0 : i32
    %c0_i32_1 = arith.constant 0 : i32
    return %c0_i32, %c0_i32_0 : i32, i32
  }
  func.func @transform_2(%arg0: i32) -> (i32, i32, i32) {
    %c0_i32 = arith.constant 0 : i32
    %c0_i32_0 = arith.constant 0 : i32
    %c0_i32_1 = arith.constant 0 : i32
    %c0_i32_2 = arith.constant 0 : i32
    return %c0_i32, %c0_i32_0, %c0_i32_1 : i32, i32, i32
  }
  func.func @transform_3(%arg0: i32) -> (i32, i32, i32) {
    %c0_i32 = arith.constant 0 : i32
    %c0_i32_0 = arith.constant 0 : i32
    %c0_i32_1 = arith.constant 0 : i32
    %c0_i32_2 = arith.constant 0 : i32
    return %c0_i32, %c0_i32_0, %c0_i32_1 : i32, i32, i32
  }
  func.func @transform_4(%arg0: i32) -> (i32, i32, i32) {
    %c0_i32 = arith.constant 0 : i32
    %c0_i32_0 = arith.constant 0 : i32
    %c0_i32_1 = arith.constant 0 : i32
    %c0_i32_2 = arith.constant 0 : i32
    return %c0_i32, %c0_i32_0, %c0_i32_1 : i32, i32, i32
  }
  func.func @transform_5(%arg0: i32) -> (i32, i32, i32) {
    %c0_i32 = arith.constant 0 : i32
    %c0_i32_0 = arith.constant 0 : i32
    %c0_i32_1 = arith.constant 0 : i32
    %c0_i32_2 = arith.constant 0 : i32
    return %c0_i32, %c0_i32_0, %c0_i32_1 : i32, i32, i32
  }
  func.func @transform_6(%arg0: i32) -> (i32, i32, i32) {
    %c0_i32 = arith.constant 0 : i32
    %c0_i32_0 = arith.constant 0 : i32
    %c0_i32_1 = arith.constant 0 : i32
    %c0_i32_2 = arith.constant 0 : i32
    return %c0_i32, %c0_i32_0, %c0_i32_1 : i32, i32, i32
  }
  func.func @transform_7(%arg0: i32) -> (i32, i32, i32) {
    %c0_i32 = arith.constant 0 : i32
    %c0_i32_0 = arith.constant 0 : i32
    %c0_i32_1 = arith.constant 0 : i32
    %c0_i32_2 = arith.constant 0 : i32
    return %c0_i32, %c0_i32_0, %c0_i32_1 : i32, i32, i32
  }
  func.func @transform_8(%arg0: i32) -> (i32, i32, i32) {
    %c0_i32 = arith.constant 0 : i32
    %c0_i32_0 = arith.constant 0 : i32
    %c0_i32_1 = arith.constant 0 : i32
    %c0_i32_2 = arith.constant 0 : i32
    return %c0_i32, %c0_i32_0, %c0_i32_1 : i32, i32, i32
  }
  func.func @transform_9(%arg0: i32) -> (i32, i32, i32) {
    %c0_i32 = arith.constant 0 : i32
    %c0_i32_0 = arith.constant 0 : i32
    %c0_i32_1 = arith.constant 0 : i32
    %c0_i32_2 = arith.constant 0 : i32
    return %c0_i32, %c0_i32_0, %c0_i32_1 : i32, i32, i32
  }
  func.func @transform_10(%arg0: i32) -> (i32, i32, i32) {
    %c0_i32 = arith.constant 0 : i32
    %c0_i32_0 = arith.constant 0 : i32
    %c0_i32_1 = arith.constant 0 : i32
    %c0_i32_2 = arith.constant 0 : i32
    return %c0_i32, %c0_i32_0, %c0_i32_1 : i32, i32, i32
  }
  func.func @transform_11(%arg0: i32) -> (i32, i32, i32) {
    %c0_i32 = arith.constant 0 : i32
    %c0_i32_0 = arith.constant 0 : i32
    %c0_i32_1 = arith.constant 0 : i32
    %c0_i32_2 = arith.constant 0 : i32
    return %c0_i32, %c0_i32_0, %c0_i32_1 : i32, i32, i32
  }
  func.func @transform_12(%arg0: i32) -> (i32, i32, i32) {
    %c0_i32 = arith.constant 0 : i32
    %c0_i32_0 = arith.constant 0 : i32
    %c0_i32_1 = arith.constant 0 : i32
    %c0_i32_2 = arith.constant 0 : i32
    return %c0_i32, %c0_i32_0, %c0_i32_1 : i32, i32, i32
  }
  func.func @transform_13(%arg0: i32) -> (i32, i32, i32) {
    %c0_i32 = arith.constant 0 : i32
    %c0_i32_0 = arith.constant 0 : i32
    %c0_i32_1 = arith.constant 0 : i32
    %c0_i32_2 = arith.constant 0 : i32
    return %c0_i32, %c0_i32_0, %c0_i32_1 : i32, i32, i32
  }
  func.func @transform_14(%arg0: i32) -> (i32, i32, i32) {
    %c0_i32 = arith.constant 0 : i32
    %c0_i32_0 = arith.constant 0 : i32
    %c0_i32_1 = arith.constant 0 : i32
    %c0_i32_2 = arith.constant 0 : i32
    return %c0_i32, %c0_i32_0, %c0_i32_1 : i32, i32, i32
  }
  func.func @transform_15(%arg0: i32) -> (i32, i32, i32) {
    %c0_i32 = arith.constant 0 : i32
    %c0_i32_0 = arith.constant 0 : i32
    %c0_i32_1 = arith.constant 0 : i32
    %c0_i32_2 = arith.constant 0 : i32
    return %c0_i32, %c0_i32_0, %c0_i32_1 : i32, i32, i32
  }
  func.func @transform_16(%arg0: i32) -> (i32, i32, i32) {
    %c0_i32 = arith.constant 0 : i32
    %c0_i32_0 = arith.constant 0 : i32
    %c0_i32_1 = arith.constant 0 : i32
    %c0_i32_2 = arith.constant 0 : i32
    return %c0_i32, %c0_i32_0, %c0_i32_1 : i32, i32, i32
  }
  func.func @transform_17(%arg0: i32) -> (i32, i32, i32) {
    %c0_i32 = arith.constant 0 : i32
    %c0_i32_0 = arith.constant 0 : i32
    %c0_i32_1 = arith.constant 0 : i32
    %c0_i32_2 = arith.constant 0 : i32
    return %c0_i32, %c0_i32_0, %c0_i32_1 : i32, i32, i32
  }
  func.func @transform_18(%arg0: i32) -> (i32, i32, i32) {
    %c0_i32 = arith.constant 0 : i32
    %c0_i32_0 = arith.constant 0 : i32
    %c0_i32_1 = arith.constant 0 : i32
    %c0_i32_2 = arith.constant 0 : i32
    return %c0_i32, %c0_i32_0, %c0_i32_1 : i32, i32, i32
  }
  func.func @transform_19(%arg0: i32) -> (i32, i32, i32) {
    %c0_i32 = arith.constant 0 : i32
    %c0_i32_0 = arith.constant 0 : i32
    %c0_i32_1 = arith.constant 0 : i32
    %c0_i32_2 = arith.constant 0 : i32
    return %c0_i32, %c0_i32_0, %c0_i32_1 : i32, i32, i32
  }
  func.func @transform_20(%arg0: i32) -> (i32, i32, i32) {
    %c0_i32 = arith.constant 0 : i32
    %c0_i32_0 = arith.constant 0 : i32
    %c0_i32_1 = arith.constant 0 : i32
    %c0_i32_2 = arith.constant 0 : i32
    return %c0_i32, %c0_i32_0, %c0_i32_1 : i32, i32, i32
  }
  func.func @transform_21(%arg0: i32) -> (i32, i32, i32) {
    %c0_i32 = arith.constant 0 : i32
    %c0_i32_0 = arith.constant 0 : i32
    %c0_i32_1 = arith.constant 0 : i32
    %c0_i32_2 = arith.constant 0 : i32
    return %c0_i32, %c0_i32_0, %c0_i32_1 : i32, i32, i32
  }
  func.func @transform_22(%arg0: i32) -> (i32, i32) {
    %c0_i32 = arith.constant 0 : i32
    %c0_i32_0 = arith.constant 0 : i32
    %c0_i32_1 = arith.constant 0 : i32
    return %c0_i32, %c0_i32_0 : i32, i32
  }
  func.func @transform_23(%arg0: i32) -> (i32, i32) {
    %c0_i32 = arith.constant 0 : i32
    %c0_i32_0 = arith.constant 0 : i32
    %c0_i32_1 = arith.constant 0 : i32
    return %c0_i32, %c0_i32_0 : i32, i32
  }
  func.func @transform_24(%arg0: i32) -> (i32, i32) {
    %c0_i32 = arith.constant 0 : i32
    %c0_i32_0 = arith.constant 0 : i32
    %c0_i32_1 = arith.constant 0 : i32
    return %c0_i32, %c0_i32_0 : i32, i32
  }
}

</mosaic_0001>

<llo_original>
// kernel: story_transformer_forward.1
$region0: #{story_transformer_forward.1}
  #allocation0 [shape = 'u32[]', space=smem, size = 0x4, offset = 0x4, fixed_abs, tag = 'smem constant byte address 0x4 - core index']
  #allocation1 [shape = 'u32[144,128]{1,0:T(1,128)}', space=vmem, size = 0x12000, scoped, tag = 'internal scratch']
  %s0 = inlined_call_operand.vmem [shape: f32[16,32], index: 0, kind: input, shape index: {}]
  %s1 = inlined_call_operand.vmem [shape: f32[16,32], index: 1, kind: input, shape index: {}]
  %s2 = inlined_call_operand.vmem [shape: f32[2,32,96], index: 2, kind: input, shape index: {}]
  %s3 = inlined_call_operand.vmem [shape: f32[2,1,96], index: 3, kind: input, shape index: {}]
  %s4 = inlined_call_operand.vmem [shape: f32[2,32,32], index: 4, kind: input, shape index: {}]
  %s5 = inlined_call_operand.vmem [shape: f32[2,1,32], index: 5, kind: input, shape index: {}]
  %s6 = inlined_call_operand.vmem [shape: f32[2,1,32], index: 6, kind: input, shape index: {}]
  %s7 = inlined_call_operand.vmem [shape: f32[2,1,32], index: 7, kind: input, shape index: {}]
  %s8 = inlined_call_operand.vmem [shape: f32[2,32,32], index: 8, kind: input, shape index: {}]
  %s9 = inlined_call_operand.vmem [shape: f32[2,1,32], index: 9, kind: input, shape index: {}]
  %s10 = inlined_call_operand.vmem [shape: f32[2,32,64], index: 10, kind: input, shape index: {}]
  %s11 = inlined_call_operand.vmem [shape: f32[2,1,64], index: 11, kind: input, shape index: {}]
  %s12 = inlined_call_operand.vmem [shape: f32[2,32,32], index: 12, kind: input, shape index: {}]
  %s13 = inlined_call_operand.vmem [shape: f32[2,1,32], index: 13, kind: input, shape index: {}]
  %s14 = inlined_call_operand.vmem [shape: f32[2,1,32], index: 14, kind: input, shape index: {}]
  %s15 = inlined_call_operand.vmem [shape: f32[2,1,32], index: 15, kind: input, shape index: {}]
  %s16 = inlined_call_operand.vmem [shape: f32[2,32,64], index: 16, kind: input, shape index: {}]
  %s17 = inlined_call_operand.vmem [shape: f32[2,1,64], index: 17, kind: input, shape index: {}]
  %s18 = inlined_call_operand.vmem [shape: f32[2,64,32], index: 18, kind: input, shape index: {}]
  %s19 = inlined_call_operand.vmem [shape: f32[2,1,32], index: 19, kind: input, shape index: {}]
  %s20 = inlined_call_operand.vmem [shape: f32[2,1,32], index: 20, kind: input, shape index: {}]
  %s21 = inlined_call_operand.vmem [shape: f32[2,1,32], index: 21, kind: input, shape index: {}]
  %s22 = inlined_call_operand.vmem [shape: f32[32,128], index: 22, kind: input, shape index: {}]
  %s23 = inlined_call_operand.vmem [shape: f32[1,128], index: 23, kind: input, shape index: {}]
  %s24 = inlined_call_operand.vmem [shape: f32[16,128], index: 24, kind: output, shape index: {}]
  %s25 = sld [smem:[#allocation0]]
  $region106: #{story_transformer_forward.1} parent=0
    _
  %s27 = ssub.s32 1, %s25
  %s28 = scalar_select 0, %s27, %s25
  // Predicated region
  $region2: #{story_transformer_forward.1} parent=0 // pred_check
    _
  $region3: #{story_transformer_forward.1} parent=0 // pred_check_branch
    %30 = sbr.rel (0) target = $region5
  $region4: #{story_transformer_forward.1} parent=0 // pred_region
    _
  $region5: #{story_transformer_forward.1} parent=0 // pred_fallthru
    _
  // Predicated region
  $region6: #{story_transformer_forward.1} parent=0 // pred_check
    _
  $region7: #{story_transformer_forward.1} parent=0 // pred_check_branch
    %32 = sbr.rel (0) target = $region9
  $region8: #{story_transformer_forward.1} parent=0 // pred_region
    _
  $region9: #{story_transformer_forward.1} parent=0 // pred_fallthru
    _
  // Predicated region
  $region10: #{story_transformer_forward.1} parent=0 // pred_check
    _
  $region11: #{story_transformer_forward.1} parent=0 // pred_check_branch
    %34 = sbr.rel (0) target = $region13
  $region12: #{story_transformer_forward.1} parent=0 // pred_region
    _
  $region13: #{story_transformer_forward.1} parent=0 // pred_fallthru
    _
  // Predicated region
  $region14: #{story_transformer_forward.1} parent=0 // pred_check
    _
  $region15: #{story_transformer_forward.1} parent=0 // pred_check_branch
    %36 = sbr.rel (0) target = $region17
  $region16: #{story_transformer_forward.1} parent=0 // pred_region
    _
  $region17: #{story_transformer_forward.1} parent=0 // pred_fallthru
    _
  // Predicated region
  $region18: #{story_transformer_forward.1} parent=0 // pred_check
    _
  $region19: #{story_transformer_forward.1} parent=0 // pred_check_branch
    %38 = sbr.rel (0) target = $region21
  $region20: #{story_transformer_forward.1} parent=0 // pred_region
    _
  $region21: #{story_transformer_forward.1} parent=0 // pred_fallthru
    _
  // Predicated region
  $region22: #{story_transformer_forward.1} parent=0 // pred_check
    _
  $region23: #{story_transformer_forward.1} parent=0 // pred_check_branch
    %40 = sbr.rel (0) target = $region25
  $region24: #{story_transformer_forward.1} parent=0 // pred_region
    _
  $region25: #{story_transformer_forward.1} parent=0 // pred_fallthru
    _
  // Predicated region
  $region26: #{story_transformer_forward.1} parent=0 // pred_check
    _
  $region27: #{story_transformer_forward.1} parent=0 // pred_check_branch
    %42 = sbr.rel (0) target = $region29
  $region28: #{story_transformer_forward.1} parent=0 // pred_region
    _
  $region29: #{story_transformer_forward.1} parent=0 // pred_fallthru
    _
  // Predicated region
  $region30: #{story_transformer_forward.1} parent=0 // pred_check
    _
  $region31: #{story_transformer_forward.1} parent=0 // pred_check_branch
    %44 = sbr.rel (0) target = $region33
  $region32: #{story_transformer_forward.1} parent=0 // pred_region
    _
  $region33: #{story_transformer_forward.1} parent=0 // pred_fallthru
    _
  // Predicated region
  $region34: #{story_transformer_forward.1} parent=0 // pred_check
    _
  $region35: #{story_transformer_forward.1} parent=0 // pred_check_branch
    %46 = sbr.rel (0) target = $region37
  $region36: #{story_transformer_forward.1} parent=0 // pred_region
    _
  $region37: #{story_transformer_forward.1} parent=0 // pred_fallthru
    _
  // Predicated region
  $region38: #{story_transformer_forward.1} parent=0 // pred_check
    _
  $region39: #{story_transformer_forward.1} parent=0 // pred_check_branch
    %48 = sbr.rel (0) target = $region41
  $region40: #{story_transformer_forward.1} parent=0 // pred_region
    _
  $region41: #{story_transformer_forward.1} parent=0 // pred_fallthru
    _
  // Predicated region
  $region42: #{story_transformer_forward.1} parent=0 // pred_check
    _
  $region43: #{story_transformer_forward.1} parent=0 // pred_check_branch
    %50 = sbr.rel (0) target = $region45
  $region44: #{story_transformer_forward.1} parent=0 // pred_region
    _
  $region45: #{story_transformer_forward.1} parent=0 // pred_fallthru
    _
  // Predicated region
  $region46: #{story_transformer_forward.1} parent=0 // pred_check
    _
  $region47: #{story_transformer_forward.1} parent=0 // pred_check_branch
    %52 = sbr.rel (0) target = $region49
  $region48: #{story_transformer_forward.1} parent=0 // pred_region
    _
  $region49: #{story_transformer_forward.1} parent=0 // pred_fallthru
    _
  // Predicated region
  $region50: #{story_transformer_forward.1} parent=0 // pred_check
    _
  $region51: #{story_transformer_forward.1} parent=0 // pred_check_branch
    %54 = sbr.rel (0) target = $region53
  $region52: #{story_transformer_forward.1} parent=0 // pred_region
    _
  $region53: #{story_transformer_forward.1} parent=0 // pred_fallthru
    _
  // Predicated region
  $region54: #{story_transformer_forward.1} parent=0 // pred_check
    _
  $region55: #{story_transformer_forward.1} parent=0 // pred_check_branch
    %56 = sbr.rel (0) target = $region57
  $region56: #{story_transformer_forward.1} parent=0 // pred_region
    _
  $region57: #{story_transformer_forward.1} parent=0 // pred_fallthru
    _
  // Predicated region
  $region58: #{story_transformer_forward.1} parent=0 // pred_check
    _
  $region59: #{story_transformer_forward.1} parent=0 // pred_check_branch
    %58 = sbr.rel (0) target = $region61
  $region60: #{story_transformer_forward.1} parent=0 // pred_region
    _
  $region61: #{story_transformer_forward.1} parent=0 // pred_fallthru
    _
  // Predicated region
  $region62: #{story_transformer_forward.1} parent=0 // pred_check
    _
  $region63: #{story_transformer_forward.1} parent=0 // pred_check_branch
    %60 = sbr.rel (0) target = $region65
  $region64: #{story_transformer_forward.1} parent=0 // pred_region
    _
  $region65: #{story_transformer_forward.1} parent=0 // pred_fallthru
    _
  // Predicated region
  $region66: #{story_transformer_forward.1} parent=0 // pred_check
    _
  $region67: #{story_transformer_forward.1} parent=0 // pred_check_branch
    %62 = sbr.rel (0) target = $region69
  $region68: #{story_transformer_forward.1} parent=0 // pred_region
    _
  $region69: #{story_transformer_forward.1} parent=0 // pred_fallthru
    _
  // Predicated region
  $region70: #{story_transformer_forward.1} parent=0 // pred_check
    _
  $region71: #{story_transformer_forward.1} parent=0 // pred_check_branch
    %64 = sbr.rel (0) target = $region73
  $region72: #{story_transformer_forward.1} parent=0 // pred_region
    _
  $region73: #{story_transformer_forward.1} parent=0 // pred_fallthru
    _
  // Predicated region
  $region74: #{story_transformer_forward.1} parent=0 // pred_check
    _
  $region75: #{story_transformer_forward.1} parent=0 // pred_check_branch
    %66 = sbr.rel (0) target = $region77
  $region76: #{story_transformer_forward.1} parent=0 // pred_region
    _
  $region77: #{story_transformer_forward.1} parent=0 // pred_fallthru
    _
  // Predicated region
  $region78: #{story_transformer_forward.1} parent=0 // pred_check
    _
  $region79: #{story_transformer_forward.1} parent=0 // pred_check_branch
    %68 = sbr.rel (0) target = $region81
  $region80: #{story_transformer_forward.1} parent=0 // pred_region
    _
  $region81: #{story_transformer_forward.1} parent=0 // pred_fallthru
    _
  // Predicated region
  $region82: #{story_transformer_forward.1} parent=0 // pred_check
    _
  $region83: #{story_transformer_forward.1} parent=0 // pred_check_branch
    %70 = sbr.rel (0) target = $region85
  $region84: #{story_transformer_forward.1} parent=0 // pred_region
    _
  $region85: #{story_transformer_forward.1} parent=0 // pred_fallthru
    _
  // Predicated region
  $region86: #{story_transformer_forward.1} parent=0 // pred_check
    _
  $region87: #{story_transformer_forward.1} parent=0 // pred_check_branch
    %72 = sbr.rel (0) target = $region89
  $region88: #{story_transformer_forward.1} parent=0 // pred_region
    _
  $region89: #{story_transformer_forward.1} parent=0 // pred_fallthru
    _
  // Predicated region
  $region90: #{story_transformer_forward.1} parent=0 // pred_check
    _
  $region91: #{story_transformer_forward.1} parent=0 // pred_check_branch
    %74 = sbr.rel (0) target = $region93
  $region92: #{story_transformer_forward.1} parent=0 // pred_region
    _
  $region93: #{story_transformer_forward.1} parent=0 // pred_fallthru
    _
  // Predicated region
  $region94: #{story_transformer_forward.1} parent=0 // pred_check
    _
  $region95: #{story_transformer_forward.1} parent=0 // pred_check_branch
    %76 = sbr.rel (0) target = $region97
  $region96: #{story_transformer_forward.1} parent=0 // pred_region
    _
  $region97: #{story_transformer_forward.1} parent=0 // pred_fallthru
    _
  %v77 = vld [vmem:[%s0] sm:$0xff]
  %v78 = vld [vmem:[%s0 + $0x8] sm:$0xff]
  %v79 = vld [vmem:[%s1] sm:$0xff]
  %v80 = vld [vmem:[%s1 + $0x8] sm:$0xff]
  %v81 = vlaneseq
  %v82 = vshrl.u32 %v81, 7
  %v83 = vlaneseq
  %v84 = vand.u32 %v83, 127
  %vm85 = vcmp.gt.s32.totalorder %v84, %v82
  %v86 = vsel %vm85, -1e+30, 0.0
  %v87 = vld [vmem:[%s2] sm:$0xff]
  %v88 = vld [vmem:[%s2 + $0x8] sm:$0xff]
  %v89 = vld [vmem:[%s2 + $0x10] sm:$0xff]
  %v90 = vld [vmem:[%s2 + $0x18] sm:$0xff]
  %v91 = vld [vmem:[%s3] sm:$0x1]
  %v92 = vld [vmem:[%s4] sm:$0xff]
  %v93 = vld [vmem:[%s4 + $0x8] sm:$0xff]
  %v94 = vld [vmem:[%s4 + $0x10] sm:$0xff]
  %v95 = vld [vmem:[%s4 + $0x18] sm:$0xff]
  %v96 = vld [vmem:[%s5] sm:$0x1]
  %v97 = vld [vmem:[%s6] sm:$0x1]
  %v98 = vld [vmem:[%s7] sm:$0x1]
  %v99 = vld [vmem:[%s8] sm:$0xff]
  %v100 = vld [vmem:[%s8 + $0x8] sm:$0xff]
  %v101 = vld [vmem:[%s8 + $0x10] sm:$0xff]
  %v102 = vld [vmem:[%s8 + $0x18] sm:$0xff]
  %v103 = vld [vmem:[%s9] sm:$0x1]
  %v104 = vld [vmem:[%s10] sm:$0xff]
  %v105 = vld [vmem:[%s10 + $0x8] sm:$0xff]
  %v106 = vld [vmem:[%s10 + $0x10] sm:$0xff]
  %v107 = vld [vmem:[%s10 + $0x18] sm:$0xff]
  %v108 = vld [vmem:[%s11] sm:$0x1]
  %v109 = vld [vmem:[%s12] sm:$0xff]
  %v110 = vld [vmem:[%s12 + $0x8] sm:$0xff]
  %v111 = vld [vmem:[%s12 + $0x10] sm:$0xff]
  %v112 = vld [vmem:[%s12 + $0x18] sm:$0xff]
  %v113 = vld [vmem:[%s13] sm:$0x1]
  %v114 = vld [vmem:[%s14] sm:$0x1]
  %v115 = vld [vmem:[%s15] sm:$0x1]
  %v116 = vld [vmem:[%s16] sm:$0xff]
  %v117 = vld [vmem:[%s16 + $0x8] sm:$0xff]
  %v118 = vld [vmem:[%s16 + $0x10] sm:$0xff]
  %v119 = vld [vmem:[%s16 + $0x18] sm:$0xff]
  %v120 = vld [vmem:[%s17] sm:$0x1]
  %v121 = vld [vmem:[%s18] sm:$0xff]
  %v122 = vld [vmem:[%s18 + $0x8] sm:$0xff]
  %v123 = vld [vmem:[%s18 + $0x10] sm:$0xff]
  %v124 = vld [vmem:[%s18 + $0x18] sm:$0xff]
  %v125 = vld [vmem:[%s18 + $0x20] sm:$0xff]
  %v126 = vld [vmem:[%s18 + $0x28] sm:$0xff]
  %v127 = vld [vmem:[%s18 + $0x30] sm:$0xff]
  %v128 = vld [vmem:[%s18 + $0x38] sm:$0xff]
  %v129 = vld [vmem:[%s19] sm:$0x1]
  %v130 = vld [vmem:[%s20] sm:$0x1]
  %v131 = vld [vmem:[%s21] sm:$0x1]
  %v133 = vlaneseq
  %v134 = vshrl.u32 %v133, 7
  %v135 = vsub.s32 0, %v134
  %v136 = vrot.slane %v91, %v135
  %vm138 = vcmask 261120
  %v140 = vsel %vm138, %v77, 0
  %v143 = vsel %vm138, %v78, 0
  %145 = vmatprep.subr.mxu0 0.0
  %146 = vmatpush1.msra.mxu0 %v87
  %147 = vmatprep.subr.mxu0 0.0
  %148 = vmatpush1.msra.mxu0 %v88
  %149 = vmatprep.subr.mxu0 0.0
  %150 = vmatpush1.msra.mxu0 %v89
  %151 = vmatprep.subr.mxu0 0.0
  %152 = vmatpush1.msra.mxu0 %v90
  %153 = vmatprep.subr.mxu0 0.0
  %154 = vmatpush1.msra.mxu0 0.0
  %155 = vmatprep.subr.mxu0 0.0
  %156 = vmatpush1.msra.mxu0 0.0
  %157 = vmatprep.subr.mxu0 0.0
  %158 = vmatpush1.msra.mxu0 0.0
  %159 = vmatprep.subr.mxu0 0.0
  %160 = vmatpush1.msra.mxu0 0.0
  %161 = vmatprep.subr.mxu0 0.0
  %162 = vmatpush1.msra.mxu0 0.0
  %163 = vmatprep.subr.mxu0 0.0
  %164 = vmatpush1.msra.mxu0 0.0
  %165 = vmatprep.subr.mxu0 0.0
  %166 = vmatpush1.msra.mxu0 0.0
  %167 = vmatprep.subr.mxu0 0.0
  %168 = vmatpush1.msra.mxu0 0.0
  %169 = vmatprep.subr.mxu0 0.0
  %170 = vmatpush1.msra.mxu0 0.0
  %171 = vmatprep.subr.mxu0 0.0
  %172 = vmatpush1.msra.mxu0 0.0
  %173 = vmatprep.subr.mxu0 0.0
  %174 = vmatpush1.msra.mxu0 0.0
  %175 = vmatprep.subr.mxu0 0.0
  %176 = vmatpush1.msra.mxu0 0.0
  %177 = vmatprep.subr.mxu0 0.0
  %178 = vmatpush1.msra.mxu0 0.0
  %179 = vmatprep.subr.mxu0 0.0
  %180 = vmatpush1.msra.mxu0 0.0
  %181 = vmatprep.subr.mxu0 0.0
  %182 = vmatpush1.msra.mxu0 0.0
  %183 = vmatprep.subr.mxu0 0.0
  %184 = vmatpush1.msra.mxu0 0.0
  %185 = vmatprep.subr.mxu0 0.0
  %186 = vmatpush1.msra.mxu0 0.0
  %187 = vmatprep.subr.mxu0 0.0
  %188 = vmatpush1.msra.mxu0 0.0
  %189 = vmatprep.subr.mxu0 0.0
  %190 = vmatpush1.msra.mxu0 0.0
  %191 = vmatprep.subr.mxu0 0.0
  %192 = vmatpush1.msra.mxu0 0.0
  %193 = vmatprep.subr.mxu0 0.0
  %194 = vmatpush1.msra.mxu0 0.0
  %195 = vmatprep.subr.mxu0 0.0
  %196 = vmatpush1.msra.mxu0 0.0
  %197 = vmatprep.subr.mxu0 0.0
  %198 = vmatpush1.msra.mxu0 0.0
  %199 = vmatprep.subr.mxu0 0.0
  %200 = vmatpush1.msra.mxu0 0.0
  %201 = vmatprep.subr.mxu0 0.0
  %202 = vmatpush1.msra.mxu0 0.0
  %203 = vmatprep.subr.mxu0 0.0
  %204 = vmatpush1.msra.mxu0 0.0
  %205 = vmatprep.subr.mxu0 0.0
  %206 = vmatpush1.msra.mxu0 0.0
  %207 = vmatprep.subr.mxu0 0.0
  %208 = vmatpush1.msra.mxu0 0.0
  %209 = vmatprep.mubr.f32.mxu0 0.0
  %210 = vmatmul.mubr.f32.gmra.mrb[0].mxu0 %v140
  %v211 = vpop.f32.mrb[0].mxu0
  %v212 = vadd.f32 %v136, %v211
  %v213 = vpop.f32.mrb[0].mxu0
  %214 = vmatprep.mubr.f32.mxu0 0.0
  %215 = vmatmul.mubr.f32.gmra.mrb[0].mxu0 %v143
  %v216 = vpop.f32.mrb[0].mxu0
  %v217 = vadd.f32 %v136, %v216
  %v218 = vpop.f32.mrb[0].mxu0
  %219 = vdwg.mxu0
  %221 = vrot.lane.b32.xlu0 %v212, 96
  %v222 = vpop.permute.xlu0 %221
  %vm223 = vcmask 64512
  %v224 = vsel %vm223, %v212, 0
  %v226 = vsel %vm223, %v222, 0
  %228 = vmatprep.subr.mxu0 0.0
  %229 = vmatpush1.xpose.msra.mxu0 %v226
  %230 = vmatprep.subr.mxu0 0.0
  %231 = vmatpush1.xpose.msra.mxu0 0.0
  %232 = vmatprep.subr.mxu0 0.0
  %233 = vmatpush1.xpose.msra.mxu0 0.0
  %234 = vmatprep.subr.mxu0 0.0
  %235 = vmatpush1.xpose.msra.mxu0 0.0
  %236 = vmatprep.subr.mxu0 0.0
  %237 = vmatpush1.xpose.msra.mxu0 0.0
  %238 = vmatprep.subr.mxu0 0.0
  %239 = vmatpush1.xpose.msra.mxu0 0.0
  %240 = vmatprep.subr.mxu0 0.0
  %241 = vmatpush1.xpose.msra.mxu0 0.0
  %242 = vmatprep.subr.mxu0 0.0
  %243 = vmatpush1.xpose.msra.mxu0 0.0
  %244 = vmatprep.subr.mxu0 0.0
  %245 = vmatpush1.xpose.msra.mxu0 0.0
  %246 = vmatprep.subr.mxu0 0.0
  %247 = vmatpush1.xpose.msra.mxu0 0.0
  %248 = vmatprep.subr.mxu0 0.0
  %249 = vmatpush1.xpose.msra.mxu0 0.0
  %250 = vmatprep.subr.mxu0 0.0
  %251 = vmatpush1.xpose.msra.mxu0 0.0
  %252 = vmatprep.subr.mxu0 0.0
  %253 = vmatpush1.xpose.msra.mxu0 0.0
  %254 = vmatprep.subr.mxu0 0.0
  %255 = vmatpush1.xpose.msra.mxu0 0.0
  %256 = vmatprep.subr.mxu0 0.0
  %257 = vmatpush1.xpose.msra.mxu0 0.0
  %258 = vmatprep.subr.mxu0 0.0
  %259 = vmatpush1.xpose.msra.mxu0 0.0
  %260 = vmatprep.subr.mxu0 0.0
  %261 = vmatpush1.xpose.msra.mxu0 0.0
  %262 = vmatprep.subr.mxu0 0.0
  %263 = vmatpush1.xpose.msra.mxu0 0.0
  %264 = vmatprep.subr.mxu0 0.0
  %265 = vmatpush1.xpose.msra.mxu0 0.0
  %266 = vmatprep.subr.mxu0 0.0
  %267 = vmatpush1.xpose.msra.mxu0 0.0
  %268 = vmatprep.subr.mxu0 0.0
  %269 = vmatpush1.xpose.msra.mxu0 0.0
  %270 = vmatprep.subr.mxu0 0.0
  %271 = vmatpush1.xpose.msra.mxu0 0.0
  %272 = vmatprep.subr.mxu0 0.0
  %273 = vmatpush1.xpose.msra.mxu0 0.0
  %274 = vmatprep.subr.mxu0 0.0
  %275 = vmatpush1.xpose.msra.mxu0 0.0
  %276 = vmatprep.subr.mxu0 0.0
  %277 = vmatpush1.xpose.msra.mxu0 0.0
  %278 = vmatprep.subr.mxu0 0.0
  %279 = vmatpush1.xpose.msra.mxu0 0.0
  %280 = vmatprep.subr.mxu0 0.0
  %281 = vmatpush1.xpose.msra.mxu0 0.0
  %282 = vmatprep.subr.mxu0 0.0
  %283 = vmatpush1.xpose.msra.mxu0 0.0
  %284 = vmatprep.subr.mxu0 0.0
  %285 = vmatpush1.xpose.msra.mxu0 0.0
  %286 = vmatprep.subr.mxu0 0.0
  %287 = vmatpush1.xpose.msra.mxu0 0.0
  %288 = vmatprep.subr.mxu0 0.0
  %289 = vmatpush1.xpose.msra.mxu0 0.0
  %290 = vmatprep.subr.mxu0 0.0
  %291 = vmatpush1.xpose.msra.mxu0 0.0
  %292 = vmatprep.mubr.f32.mxu0 0.0
  %293 = vmatmul.mubr.f32.gmra.mrb[0].mxu0 %v224
  %v294 = vpop.f32.mrb[0].mxu0
  %v295 = vadd.f32 0.0, %v294
  %v296 = vpop.f32.mrb[0].mxu0
  %297 = vdwg.mxu0
  %299 = vrot.lane.b32.xlu0 %v217, 96
  %v300 = vpop.permute.xlu0 %299
  %v301 = vsel %vm223, %v217, 0
  %v303 = vsel %vm223, %v300, 0
  %305 = vmatprep.subr.mxu0 0.0
  %306 = vmatpush1.xpose.msra.mxu0 %v303
  %307 = vmatprep.subr.mxu0 0.0
  %308 = vmatpush1.xpose.msra.mxu0 0.0
  %309 = vmatprep.subr.mxu0 0.0
  %310 = vmatpush1.xpose.msra.mxu0 0.0
  %311 = vmatprep.subr.mxu0 0.0
  %312 = vmatpush1.xpose.msra.mxu0 0.0
  %313 = vmatprep.subr.mxu0 0.0
  %314 = vmatpush1.xpose.msra.mxu0 0.0
  %315 = vmatprep.subr.mxu0 0.0
  %316 = vmatpush1.xpose.msra.mxu0 0.0
  %317 = vmatprep.subr.mxu0 0.0
  %318 = vmatpush1.xpose.msra.mxu0 0.0
  %319 = vmatprep.subr.mxu0 0.0
  %320 = vmatpush1.xpose.msra.mxu0 0.0
  %321 = vmatprep.subr.mxu0 0.0
  %322 = vmatpush1.xpose.msra.mxu0 0.0
  %323 = vmatprep.subr.mxu0 0.0
  %324 = vmatpush1.xpose.msra.mxu0 0.0
  %325 = vmatprep.subr.mxu0 0.0
  %326 = vmatpush1.xpose.msra.mxu0 0.0
  %327 = vmatprep.subr.mxu0 0.0
  %328 = vmatpush1.xpose.msra.mxu0 0.0
  %329 = vmatprep.subr.mxu0 0.0
  %330 = vmatpush1.xpose.msra.mxu0 0.0
  %331 = vmatprep.subr.mxu0 0.0
  %332 = vmatpush1.xpose.msra.mxu0 0.0
  %333 = vmatprep.subr.mxu0 0.0
  %334 = vmatpush1.xpose.msra.mxu0 0.0
  %335 = vmatprep.subr.mxu0 0.0
  %336 = vmatpush1.xpose.msra.mxu0 0.0
  %337 = vmatprep.subr.mxu0 0.0
  %338 = vmatpush1.xpose.msra.mxu0 0.0
  %339 = vmatprep.subr.mxu0 0.0
  %340 = vmatpush1.xpose.msra.mxu0 0.0
  %341 = vmatprep.subr.mxu0 0.0
  %342 = vmatpush1.xpose.msra.mxu0 0.0
  %343 = vmatprep.subr.mxu0 0.0
  %344 = vmatpush1.xpose.msra.mxu0 0.0
  %345 = vmatprep.subr.mxu0 0.0
  %346 = vmatpush1.xpose.msra.mxu0 0.0
  %347 = vmatprep.subr.mxu0 0.0
  %348 = vmatpush1.xpose.msra.mxu0 0.0
  %349 = vmatprep.subr.mxu0 0.0
  %350 = vmatpush1.xpose.msra.mxu0 0.0
  %351 = vmatprep.subr.mxu0 0.0
  %352 = vmatpush1.xpose.msra.mxu0 0.0
  %353 = vmatprep.subr.mxu0 0.0
  %354 = vmatpush1.xpose.msra.mxu0 0.0
  %355 = vmatprep.subr.mxu0 0.0
  %356 = vmatpush1.xpose.msra.mxu0 0.0
  %357 = vmatprep.subr.mxu0 0.0
  %358 = vmatpush1.xpose.msra.mxu0 0.0
  %359 = vmatprep.subr.mxu0 0.0
  %360 = vmatpush1.xpose.msra.mxu0 0.0
  %361 = vmatprep.subr.mxu0 0.0
  %362 = vmatpush1.xpose.msra.mxu0 0.0
  %363 = vmatprep.subr.mxu0 0.0
  %364 = vmatpush1.xpose.msra.mxu0 0.0
  %365 = vmatprep.subr.mxu0 0.0
  %366 = vmatpush1.xpose.msra.mxu0 0.0
  %367 = vmatprep.subr.mxu0 0.0
  %368 = vmatpush1.xpose.msra.mxu0 0.0
  %369 = vmatprep.mubr.f32.mxu0 0.0
  %370 = vmatmul.mubr.f32.gmra.mrb[0].mxu0 %v301
  %v371 = vpop.f32.mrb[0].mxu0
  %v372 = vadd.f32 0.0, %v371
  %v373 = vpop.f32.mrb[0].mxu0
  %374 = vdwg.mxu0
  %v375 = vmul.f32 %v295, 0.35355338
  %v376 = vmul.f32 %v372, 0.35355338
  %v377 = vadd.f32 %v375, %v86
  %v378 = vadd.f32 %v376, %v86
  %v379 = vsel %vm223, %v377, -inf
  %380 = vmax.xlane.f32.xlu0 %v379
  %v381 = vpop.xlane.xlu0 %380
  %v382 = vsel %vm223, %v378, -inf
  %383 = vmax.xlane.f32.xlu0 %v382
  %v384 = vpop.xlane.xlu0 %383
  %v385 = vsub.f32 %v377, %v381
  %v386 = vsub.f32 %v378, %v384
  %v387 = vmul.f32 %v385, 1.442695
  %v388 = vpow.pop %v387
  %v389 = vmul.f32 %v386, 1.442695
  %v390 = vpow.pop %v389
  %v391 = vsel %vm223, %v388, 0.0
  %392 = vadd.xlane.f32.xlu0 %v391
  %v393 = vpop.xlane.xlu0 %392
  %v394 = vsel %vm223, %v390, 0.0
  %395 = vadd.xlane.f32.xlu0 %v394
  %v396 = vpop.xlane.xlu0 %395
  %397 = vrot.lane.b32.xlu0 %v212, 64
  %v398 = vpop.permute.xlu0 %397
  %v401 = vsel %vm223, %v388, 0
  %403 = vmatprep.subr.mxu0 0.0
  %404 = vmatpush1.msra.mxu0 %v398
  %405 = vmatprep.subr.mxu0 0.0
  %406 = vmatpush1.msra.mxu0 0.0
  %407 = vmatprep.subr.mxu0 0.0
  %408 = vmatpush1.msra.mxu0 0.0
  %409 = vmatprep.subr.mxu0 0.0
  %410 = vmatpush1.msra.mxu0 0.0
  %411 = vmatprep.subr.mxu0 0.0
  %412 = vmatpush1.msra.mxu0 0.0
  %413 = vmatprep.subr.mxu0 0.0
  %414 = vmatpush1.msra.mxu0 0.0
  %415 = vmatprep.subr.mxu0 0.0
  %416 = vmatpush1.msra.mxu0 0.0
  %417 = vmatprep.subr.mxu0 0.0
  %418 = vmatpush1.msra.mxu0 0.0
  %419 = vmatprep.subr.mxu0 0.0
  %420 = vmatpush1.msra.mxu0 0.0
  %421 = vmatprep.subr.mxu0 0.0
  %422 = vmatpush1.msra.mxu0 0.0
  %423 = vmatprep.subr.mxu0 0.0
  %424 = vmatpush1.msra.mxu0 0.0
  %425 = vmatprep.subr.mxu0 0.0
  %426 = vmatpush1.msra.mxu0 0.0
  %427 = vmatprep.subr.mxu0 0.0
  %428 = vmatpush1.msra.mxu0 0.0
  %429 = vmatprep.subr.mxu0 0.0
  %430 = vmatpush1.msra.mxu0 0.0
  %431 = vmatprep.subr.mxu0 0.0
  %432 = vmatpush1.msra.mxu0 0.0
  %433 = vmatprep.subr.mxu0 0.0
  %434 = vmatpush1.msra.mxu0 0.0
  %435 = vmatprep.subr.mxu0 0.0
  %436 = vmatpush1.msra.mxu0 0.0
  %437 = vmatprep.subr.mxu0 0.0
  %438 = vmatpush1.msra.mxu0 0.0
  %439 = vmatprep.subr.mxu0 0.0
  %440 = vmatpush1.msra.mxu0 0.0
  %441 = vmatprep.subr.mxu0 0.0
  %442 = vmatpush1.msra.mxu0 0.0
  %443 = vmatprep.subr.mxu0 0.0
  %444 = vmatpush1.msra.mxu0 0.0
  %445 = vmatprep.subr.mxu0 0.0
  %446 = vmatpush1.msra.mxu0 0.0
  %447 = vmatprep.subr.mxu0 0.0
  %448 = vmatpush1.msra.mxu0 0.0
  %449 = vmatprep.subr.mxu0 0.0
  %450 = vmatpush1.msra.mxu0 0.0
  %451 = vmatprep.subr.mxu0 0.0
  %452 = vmatpush1.msra.mxu0 0.0
  %453 = vmatprep.subr.mxu0 0.0
  %454 = vmatpush1.msra.mxu0 0.0
  %455 = vmatprep.subr.mxu0 0.0
  %456 = vmatpush1.msra.mxu0 0.0
  %457 = vmatprep.subr.mxu0 0.0
  %458 = vmatpush1.msra.mxu0 0.0
  %459 = vmatprep.subr.mxu0 0.0
  %460 = vmatpush1.msra.mxu0 0.0
  %461 = vmatprep.subr.mxu0 0.0
  %462 = vmatpush1.msra.mxu0 0.0
  %463 = vmatprep.subr.mxu0 0.0
  %464 = vmatpush1.msra.mxu0 0.0
  %465 = vmatprep.subr.mxu0 0.0
  %466 = vmatpush1.msra.mxu0 0.0
  %467 = vmatprep.mubr.f32.mxu0 0.0
  %468 = vmatmul.mubr.f32.gmra.mrb[0].mxu0 %v401
  %v469 = vpop.f32.mrb[0].mxu0
  %v470 = vadd.f32 0.0, %v469
  %v471 = vpop.f32.mrb[0].mxu0
  %472 = vdwg.mxu0
  %473 = vrot.lane.b32.xlu0 %v217, 64
  %v474 = vpop.permute.xlu0 %473
  %v477 = vsel %vm223, %v390, 0
  %479 = vmatprep.subr.mxu0 0.0
  %480 = vmatpush1.msra.mxu0 %v474
  %481 = vmatprep.subr.mxu0 0.0
  %482 = vmatpush1.msra.mxu0 0.0
  %483 = vmatprep.subr.mxu0 0.0
  %484 = vmatpush1.msra.mxu0 0.0
  %485 = vmatprep.subr.mxu0 0.0
  %486 = vmatpush1.msra.mxu0 0.0
  %487 = vmatprep.subr.mxu0 0.0
  %488 = vmatpush1.msra.mxu0 0.0
  %489 = vmatprep.subr.mxu0 0.0
  %490 = vmatpush1.msra.mxu0 0.0
  %491 = vmatprep.subr.mxu0 0.0
  %492 = vmatpush1.msra.mxu0 0.0
  %493 = vmatprep.subr.mxu0 0.0
  %494 = vmatpush1.msra.mxu0 0.0
  %495 = vmatprep.subr.mxu0 0.0
  %496 = vmatpush1.msra.mxu0 0.0
  %497 = vmatprep.subr.mxu0 0.0
  %498 = vmatpush1.msra.mxu0 0.0
  %499 = vmatprep.subr.mxu0 0.0
  %500 = vmatpush1.msra.mxu0 0.0
  %501 = vmatprep.subr.mxu0 0.0
  %502 = vmatpush1.msra.mxu0 0.0
  %503 = vmatprep.subr.mxu0 0.0
  %504 = vmatpush1.msra.mxu0 0.0
  %505 = vmatprep.subr.mxu0 0.0
  %506 = vmatpush1.msra.mxu0 0.0
  %507 = vmatprep.subr.mxu0 0.0
  %508 = vmatpush1.msra.mxu0 0.0
  %509 = vmatprep.subr.mxu0 0.0
  %510 = vmatpush1.msra.mxu0 0.0
  %511 = vmatprep.subr.mxu0 0.0
  %512 = vmatpush1.msra.mxu0 0.0
  %513 = vmatprep.subr.mxu0 0.0
  %514 = vmatpush1.msra.mxu0 0.0
  %515 = vmatprep.subr.mxu0 0.0
  %516 = vmatpush1.msra.mxu0 0.0
  %517 = vmatprep.subr.mxu0 0.0
  %518 = vmatpush1.msra.mxu0 0.0
  %519 = vmatprep.subr.mxu0 0.0
  %520 = vmatpush1.msra.mxu0 0.0
  %521 = vmatprep.subr.mxu0 0.0
  %522 = vmatpush1.msra.mxu0 0.0
  %523 = vmatprep.subr.mxu0 0.0
  %524 = vmatpush1.msra.mxu0 0.0
  %525 = vmatprep.subr.mxu0 0.0
  %526 = vmatpush1.msra.mxu0 0.0
  %527 = vmatprep.subr.mxu0 0.0
  %528 = vmatpush1.msra.mxu0 0.0
  %529 = vmatprep.subr.mxu0 0.0
  %530 = vmatpush1.msra.mxu0 0.0
  %531 = vmatprep.subr.mxu0 0.0
  %532 = vmatpush1.msra.mxu0 0.0
  %533 = vmatprep.subr.mxu0 0.0
  %534 = vmatpush1.msra.mxu0 0.0
  %535 = vmatprep.subr.mxu0 0.0
  %536 = vmatpush1.msra.mxu0 0.0
  %537 = vmatprep.subr.mxu0 0.0
  %538 = vmatpush1.msra.mxu0 0.0
  %539 = vmatprep.subr.mxu0 0.0
  %540 = vmatpush1.msra.mxu0 0.0
  %541 = vmatprep.subr.mxu0 0.0
  %542 = vmatpush1.msra.mxu0 0.0
  %543 = vmatprep.mubr.f32.mxu0 0.0
  %544 = vmatmul.mubr.f32.gmra.mrb[0].mxu0 %v477
  %v545 = vpop.f32.mrb[0].mxu0
  %v546 = vadd.f32 0.0, %v545
  %v547 = vpop.f32.mrb[0].mxu0
  %548 = vdwg.mxu0
  %v549 = vrcp.pop %v393
  %v550 = vrcp.pop %v396
  %v551 = vmul.f32 %v470, %v549
  %v552 = vmul.f32 %v546, %v550
  %553 = vrot.lane.b32.xlu0 %v212, 120
  %v554 = vpop.permute.xlu0 %553
  %555 = vrot.lane.b32.xlu0 %v212, 88
  %v556 = vpop.permute.xlu0 %555
  %v557 = vsel %vm223, %v554, 0
  %v559 = vsel %vm223, %v556, 0
  %561 = vmatprep.subr.mxu0 0.0
  %562 = vmatpush1.xpose.msra.mxu0 %v559
  %563 = vmatprep.subr.mxu0 0.0
  %564 = vmatpush1.xpose.msra.mxu0 0.0
  %565 = vmatprep.subr.mxu0 0.0
  %566 = vmatpush1.xpose.msra.mxu0 0.0
  %567 = vmatprep.subr.mxu0 0.0
  %568 = vmatpush1.xpose.msra.mxu0 0.0
  %569 = vmatprep.subr.mxu0 0.0
  %570 = vmatpush1.xpose.msra.mxu0 0.0
  %571 = vmatprep.subr.mxu0 0.0
  %572 = vmatpush1.xpose.msra.mxu0 0.0
  %573 = vmatprep.subr.mxu0 0.0
  %574 = vmatpush1.xpose.msra.mxu0 0.0
  %575 = vmatprep.subr.mxu0 0.0
  %576 = vmatpush1.xpose.msra.mxu0 0.0
  %577 = vmatprep.subr.mxu0 0.0
  %578 = vmatpush1.xpose.msra.mxu0 0.0
  %579 = vmatprep.subr.mxu0 0.0
  %580 = vmatpush1.xpose.msra.mxu0 0.0
  %581 = vmatprep.subr.mxu0 0.0
  %582 = vmatpush1.xpose.msra.mxu0 0.0
  %583 = vmatprep.subr.mxu0 0.0
  %584 = vmatpush1.xpose.msra.mxu0 0.0
  %585 = vmatprep.subr.mxu0 0.0
  %586 = vmatpush1.xpose.msra.mxu0 0.0
  %587 = vmatprep.subr.mxu0 0.0
  %588 = vmatpush1.xpose.msra.mxu0 0.0
  %589 = vmatprep.subr.mxu0 0.0
  %590 = vmatpush1.xpose.msra.mxu0 0.0
  %591 = vmatprep.subr.mxu0 0.0
  %592 = vmatpush1.xpose.msra.mxu0 0.0
  %593 = vmatprep.subr.mxu0 0.0
  %594 = vmatpush1.xpose.msra.mxu0 0.0
  %595 = vmatprep.subr.mxu0 0.0
  %596 = vmatpush1.xpose.msra.mxu0 0.0
  %597 = vmatprep.subr.mxu0 0.0
  %598 = vmatpush1.xpose.msra.mxu0 0.0
  %599 = vmatprep.subr.mxu0 0.0
  %600 = vmatpush1.xpose.msra.mxu0 0.0
  %601 = vmatprep.subr.mxu0 0.0
  %602 = vmatpush1.xpose.msra.mxu0 0.0
  %603 = vmatprep.subr.mxu0 0.0
  %604 = vmatpush1.xpose.msra.mxu0 0.0
  %605 = vmatprep.subr.mxu0 0.0
  %606 = vmatpush1.xpose.msra.mxu0 0.0
  %607 = vmatprep.subr.mxu0 0.0
  %608 = vmatpush1.xpose.msra.mxu0 0.0
  %609 = vmatprep.subr.mxu0 0.0
  %610 = vmatpush1.xpose.msra.mxu0 0.0
  %611 = vmatprep.subr.mxu0 0.0
  %612 = vmatpush1.xpose.msra.mxu0 0.0
  %613 = vmatprep.subr.mxu0 0.0
  %614 = vmatpush1.xpose.msra.mxu0 0.0
  %615 = vmatprep.subr.mxu0 0.0
  %616 = vmatpush1.xpose.msra.mxu0 0.0
  %617 = vmatprep.subr.mxu0 0.0
  %618 = vmatpush1.xpose.msra.mxu0 0.0
  %619 = vmatprep.subr.mxu0 0.0
  %620 = vmatpush1.xpose.msra.mxu0 0.0
  %621 = vmatprep.subr.mxu0 0.0
  %622 = vmatpush1.xpose.msra.mxu0 0.0
  %623 = vmatprep.subr.mxu0 0.0
  %624 = vmatpush1.xpose.msra.mxu0 0.0
  %625 = vmatprep.mubr.f32.mxu0 0.0
  %626 = vmatmul.mubr.f32.gmra.mrb[0].mxu0 %v557
  %v627 = vpop.f32.mrb[0].mxu0
  %v628 = vadd.f32 0.0, %v627
  %v629 = vpop.f32.mrb[0].mxu0
  %630 = vdwg.mxu0
  %631 = vrot.lane.b32.xlu0 %v217, 120
  %v632 = vpop.permute.xlu0 %631
  %633 = vrot.lane.b32.xlu0 %v217, 88
  %v634 = vpop.permute.xlu0 %633
  %v635 = vsel %vm223, %v632, 0
  %v637 = vsel %vm223, %v634, 0
  %639 = vmatprep.subr.mxu0 0.0
  %640 = vmatpush1.xpose.msra.mxu0 %v637
  %641 = vmatprep.subr.mxu0 0.0
  %642 = vmatpush1.xpose.msra.mxu0 0.0
  %643 = vmatprep.subr.mxu0 0.0
  %644 = vmatpush1.xpose.msra.mxu0 0.0
  %645 = vmatprep.subr.mxu0 0.0
  %646 = vmatpush1.xpose.msra.mxu0 0.0
  %647 = vmatprep.subr.mxu0 0.0
  %648 = vmatpush1.xpose.msra.mxu0 0.0
  %649 = vmatprep.subr.mxu0 0.0
  %650 = vmatpush1.xpose.msra.mxu0 0.0
  %651 = vmatprep.subr.mxu0 0.0
  %652 = vmatpush1.xpose.msra.mxu0 0.0
  %653 = vmatprep.subr.mxu0 0.0
  %654 = vmatpush1.xpose.msra.mxu0 0.0
  %655 = vmatprep.subr.mxu0 0.0
  %656 = vmatpush1.xpose.msra.mxu0 0.0
  %657 = vmatprep.subr.mxu0 0.0
  %658 = vmatpush1.xpose.msra.mxu0 0.0
  %659 = vmatprep.subr.mxu0 0.0
  %660 = vmatpush1.xpose.msra.mxu0 0.0
  %661 = vmatprep.subr.mxu0 0.0
  %662 = vmatpush1.xpose.msra.mxu0 0.0
  %663 = vmatprep.subr.mxu0 0.0
  %664 = vmatpush1.xpose.msra.mxu0 0.0
  %665 = vmatprep.subr.mxu0 0.0
  %666 = vmatpush1.xpose.msra.mxu0 0.0
  %667 = vmatprep.subr.mxu0 0.0
  %668 = vmatpush1.xpose.msra.mxu0 0.0
  %669 = vmatprep.subr.mxu0 0.0
  %670 = vmatpush1.xpose.msra.mxu0 0.0
  %671 = vmatprep.subr.mxu0 0.0
  %672 = vmatpush1.xpose.msra.mxu0 0.0
  %673 = vmatprep.subr.mxu0 0.0
  %674 = vmatpush1.xpose.msra.mxu0 0.0
  %675 = vmatprep.subr.mxu0 0.0
  %676 = vmatpush1.xpose.msra.mxu0 0.0
  %677 = vmatprep.subr.mxu0 0.0
  %678 = vmatpush1.xpose.msra.mxu0 0.0
  %679 = vmatprep.subr.mxu0 0.0
  %680 = vmatpush1.xpose.msra.mxu0 0.0
  %681 = vmatprep.subr.mxu0 0.0
  %682 = vmatpush1.xpose.msra.mxu0 0.0
  %683 = vmatprep.subr.mxu0 0.0
  %684 = vmatpush1.xpose.msra.mxu0 0.0
  %685 = vmatprep.subr.mxu0 0.0
  %686 = vmatpush1.xpose.msra.mxu0 0.0
  %687 = vmatprep.subr.mxu0 0.0
  %688 = vmatpush1.xpose.msra.mxu0 0.0
  %689 = vmatprep.subr.mxu0 0.0
  %690 = vmatpush1.xpose.msra.mxu0 0.0
  %691 = vmatprep.subr.mxu0 0.0
  %692 = vmatpush1.xpose.msra.mxu0 0.0
  %693 = vmatprep.subr.mxu0 0.0
  %694 = vmatpush1.xpose.msra.mxu0 0.0
  %695 = vmatprep.subr.mxu0 0.0
  %696 = vmatpush1.xpose.msra.mxu0 0.0
  %697 = vmatprep.subr.mxu0 0.0
  %698 = vmatpush1.xpose.msra.mxu0 0.0
  %699 = vmatprep.subr.mxu0 0.0
  %700 = vmatpush1.xpose.msra.mxu0 0.0
  %701 = vmatprep.subr.mxu0 0.0
  %702 = vmatpush1.xpose.msra.mxu0 0.0
  %703 = vmatprep.mubr.f32.mxu0 0.0
  %704 = vmatmul.mubr.f32.gmra.mrb[0].mxu0 %v635
  %v705 = vpop.f32.mrb[0].mxu0
  %v706 = vadd.f32 0.0, %v705
  %v707 = vpop.f32.mrb[0].mxu0
  %708 = vdwg.mxu0
  %v709 = vmul.f32 %v628, 0.35355338
  %v710 = vmul.f32 %v706, 0.35355338
  %v711 = vadd.f32 %v709, %v86
  %v712 = vadd.f32 %v710, %v86
  %v713 = vsel %vm223, %v711, -inf
  %714 = vmax.xlane.f32.xlu0 %v713
  %v715 = vpop.xlane.xlu0 %714
  %v716 = vsel %vm223, %v712, -inf
  %717 = vmax.xlane.f32.xlu0 %v716
  %v718 = vpop.xlane.xlu0 %717
  %v719 = vsub.f32 %v711, %v715
  %v720 = vsub.f32 %v712, %v718
  %v721 = vmul.f32 %v719, 1.442695
  %v722 = vpow.pop %v721
  %v723 = vmul.f32 %v720, 1.442695
  %v724 = vpow.pop %v723
  %v725 = vsel %vm223, %v722, 0.0
  %726 = vadd.xlane.f32.xlu0 %v725
  %v727 = vpop.xlane.xlu0 %726
  %v728 = vsel %vm223, %v724, 0.0
  %729 = vadd.xlane.f32.xlu0 %v728
  %v730 = vpop.xlane.xlu0 %729
  %731 = vrot.lane.b32.xlu0 %v212, 56
  %v732 = vpop.permute.xlu0 %731
  %v735 = vsel %vm223, %v722, 0
  %737 = vmatprep.subr.mxu0 0.0
  %738 = vmatpush1.msra.mxu0 %v732
  %739 = vmatprep.subr.mxu0 0.0
  %740 = vmatpush1.msra.mxu0 0.0
  %741 = vmatprep.subr.mxu0 0.0
  %742 = vmatpush1.msra.mxu0 0.0
  %743 = vmatprep.subr.mxu0 0.0
  %744 = vmatpush1.msra.mxu0 0.0
  %745 = vmatprep.subr.mxu0 0.0
  %746 = vmatpush1.msra.mxu0 0.0
  %747 = vmatprep.subr.mxu0 0.0
  %748 = vmatpush1.msra.mxu0 0.0
  %749 = vmatprep.subr.mxu0 0.0
  %750 = vmatpush1.msra.mxu0 0.0
  %751 = vmatprep.subr.mxu0 0.0
  %752 = vmatpush1.msra.mxu0 0.0
  %753 = vmatprep.subr.mxu0 0.0
  %754 = vmatpush1.msra.mxu0 0.0
  %755 = vmatprep.subr.mxu0 0.0
  %756 = vmatpush1.msra.mxu0 0.0
  %757 = vmatprep.subr.mxu0 0.0
  %758 = vmatpush1.msra.mxu0 0.0
  %759 = vmatprep.subr.mxu0 0.0
  %760 = vmatpush1.msra.mxu0 0.0
  %761 = vmatprep.subr.mxu0 0.0
  %762 = vmatpush1.msra.mxu0 0.0
  %763 = vmatprep.subr.mxu0 0.0
  %764 = vmatpush1.msra.mxu0 0.0
  %765 = vmatprep.subr.mxu0 0.0
  %766 = vmatpush1.msra.mxu0 0.0
  %767 = vmatprep.subr.mxu0 0.0
  %768 = vmatpush1.msra.mxu0 0.0
  %769 = vmatprep.subr.mxu0 0.0
  %770 = vmatpush1.msra.mxu0 0.0
  %771 = vmatprep.subr.mxu0 0.0
  %772 = vmatpush1.msra.mxu0 0.0
  %773 = vmatprep.subr.mxu0 0.0
  %774 = vmatpush1.msra.mxu0 0.0
  %775 = vmatprep.subr.mxu0 0.0
  %776 = vmatpush1.msra.mxu0 0.0
  %777 = vmatprep.subr.mxu0 0.0
  %778 = vmatpush1.msra.mxu0 0.0
  %779 = vmatprep.subr.mxu0 0.0
  %780 = vmatpush1.msra.mxu0 0.0
  %781 = vmatprep.subr.mxu0 0.0
  %782 = vmatpush1.msra.mxu0 0.0
  %783 = vmatprep.subr.mxu0 0.0
  %784 = vmatpush1.msra.mxu0 0.0
  %785 = vmatprep.subr.mxu0 0.0
  %786 = vmatpush1.msra.mxu0 0.0
  %787 = vmatprep.subr.mxu0 0.0
  %788 = vmatpush1.msra.mxu0 0.0
  %789 = vmatprep.subr.mxu0 0.0
  %790 = vmatpush1.msra.mxu0 0.0
  %791 = vmatprep.subr.mxu0 0.0
  %792 = vmatpush1.msra.mxu0 0.0
  %793 = vmatprep.subr.mxu0 0.0
  %794 = vmatpush1.msra.mxu0 0.0
  %795 = vmatprep.subr.mxu0 0.0
  %796 = vmatpush1.msra.mxu0 0.0
  %797 = vmatprep.subr.mxu0 0.0
  %798 = vmatpush1.msra.mxu0 0.0
  %799 = vmatprep.subr.mxu0 0.0
  %800 = vmatpush1.msra.mxu0 0.0
  %801 = vmatprep.mubr.f32.mxu0 0.0
  %802 = vmatmul.mubr.f32.gmra.mrb[0].mxu0 %v735
  %v803 = vpop.f32.mrb[0].mxu0
  %v804 = vadd.f32 0.0, %v803
  %v805 = vpop.f32.mrb[0].mxu0
  %806 = vdwg.mxu0
  %807 = vrot.lane.b32.xlu0 %v217, 56
  %v808 = vpop.permute.xlu0 %807
  %v811 = vsel %vm223, %v724, 0
  %813 = vmatprep.subr.mxu0 0.0
  %814 = vmatpush1.msra.mxu0 %v808
  %815 = vmatprep.subr.mxu0 0.0
  %816 = vmatpush1.msra.mxu0 0.0
  %817 = vmatprep.subr.mxu0 0.0
  %818 = vmatpush1.msra.mxu0 0.0
  %819 = vmatprep.subr.mxu0 0.0
  %820 = vmatpush1.msra.mxu0 0.0
  %821 = vmatprep.subr.mxu0 0.0
  %822 = vmatpush1.msra.mxu0 0.0
  %823 = vmatprep.subr.mxu0 0.0
  %824 = vmatpush1.msra.mxu0 0.0
  %825 = vmatprep.subr.mxu0 0.0
  %826 = vmatpush1.msra.mxu0 0.0
  %827 = vmatprep.subr.mxu0 0.0
  %828 = vmatpush1.msra.mxu0 0.0
  %829 = vmatprep.subr.mxu0 0.0
  %830 = vmatpush1.msra.mxu0 0.0
  %831 = vmatprep.subr.mxu0 0.0
  %832 = vmatpush1.msra.mxu0 0.0
  %833 = vmatprep.subr.mxu0 0.0
  %834 = vmatpush1.msra.mxu0 0.0
  %835 = vmatprep.subr.mxu0 0.0
  %836 = vmatpush1.msra.mxu0 0.0
  %837 = vmatprep.subr.mxu0 0.0
  %838 = vmatpush1.msra.mxu0 0.0
  %839 = vmatprep.subr.mxu0 0.0
  %840 = vmatpush1.msra.mxu0 0.0
  %841 = vmatprep.subr.mxu0 0.0
  %842 = vmatpush1.msra.mxu0 0.0
  %843 = vmatprep.subr.mxu0 0.0
  %844 = vmatpush1.msra.mxu0 0.0
  %845 = vmatprep.subr.mxu0 0.0
  %846 = vmatpush1.msra.mxu0 0.0
  %847 = vmatprep.subr.mxu0 0.0
  %848 = vmatpush1.msra.mxu0 0.0
  %849 = vmatprep.subr.mxu0 0.0
  %850 = vmatpush1.msra.mxu0 0.0
  %851 = vmatprep.subr.mxu0 0.0
  %852 = vmatpush1.msra.mxu0 0.0
  %853 = vmatprep.subr.mxu0 0.0
  %854 = vmatpush1.msra.mxu0 0.0
  %855 = vmatprep.subr.mxu0 0.0
  %856 = vmatpush1.msra.mxu0 0.0
  %857 = vmatprep.subr.mxu0 0.0
  %858 = vmatpush1.msra.mxu0 0.0
  %859 = vmatprep.subr.mxu0 0.0
  %860 = vmatpush1.msra.mxu0 0.0
  %861 = vmatprep.subr.mxu0 0.0
  %862 = vmatpush1.msra.mxu0 0.0
  %863 = vmatprep.subr.mxu0 0.0
  %864 = vmatpush1.msra.mxu0 0.0
  %865 = vmatprep.subr.mxu0 0.0
  %866 = vmatpush1.msra.mxu0 0.0
  %867 = vmatprep.subr.mxu0 0.0
  %868 = vmatpush1.msra.mxu0 0.0
  %869 = vmatprep.subr.mxu0 0.0
  %870 = vmatpush1.msra.mxu0 0.0
  %871 = vmatprep.subr.mxu0 0.0
  %872 = vmatpush1.msra.mxu0 0.0
  %873 = vmatprep.subr.mxu0 0.0
  %874 = vmatpush1.msra.mxu0 0.0
  %875 = vmatprep.subr.mxu0 0.0
  %876 = vmatpush1.msra.mxu0 0.0
  %877 = vmatprep.mubr.f32.mxu0 0.0
  %878 = vmatmul.mubr.f32.gmra.mrb[0].mxu0 %v811
  %v879 = vpop.f32.mrb[0].mxu0
  %v880 = vadd.f32 0.0, %v879
  %v881 = vpop.f32.mrb[0].mxu0
  %882 = vdwg.mxu0
  %v883 = vrcp.pop %v727
  %v884 = vrcp.pop %v730
  %v885 = vmul.f32 %v804, %v883
  %v886 = vmul.f32 %v880, %v884
  %v888 = vsel %vm223, %v885, 0
  %v891 = vsel %vm223, %v886, 0
  %893 = vmatprep.subr.mxu0 0.0
  %894 = vmatpush1.msra.mxu0 %v93
  %895 = vmatprep.subr.mxu0 0.0
  %896 = vmatpush1.msra.mxu0 0.0
  %897 = vmatprep.subr.mxu0 0.0
  %898 = vmatpush1.msra.mxu0 0.0
  %899 = vmatprep.subr.mxu0 0.0
  %900 = vmatpush1.msra.mxu0 0.0
  %901 = vmatprep.subr.mxu0 0.0
  %902 = vmatpush1.msra.mxu0 0.0
  %903 = vmatprep.subr.mxu0 0.0
  %904 = vmatpush1.msra.mxu0 0.0
  %905 = vmatprep.subr.mxu0 0.0
  %906 = vmatpush1.msra.mxu0 0.0
  %907 = vmatprep.subr.mxu0 0.0
  %908 = vmatpush1.msra.mxu0 0.0
  %909 = vmatprep.subr.mxu0 0.0
  %910 = vmatpush1.msra.mxu0 0.0
  %911 = vmatprep.subr.mxu0 0.0
  %912 = vmatpush1.msra.mxu0 0.0
  %913 = vmatprep.subr.mxu0 0.0
  %914 = vmatpush1.msra.mxu0 0.0
  %915 = vmatprep.subr.mxu0 0.0
  %916 = vmatpush1.msra.mxu0 0.0
  %917 = vmatprep.subr.mxu0 0.0
  %918 = vmatpush1.msra.mxu0 0.0
  %919 = vmatprep.subr.mxu0 0.0
  %920 = vmatpush1.msra.mxu0 0.0
  %921 = vmatprep.subr.mxu0 0.0
  %922 = vmatpush1.msra.mxu0 0.0
  %923 = vmatprep.subr.mxu0 0.0
  %924 = vmatpush1.msra.mxu0 0.0
  %925 = vmatprep.subr.mxu0 0.0
  %926 = vmatpush1.msra.mxu0 0.0
  %927 = vmatprep.subr.mxu0 0.0
  %928 = vmatpush1.msra.mxu0 0.0
  %929 = vmatprep.subr.mxu0 0.0
  %930 = vmatpush1.msra.mxu0 0.0
  %931 = vmatprep.subr.mxu0 0.0
  %932 = vmatpush1.msra.mxu0 0.0
  %933 = vmatprep.subr.mxu0 0.0
  %934 = vmatpush1.msra.mxu0 0.0
  %935 = vmatprep.subr.mxu0 0.0
  %936 = vmatpush1.msra.mxu0 0.0
  %937 = vmatprep.subr.mxu0 0.0
  %938 = vmatpush1.msra.mxu0 0.0
  %939 = vmatprep.subr.mxu0 0.0
  %940 = vmatpush1.msra.mxu0 0.0
  %941 = vmatprep.subr.mxu0 0.0
  %942 = vmatpush1.msra.mxu0 0.0
  %943 = vmatprep.subr.mxu0 0.0
  %944 = vmatpush1.msra.mxu0 0.0
  %945 = vmatprep.subr.mxu0 0.0
  %946 = vmatpush1.msra.mxu0 0.0
  %947 = vmatprep.subr.mxu0 0.0
  %948 = vmatpush1.msra.mxu0 0.0
  %949 = vmatprep.subr.mxu0 0.0
  %950 = vmatpush1.msra.mxu0 0.0
  %951 = vmatprep.subr.mxu0 0.0
  %952 = vmatpush1.msra.mxu0 0.0
  %953 = vmatprep.subr.mxu0 0.0
  %954 = vmatpush1.msra.mxu0 0.0
  %955 = vmatprep.subr.mxu0 0.0
  %956 = vmatpush1.msra.mxu0 0.0
  %957 = vmatprep.mubr.f32.mxu0 0.0
  %958 = vmatmul.mubr.f32.gmra.mrb[0].mxu0 %v888
  %v959 = vpop.f32.mrb[0].mxu0
  %v960 = vadd.f32 0.0, %v959
  %v961 = vpop.f32.mrb[0].mxu0
  %962 = vmatprep.mubr.f32.mxu0 0.0
  %963 = vmatmul.mubr.f32.gmra.mrb[0].mxu0 %v891
  %v964 = vpop.f32.mrb[0].mxu0
  %v965 = vadd.f32 0.0, %v964
  %v966 = vpop.f32.mrb[0].mxu0
  %967 = vdwg.mxu0
  %v969 = vsel %vm223, %v551, 0
  %v972 = vsel %vm223, %v552, 0
  %974 = vmatprep.subr.mxu0 0.0
  %975 = vmatpush1.msra.mxu0 %v92
  %976 = vmatprep.subr.mxu0 0.0
  %977 = vmatpush1.msra.mxu0 0.0
  %978 = vmatprep.subr.mxu0 0.0
  %979 = vmatpush1.msra.mxu0 0.0
  %980 = vmatprep.subr.mxu0 0.0
  %981 = vmatpush1.msra.mxu0 0.0
  %982 = vmatprep.subr.mxu0 0.0
  %983 = vmatpush1.msra.mxu0 0.0
  %984 = vmatprep.subr.mxu0 0.0
  %985 = vmatpush1.msra.mxu0 0.0
  %986 = vmatprep.subr.mxu0 0.0
  %987 = vmatpush1.msra.mxu0 0.0
  %988 = vmatprep.subr.mxu0 0.0
  %989 = vmatpush1.msra.mxu0 0.0
  %990 = vmatprep.subr.mxu0 0.0
  %991 = vmatpush1.msra.mxu0 0.0
  %992 = vmatprep.subr.mxu0 0.0
  %993 = vmatpush1.msra.mxu0 0.0
  %994 = vmatprep.subr.mxu0 0.0
  %995 = vmatpush1.msra.mxu0 0.0
  %996 = vmatprep.subr.mxu0 0.0
  %997 = vmatpush1.msra.mxu0 0.0
  %998 = vmatprep.subr.mxu0 0.0
  %999 = vmatpush1.msra.mxu0 0.0
  %1000 = vmatprep.subr.mxu0 0.0
  %1001 = vmatpush1.msra.mxu0 0.0
  %1002 = vmatprep.subr.mxu0 0.0
  %1003 = vmatpush1.msra.mxu0 0.0
  %1004 = vmatprep.subr.mxu0 0.0
  %1005 = vmatpush1.msra.mxu0 0.0
  %1006 = vmatprep.subr.mxu0 0.0
  %1007 = vmatpush1.msra.mxu0 0.0
  %1008 = vmatprep.subr.mxu0 0.0
  %1009 = vmatpush1.msra.mxu0 0.0
  %1010 = vmatprep.subr.mxu0 0.0
  %1011 = vmatpush1.msra.mxu0 0.0
  %1012 = vmatprep.subr.mxu0 0.0
  %1013 = vmatpush1.msra.mxu0 0.0
  %1014 = vmatprep.subr.mxu0 0.0
  %1015 = vmatpush1.msra.mxu0 0.0
  %1016 = vmatprep.subr.mxu0 0.0
  %1017 = vmatpush1.msra.mxu0 0.0
  %1018 = vmatprep.subr.mxu0 0.0
  %1019 = vmatpush1.msra.mxu0 0.0
  %1020 = vmatprep.subr.mxu0 0.0
  %1021 = vmatpush1.msra.mxu0 0.0
  %1022 = vmatprep.subr.mxu0 0.0
  %1023 = vmatpush1.msra.mxu0 0.0
  %1024 = vmatprep.subr.mxu0 0.0
  %1025 = vmatpush1.msra.mxu0 0.0
  %1026 = vmatprep.subr.mxu0 0.0
  %1027 = vmatpush1.msra.mxu0 0.0
  %1028 = vmatprep.subr.mxu0 0.0
  %1029 = vmatpush1.msra.mxu0 0.0
  %1030 = vmatprep.subr.mxu0 0.0
  %1031 = vmatpush1.msra.mxu0 0.0
  %1032 = vmatprep.subr.mxu0 0.0
  %1033 = vmatpush1.msra.mxu0 0.0
  %1034 = vmatprep.subr.mxu0 0.0
  %1035 = vmatpush1.msra.mxu0 0.0
  %1036 = vmatprep.subr.mxu0 0.0
  %1037 = vmatpush1.msra.mxu0 0.0
  %1038 = vmatprep.mubr.f32.mxu0 0.0
  %1039 = vmatmul.mubr.f32.gmra.mrb[0].mxu0 %v969
  %v1040 = vpop.f32.mrb[0].mxu0
  %v1041 = vadd.f32 %v960, %v1040
  %v1042 = vpop.f32.mrb[0].mxu0
  %1043 = vmatprep.mubr.f32.mxu0 0.0
  %1044 = vmatmul.mubr.f32.gmra.mrb[0].mxu0 %v972
  %v1045 = vpop.f32.mrb[0].mxu0
  %v1046 = vadd.f32 %v965, %v1045
  %v1047 = vpop.f32.mrb[0].mxu0
  %1048 = vdwg.mxu0
  %1049 = vrot.lane.b32.xlu0 %v212, 112
  %v1050 = vpop.permute.xlu0 %1049
  %1051 = vrot.lane.b32.xlu0 %v212, 80
  %v1052 = vpop.permute.xlu0 %1051
  %v1053 = vsel %vm223, %v1050, 0
  %v1055 = vsel %vm223, %v1052, 0
  %1057 = vmatprep.subr.mxu0 0.0
  %1058 = vmatpush1.xpose.msra.mxu0 %v1055
  %1059 = vmatprep.subr.mxu0 0.0
  %1060 = vmatpush1.xpose.msra.mxu0 0.0
  %1061 = vmatprep.subr.mxu0 0.0
  %1062 = vmatpush1.xpose.msra.mxu0 0.0
  %1063 = vmatprep.subr.mxu0 0.0
  %1064 = vmatpush1.xpose.msra.mxu0 0.0
  %1065 = vmatprep.subr.mxu0 0.0
  %1066 = vmatpush1.xpose.msra.mxu0 0.0
  %1067 = vmatprep.subr.mxu0 0.0
  %1068 = vmatpush1.xpose.msra.mxu0 0.0
  %1069 = vmatprep.subr.mxu0 0.0
  %1070 = vmatpush1.xpose.msra.mxu0 0.0
  %1071 = vmatprep.subr.mxu0 0.0
  %1072 = vmatpush1.xpose.msra.mxu0 0.0
  %1073 = vmatprep.subr.mxu0 0.0
  %1074 = vmatpush1.xpose.msra.mxu0 0.0
  %1075 = vmatprep.subr.mxu0 0.0
  %1076 = vmatpush1.xpose.msra.mxu0 0.0
  %1077 = vmatprep.subr.mxu0 0.0
  %1078 = vmatpush1.xpose.msra.mxu0 0.0
  %1079 = vmatprep.subr.mxu0 0.0
  %1080 = vmatpush1.xpose.msra.mxu0 0.0
  %1081 = vmatprep.subr.mxu0 0.0
  %1082 = vmatpush1.xpose.msra.mxu0 0.0
  %1083 = vmatprep.subr.mxu0 0.0
  %1084 = vmatpush1.xpose.msra.mxu0 0.0
  %1085 = vmatprep.subr.mxu0 0.0
  %1086 = vmatpush1.xpose.msra.mxu0 0.0
  %1087 = vmatprep.subr.mxu0 0.0
  %1088 = vmatpush1.xpose.msra.mxu0 0.0
  %1089 = vmatprep.subr.mxu0 0.0
  %1090 = vmatpush1.xpose.msra.mxu0 0.0
  %1091 = vmatprep.subr.mxu0 0.0
  %1092 = vmatpush1.xpose.msra.mxu0 0.0
  %1093 = vmatprep.subr.mxu0 0.0
  %1094 = vmatpush1.xpose.msra.mxu0 0.0
  %1095 = vmatprep.subr.mxu0 0.0
  %1096 = vmatpush1.xpose.msra.mxu0 0.0
  %1097 = vmatprep.subr.mxu0 0.0
  %1098 = vmatpush1.xpose.msra.mxu0 0.0
  %1099 = vmatprep.subr.mxu0 0.0
  %1100 = vmatpush1.xpose.msra.mxu0 0.0
  %1101 = vmatprep.subr.mxu0 0.0
  %1102 = vmatpush1.xpose.msra.mxu0 0.0
  %1103 = vmatprep.subr.mxu0 0.0
  %1104 = vmatpush1.xpose.msra.mxu0 0.0
  %1105 = vmatprep.subr.mxu0 0.0
  %1106 = vmatpush1.xpose.msra.mxu0 0.0
  %1107 = vmatprep.subr.mxu0 0.0
  %1108 = vmatpush1.xpose.msra.mxu0 0.0
  %1109 = vmatprep.subr.mxu0 0.0
  %1110 = vmatpush1.xpose.msra.mxu0 0.0
  %1111 = vmatprep.subr.mxu0 0.0
  %1112 = vmatpush1.xpose.msra.mxu0 0.0
  %1113 = vmatprep.subr.mxu0 0.0
  %1114 = vmatpush1.xpose.msra.mxu0 0.0
  %1115 = vmatprep.subr.mxu0 0.0
  %1116 = vmatpush1.xpose.msra.mxu0 0.0
  %1117 = vmatprep.subr.mxu0 0.0
  %1118 = vmatpush1.xpose.msra.mxu0 0.0
  %1119 = vmatprep.subr.mxu0 0.0
  %1120 = vmatpush1.xpose.msra.mxu0 0.0
  %1121 = vmatprep.mubr.f32.mxu0 0.0
  %1122 = vmatmul.mubr.f32.gmra.mrb[0].mxu0 %v1053
  %v1123 = vpop.f32.mrb[0].mxu0
  %v1124 = vadd.f32 0.0, %v1123
  %v1125 = vpop.f32.mrb[0].mxu0
  %1126 = vdwg.mxu0
  %1127 = vrot.lane.b32.xlu0 %v217, 112
  %v1128 = vpop.permute.xlu0 %1127
  %1129 = vrot.lane.b32.xlu0 %v217, 80
  %v1130 = vpop.permute.xlu0 %1129
  %v1131 = vsel %vm223, %v1128, 0
  %v1133 = vsel %vm223, %v1130, 0
  %1135 = vmatprep.subr.mxu0 0.0
  %1136 = vmatpush1.xpose.msra.mxu0 %v1133
  %1137 = vmatprep.subr.mxu0 0.0
  %1138 = vmatpush1.xpose.msra.mxu0 0.0
  %1139 = vmatprep.subr.mxu0 0.0
  %1140 = vmatpush1.xpose.msra.mxu0 0.0
  %1141 = vmatprep.subr.mxu0 0.0
  %1142 = vmatpush1.xpose.msra.mxu0 0.0
  %1143 = vmatprep.subr.mxu0 0.0
  %1144 = vmatpush1.xpose.msra.mxu0 0.0
  %1145 = vmatprep.subr.mxu0 0.0
  %1146 = vmatpush1.xpose.msra.mxu0 0.0
  %1147 = vmatprep.subr.mxu0 0.0
  %1148 = vmatpush1.xpose.msra.mxu0 0.0
  %1149 = vmatprep.subr.mxu0 0.0
  %1150 = vmatpush1.xpose.msra.mxu0 0.0
  %1151 = vmatprep.subr.mxu0 0.0
  %1152 = vmatpush1.xpose.msra.mxu0 0.0
  %1153 = vmatprep.subr.mxu0 0.0
  %1154 = vmatpush1.xpose.msra.mxu0 0.0
  %1155 = vmatprep.subr.mxu0 0.0
  %1156 = vmatpush1.xpose.msra.mxu0 0.0
  %1157 = vmatprep.subr.mxu0 0.0
  %1158 = vmatpush1.xpose.msra.mxu0 0.0
  %1159 = vmatprep.subr.mxu0 0.0
  %1160 = vmatpush1.xpose.msra.mxu0 0.0
  %1161 = vmatprep.subr.mxu0 0.0
  %1162 = vmatpush1.xpose.msra.mxu0 0.0
  %1163 = vmatprep.subr.mxu0 0.0
  %1164 = vmatpush1.xpose.msra.mxu0 0.0
  %1165 = vmatprep.subr.mxu0 0.0
  %1166 = vmatpush1.xpose.msra.mxu0 0.0
  %1167 = vmatprep.subr.mxu0 0.0
  %1168 = vmatpush1.xpose.msra.mxu0 0.0
  %1169 = vmatprep.subr.mxu0 0.0
  %1170 = vmatpush1.xpose.msra.mxu0 0.0
  %1171 = vmatprep.subr.mxu0 0.0
  %1172 = vmatpush1.xpose.msra.mxu0 0.0
  %1173 = vmatprep.subr.mxu0 0.0
  %1174 = vmatpush1.xpose.msra.mxu0 0.0
  %1175 = vmatprep.subr.mxu0 0.0
  %1176 = vmatpush1.xpose.msra.mxu0 0.0
  %1177 = vmatprep.subr.mxu0 0.0
  %1178 = vmatpush1.xpose.msra.mxu0 0.0
  %1179 = vmatprep.subr.mxu0 0.0
  %1180 = vmatpush1.xpose.msra.mxu0 0.0
  %1181 = vmatprep.subr.mxu0 0.0
  %1182 = vmatpush1.xpose.msra.mxu0 0.0
  %1183 = vmatprep.subr.mxu0 0.0
  %1184 = vmatpush1.xpose.msra.mxu0 0.0
  %1185 = vmatprep.subr.mxu0 0.0
  %1186 = vmatpush1.xpose.msra.mxu0 0.0
  %1187 = vmatprep.subr.mxu0 0.0
  %1188 = vmatpush1.xpose.msra.mxu0 0.0
  %1189 = vmatprep.subr.mxu0 0.0
  %1190 = vmatpush1.xpose.msra.mxu0 0.0
  %1191 = vmatprep.subr.mxu0 0.0
  %1192 = vmatpush1.xpose.msra.mxu0 0.0
  %1193 = vmatprep.subr.mxu0 0.0
  %1194 = vmatpush1.xpose.msra.mxu0 0.0
  %1195 = vmatprep.subr.mxu0 0.0
  %1196 = vmatpush1.xpose.msra.mxu0 0.0
  %1197 = vmatprep.subr.mxu0 0.0
  %1198 = vmatpush1.xpose.msra.mxu0 0.0
  %1199 = vmatprep.mubr.f32.mxu0 0.0
  %1200 = vmatmul.mubr.f32.gmra.mrb[0].mxu0 %v1131
  %v1201 = vpop.f32.mrb[0].mxu0
  %v1202 = vadd.f32 0.0, %v1201
  %v1203 = vpop.f32.mrb[0].mxu0
  %1204 = vdwg.mxu0
  %v1205 = vmul.f32 %v1124, 0.35355338
  %v1206 = vmul.f32 %v1202, 0.35355338
  %v1207 = vadd.f32 %v1205, %v86
  %v1208 = vadd.f32 %v1206, %v86
  %v1209 = vsel %vm223, %v1207, -inf
  %1210 = vmax.xlane.f32.xlu0 %v1209
  %v1211 = vpop.xlane.xlu0 %1210
  %v1212 = vsel %vm223, %v1208, -inf
  %1213 = vmax.xlane.f32.xlu0 %v1212
  %v1214 = vpop.xlane.xlu0 %1213
  %v1215 = vsub.f32 %v1207, %v1211
  %v1216 = vsub.f32 %v1208, %v1214
  %v1217 = vmul.f32 %v1215, 1.442695
  %v1218 = vpow.pop %v1217
  %v1219 = vmul.f32 %v1216, 1.442695
  %v1220 = vpow.pop %v1219
  %v1221 = vsel %vm223, %v1218, 0.0
  %1222 = vadd.xlane.f32.xlu0 %v1221
  %v1223 = vpop.xlane.xlu0 %1222
  %v1224 = vsel %vm223, %v1220, 0.0
  %1225 = vadd.xlane.f32.xlu0 %v1224
  %v1226 = vpop.xlane.xlu0 %1225
  %1227 = vrot.lane.b32.xlu0 %v212, 48
  %v1228 = vpop.permute.xlu0 %1227
  %v1231 = vsel %vm223, %v1218, 0
  %1233 = vmatprep.subr.mxu0 0.0
  %1234 = vmatpush1.msra.mxu0 %v1228
  %1235 = vmatprep.subr.mxu0 0.0
  %1236 = vmatpush1.msra.mxu0 0.0
  %1237 = vmatprep.subr.mxu0 0.0
  %1238 = vmatpush1.msra.mxu0 0.0
  %1239 = vmatprep.subr.mxu0 0.0
  %1240 = vmatpush1.msra.mxu0 0.0
  %1241 = vmatprep.subr.mxu0 0.0
  %1242 = vmatpush1.msra.mxu0 0.0
  %1243 = vmatprep.subr.mxu0 0.0
  %1244 = vmatpush1.msra.mxu0 0.0
  %1245 = vmatprep.subr.mxu0 0.0
  %1246 = vmatpush1.msra.mxu0 0.0
  %1247 = vmatprep.subr.mxu0 0.0
  %1248 = vmatpush1.msra.mxu0 0.0
  %1249 = vmatprep.subr.mxu0 0.0
  %1250 = vmatpush1.msra.mxu0 0.0
  %1251 = vmatprep.subr.mxu0 0.0
  %1252 = vmatpush1.msra.mxu0 0.0
  %1253 = vmatprep.subr.mxu0 0.0
  %1254 = vmatpush1.msra.mxu0 0.0
  %1255 = vmatprep.subr.mxu0 0.0
  %1256 = vmatpush1.msra.mxu0 0.0
  %1257 = vmatprep.subr.mxu0 0.0
  %1258 = vmatpush1.msra.mxu0 0.0
  %1259 = vmatprep.subr.mxu0 0.0
  %1260 = vmatpush1.msra.mxu0 0.0
  %1261 = vmatprep.subr.mxu0 0.0
  %1262 = vmatpush1.msra.mxu0 0.0
  %1263 = vmatprep.subr.mxu0 0.0
  %1264 = vmatpush1.msra.mxu0 0.0
  %1265 = vmatprep.subr.mxu0 0.0
  %1266 = vmatpush1.msra.mxu0 0.0
  %1267 = vmatprep.subr.mxu0 0.0
  %1268 = vmatpush1.msra.mxu0 0.0
  %1269 = vmatprep.subr.mxu0 0.0
  %1270 = vmatpush1.msra.mxu0 0.0
  %1271 = vmatprep.subr.mxu0 0.0
  %1272 = vmatpush1.msra.mxu0 0.0
  %1273 = vmatprep.subr.mxu0 0.0
  %1274 = vmatpush1.msra.mxu0 0.0
  %1275 = vmatprep.subr.mxu0 0.0
  %1276 = vmatpush1.msra.mxu0 0.0
  %1277 = vmatprep.subr.mxu0 0.0
  %1278 = vmatpush1.msra.mxu0 0.0
  %1279 = vmatprep.subr.mxu0 0.0
  %1280 = vmatpush1.msra.mxu0 0.0
  %1281 = vmatprep.subr.mxu0 0.0
  %1282 = vmatpush1.msra.mxu0 0.0
  %1283 = vmatprep.subr.mxu0 0.0
  %1284 = vmatpush1.msra.mxu0 0.0
  %1285 = vmatprep.subr.mxu0 0.0
  %1286 = vmatpush1.msra.mxu0 0.0
  %1287 = vmatprep.subr.mxu0 0.0
  %1288 = vmatpush1.msra.mxu0 0.0
  %1289 = vmatprep.subr.mxu0 0.0
  %1290 = vmatpush1.msra.mxu0 0.0
  %1291 = vmatprep.subr.mxu0 0.0
  %1292 = vmatpush1.msra.mxu0 0.0
  %1293 = vmatprep.subr.mxu0 0.0
  %1294 = vmatpush1.msra.mxu0 0.0
  %1295 = vmatprep.subr.mxu0 0.0
  %1296 = vmatpush1.msra.mxu0 0.0
  %1297 = vmatprep.mubr.f32.mxu0 0.0
  %1298 = vmatmul.mubr.f32.gmra.mrb[0].mxu0 %v1231
  %v1299 = vpop.f32.mrb[0].mxu0
  %v1300 = vadd.f32 0.0, %v1299
  %v1301 = vpop.f32.mrb[0].mxu0
  %1302 = vdwg.mxu0
  %1303 = vrot.lane.b32.xlu0 %v217, 48
  %v1304 = vpop.permute.xlu0 %1303
  %v1307 = vsel %vm223, %v1220, 0
  %1309 = vmatprep.subr.mxu0 0.0
  %1310 = vmatpush1.msra.mxu0 %v1304
  %1311 = vmatprep.subr.mxu0 0.0
  %1312 = vmatpush1.msra.mxu0 0.0
  %1313 = vmatprep.subr.mxu0 0.0
  %1314 = vmatpush1.msra.mxu0 0.0
  %1315 = vmatprep.subr.mxu0 0.0
  %1316 = vmatpush1.msra.mxu0 0.0
  %1317 = vmatprep.subr.mxu0 0.0
  %1318 = vmatpush1.msra.mxu0 0.0
  %1319 = vmatprep.subr.mxu0 0.0
  %1320 = vmatpush1.msra.mxu0 0.0
  %1321 = vmatprep.subr.mxu0 0.0
  %1322 = vmatpush1.msra.mxu0 0.0
  %1323 = vmatprep.subr.mxu0 0.0
  %1324 = vmatpush1.msra.mxu0 0.0
  %1325 = vmatprep.subr.mxu0 0.0
  %1326 = vmatpush1.msra.mxu0 0.0
  %1327 = vmatprep.subr.mxu0 0.0
  %1328 = vmatpush1.msra.mxu0 0.0
  %1329 = vmatprep.subr.mxu0 0.0
  %1330 = vmatpush1.msra.mxu0 0.0
  %1331 = vmatprep.subr.mxu0 0.0
  %1332 = vmatpush1.msra.mxu0 0.0
  %1333 = vmatprep.subr.mxu0 0.0
  %1334 = vmatpush1.msra.mxu0 0.0
  %1335 = vmatprep.subr.mxu0 0.0
  %1336 = vmatpush1.msra.mxu0 0.0
  %1337 = vmatprep.subr.mxu0 0.0
  %1338 = vmatpush1.msra.mxu0 0.0
  %1339 = vmatprep.subr.mxu0 0.0
  %1340 = vmatpush1.msra.mxu0 0.0
  %1341 = vmatprep.subr.mxu0 0.0
  %1342 = vmatpush1.msra.mxu0 0.0
  %1343 = vmatprep.subr.mxu0 0.0
  %1344 = vmatpush1.msra.mxu0 0.0
  %1345 = vmatprep.subr.mxu0 0.0
  %1346 = vmatpush1.msra.mxu0 0.0
  %1347 = vmatprep.subr.mxu0 0.0
  %1348 = vmatpush1.msra.mxu0 0.0
  %1349 = vmatprep.subr.mxu0 0.0
  %1350 = vmatpush1.msra.mxu0 0.0
  %1351 = vmatprep.subr.mxu0 0.0
  %1352 = vmatpush1.msra.mxu0 0.0
  %1353 = vmatprep.subr.mxu0 0.0
  %1354 = vmatpush1.msra.mxu0 0.0
  %1355 = vmatprep.subr.mxu0 0.0
  %1356 = vmatpush1.msra.mxu0 0.0
  %1357 = vmatprep.subr.mxu0 0.0
  %1358 = vmatpush1.msra.mxu0 0.0
  %1359 = vmatprep.subr.mxu0 0.0
  %1360 = vmatpush1.msra.mxu0 0.0
  %1361 = vmatprep.subr.mxu0 0.0
  %1362 = vmatpush1.msra.mxu0 0.0
  %1363 = vmatprep.subr.mxu0 0.0
  %1364 = vmatpush1.msra.mxu0 0.0
  %1365 = vmatprep.subr.mxu0 0.0
  %1366 = vmatpush1.msra.mxu0 0.0
  %1367 = vmatprep.subr.mxu0 0.0
  %1368 = vmatpush1.msra.mxu0 0.0
  %1369 = vmatprep.subr.mxu0 0.0
  %1370 = vmatpush1.msra.mxu0 0.0
  %1371 = vmatprep.subr.mxu0 0.0
  %1372 = vmatpush1.msra.mxu0 0.0
  %1373 = vmatprep.mubr.f32.mxu0 0.0
  %1374 = vmatmul.mubr.f32.gmra.mrb[0].mxu0 %v1307
  %v1375 = vpop.f32.mrb[0].mxu0
  %v1376 = vadd.f32 0.0, %v1375
  %v1377 = vpop.f32.mrb[0].mxu0
  %1378 = vdwg.mxu0
  %v1379 = vrcp.pop %v1223
  %v1380 = vrcp.pop %v1226
  %v1381 = vmul.f32 %v1300, %v1379
  %v1382 = vmul.f32 %v1376, %v1380
  %v1384 = vsel %vm223, %v1381, 0
  %v1387 = vsel %vm223, %v1382, 0
  %1389 = vmatprep.subr.mxu0 0.0
  %1390 = vmatpush1.msra.mxu0 %v94
  %1391 = vmatprep.subr.mxu0 0.0
  %1392 = vmatpush1.msra.mxu0 0.0
  %1393 = vmatprep.subr.mxu0 0.0
  %1394 = vmatpush1.msra.mxu0 0.0
  %1395 = vmatprep.subr.mxu0 0.0
  %1396 = vmatpush1.msra.mxu0 0.0
  %1397 = vmatprep.subr.mxu0 0.0
  %1398 = vmatpush1.msra.mxu0 0.0
  %1399 = vmatprep.subr.mxu0 0.0
  %1400 = vmatpush1.msra.mxu0 0.0
  %1401 = vmatprep.subr.mxu0 0.0
  %1402 = vmatpush1.msra.mxu0 0.0
  %1403 = vmatprep.subr.mxu0 0.0
  %1404 = vmatpush1.msra.mxu0 0.0
  %1405 = vmatprep.subr.mxu0 0.0
  %1406 = vmatpush1.msra.mxu0 0.0
  %1407 = vmatprep.subr.mxu0 0.0
  %1408 = vmatpush1.msra.mxu0 0.0
  %1409 = vmatprep.subr.mxu0 0.0
  %1410 = vmatpush1.msra.mxu0 0.0
  %1411 = vmatprep.subr.mxu0 0.0
  %1412 = vmatpush1.msra.mxu0 0.0
  %1413 = vmatprep.subr.mxu0 0.0
  %1414 = vmatpush1.msra.mxu0 0.0
  %1415 = vmatprep.subr.mxu0 0.0
  %1416 = vmatpush1.msra.mxu0 0.0
  %1417 = vmatprep.subr.mxu0 0.0
  %1418 = vmatpush1.msra.mxu0 0.0
  %1419 = vmatprep.subr.mxu0 0.0
  %1420 = vmatpush1.msra.mxu0 0.0
  %1421 = vmatprep.subr.mxu0 0.0
  %1422 = vmatpush1.msra.mxu0 0.0
  %1423 = vmatprep.subr.mxu0 0.0
  %1424 = vmatpush1.msra.mxu0 0.0
  %1425 = vmatprep.subr.mxu0 0.0
  %1426 = vmatpush1.msra.mxu0 0.0
  %1427 = vmatprep.subr.mxu0 0.0
  %1428 = vmatpush1.msra.mxu0 0.0
  %1429 = vmatprep.subr.mxu0 0.0
  %1430 = vmatpush1.msra.mxu0 0.0
  %1431 = vmatprep.subr.mxu0 0.0
  %1432 = vmatpush1.msra.mxu0 0.0
  %1433 = vmatprep.subr.mxu0 0.0
  %1434 = vmatpush1.msra.mxu0 0.0
  %1435 = vmatprep.subr.mxu0 0.0
  %1436 = vmatpush1.msra.mxu0 0.0
  %1437 = vmatprep.subr.mxu0 0.0
  %1438 = vmatpush1.msra.mxu0 0.0
  %1439 = vmatprep.subr.mxu0 0.0
  %1440 = vmatpush1.msra.mxu0 0.0
  %1441 = vmatprep.subr.mxu0 0.0
  %1442 = vmatpush1.msra.mxu0 0.0
  %1443 = vmatprep.subr.mxu0 0.0
  %1444 = vmatpush1.msra.mxu0 0.0
  %1445 = vmatprep.subr.mxu0 0.0
  %1446 = vmatpush1.msra.mxu0 0.0
  %1447 = vmatprep.subr.mxu0 0.0
  %1448 = vmatpush1.msra.mxu0 0.0
  %1449 = vmatprep.subr.mxu0 0.0
  %1450 = vmatpush1.msra.mxu0 0.0
  %1451 = vmatprep.subr.mxu0 0.0
  %1452 = vmatpush1.msra.mxu0 0.0
  %1453 = vmatprep.mubr.f32.mxu0 0.0
  %1454 = vmatmul.mubr.f32.gmra.mrb[0].mxu0 %v1384
  %v1455 = vpop.f32.mrb[0].mxu0
  %v1456 = vadd.f32 0.0, %v1455
  %v1457 = vpop.f32.mrb[0].mxu0
  %1458 = vmatprep.mubr.f32.mxu0 0.0
  %1459 = vmatmul.mubr.f32.gmra.mrb[0].mxu0 %v1387
  %v1460 = vpop.f32.mrb[0].mxu0
  %v1461 = vadd.f32 0.0, %v1460
  %v1462 = vpop.f32.mrb[0].mxu0
  %1463 = vdwg.mxu0
  %v1464 = vadd.f32 %v1041, %v1456
  %v1465 = vadd.f32 %v1046, %v1461
  %1466 = vrot.lane.b32.xlu0 %v212, 104
  %v1467 = vpop.permute.xlu0 %1466
  %1468 = vrot.lane.b32.xlu0 %v212, 72
  %v1469 = vpop.permute.xlu0 %1468
  %v1470 = vsel %vm223, %v1467, 0
  %v1472 = vsel %vm223, %v1469, 0
  %1474 = vmatprep.subr.mxu0 0.0
  %1475 = vmatpush1.xpose.msra.mxu0 %v1472
  %1476 = vmatprep.subr.mxu0 0.0
  %1477 = vmatpush1.xpose.msra.mxu0 0.0
  %1478 = vmatprep.subr.mxu0 0.0
  %1479 = vmatpush1.xpose.msra.mxu0 0.0
  %1480 = vmatprep.subr.mxu0 0.0
  %1481 = vmatpush1.xpose.msra.mxu0 0.0
  %1482 = vmatprep.subr.mxu0 0.0
  %1483 = vmatpush1.xpose.msra.mxu0 0.0
  %1484 = vmatprep.subr.mxu0 0.0
  %1485 = vmatpush1.xpose.msra.mxu0 0.0
  %1486 = vmatprep.subr.mxu0 0.0
  %1487 = vmatpush1.xpose.msra.mxu0 0.0
  %1488 = vmatprep.subr.mxu0 0.0
  %1489 = vmatpush1.xpose.msra.mxu0 0.0
  %1490 = vmatprep.subr.mxu0 0.0
  %1491 = vmatpush1.xpose.msra.mxu0 0.0
  %1492 = vmatprep.subr.mxu0 0.0
  %1493 = vmatpush1.xpose.msra.mxu0 0.0
  %1494 = vmatprep.subr.mxu0 0.0
  %1495 = vmatpush1.xpose.msra.mxu0 0.0
  %1496 = vmatprep.subr.mxu0 0.0
  %1497 = vmatpush1.xpose.msra.mxu0 0.0
  %1498 = vmatprep.subr.mxu0 0.0
  %1499 = vmatpush1.xpose.msra.mxu0 0.0
  %1500 = vmatprep.subr.mxu0 0.0
  %1501 = vmatpush1.xpose.msra.mxu0 0.0
  %1502 = vmatprep.subr.mxu0 0.0
  %1503 = vmatpush1.xpose.msra.mxu0 0.0
  %1504 = vmatprep.subr.mxu0 0.0
  %1505 = vmatpush1.xpose.msra.mxu0 0.0
  %1506 = vmatprep.subr.mxu0 0.0
  %1507 = vmatpush1.xpose.msra.mxu0 0.0
  %1508 = vmatprep.subr.mxu0 0.0
  %1509 = vmatpush1.xpose.msra.mxu0 0.0
  %1510 = vmatprep.subr.mxu0 0.0
  %1511 = vmatpush1.xpose.msra.mxu0 0.0
  %1512 = vmatprep.subr.mxu0 0.0
  %1513 = vmatpush1.xpose.msra.mxu0 0.0
  %1514 = vmatprep.subr.mxu0 0.0
  %1515 = vmatpush1.xpose.msra.mxu0 0.0
  %1516 = vmatprep.subr.mxu0 0.0
  %1517 = vmatpush1.xpose.msra.mxu0 0.0
  %1518 = vmatprep.subr.mxu0 0.0
  %1519 = vmatpush1.xpose.msra.mxu0 0.0
  %1520 = vmatprep.subr.mxu0 0.0
  %1521 = vmatpush1.xpose.msra.mxu0 0.0
  %1522 = vmatprep.subr.mxu0 0.0
  %1523 = vmatpush1.xpose.msra.mxu0 0.0
  %1524 = vmatprep.subr.mxu0 0.0
  %1525 = vmatpush1.xpose.msra.mxu0 0.0
  %1526 = vmatprep.subr.mxu0 0.0
  %1527 = vmatpush1.xpose.msra.mxu0 0.0
  %1528 = vmatprep.subr.mxu0 0.0
  %1529 = vmatpush1.xpose.msra.mxu0 0.0
  %1530 = vmatprep.subr.mxu0 0.0
  %1531 = vmatpush1.xpose.msra.mxu0 0.0
  %1532 = vmatprep.subr.mxu0 0.0
  %1533 = vmatpush1.xpose.msra.mxu0 0.0
  %1534 = vmatprep.subr.mxu0 0.0
  %1535 = vmatpush1.xpose.msra.mxu0 0.0
  %1536 = vmatprep.subr.mxu0 0.0
  %1537 = vmatpush1.xpose.msra.mxu0 0.0
  %1538 = vmatprep.mubr.f32.mxu0 0.0
  %1539 = vmatmul.mubr.f32.gmra.mrb[0].mxu0 %v1470
  %v1540 = vpop.f32.mrb[0].mxu0
  %v1541 = vadd.f32 0.0, %v1540
  %v1542 = vpop.f32.mrb[0].mxu0
  %1543 = vdwg.mxu0
  %1544 = vrot.lane.b32.xlu0 %v217, 104
  %v1545 = vpop.permute.xlu0 %1544
  %1546 = vrot.lane.b32.xlu0 %v217, 72
  %v1547 = vpop.permute.xlu0 %1546
  %v1548 = vsel %vm223, %v1545, 0
  %v1550 = vsel %vm223, %v1547, 0
  %1552 = vmatprep.subr.mxu0 0.0
  %1553 = vmatpush1.xpose.msra.mxu0 %v1550
  %1554 = vmatprep.subr.mxu0 0.0
  %1555 = vmatpush1.xpose.msra.mxu0 0.0
  %1556 = vmatprep.subr.mxu0 0.0
  %1557 = vmatpush1.xpose.msra.mxu0 0.0
  %1558 = vmatprep.subr.mxu0 0.0
  %1559 = vmatpush1.xpose.msra.mxu0 0.0
  %1560 = vmatprep.subr.mxu0 0.0
  %1561 = vmatpush1.xpose.msra.mxu0 0.0
  %1562 = vmatprep.subr.mxu0 0.0
  %1563 = vmatpush1.xpose.msra.mxu0 0.0
  %1564 = vmatprep.subr.mxu0 0.0
  %1565 = vmatpush1.xpose.msra.mxu0 0.0
  %1566 = vmatprep.subr.mxu0 0.0
  %1567 = vmatpush1.xpose.msra.mxu0 0.0
  %1568 = vmatprep.subr.mxu0 0.0
  %1569 = vmatpush1.xpose.msra.mxu0 0.0
  %1570 = vmatprep.subr.mxu0 0.0
  %1571 = vmatpush1.xpose.msra.mxu0 0.0
  %1572 = vmatprep.subr.mxu0 0.0
  %1573 = vmatpush1.xpose.msra.mxu0 0.0
  %1574 = vmatprep.subr.mxu0 0.0
  %1575 = vmatpush1.xpose.msra.mxu0 0.0
  %1576 = vmatprep.subr.mxu0 0.0
  %1577 = vmatpush1.xpose.msra.mxu0 0.0
  %1578 = vmatprep.subr.mxu0 0.0
  %1579 = vmatpush1.xpose.msra.mxu0 0.0
  %1580 = vmatprep.subr.mxu0 0.0
  %1581 = vmatpush1.xpose.msra.mxu0 0.0
  %1582 = vmatprep.subr.mxu0 0.0
  %1583 = vmatpush1.xpose.msra.mxu0 0.0
  %1584 = vmatprep.subr.mxu0 0.0
  %1585 = vmatpush1.xpose.msra.mxu0 0.0
  %1586 = vmatprep.subr.mxu0 0.0
  %1587 = vmatpush1.xpose.msra.mxu0 0.0
  %1588 = vmatprep.subr.mxu0 0.0
  %1589 = vmatpush1.xpose.msra.mxu0 0.0
  %1590 = vmatprep.subr.mxu0 0.0
  %1591 = vmatpush1.xpose.msra.mxu0 0.0
  %1592 = vmatprep.subr.mxu0 0.0
  %1593 = vmatpush1.xpose.msra.mxu0 0.0
  %1594 = vmatprep.subr.mxu0 0.0
  %1595 = vmatpush1.xpose.msra.mxu0 0.0
  %1596 = vmatprep.subr.mxu0 0.0
  %1597 = vmatpush1.xpose.msra.mxu0 0.0
  %1598 = vmatprep.subr.mxu0 0.0
  %1599 = vmatpush1.xpose.msra.mxu0 0.0
  %1600 = vmatprep.subr.mxu0 0.0
  %1601 = vmatpush1.xpose.msra.mxu0 0.0
  %1602 = vmatprep.subr.mxu0 0.0
  %1603 = vmatpush1.xpose.msra.mxu0 0.0
  %1604 = vmatprep.subr.mxu0 0.0
  %1605 = vmatpush1.xpose.msra.mxu0 0.0
  %1606 = vmatprep.subr.mxu0 0.0
  %1607 = vmatpush1.xpose.msra.mxu0 0.0
  %1608 = vmatprep.subr.mxu0 0.0
  %1609 = vmatpush1.xpose.msra.mxu0 0.0
  %1610 = vmatprep.subr.mxu0 0.0
  %1611 = vmatpush1.xpose.msra.mxu0 0.0
  %1612 = vmatprep.subr.mxu0 0.0
  %1613 = vmatpush1.xpose.msra.mxu0 0.0
  %1614 = vmatprep.subr.mxu0 0.0
  %1615 = vmatpush1.xpose.msra.mxu0 0.0
  %1616 = vmatprep.mubr.f32.mxu0 0.0
  %1617 = vmatmul.mubr.f32.gmra.mrb[0].mxu0 %v1548
  %v1618 = vpop.f32.mrb[0].mxu0
  %v1619 = vadd.f32 0.0, %v1618
  %v1620 = vpop.f32.mrb[0].mxu0
  %1621 = vdwg.mxu0
  %v1622 = vmul.f32 %v1541, 0.35355338
  %v1623 = vmul.f32 %v1619, 0.35355338
  %v1624 = vadd.f32 %v1622, %v86
  %v1625 = vadd.f32 %v1623, %v86
  %v1626 = vsel %vm223, %v1624, -inf
  %1627 = vmax.xlane.f32.xlu0 %v1626
  %v1628 = vpop.xlane.xlu0 %1627
  %v1629 = vsel %vm223, %v1625, -inf
  %1630 = vmax.xlane.f32.xlu0 %v1629
  %v1631 = vpop.xlane.xlu0 %1630
  %v1632 = vsub.f32 %v1624, %v1628
  %v1633 = vsub.f32 %v1625, %v1631
  %v1634 = vmul.f32 %v1632, 1.442695
  %v1635 = vpow.pop %v1634
  %v1636 = vmul.f32 %v1633, 1.442695
  %v1637 = vpow.pop %v1636
  %v1638 = vsel %vm223, %v1635, 0.0
  %1639 = vadd.xlane.f32.xlu0 %v1638
  %v1640 = vpop.xlane.xlu0 %1639
  %v1641 = vsel %vm223, %v1637, 0.0
  %1642 = vadd.xlane.f32.xlu0 %v1641
  %v1643 = vpop.xlane.xlu0 %1642
  %1644 = vrot.lane.b32.xlu0 %v212, 40
  %v1645 = vpop.permute.xlu0 %1644
  %v1648 = vsel %vm223, %v1635, 0
  %1650 = vmatprep.subr.mxu0 0.0
  %1651 = vmatpush1.msra.mxu0 %v1645
  %1652 = vmatprep.subr.mxu0 0.0
  %1653 = vmatpush1.msra.mxu0 0.0
  %1654 = vmatprep.subr.mxu0 0.0
  %1655 = vmatpush1.msra.mxu0 0.0
  %1656 = vmatprep.subr.mxu0 0.0
  %1657 = vmatpush1.msra.mxu0 0.0
  %1658 = vmatprep.subr.mxu0 0.0
  %1659 = vmatpush1.msra.mxu0 0.0
  %1660 = vmatprep.subr.mxu0 0.0
  %1661 = vmatpush1.msra.mxu0 0.0
  %1662 = vmatprep.subr.mxu0 0.0
  %1663 = vmatpush1.msra.mxu0 0.0
  %1664 = vmatprep.subr.mxu0 0.0
  %1665 = vmatpush1.msra.mxu0 0.0
  %1666 = vmatprep.subr.mxu0 0.0
  %1667 = vmatpush1.msra.mxu0 0.0
  %1668 = vmatprep.subr.mxu0 0.0
  %1669 = vmatpush1.msra.mxu0 0.0
  %1670 = vmatprep.subr.mxu0 0.0
  %1671 = vmatpush1.msra.mxu0 0.0
  %1672 = vmatprep.subr.mxu0 0.0
  %1673 = vmatpush1.msra.mxu0 0.0
  %1674 = vmatprep.subr.mxu0 0.0
  %1675 = vmatpush1.msra.mxu0 0.0
  %1676 = vmatprep.subr.mxu0 0.0
  %1677 = vmatpush1.msra.mxu0 0.0
  %1678 = vmatprep.subr.mxu0 0.0
  %1679 = vmatpush1.msra.mxu0 0.0
  %1680 = vmatprep.subr.mxu0 0.0
  %1681 = vmatpush1.msra.mxu0 0.0
  %1682 = vmatprep.subr.mxu0 0.0
  %1683 = vmatpush1.msra.mxu0 0.0
  %1684 = vmatprep.subr.mxu0 0.0
  %1685 = vmatpush1.msra.mxu0 0.0
  %1686 = vmatprep.subr.mxu0 0.0
  %1687 = vmatpush1.msra.mxu0 0.0
  %1688 = vmatprep.subr.mxu0 0.0
  %1689 = vmatpush1.msra.mxu0 0.0
  %1690 = vmatprep.subr.mxu0 0.0
  %1691 = vmatpush1.msra.mxu0 0.0
  %1692 = vmatprep.subr.mxu0 0.0
  %1693 = vmatpush1.msra.mxu0 0.0
  %1694 = vmatprep.subr.mxu0 0.0
  %1695 = vmatpush1.msra.mxu0 0.0
  %1696 = vmatprep.subr.mxu0 0.0
  %1697 = vmatpush1.msra.mxu0 0.0
  %1698 = vmatprep.subr.mxu0 0.0
  %1699 = vmatpush1.msra.mxu0 0.0
  %1700 = vmatprep.subr.mxu0 0.0
  %1701 = vmatpush1.msra.mxu0 0.0
  %1702 = vmatprep.subr.mxu0 0.0
  %1703 = vmatpush1.msra.mxu0 0.0
  %1704 = vmatprep.subr.mxu0 0.0
  %1705 = vmatpush1.msra.mxu0 0.0
  %1706 = vmatprep.subr.mxu0 0.0
  %1707 = vmatpush1.msra.mxu0 0.0
  %1708 = vmatprep.subr.mxu0 0.0
  %1709 = vmatpush1.msra.mxu0 0.0
  %1710 = vmatprep.subr.mxu0 0.0
  %1711 = vmatpush1.msra.mxu0 0.0
  %1712 = vmatprep.subr.mxu0 0.0
  %1713 = vmatpush1.msra.mxu0 0.0
  %1714 = vmatprep.mubr.f32.mxu0 0.0
  %1715 = vmatmul.mubr.f32.gmra.mrb[0].mxu0 %v1648
  %v1716 = vpop.f32.mrb[0].mxu0
  %v1717 = vadd.f32 0.0, %v1716
  %v1718 = vpop.f32.mrb[0].mxu0
  %1719 = vdwg.mxu0
  %1720 = vrot.lane.b32.xlu0 %v217, 40
  %v1721 = vpop.permute.xlu0 %1720
  %v1724 = vsel %vm223, %v1637, 0
  %1726 = vmatprep.subr.mxu0 0.0
  %1727 = vmatpush1.msra.mxu0 %v1721
  %1728 = vmatprep.subr.mxu0 0.0
  %1729 = vmatpush1.msra.mxu0 0.0
  %1730 = vmatprep.subr.mxu0 0.0
  %1731 = vmatpush1.msra.mxu0 0.0
  %1732 = vmatprep.subr.mxu0 0.0
  %1733 = vmatpush1.msra.mxu0 0.0
  %1734 = vmatprep.subr.mxu0 0.0
  %1735 = vmatpush1.msra.mxu0 0.0
  %1736 = vmatprep.subr.mxu0 0.0
  %1737 = vmatpush1.msra.mxu0 0.0
  %1738 = vmatprep.subr.mxu0 0.0
  %1739 = vmatpush1.msra.mxu0 0.0
  %1740 = vmatprep.subr.mxu0 0.0
  %1741 = vmatpush1.msra.mxu0 0.0
  %1742 = vmatprep.subr.mxu0 0.0
  %1743 = vmatpush1.msra.mxu0 0.0
  %1744 = vmatprep.subr.mxu0 0.0
  %1745 = vmatpush1.msra.mxu0 0.0
  %1746 = vmatprep.subr.mxu0 0.0
  %1747 = vmatpush1.msra.mxu0 0.0
  %1748 = vmatprep.subr.mxu0 0.0
  %1749 = vmatpush1.msra.mxu0 0.0
  %1750 = vmatprep.subr.mxu0 0.0
  %1751 = vmatpush1.msra.mxu0 0.0
  %1752 = vmatprep.subr.mxu0 0.0
  %1753 = vmatpush1.msra.mxu0 0.0
  %1754 = vmatprep.subr.mxu0 0.0
  %1755 = vmatpush1.msra.mxu0 0.0
  %1756 = vmatprep.subr.mxu0 0.0
  %1757 = vmatpush1.msra.mxu0 0.0
  %1758 = vmatprep.subr.mxu0 0.0
  %1759 = vmatpush1.msra.mxu0 0.0
  %1760 = vmatprep.subr.mxu0 0.0
  %1761 = vmatpush1.msra.mxu0 0.0
  %1762 = vmatprep.subr.mxu0 0.0
  %1763 = vmatpush1.msra.mxu0 0.0
  %1764 = vmatprep.subr.mxu0 0.0
  %1765 = vmatpush1.msra.mxu0 0.0
  %1766 = vmatprep.subr.mxu0 0.0
  %1767 = vmatpush1.msra.mxu0 0.0
  %1768 = vmatprep.subr.mxu0 0.0
  %1769 = vmatpush1.msra.mxu0 0.0
  %1770 = vmatprep.subr.mxu0 0.0
  %1771 = vmatpush1.msra.mxu0 0.0
  %1772 = vmatprep.subr.mxu0 0.0
  %1773 = vmatpush1.msra.mxu0 0.0
  %1774 = vmatprep.subr.mxu0 0.0
  %1775 = vmatpush1.msra.mxu0 0.0
  %1776 = vmatprep.subr.mxu0 0.0
  %1777 = vmatpush1.msra.mxu0 0.0
  %1778 = vmatprep.subr.mxu0 0.0
  %1779 = vmatpush1.msra.mxu0 0.0
  %1780 = vmatprep.subr.mxu0 0.0
  %1781 = vmatpush1.msra.mxu0 0.0
  %1782 = vmatprep.subr.mxu0 0.0
  %1783 = vmatpush1.msra.mxu0 0.0
  %1784 = vmatprep.subr.mxu0 0.0
  %1785 = vmatpush1.msra.mxu0 0.0
  %1786 = vmatprep.subr.mxu0 0.0
  %1787 = vmatpush1.msra.mxu0 0.0
  %1788 = vmatprep.subr.mxu0 0.0
  %1789 = vmatpush1.msra.mxu0 0.0
  %1790 = vmatprep.mubr.f32.mxu0 0.0
  %1791 = vmatmul.mubr.f32.gmra.mrb[0].mxu0 %v1724
  %v1792 = vpop.f32.mrb[0].mxu0
  %v1793 = vadd.f32 0.0, %v1792
  %v1794 = vpop.f32.mrb[0].mxu0
  %1795 = vdwg.mxu0
  %v1796 = vrcp.pop %v1640
  %v1797 = vrcp.pop %v1643
  %v1798 = vmul.f32 %v1717, %v1796
  %v1799 = vmul.f32 %v1793, %v1797
  %v1801 = vsel %vm223, %v1798, 0
  %v1804 = vsel %vm223, %v1799, 0
  %1806 = vmatprep.subr.mxu0 0.0
  %1807 = vmatpush1.msra.mxu0 %v95
  %1808 = vmatprep.subr.mxu0 0.0
  %1809 = vmatpush1.msra.mxu0 0.0
  %1810 = vmatprep.subr.mxu0 0.0
  %1811 = vmatpush1.msra.mxu0 0.0
  %1812 = vmatprep.subr.mxu0 0.0
  %1813 = vmatpush1.msra.mxu0 0.0
  %1814 = vmatprep.subr.mxu0 0.0
  %1815 = vmatpush1.msra.mxu0 0.0
  %1816 = vmatprep.subr.mxu0 0.0
  %1817 = vmatpush1.msra.mxu0 0.0
  %1818 = vmatprep.subr.mxu0 0.0
  %1819 = vmatpush1.msra.mxu0 0.0
  %1820 = vmatprep.subr.mxu0 0.0
  %1821 = vmatpush1.msra.mxu0 0.0
  %1822 = vmatprep.subr.mxu0 0.0
  %1823 = vmatpush1.msra.mxu0 0.0
  %1824 = vmatprep.subr.mxu0 0.0
  %1825 = vmatpush1.msra.mxu0 0.0
  %1826 = vmatprep.subr.mxu0 0.0
  %1827 = vmatpush1.msra.mxu0 0.0
  %1828 = vmatprep.subr.mxu0 0.0
  %1829 = vmatpush1.msra.mxu0 0.0
  %1830 = vmatprep.subr.mxu0 0.0
  %1831 = vmatpush1.msra.mxu0 0.0
  %1832 = vmatprep.subr.mxu0 0.0
  %1833 = vmatpush1.msra.mxu0 0.0
  %1834 = vmatprep.subr.mxu0 0.0
  %1835 = vmatpush1.msra.mxu0 0.0
  %1836 = vmatprep.subr.mxu0 0.0
  %1837 = vmatpush1.msra.mxu0 0.0
  %1838 = vmatprep.subr.mxu0 0.0
  %1839 = vmatpush1.msra.mxu0 0.0
  %1840 = vmatprep.subr.mxu0 0.0
  %1841 = vmatpush1.msra.mxu0 0.0
  %1842 = vmatprep.subr.mxu0 0.0
  %1843 = vmatpush1.msra.mxu0 0.0
  %1844 = vmatprep.subr.mxu0 0.0
  %1845 = vmatpush1.msra.mxu0 0.0
  %1846 = vmatprep.subr.mxu0 0.0
  %1847 = vmatpush1.msra.mxu0 0.0
  %1848 = vmatprep.subr.mxu0 0.0
  %1849 = vmatpush1.msra.mxu0 0.0
  %1850 = vmatprep.subr.mxu0 0.0
  %1851 = vmatpush1.msra.mxu0 0.0
  %1852 = vmatprep.subr.mxu0 0.0
  %1853 = vmatpush1.msra.mxu0 0.0
  %1854 = vmatprep.subr.mxu0 0.0
  %1855 = vmatpush1.msra.mxu0 0.0
  %1856 = vmatprep.subr.mxu0 0.0
  %1857 = vmatpush1.msra.mxu0 0.0
  %1858 = vmatprep.subr.mxu0 0.0
  %1859 = vmatpush1.msra.mxu0 0.0
  %1860 = vmatprep.subr.mxu0 0.0
  %1861 = vmatpush1.msra.mxu0 0.0
  %1862 = vmatprep.subr.mxu0 0.0
  %1863 = vmatpush1.msra.mxu0 0.0
  %1864 = vmatprep.subr.mxu0 0.0
  %1865 = vmatpush1.msra.mxu0 0.0
  %1866 = vmatprep.subr.mxu0 0.0
  %1867 = vmatpush1.msra.mxu0 0.0
  %1868 = vmatprep.subr.mxu0 0.0
  %1869 = vmatpush1.msra.mxu0 0.0
  %1870 = vmatprep.mubr.f32.mxu0 0.0
  %1871 = vmatmul.mubr.f32.gmra.mrb[0].mxu0 %v1801
  %v1872 = vpop.f32.mrb[0].mxu0
  %v1873 = vadd.f32 0.0, %v1872
  %v1874 = vpop.f32.mrb[0].mxu0
  %1875 = vmatprep.mubr.f32.mxu0 0.0
  %1876 = vmatmul.mubr.f32.gmra.mrb[0].mxu0 %v1804
  %v1877 = vpop.f32.mrb[0].mxu0
  %v1878 = vadd.f32 0.0, %v1877
  %v1879 = vpop.f32.mrb[0].mxu0
  %1880 = vdwg.mxu0
  %v1881 = vadd.f32 %v1464, %v1873
  %v1882 = vadd.f32 %v1465, %v1878
  %v1884 = vlaneseq
  %v1885 = vshrl.u32 %v1884, 7
  %v1886 = vsub.s32 0, %v1885
  %v1887 = vrot.slane %v96, %v1886
  %v1889 = vadd.f32 %v1881, %v1887
  %v1890 = vadd.f32 %v1882, %v1887
  %v1891 = vadd.f32 %v77, %v1889
  %v1892 = vadd.f32 %v78, %v1890
  %v1893 = vsel %vm138, %v1891, 0.0
  %1894 = vadd.xlane.f32.xlu0 %v1893
  %v1895 = vpop.xlane.xlu0 %1894
  %v1896 = vsel %vm138, %v1892, 0.0
  %1897 = vadd.xlane.f32.xlu0 %v1896
  %v1898 = vpop.xlane.xlu0 %1897
  %v1899 = vrcp.pop 32.0
  %v1900 = vmul.f32 %v1895, %v1899
  %v1901 = vmul.f32 %v1898, %v1899
  %v1902 = vsub.f32 %v1891, %v1900
  %v1903 = vsub.f32 %v1892, %v1901
  %v1904 = vmul.f32 %v1902, %v1902
  %v1905 = vmul.f32 %v1903, %v1903
  %v1906 = vsel %vm138, %v1904, 0.0
  %1907 = vadd.xlane.f32.xlu0 %v1906
  %v1908 = vpop.xlane.xlu0 %1907
  %v1909 = vsel %vm138, %v1905, 0.0
  %1910 = vadd.xlane.f32.xlu0 %v1909
  %v1911 = vpop.xlane.xlu0 %1910
  %v1912 = vmul.f32 %v1908, %v1899
  %v1913 = vmul.f32 %v1911, %v1899
  %v1914 = vadd.f32 %v1912, 1e-05
  %v1915 = vadd.f32 %v1913, 1e-05
  %v1916 = vrsqrt.pop %v1914
  %v1917 = vrsqrt.pop %v1915
  %v1918 = vmul.f32 %v1902, %v1916
  %v1919 = vmul.f32 %v1903, %v1917
  %v1921 = vlaneseq
  %v1922 = vshrl.u32 %v1921, 7
  %v1923 = vsub.s32 0, %v1922
  %v1924 = vrot.slane %v97, %v1923
  %v1926 = vmul.f32 %v1918, %v1924
  %v1927 = vmul.f32 %v1919, %v1924
  %v1929 = vlaneseq
  %v1930 = vshrl.u32 %v1929, 7
  %v1931 = vsub.s32 0, %v1930
  %v1932 = vrot.slane %v98, %v1931
  %v1934 = vadd.f32 %v1926, %v1932
  %v1935 = vadd.f32 %v1927, %v1932
  %v1937 = vlaneseq
  %v1938 = vshrl.u32 %v1937, 7
  %v1939 = vsub.s32 0, %v1938
  %v1940 = vrot.slane %v103, %v1939
  %v1943 = vsel %vm138, %v1934, 0
  %v1946 = vsel %vm138, %v1935, 0
  %1948 = vmatprep.subr.mxu0 0.0
  %1949 = vmatpush1.msra.mxu0 %v99
  %1950 = vmatprep.subr.mxu0 0.0
  %1951 = vmatpush1.msra.mxu0 %v100
  %1952 = vmatprep.subr.mxu0 0.0
  %1953 = vmatpush1.msra.mxu0 %v101
  %1954 = vmatprep.subr.mxu0 0.0
  %1955 = vmatpush1.msra.mxu0 %v102
  %1956 = vmatprep.subr.mxu0 0.0
  %1957 = vmatpush1.msra.mxu0 0.0
  %1958 = vmatprep.subr.mxu0 0.0
  %1959 = vmatpush1.msra.mxu0 0.0
  %1960 = vmatprep.subr.mxu0 0.0
  %1961 = vmatpush1.msra.mxu0 0.0
  %1962 = vmatprep.subr.mxu0 0.0
  %1963 = vmatpush1.msra.mxu0 0.0
  %1964 = vmatprep.subr.mxu0 0.0
  %1965 = vmatpush1.msra.mxu0 0.0
  %1966 = vmatprep.subr.mxu0 0.0
  %1967 = vmatpush1.msra.mxu0 0.0
  %1968 = vmatprep.subr.mxu0 0.0
  %1969 = vmatpush1.msra.mxu0 0.0
  %1970 = vmatprep.subr.mxu0 0.0
  %1971 = vmatpush1.msra.mxu0 0.0
  %1972 = vmatprep.subr.mxu0 0.0
  %1973 = vmatpush1.msra.mxu0 0.0
  %1974 = vmatprep.subr.mxu0 0.0
  %1975 = vmatpush1.msra.mxu0 0.0
  %1976 = vmatprep.subr.mxu0 0.0
  %1977 = vmatpush1.msra.mxu0 0.0
  %1978 = vmatprep.subr.mxu0 0.0
  %1979 = vmatpush1.msra.mxu0 0.0
  %1980 = vmatprep.subr.mxu0 0.0
  %1981 = vmatpush1.msra.mxu0 0.0
  %1982 = vmatprep.subr.mxu0 0.0
  %1983 = vmatpush1.msra.mxu0 0.0
  %1984 = vmatprep.subr.mxu0 0.0
  %1985 = vmatpush1.msra.mxu0 0.0
  %1986 = vmatprep.subr.mxu0 0.0
  %1987 = vmatpush1.msra.mxu0 0.0
  %1988 = vmatprep.subr.mxu0 0.0
  %1989 = vmatpush1.msra.mxu0 0.0
  %1990 = vmatprep.subr.mxu0 0.0
  %1991 = vmatpush1.msra.mxu0 0.0
  %1992 = vmatprep.subr.mxu0 0.0
  %1993 = vmatpush1.msra.mxu0 0.0
  %1994 = vmatprep.subr.mxu0 0.0
  %1995 = vmatpush1.msra.mxu0 0.0
  %1996 = vmatprep.subr.mxu0 0.0
  %1997 = vmatpush1.msra.mxu0 0.0
  %1998 = vmatprep.subr.mxu0 0.0
  %1999 = vmatpush1.msra.mxu0 0.0
  %2000 = vmatprep.subr.mxu0 0.0
  %2001 = vmatpush1.msra.mxu0 0.0
  %2002 = vmatprep.subr.mxu0 0.0
  %2003 = vmatpush1.msra.mxu0 0.0
  %2004 = vmatprep.subr.mxu0 0.0
  %2005 = vmatpush1.msra.mxu0 0.0
  %2006 = vmatprep.subr.mxu0 0.0
  %2007 = vmatpush1.msra.mxu0 0.0
  %2008 = vmatprep.subr.mxu0 0.0
  %2009 = vmatpush1.msra.mxu0 0.0
  %2010 = vmatprep.subr.mxu0 0.0
  %2011 = vmatpush1.msra.mxu0 0.0
  %2012 = vmatprep.mubr.f32.mxu0 0.0
  %2013 = vmatmul.mubr.f32.gmra.mrb[0].mxu0 %v1943
  %v2014 = vpop.f32.mrb[0].mxu0
  %v2015 = vadd.f32 %v1940, %v2014
  %v2016 = vpop.f32.mrb[0].mxu0
  %2017 = vmatprep.mubr.f32.mxu0 0.0
  %2018 = vmatmul.mubr.f32.gmra.mrb[0].mxu0 %v1946
  %v2019 = vpop.f32.mrb[0].mxu0
  %v2020 = vadd.f32 %v1940, %v2019
  %v2021 = vpop.f32.mrb[0].mxu0
  %2022 = vdwg.mxu0
  %v2024 = vlaneseq
  %v2025 = vshrl.u32 %v2024, 7
  %v2026 = vsub.s32 0, %v2025
  %v2027 = vrot.slane %v108, %v2026
  %v2030 = vsel %vm138, %v79, 0
  %v2033 = vsel %vm138, %v80, 0
  %2035 = vmatprep.subr.mxu0 0.0
  %2036 = vmatpush1.msra.mxu0 %v104
  %2037 = vmatprep.subr.mxu0 0.0
  %2038 = vmatpush1.msra.mxu0 %v105
  %2039 = vmatprep.subr.mxu0 0.0
  %2040 = vmatpush1.msra.mxu0 %v106
  %2041 = vmatprep.subr.mxu0 0.0
  %2042 = vmatpush1.msra.mxu0 %v107
  %2043 = vmatprep.subr.mxu0 0.0
  %2044 = vmatpush1.msra.mxu0 0.0
  %2045 = vmatprep.subr.mxu0 0.0
  %2046 = vmatpush1.msra.mxu0 0.0
  %2047 = vmatprep.subr.mxu0 0.0
  %2048 = vmatpush1.msra.mxu0 0.0
  %2049 = vmatprep.subr.mxu0 0.0
  %2050 = vmatpush1.msra.mxu0 0.0
  %2051 = vmatprep.subr.mxu0 0.0
  %2052 = vmatpush1.msra.mxu0 0.0
  %2053 = vmatprep.subr.mxu0 0.0
  %2054 = vmatpush1.msra.mxu0 0.0
  %2055 = vmatprep.subr.mxu0 0.0
  %2056 = vmatpush1.msra.mxu0 0.0
  %2057 = vmatprep.subr.mxu0 0.0
  %2058 = vmatpush1.msra.mxu0 0.0
  %2059 = vmatprep.subr.mxu0 0.0
  %2060 = vmatpush1.msra.mxu0 0.0
  %2061 = vmatprep.subr.mxu0 0.0
  %2062 = vmatpush1.msra.mxu0 0.0
  %2063 = vmatprep.subr.mxu0 0.0
  %2064 = vmatpush1.msra.mxu0 0.0
  %2065 = vmatprep.subr.mxu0 0.0
  %2066 = vmatpush1.msra.mxu0 0.0
  %2067 = vmatprep.subr.mxu0 0.0
  %2068 = vmatpush1.msra.mxu0 0.0
  %2069 = vmatprep.subr.mxu0 0.0
  %2070 = vmatpush1.msra.mxu0 0.0
  %2071 = vmatprep.subr.mxu0 0.0
  %2072 = vmatpush1.msra.mxu0 0.0
  %2073 = vmatprep.subr.mxu0 0.0
  %2074 = vmatpush1.msra.mxu0 0.0
  %2075 = vmatprep.subr.mxu0 0.0
  %2076 = vmatpush1.msra.mxu0 0.0
  %2077 = vmatprep.subr.mxu0 0.0
  %2078 = vmatpush1.msra.mxu0 0.0
  %2079 = vmatprep.subr.mxu0 0.0
  %2080 = vmatpush1.msra.mxu0 0.0
  %2081 = vmatprep.subr.mxu0 0.0
  %2082 = vmatpush1.msra.mxu0 0.0
  %2083 = vmatprep.subr.mxu0 0.0
  %2084 = vmatpush1.msra.mxu0 0.0
  %2085 = vmatprep.subr.mxu0 0.0
  %2086 = vmatpush1.msra.mxu0 0.0
  %2087 = vmatprep.subr.mxu0 0.0
  %2088 = vmatpush1.msra.mxu0 0.0
  %2089 = vmatprep.subr.mxu0 0.0
  %2090 = vmatpush1.msra.mxu0 0.0
  %2091 = vmatprep.subr.mxu0 0.0
  %2092 = vmatpush1.msra.mxu0 0.0
  %2093 = vmatprep.subr.mxu0 0.0
  %2094 = vmatpush1.msra.mxu0 0.0
  %2095 = vmatprep.subr.mxu0 0.0
  %2096 = vmatpush1.msra.mxu0 0.0
  %2097 = vmatprep.subr.mxu0 0.0
  %2098 = vmatpush1.msra.mxu0 0.0
  %2099 = vmatprep.mubr.f32.mxu0 0.0
  %2100 = vmatmul.mubr.f32.gmra.mrb[0].mxu0 %v2030
  %v2101 = vpop.f32.mrb[0].mxu0
  %v2102 = vadd.f32 %v2027, %v2101
  %v2103 = vpop.f32.mrb[0].mxu0
  %2104 = vmatprep.mubr.f32.mxu0 0.0
  %2105 = vmatmul.mubr.f32.gmra.mrb[0].mxu0 %v2033
  %v2106 = vpop.f32.mrb[0].mxu0
  %v2107 = vadd.f32 %v2027, %v2106
  %v2108 = vpop.f32.mrb[0].mxu0
  %2109 = vdwg.mxu0
  %v2111 = vsel %vm223, %v2015, 0
  %v2114 = vsel %vm223, %v2102, 0
  %2116 = vmatprep.subr.mxu0 0.0
  %2117 = vmatpush1.xpose.msra.mxu0 %v2114
  %2118 = vmatprep.subr.mxu0 0.0
  %2119 = vmatpush1.xpose.msra.mxu0 0.0
  %2120 = vmatprep.subr.mxu0 0.0
  %2121 = vmatpush1.xpose.msra.mxu0 0.0
  %2122 = vmatprep.subr.mxu0 0.0
  %2123 = vmatpush1.xpose.msra.mxu0 0.0
  %2124 = vmatprep.subr.mxu0 0.0
  %2125 = vmatpush1.xpose.msra.mxu0 0.0
  %2126 = vmatprep.subr.mxu0 0.0
  %2127 = vmatpush1.xpose.msra.mxu0 0.0
  %2128 = vmatprep.subr.mxu0 0.0
  %2129 = vmatpush1.xpose.msra.mxu0 0.0
  %2130 = vmatprep.subr.mxu0 0.0
  %2131 = vmatpush1.xpose.msra.mxu0 0.0
  %2132 = vmatprep.subr.mxu0 0.0
  %2133 = vmatpush1.xpose.msra.mxu0 0.0
  %2134 = vmatprep.subr.mxu0 0.0
  %2135 = vmatpush1.xpose.msra.mxu0 0.0
  %2136 = vmatprep.subr.mxu0 0.0
  %2137 = vmatpush1.xpose.msra.mxu0 0.0
  %2138 = vmatprep.subr.mxu0 0.0
  %2139 = vmatpush1.xpose.msra.mxu0 0.0
  %2140 = vmatprep.subr.mxu0 0.0
  %2141 = vmatpush1.xpose.msra.mxu0 0.0
  %2142 = vmatprep.subr.mxu0 0.0
  %2143 = vmatpush1.xpose.msra.mxu0 0.0
  %2144 = vmatprep.subr.mxu0 0.0
  %2145 = vmatpush1.xpose.msra.mxu0 0.0
  %2146 = vmatprep.subr.mxu0 0.0
  %2147 = vmatpush1.xpose.msra.mxu0 0.0
  %2148 = vmatprep.subr.mxu0 0.0
  %2149 = vmatpush1.xpose.msra.mxu0 0.0
  %2150 = vmatprep.subr.mxu0 0.0
  %2151 = vmatpush1.xpose.msra.mxu0 0.0
  %2152 = vmatprep.subr.mxu0 0.0
  %2153 = vmatpush1.xpose.msra.mxu0 0.0
  %2154 = vmatprep.subr.mxu0 0.0
  %2155 = vmatpush1.xpose.msra.mxu0 0.0
  %2156 = vmatprep.subr.mxu0 0.0
  %2157 = vmatpush1.xpose.msra.mxu0 0.0
  %2158 = vmatprep.subr.mxu0 0.0
  %2159 = vmatpush1.xpose.msra.mxu0 0.0
  %2160 = vmatprep.subr.mxu0 0.0
  %2161 = vmatpush1.xpose.msra.mxu0 0.0
  %2162 = vmatprep.subr.mxu0 0.0
  %2163 = vmatpush1.xpose.msra.mxu0 0.0
  %2164 = vmatprep.subr.mxu0 0.0
  %2165 = vmatpush1.xpose.msra.mxu0 0.0
  %2166 = vmatprep.subr.mxu0 0.0
  %2167 = vmatpush1.xpose.msra.mxu0 0.0
  %2168 = vmatprep.subr.mxu0 0.0
  %2169 = vmatpush1.xpose.msra.mxu0 0.0
  %2170 = vmatprep.subr.mxu0 0.0
  %2171 = vmatpush1.xpose.msra.mxu0 0.0
  %2172 = vmatprep.subr.mxu0 0.0
  %2173 = vmatpush1.xpose.msra.mxu0 0.0
  %2174 = vmatprep.subr.mxu0 0.0
  %2175 = vmatpush1.xpose.msra.mxu0 0.0
  %2176 = vmatprep.subr.mxu0 0.0
  %2177 = vmatpush1.xpose.msra.mxu0 0.0
  %2178 = vmatprep.subr.mxu0 0.0
  %2179 = vmatpush1.xpose.msra.mxu0 0.0
  %2180 = vmatprep.mubr.f32.mxu0 0.0
  %2181 = vmatmul.mubr.f32.gmra.mrb[0].mxu0 %v2111
  %v2182 = vpop.f32.mrb[0].mxu0
  %v2183 = vadd.f32 0.0, %v2182
  %v2184 = vpop.f32.mrb[0].mxu0
  %2185 = vdwg.mxu0
  %v2187 = vsel %vm223, %v2020, 0
  %v2190 = vsel %vm223, %v2107, 0
  %2192 = vmatprep.subr.mxu0 0.0
  %2193 = vmatpush1.xpose.msra.mxu0 %v2190
  %2194 = vmatprep.subr.mxu0 0.0
  %2195 = vmatpush1.xpose.msra.mxu0 0.0
  %2196 = vmatprep.subr.mxu0 0.0
  %2197 = vmatpush1.xpose.msra.mxu0 0.0
  %2198 = vmatprep.subr.mxu0 0.0
  %2199 = vmatpush1.xpose.msra.mxu0 0.0
  %2200 = vmatprep.subr.mxu0 0.0
  %2201 = vmatpush1.xpose.msra.mxu0 0.0
  %2202 = vmatprep.subr.mxu0 0.0
  %2203 = vmatpush1.xpose.msra.mxu0 0.0
  %2204 = vmatprep.subr.mxu0 0.0
  %2205 = vmatpush1.xpose.msra.mxu0 0.0
  %2206 = vmatprep.subr.mxu0 0.0
  %2207 = vmatpush1.xpose.msra.mxu0 0.0
  %2208 = vmatprep.subr.mxu0 0.0
  %2209 = vmatpush1.xpose.msra.mxu0 0.0
  %2210 = vmatprep.subr.mxu0 0.0
  %2211 = vmatpush1.xpose.msra.mxu0 0.0
  %2212 = vmatprep.subr.mxu0 0.0
  %2213 = vmatpush1.xpose.msra.mxu0 0.0
  %2214 = vmatprep.subr.mxu0 0.0
  %2215 = vmatpush1.xpose.msra.mxu0 0.0
  %2216 = vmatprep.subr.mxu0 0.0
  %2217 = vmatpush1.xpose.msra.mxu0 0.0
  %2218 = vmatprep.subr.mxu0 0.0
  %2219 = vmatpush1.xpose.msra.mxu0 0.0
  %2220 = vmatprep.subr.mxu0 0.0
  %2221 = vmatpush1.xpose.msra.mxu0 0.0
  %2222 = vmatprep.subr.mxu0 0.0
  %2223 = vmatpush1.xpose.msra.mxu0 0.0
  %2224 = vmatprep.subr.mxu0 0.0
  %2225 = vmatpush1.xpose.msra.mxu0 0.0
  %2226 = vmatprep.subr.mxu0 0.0
  %2227 = vmatpush1.xpose.msra.mxu0 0.0
  %2228 = vmatprep.subr.mxu0 0.0
  %2229 = vmatpush1.xpose.msra.mxu0 0.0
  %2230 = vmatprep.subr.mxu0 0.0
  %2231 = vmatpush1.xpose.msra.mxu0 0.0
  %2232 = vmatprep.subr.mxu0 0.0
  %2233 = vmatpush1.xpose.msra.mxu0 0.0
  %2234 = vmatprep.subr.mxu0 0.0
  %2235 = vmatpush1.xpose.msra.mxu0 0.0
  %2236 = vmatprep.subr.mxu0 0.0
  %2237 = vmatpush1.xpose.msra.mxu0 0.0
  %2238 = vmatprep.subr.mxu0 0.0
  %2239 = vmatpush1.xpose.msra.mxu0 0.0
  %2240 = vmatprep.subr.mxu0 0.0
  %2241 = vmatpush1.xpose.msra.mxu0 0.0
  %2242 = vmatprep.subr.mxu0 0.0
  %2243 = vmatpush1.xpose.msra.mxu0 0.0
  %2244 = vmatprep.subr.mxu0 0.0
  %2245 = vmatpush1.xpose.msra.mxu0 0.0
  %2246 = vmatprep.subr.mxu0 0.0
  %2247 = vmatpush1.xpose.msra.mxu0 0.0
  %2248 = vmatprep.subr.mxu0 0.0
  %2249 = vmatpush1.xpose.msra.mxu0 0.0
  %2250 = vmatprep.subr.mxu0 0.0
  %2251 = vmatpush1.xpose.msra.mxu0 0.0
  %2252 = vmatprep.subr.mxu0 0.0
  %2253 = vmatpush1.xpose.msra.mxu0 0.0
  %2254 = vmatprep.subr.mxu0 0.0
  %2255 = vmatpush1.xpose.msra.mxu0 0.0
  %2256 = vmatprep.mubr.f32.mxu0 0.0
  %2257 = vmatmul.mubr.f32.gmra.mrb[0].mxu0 %v2187
  %v2258 = vpop.f32.mrb[0].mxu0
  %v2259 = vadd.f32 0.0, %v2258
  %v2260 = vpop.f32.mrb[0].mxu0
  %2261 = vdwg.mxu0
  %v2262 = vmul.f32 %v2183, 0.35355338
  %v2263 = vmul.f32 %v2259, 0.35355338
  %v2264 = vsel %vm223, %v2262, -inf
  %2265 = vmax.xlane.f32.xlu0 %v2264
  %v2266 = vpop.xlane.xlu0 %2265
  %v2267 = vsel %vm223, %v2263, -inf
  %2268 = vmax.xlane.f32.xlu0 %v2267
  %v2269 = vpop.xlane.xlu0 %2268
  %v2270 = vsub.f32 %v2262, %v2266
  %v2271 = vsub.f32 %v2263, %v2269
  %v2272 = vmul.f32 %v2270, 1.442695
  %v2273 = vpow.pop %v2272
  %v2274 = vmul.f32 %v2271, 1.442695
  %v2275 = vpow.pop %v2274
  %v2276 = vsel %vm223, %v2273, 0.0
  %2277 = vadd.xlane.f32.xlu0 %v2276
  %v2278 = vpop.xlane.xlu0 %2277
  %v2279 = vsel %vm223, %v2275, 0.0
  %2280 = vadd.xlane.f32.xlu0 %v2279
  %v2281 = vpop.xlane.xlu0 %2280
  %2282 = vrot.lane.b32.xlu0 %v2102, 96
  %v2283 = vpop.permute.xlu0 %2282
  %v2286 = vsel %vm223, %v2273, 0
  %2288 = vmatprep.subr.mxu0 0.0
  %2289 = vmatpush1.msra.mxu0 %v2283
  %2290 = vmatprep.subr.mxu0 0.0
  %2291 = vmatpush1.msra.mxu0 0.0
  %2292 = vmatprep.subr.mxu0 0.0
  %2293 = vmatpush1.msra.mxu0 0.0
  %2294 = vmatprep.subr.mxu0 0.0
  %2295 = vmatpush1.msra.mxu0 0.0
  %2296 = vmatprep.subr.mxu0 0.0
  %2297 = vmatpush1.msra.mxu0 0.0
  %2298 = vmatprep.subr.mxu0 0.0
  %2299 = vmatpush1.msra.mxu0 0.0
  %2300 = vmatprep.subr.mxu0 0.0
  %2301 = vmatpush1.msra.mxu0 0.0
  %2302 = vmatprep.subr.mxu0 0.0
  %2303 = vmatpush1.msra.mxu0 0.0
  %2304 = vmatprep.subr.mxu0 0.0
  %2305 = vmatpush1.msra.mxu0 0.0
  %2306 = vmatprep.subr.mxu0 0.0
  %2307 = vmatpush1.msra.mxu0 0.0
  %2308 = vmatprep.subr.mxu0 0.0
  %2309 = vmatpush1.msra.mxu0 0.0
  %2310 = vmatprep.subr.mxu0 0.0
  %2311 = vmatpush1.msra.mxu0 0.0
  %2312 = vmatprep.subr.mxu0 0.0
  %2313 = vmatpush1.msra.mxu0 0.0
  %2314 = vmatprep.subr.mxu0 0.0
  %2315 = vmatpush1.msra.mxu0 0.0
  %2316 = vmatprep.subr.mxu0 0.0
  %2317 = vmatpush1.msra.mxu0 0.0
  %2318 = vmatprep.subr.mxu0 0.0
  %2319 = vmatpush1.msra.mxu0 0.0
  %2320 = vmatprep.subr.mxu0 0.0
  %2321 = vmatpush1.msra.mxu0 0.0
  %2322 = vmatprep.subr.mxu0 0.0
  %2323 = vmatpush1.msra.mxu0 0.0
  %2324 = vmatprep.subr.mxu0 0.0
  %2325 = vmatpush1.msra.mxu0 0.0
  %2326 = vmatprep.subr.mxu0 0.0
  %2327 = vmatpush1.msra.mxu0 0.0
  %2328 = vmatprep.subr.mxu0 0.0
  %2329 = vmatpush1.msra.mxu0 0.0
  %2330 = vmatprep.subr.mxu0 0.0
  %2331 = vmatpush1.msra.mxu0 0.0
  %2332 = vmatprep.subr.mxu0 0.0
  %2333 = vmatpush1.msra.mxu0 0.0
  %2334 = vmatprep.subr.mxu0 0.0
  %2335 = vmatpush1.msra.mxu0 0.0
  %2336 = vmatprep.subr.mxu0 0.0
  %2337 = vmatpush1.msra.mxu0 0.0
  %2338 = vmatprep.subr.mxu0 0.0
  %2339 = vmatpush1.msra.mxu0 0.0
  %2340 = vmatprep.subr.mxu0 0.0
  %2341 = vmatpush1.msra.mxu0 0.0
  %2342 = vmatprep.subr.mxu0 0.0
  %2343 = vmatpush1.msra.mxu0 0.0
  %2344 = vmatprep.subr.mxu0 0.0
  %2345 = vmatpush1.msra.mxu0 0.0
  %2346 = vmatprep.subr.mxu0 0.0
  %2347 = vmatpush1.msra.mxu0 0.0
  %2348 = vmatprep.subr.mxu0 0.0
  %2349 = vmatpush1.msra.mxu0 0.0
  %2350 = vmatprep.subr.mxu0 0.0
  %2351 = vmatpush1.msra.mxu0 0.0
  %2352 = vmatprep.mubr.f32.mxu0 0.0
  %2353 = vmatmul.mubr.f32.gmra.mrb[0].mxu0 %v2286
  %v2354 = vpop.f32.mrb[0].mxu0
  %v2355 = vadd.f32 0.0, %v2354
  %v2356 = vpop.f32.mrb[0].mxu0
  %2357 = vdwg.mxu0
  %2358 = vrot.lane.b32.xlu0 %v2107, 96
  %v2359 = vpop.permute.xlu0 %2358
  %v2362 = vsel %vm223, %v2275, 0
  %2364 = vmatprep.subr.mxu0 0.0
  %2365 = vmatpush1.msra.mxu0 %v2359
  %2366 = vmatprep.subr.mxu0 0.0
  %2367 = vmatpush1.msra.mxu0 0.0
  %2368 = vmatprep.subr.mxu0 0.0
  %2369 = vmatpush1.msra.mxu0 0.0
  %2370 = vmatprep.subr.mxu0 0.0
  %2371 = vmatpush1.msra.mxu0 0.0
  %2372 = vmatprep.subr.mxu0 0.0
  %2373 = vmatpush1.msra.mxu0 0.0
  %2374 = vmatprep.subr.mxu0 0.0
  %2375 = vmatpush1.msra.mxu0 0.0
  %2376 = vmatprep.subr.mxu0 0.0
  %2377 = vmatpush1.msra.mxu0 0.0
  %2378 = vmatprep.subr.mxu0 0.0
  %2379 = vmatpush1.msra.mxu0 0.0
  %2380 = vmatprep.subr.mxu0 0.0
  %2381 = vmatpush1.msra.mxu0 0.0
  %2382 = vmatprep.subr.mxu0 0.0
  %2383 = vmatpush1.msra.mxu0 0.0
  %2384 = vmatprep.subr.mxu0 0.0
  %2385 = vmatpush1.msra.mxu0 0.0
  %2386 = vmatprep.subr.mxu0 0.0
  %2387 = vmatpush1.msra.mxu0 0.0
  %2388 = vmatprep.subr.mxu0 0.0
  %2389 = vmatpush1.msra.mxu0 0.0
  %2390 = vmatprep.subr.mxu0 0.0
  %2391 = vmatpush1.msra.mxu0 0.0
  %2392 = vmatprep.subr.mxu0 0.0
  %2393 = vmatpush1.msra.mxu0 0.0
  %2394 = vmatprep.subr.mxu0 0.0
  %2395 = vmatpush1.msra.mxu0 0.0
  %2396 = vmatprep.subr.mxu0 0.0
  %2397 = vmatpush1.msra.mxu0 0.0
  %2398 = vmatprep.subr.mxu0 0.0
  %2399 = vmatpush1.msra.mxu0 0.0
  %2400 = vmatprep.subr.mxu0 0.0
  %2401 = vmatpush1.msra.mxu0 0.0
  %2402 = vmatprep.subr.mxu0 0.0
  %2403 = vmatpush1.msra.mxu0 0.0
  %2404 = vmatprep.subr.mxu0 0.0
  %2405 = vmatpush1.msra.mxu0 0.0
  %2406 = vmatprep.subr.mxu0 0.0
  %2407 = vmatpush1.msra.mxu0 0.0
  %2408 = vmatprep.subr.mxu0 0.0
  %2409 = vmatpush1.msra.mxu0 0.0
  %2410 = vmatprep.subr.mxu0 0.0
  %2411 = vmatpush1.msra.mxu0 0.0
  %2412 = vmatprep.subr.mxu0 0.0
  %2413 = vmatpush1.msra.mxu0 0.0
  %2414 = vmatprep.subr.mxu0 0.0
  %2415 = vmatpush1.msra.mxu0 0.0
  %2416 = vmatprep.subr.mxu0 0.0
  %2417 = vmatpush1.msra.mxu0 0.0
  %2418 = vmatprep.subr.mxu0 0.0
  %2419 = vmatpush1.msra.mxu0 0.0
  %2420 = vmatprep.subr.mxu0 0.0
  %2421 = vmatpush1.msra.mxu0 0.0
  %2422 = vmatprep.subr.mxu0 0.0
  %2423 = vmatpush1.msra.mxu0 0.0
  %2424 = vmatprep.subr.mxu0 0.0
  %2425 = vmatpush1.msra.mxu0 0.0
  %2426 = vmatprep.subr.mxu0 0.0
  %2427 = vmatpush1.msra.mxu0 0.0
  %2428 = vmatprep.mubr.f32.mxu0 0.0
  %2429 = vmatmul.mubr.f32.gmra.mrb[0].mxu0 %v2362
  %v2430 = vpop.f32.mrb[0].mxu0
  %v2431 = vadd.f32 0.0, %v2430
  %v2432 = vpop.f32.mrb[0].mxu0
  %2433 = vdwg.mxu0
  %v2434 = vrcp.pop %v2278
  %v2435 = vrcp.pop %v2281
  %v2436 = vmul.f32 %v2355, %v2434
  %v2437 = vmul.f32 %v2431, %v2435
  %2438 = vrot.lane.b32.xlu0 %v2015, 120
  %v2439 = vpop.permute.xlu0 %2438
  %2440 = vrot.lane.b32.xlu0 %v2102, 120
  %v2441 = vpop.permute.xlu0 %2440
  %v2442 = vsel %vm223, %v2439, 0
  %v2444 = vsel %vm223, %v2441, 0
  %2446 = vmatprep.subr.mxu0 0.0
  %2447 = vmatpush1.xpose.msra.mxu0 %v2444
  %2448 = vmatprep.subr.mxu0 0.0
  %2449 = vmatpush1.xpose.msra.mxu0 0.0
  %2450 = vmatprep.subr.mxu0 0.0
  %2451 = vmatpush1.xpose.msra.mxu0 0.0
  %2452 = vmatprep.subr.mxu0 0.0
  %2453 = vmatpush1.xpose.msra.mxu0 0.0
  %2454 = vmatprep.subr.mxu0 0.0
  %2455 = vmatpush1.xpose.msra.mxu0 0.0
  %2456 = vmatprep.subr.mxu0 0.0
  %2457 = vmatpush1.xpose.msra.mxu0 0.0
  %2458 = vmatprep.subr.mxu0 0.0
  %2459 = vmatpush1.xpose.msra.mxu0 0.0
  %2460 = vmatprep.subr.mxu0 0.0
  %2461 = vmatpush1.xpose.msra.mxu0 0.0
  %2462 = vmatprep.subr.mxu0 0.0
  %2463 = vmatpush1.xpose.msra.mxu0 0.0
  %2464 = vmatprep.subr.mxu0 0.0
  %2465 = vmatpush1.xpose.msra.mxu0 0.0
  %2466 = vmatprep.subr.mxu0 0.0
  %2467 = vmatpush1.xpose.msra.mxu0 0.0
  %2468 = vmatprep.subr.mxu0 0.0
  %2469 = vmatpush1.xpose.msra.mxu0 0.0
  %2470 = vmatprep.subr.mxu0 0.0
  %2471 = vmatpush1.xpose.msra.mxu0 0.0
  %2472 = vmatprep.subr.mxu0 0.0
  %2473 = vmatpush1.xpose.msra.mxu0 0.0
  %2474 = vmatprep.subr.mxu0 0.0
  %2475 = vmatpush1.xpose.msra.mxu0 0.0
  %2476 = vmatprep.subr.mxu0 0.0
  %2477 = vmatpush1.xpose.msra.mxu0 0.0
  %2478 = vmatprep.subr.mxu0 0.0
  %2479 = vmatpush1.xpose.msra.mxu0 0.0
  %2480 = vmatprep.subr.mxu0 0.0
  %2481 = vmatpush1.xpose.msra.mxu0 0.0
  %2482 = vmatprep.subr.mxu0 0.0
  %2483 = vmatpush1.xpose.msra.mxu0 0.0
  %2484 = vmatprep.subr.mxu0 0.0
  %2485 = vmatpush1.xpose.msra.mxu0 0.0
  %2486 = vmatprep.subr.mxu0 0.0
  %2487 = vmatpush1.xpose.msra.mxu0 0.0
  %2488 = vmatprep.subr.mxu0 0.0
  %2489 = vmatpush1.xpose.msra.mxu0 0.0
  %2490 = vmatprep.subr.mxu0 0.0
  %2491 = vmatpush1.xpose.msra.mxu0 0.0
  %2492 = vmatprep.subr.mxu0 0.0
  %2493 = vmatpush1.xpose.msra.mxu0 0.0
  %2494 = vmatprep.subr.mxu0 0.0
  %2495 = vmatpush1.xpose.msra.mxu0 0.0
  %2496 = vmatprep.subr.mxu0 0.0
  %2497 = vmatpush1.xpose.msra.mxu0 0.0
  %2498 = vmatprep.subr.mxu0 0.0
  %2499 = vmatpush1.xpose.msra.mxu0 0.0
  %2500 = vmatprep.subr.mxu0 0.0
  %2501 = vmatpush1.xpose.msra.mxu0 0.0
  %2502 = vmatprep.subr.mxu0 0.0
  %2503 = vmatpush1.xpose.msra.mxu0 0.0
  %2504 = vmatprep.subr.mxu0 0.0
  %2505 = vmatpush1.xpose.msra.mxu0 0.0
  %2506 = vmatprep.subr.mxu0 0.0
  %2507 = vmatpush1.xpose.msra.mxu0 0.0
  %2508 = vmatprep.subr.mxu0 0.0
  %2509 = vmatpush1.xpose.msra.mxu0 0.0
  %2510 = vmatprep.mubr.f32.mxu0 0.0
  %2511 = vmatmul.mubr.f32.gmra.mrb[0].mxu0 %v2442
  %v2512 = vpop.f32.mrb[0].mxu0
  %v2513 = vadd.f32 0.0, %v2512
  %v2514 = vpop.f32.mrb[0].mxu0
  %2515 = vdwg.mxu0
  %2516 = vrot.lane.b32.xlu0 %v2020, 120
  %v2517 = vpop.permute.xlu0 %2516
  %2518 = vrot.lane.b32.xlu0 %v2107, 120
  %v2519 = vpop.permute.xlu0 %2518
  %v2520 = vsel %vm223, %v2517, 0
  %v2522 = vsel %vm223, %v2519, 0
  %2524 = vmatprep.subr.mxu0 0.0
  %2525 = vmatpush1.xpose.msra.mxu0 %v2522
  %2526 = vmatprep.subr.mxu0 0.0
  %2527 = vmatpush1.xpose.msra.mxu0 0.0
  %2528 = vmatprep.subr.mxu0 0.0
  %2529 = vmatpush1.xpose.msra.mxu0 0.0
  %2530 = vmatprep.subr.mxu0 0.0
  %2531 = vmatpush1.xpose.msra.mxu0 0.0
  %2532 = vmatprep.subr.mxu0 0.0
  %2533 = vmatpush1.xpose.msra.mxu0 0.0
  %2534 = vmatprep.subr.mxu0 0.0
  %2535 = vmatpush1.xpose.msra.mxu0 0.0
  %2536 = vmatprep.subr.mxu0 0.0
  %2537 = vmatpush1.xpose.msra.mxu0 0.0
  %2538 = vmatprep.subr.mxu0 0.0
  %2539 = vmatpush1.xpose.msra.mxu0 0.0
  %2540 = vmatprep.subr.mxu0 0.0
  %2541 = vmatpush1.xpose.msra.mxu0 0.0
  %2542 = vmatprep.subr.mxu0 0.0
  %2543 = vmatpush1.xpose.msra.mxu0 0.0
  %2544 = vmatprep.subr.mxu0 0.0
  %2545 = vmatpush1.xpose.msra.mxu0 0.0
  %2546 = vmatprep.subr.mxu0 0.0
  %2547 = vmatpush1.xpose.msra.mxu0 0.0
  %2548 = vmatprep.subr.mxu0 0.0
  %2549 = vmatpush1.xpose.msra.mxu0 0.0
  %2550 = vmatprep.subr.mxu0 0.0
  %2551 = vmatpush1.xpose.msra.mxu0 0.0
  %2552 = vmatprep.subr.mxu0 0.0
  %2553 = vmatpush1.xpose.msra.mxu0 0.0
  %2554 = vmatprep.subr.mxu0 0.0
  %2555 = vmatpush1.xpose.msra.mxu0 0.0
  %2556 = vmatprep.subr.mxu0 0.0
  %2557 = vmatpush1.xpose.msra.mxu0 0.0
  %2558 = vmatprep.subr.mxu0 0.0
  %2559 = vmatpush1.xpose.msra.mxu0 0.0
  %2560 = vmatprep.subr.mxu0 0.0
  %2561 = vmatpush1.xpose.msra.mxu0 0.0
  %2562 = vmatprep.subr.mxu0 0.0
  %2563 = vmatpush1.xpose.msra.mxu0 0.0
  %2564 = vmatprep.subr.mxu0 0.0
  %2565 = vmatpush1.xpose.msra.mxu0 0.0
  %2566 = vmatprep.subr.mxu0 0.0
  %2567 = vmatpush1.xpose.msra.mxu0 0.0
  %2568 = vmatprep.subr.mxu0 0.0
  %2569 = vmatpush1.xpose.msra.mxu0 0.0
  %2570 = vmatprep.subr.mxu0 0.0
  %2571 = vmatpush1.xpose.msra.mxu0 0.0
  %2572 = vmatprep.subr.mxu0 0.0
  %2573 = vmatpush1.xpose.msra.mxu0 0.0
  %2574 = vmatprep.subr.mxu0 0.0
  %2575 = vmatpush1.xpose.msra.mxu0 0.0
  %2576 = vmatprep.subr.mxu0 0.0
  %2577 = vmatpush1.xpose.msra.mxu0 0.0
  %2578 = vmatprep.subr.mxu0 0.0
  %2579 = vmatpush1.xpose.msra.mxu0 0.0
  %2580 = vmatprep.subr.mxu0 0.0
  %2581 = vmatpush1.xpose.msra.mxu0 0.0
  %2582 = vmatprep.subr.mxu0 0.0
  %2583 = vmatpush1.xpose.msra.mxu0 0.0
  %2584 = vmatprep.subr.mxu0 0.0
  %2585 = vmatpush1.xpose.msra.mxu0 0.0
  %2586 = vmatprep.subr.mxu0 0.0
  %2587 = vmatpush1.xpose.msra.mxu0 0.0
  %2588 = vmatprep.mubr.f32.mxu0 0.0
  %2589 = vmatmul.mubr.f32.gmra.mrb[0].mxu0 %v2520
  %v2590 = vpop.f32.mrb[0].mxu0
  %v2591 = vadd.f32 0.0, %v2590
  %v2592 = vpop.f32.mrb[0].mxu0
  %2593 = vdwg.mxu0
  %v2594 = vmul.f32 %v2513, 0.35355338
  %v2595 = vmul.f32 %v2591, 0.35355338
  %v2596 = vsel %vm223, %v2594, -inf
  %2597 = vmax.xlane.f32.xlu0 %v2596
  %v2598 = vpop.xlane.xlu0 %2597
  %v2599 = vsel %vm223, %v2595, -inf
  %2600 = vmax.xlane.f32.xlu0 %v2599
  %v2601 = vpop.xlane.xlu0 %2600
  %v2602 = vsub.f32 %v2594, %v2598
  %v2603 = vsub.f32 %v2595, %v2601
  %v2604 = vmul.f32 %v2602, 1.442695
  %v2605 = vpow.pop %v2604
  %v2606 = vmul.f32 %v2603, 1.442695
  %v2607 = vpow.pop %v2606
  %v2608 = vsel %vm223, %v2605, 0.0
  %2609 = vadd.xlane.f32.xlu0 %v2608
  %v2610 = vpop.xlane.xlu0 %2609
  %v2611 = vsel %vm223, %v2607, 0.0
  %2612 = vadd.xlane.f32.xlu0 %v2611
  %v2613 = vpop.xlane.xlu0 %2612
  %2614 = vrot.lane.b32.xlu0 %v2102, 88
  %v2615 = vpop.permute.xlu0 %2614
  %v2618 = vsel %vm223, %v2605, 0
  %2620 = vmatprep.subr.mxu0 0.0
  %2621 = vmatpush1.msra.mxu0 %v2615
  %2622 = vmatprep.subr.mxu0 0.0
  %2623 = vmatpush1.msra.mxu0 0.0
  %2624 = vmatprep.subr.mxu0 0.0
  %2625 = vmatpush1.msra.mxu0 0.0
  %2626 = vmatprep.subr.mxu0 0.0
  %2627 = vmatpush1.msra.mxu0 0.0
  %2628 = vmatprep.subr.mxu0 0.0
  %2629 = vmatpush1.msra.mxu0 0.0
  %2630 = vmatprep.subr.mxu0 0.0
  %2631 = vmatpush1.msra.mxu0 0.0
  %2632 = vmatprep.subr.mxu0 0.0
  %2633 = vmatpush1.msra.mxu0 0.0
  %2634 = vmatprep.subr.mxu0 0.0
  %2635 = vmatpush1.msra.mxu0 0.0
  %2636 = vmatprep.subr.mxu0 0.0
  %2637 = vmatpush1.msra.mxu0 0.0
  %2638 = vmatprep.subr.mxu0 0.0
  %2639 = vmatpush1.msra.mxu0 0.0
  %2640 = vmatprep.subr.mxu0 0.0
  %2641 = vmatpush1.msra.mxu0 0.0
  %2642 = vmatprep.subr.mxu0 0.0
  %2643 = vmatpush1.msra.mxu0 0.0
  %2644 = vmatprep.subr.mxu0 0.0
  %2645 = vmatpush1.msra.mxu0 0.0
  %2646 = vmatprep.subr.mxu0 0.0
  %2647 = vmatpush1.msra.mxu0 0.0
  %2648 = vmatprep.subr.mxu0 0.0
  %2649 = vmatpush1.msra.mxu0 0.0
  %2650 = vmatprep.subr.mxu0 0.0
  %2651 = vmatpush1.msra.mxu0 0.0
  %2652 = vmatprep.subr.mxu0 0.0
  %2653 = vmatpush1.msra.mxu0 0.0
  %2654 = vmatprep.subr.mxu0 0.0
  %2655 = vmatpush1.msra.mxu0 0.0
  %2656 = vmatprep.subr.mxu0 0.0
  %2657 = vmatpush1.msra.mxu0 0.0
  %2658 = vmatprep.subr.mxu0 0.0
  %2659 = vmatpush1.msra.mxu0 0.0
  %2660 = vmatprep.subr.mxu0 0.0
  %2661 = vmatpush1.msra.mxu0 0.0
  %2662 = vmatprep.subr.mxu0 0.0
  %2663 = vmatpush1.msra.mxu0 0.0
  %2664 = vmatprep.subr.mxu0 0.0
  %2665 = vmatpush1.msra.mxu0 0.0
  %2666 = vmatprep.subr.mxu0 0.0
  %2667 = vmatpush1.msra.mxu0 0.0
  %2668 = vmatprep.subr.mxu0 0.0
  %2669 = vmatpush1.msra.mxu0 0.0
  %2670 = vmatprep.subr.mxu0 0.0
  %2671 = vmatpush1.msra.mxu0 0.0
  %2672 = vmatprep.subr.mxu0 0.0
  %2673 = vmatpush1.msra.mxu0 0.0
  %2674 = vmatprep.subr.mxu0 0.0
  %2675 = vmatpush1.msra.mxu0 0.0
  %2676 = vmatprep.subr.mxu0 0.0
  %2677 = vmatpush1.msra.mxu0 0.0
  %2678 = vmatprep.subr.mxu0 0.0
  %2679 = vmatpush1.msra.mxu0 0.0
  %2680 = vmatprep.subr.mxu0 0.0
  %2681 = vmatpush1.msra.mxu0 0.0
  %2682 = vmatprep.subr.mxu0 0.0
  %2683 = vmatpush1.msra.mxu0 0.0
  %2684 = vmatprep.mubr.f32.mxu0 0.0
  %2685 = vmatmul.mubr.f32.gmra.mrb[0].mxu0 %v2618
  %v2686 = vpop.f32.mrb[0].mxu0
  %v2687 = vadd.f32 0.0, %v2686
  %v2688 = vpop.f32.mrb[0].mxu0
  %2689 = vdwg.mxu0
  %2690 = vrot.lane.b32.xlu0 %v2107, 88
  %v2691 = vpop.permute.xlu0 %2690
  %v2694 = vsel %vm223, %v2607, 0
  %2696 = vmatprep.subr.mxu0 0.0
  %2697 = vmatpush1.msra.mxu0 %v2691
  %2698 = vmatprep.subr.mxu0 0.0
  %2699 = vmatpush1.msra.mxu0 0.0
  %2700 = vmatprep.subr.mxu0 0.0
  %2701 = vmatpush1.msra.mxu0 0.0
  %2702 = vmatprep.subr.mxu0 0.0
  %2703 = vmatpush1.msra.mxu0 0.0
  %2704 = vmatprep.subr.mxu0 0.0
  %2705 = vmatpush1.msra.mxu0 0.0
  %2706 = vmatprep.subr.mxu0 0.0
  %2707 = vmatpush1.msra.mxu0 0.0
  %2708 = vmatprep.subr.mxu0 0.0
  %2709 = vmatpush1.msra.mxu0 0.0
  %2710 = vmatprep.subr.mxu0 0.0
  %2711 = vmatpush1.msra.mxu0 0.0
  %2712 = vmatprep.subr.mxu0 0.0
  %2713 = vmatpush1.msra.mxu0 0.0
  %2714 = vmatprep.subr.mxu0 0.0
  %2715 = vmatpush1.msra.mxu0 0.0
  %2716 = vmatprep.subr.mxu0 0.0
  %2717 = vmatpush1.msra.mxu0 0.0
  %2718 = vmatprep.subr.mxu0 0.0
  %2719 = vmatpush1.msra.mxu0 0.0
  %2720 = vmatprep.subr.mxu0 0.0
  %2721 = vmatpush1.msra.mxu0 0.0
  %2722 = vmatprep.subr.mxu0 0.0
  %2723 = vmatpush1.msra.mxu0 0.0
  %2724 = vmatprep.subr.mxu0 0.0
  %2725 = vmatpush1.msra.mxu0 0.0
  %2726 = vmatprep.subr.mxu0 0.0
  %2727 = vmatpush1.msra.mxu0 0.0
  %2728 = vmatprep.subr.mxu0 0.0
  %2729 = vmatpush1.msra.mxu0 0.0
  %2730 = vmatprep.subr.mxu0 0.0
  %2731 = vmatpush1.msra.mxu0 0.0
  %2732 = vmatprep.subr.mxu0 0.0
  %2733 = vmatpush1.msra.mxu0 0.0
  %2734 = vmatprep.subr.mxu0 0.0
  %2735 = vmatpush1.msra.mxu0 0.0
  %2736 = vmatprep.subr.mxu0 0.0
  %2737 = vmatpush1.msra.mxu0 0.0
  %2738 = vmatprep.subr.mxu0 0.0
  %2739 = vmatpush1.msra.mxu0 0.0
  %2740 = vmatprep.subr.mxu0 0.0
  %2741 = vmatpush1.msra.mxu0 0.0
  %2742 = vmatprep.subr.mxu0 0.0
  %2743 = vmatpush1.msra.mxu0 0.0
  %2744 = vmatprep.subr.mxu0 0.0
  %2745 = vmatpush1.msra.mxu0 0.0
  %2746 = vmatprep.subr.mxu0 0.0
  %2747 = vmatpush1.msra.mxu0 0.0
  %2748 = vmatprep.subr.mxu0 0.0
  %2749 = vmatpush1.msra.mxu0 0.0
  %2750 = vmatprep.subr.mxu0 0.0
  %2751 = vmatpush1.msra.mxu0 0.0
  %2752 = vmatprep.subr.mxu0 0.0
  %2753 = vmatpush1.msra.mxu0 0.0
  %2754 = vmatprep.subr.mxu0 0.0
  %2755 = vmatpush1.msra.mxu0 0.0
  %2756 = vmatprep.subr.mxu0 0.0
  %2757 = vmatpush1.msra.mxu0 0.0
  %2758 = vmatprep.subr.mxu0 0.0
  %2759 = vmatpush1.msra.mxu0 0.0
  %2760 = vmatprep.mubr.f32.mxu0 0.0
  %2761 = vmatmul.mubr.f32.gmra.mrb[0].mxu0 %v2694
  %v2762 = vpop.f32.mrb[0].mxu0
  %v2763 = vadd.f32 0.0, %v2762
  %v2764 = vpop.f32.mrb[0].mxu0
  %2765 = vdwg.mxu0
  %v2766 = vrcp.pop %v2610
  %v2767 = vrcp.pop %v2613
  %v2768 = vmul.f32 %v2687, %v2766
  %v2769 = vmul.f32 %v2763, %v2767
  %v2771 = vsel %vm223, %v2768, 0
  %v2774 = vsel %vm223, %v2769, 0
  %2776 = vmatprep.subr.mxu0 0.0
  %2777 = vmatpush1.msra.mxu0 %v110
  %2778 = vmatprep.subr.mxu0 0.0
  %2779 = vmatpush1.msra.mxu0 0.0
  %2780 = vmatprep.subr.mxu0 0.0
  %2781 = vmatpush1.msra.mxu0 0.0
  %2782 = vmatprep.subr.mxu0 0.0
  %2783 = vmatpush1.msra.mxu0 0.0
  %2784 = vmatprep.subr.mxu0 0.0
  %2785 = vmatpush1.msra.mxu0 0.0
  %2786 = vmatprep.subr.mxu0 0.0
  %2787 = vmatpush1.msra.mxu0 0.0
  %2788 = vmatprep.subr.mxu0 0.0
  %2789 = vmatpush1.msra.mxu0 0.0
  %2790 = vmatprep.subr.mxu0 0.0
  %2791 = vmatpush1.msra.mxu0 0.0
  %2792 = vmatprep.subr.mxu0 0.0
  %2793 = vmatpush1.msra.mxu0 0.0
  %2794 = vmatprep.subr.mxu0 0.0
  %2795 = vmatpush1.msra.mxu0 0.0
  %2796 = vmatprep.subr.mxu0 0.0
  %2797 = vmatpush1.msra.mxu0 0.0
  %2798 = vmatprep.subr.mxu0 0.0
  %2799 = vmatpush1.msra.mxu0 0.0
  %2800 = vmatprep.subr.mxu0 0.0
  %2801 = vmatpush1.msra.mxu0 0.0
  %2802 = vmatprep.subr.mxu0 0.0
  %2803 = vmatpush1.msra.mxu0 0.0
  %2804 = vmatprep.subr.mxu0 0.0
  %2805 = vmatpush1.msra.mxu0 0.0
  %2806 = vmatprep.subr.mxu0 0.0
  %2807 = vmatpush1.msra.mxu0 0.0
  %2808 = vmatprep.subr.mxu0 0.0
  %2809 = vmatpush1.msra.mxu0 0.0
  %2810 = vmatprep.subr.mxu0 0.0
  %2811 = vmatpush1.msra.mxu0 0.0
  %2812 = vmatprep.subr.mxu0 0.0
  %2813 = vmatpush1.msra.mxu0 0.0
  %2814 = vmatprep.subr.mxu0 0.0
  %2815 = vmatpush1.msra.mxu0 0.0
  %2816 = vmatprep.subr.mxu0 0.0
  %2817 = vmatpush1.msra.mxu0 0.0
  %2818 = vmatprep.subr.mxu0 0.0
  %2819 = vmatpush1.msra.mxu0 0.0
  %2820 = vmatprep.subr.mxu0 0.0
  %2821 = vmatpush1.msra.mxu0 0.0
  %2822 = vmatprep.subr.mxu0 0.0
  %2823 = vmatpush1.msra.mxu0 0.0
  %2824 = vmatprep.subr.mxu0 0.0
  %2825 = vmatpush1.msra.mxu0 0.0
  %2826 = vmatprep.subr.mxu0 0.0
  %2827 = vmatpush1.msra.mxu0 0.0
  %2828 = vmatprep.subr.mxu0 0.0
  %2829 = vmatpush1.msra.mxu0 0.0
  %2830 = vmatprep.subr.mxu0 0.0
  %2831 = vmatpush1.msra.mxu0 0.0
  %2832 = vmatprep.subr.mxu0 0.0
  %2833 = vmatpush1.msra.mxu0 0.0
  %2834 = vmatprep.subr.mxu0 0.0
  %2835 = vmatpush1.msra.mxu0 0.0
  %2836 = vmatprep.subr.mxu0 0.0
  %2837 = vmatpush1.msra.mxu0 0.0
  %2838 = vmatprep.subr.mxu0 0.0
  %2839 = vmatpush1.msra.mxu0 0.0
  %2840 = vmatprep.mubr.f32.mxu0 0.0
  %2841 = vmatmul.mubr.f32.gmra.mrb[0].mxu0 %v2771
  %v2842 = vpop.f32.mrb[0].mxu0
  %v2843 = vadd.f32 0.0, %v2842
  %v2844 = vpop.f32.mrb[0].mxu0
  %2845 = vmatprep.mubr.f32.mxu0 0.0
  %2846 = vmatmul.mubr.f32.gmra.mrb[0].mxu0 %v2774
  %v2847 = vpop.f32.mrb[0].mxu0
  %v2848 = vadd.f32 0.0, %v2847
  %v2849 = vpop.f32.mrb[0].mxu0
  %2850 = vdwg.mxu0
  %v2852 = vsel %vm223, %v2436, 0
  %v2855 = vsel %vm223, %v2437, 0
  %2857 = vmatprep.subr.mxu0 0.0
  %2858 = vmatpush1.msra.mxu0 %v109
  %2859 = vmatprep.subr.mxu0 0.0
  %2860 = vmatpush1.msra.mxu0 0.0
  %2861 = vmatprep.subr.mxu0 0.0
  %2862 = vmatpush1.msra.mxu0 0.0
  %2863 = vmatprep.subr.mxu0 0.0
  %2864 = vmatpush1.msra.mxu0 0.0
  %2865 = vmatprep.subr.mxu0 0.0
  %2866 = vmatpush1.msra.mxu0 0.0
  %2867 = vmatprep.subr.mxu0 0.0
  %2868 = vmatpush1.msra.mxu0 0.0
  %2869 = vmatprep.subr.mxu0 0.0
  %2870 = vmatpush1.msra.mxu0 0.0
  %2871 = vmatprep.subr.mxu0 0.0
  %2872 = vmatpush1.msra.mxu0 0.0
  %2873 = vmatprep.subr.mxu0 0.0
  %2874 = vmatpush1.msra.mxu0 0.0
  %2875 = vmatprep.subr.mxu0 0.0
  %2876 = vmatpush1.msra.mxu0 0.0
  %2877 = vmatprep.subr.mxu0 0.0
  %2878 = vmatpush1.msra.mxu0 0.0
  %2879 = vmatprep.subr.mxu0 0.0
  %2880 = vmatpush1.msra.mxu0 0.0
  %2881 = vmatprep.subr.mxu0 0.0
  %2882 = vmatpush1.msra.mxu0 0.0
  %2883 = vmatprep.subr.mxu0 0.0
  %2884 = vmatpush1.msra.mxu0 0.0
  %2885 = vmatprep.subr.mxu0 0.0
  %2886 = vmatpush1.msra.mxu0 0.0
  %2887 = vmatprep.subr.mxu0 0.0
  %2888 = vmatpush1.msra.mxu0 0.0
  %2889 = vmatprep.subr.mxu0 0.0
  %2890 = vmatpush1.msra.mxu0 0.0
  %2891 = vmatprep.subr.mxu0 0.0
  %2892 = vmatpush1.msra.mxu0 0.0
  %2893 = vmatprep.subr.mxu0 0.0
  %2894 = vmatpush1.msra.mxu0 0.0
  %2895 = vmatprep.subr.mxu0 0.0
  %2896 = vmatpush1.msra.mxu0 0.0
  %2897 = vmatprep.subr.mxu0 0.0
  %2898 = vmatpush1.msra.mxu0 0.0
  %2899 = vmatprep.subr.mxu0 0.0
  %2900 = vmatpush1.msra.mxu0 0.0
  %2901 = vmatprep.subr.mxu0 0.0
  %2902 = vmatpush1.msra.mxu0 0.0
  %2903 = vmatprep.subr.mxu0 0.0
  %2904 = vmatpush1.msra.mxu0 0.0
  %2905 = vmatprep.subr.mxu0 0.0
  %2906 = vmatpush1.msra.mxu0 0.0
  %2907 = vmatprep.subr.mxu0 0.0
  %2908 = vmatpush1.msra.mxu0 0.0
  %2909 = vmatprep.subr.mxu0 0.0
  %2910 = vmatpush1.msra.mxu0 0.0
  %2911 = vmatprep.subr.mxu0 0.0
  %2912 = vmatpush1.msra.mxu0 0.0
  %2913 = vmatprep.subr.mxu0 0.0
  %2914 = vmatpush1.msra.mxu0 0.0
  %2915 = vmatprep.subr.mxu0 0.0
  %2916 = vmatpush1.msra.mxu0 0.0
  %2917 = vmatprep.subr.mxu0 0.0
  %2918 = vmatpush1.msra.mxu0 0.0
  %2919 = vmatprep.subr.mxu0 0.0
  %2920 = vmatpush1.msra.mxu0 0.0
  %2921 = vmatprep.mubr.f32.mxu0 0.0
  %2922 = vmatmul.mubr.f32.gmra.mrb[0].mxu0 %v2852
  %v2923 = vpop.f32.mrb[0].mxu0
  %v2924 = vadd.f32 %v2843, %v2923
  %v2925 = vpop.f32.mrb[0].mxu0
  %2926 = vmatprep.mubr.f32.mxu0 0.0
  %2927 = vmatmul.mubr.f32.gmra.mrb[0].mxu0 %v2855
  %v2928 = vpop.f32.mrb[0].mxu0
  %v2929 = vadd.f32 %v2848, %v2928
  %v2930 = vpop.f32.mrb[0].mxu0
  %2931 = vdwg.mxu0
  %2932 = vrot.lane.b32.xlu0 %v2015, 112
  %v2933 = vpop.permute.xlu0 %2932
  %2934 = vrot.lane.b32.xlu0 %v2102, 112
  %v2935 = vpop.permute.xlu0 %2934
  %v2936 = vsel %vm223, %v2933, 0
  %v2938 = vsel %vm223, %v2935, 0
  %2940 = vmatprep.subr.mxu0 0.0
  %2941 = vmatpush1.xpose.msra.mxu0 %v2938
  %2942 = vmatprep.subr.mxu0 0.0
  %2943 = vmatpush1.xpose.msra.mxu0 0.0
  %2944 = vmatprep.subr.mxu0 0.0
  %2945 = vmatpush1.xpose.msra.mxu0 0.0
  %2946 = vmatprep.subr.mxu0 0.0
  %2947 = vmatpush1.xpose.msra.mxu0 0.0
  %2948 = vmatprep.subr.mxu0 0.0
  %2949 = vmatpush1.xpose.msra.mxu0 0.0
  %2950 = vmatprep.subr.mxu0 0.0
  %2951 = vmatpush1.xpose.msra.mxu0 0.0
  %2952 = vmatprep.subr.mxu0 0.0
  %2953 = vmatpush1.xpose.msra.mxu0 0.0
  %2954 = vmatprep.subr.mxu0 0.0
  %2955 = vmatpush1.xpose.msra.mxu0 0.0
  %2956 = vmatprep.subr.mxu0 0.0
  %2957 = vmatpush1.xpose.msra.mxu0 0.0
  %2958 = vmatprep.subr.mxu0 0.0
  %2959 = vmatpush1.xpose.msra.mxu0 0.0
  %2960 = vmatprep.subr.mxu0 0.0
  %2961 = vmatpush1.xpose.msra.mxu0 0.0
  %2962 = vmatprep.subr.mxu0 0.0
  %2963 = vmatpush1.xpose.msra.mxu0 0.0
  %2964 = vmatprep.subr.mxu0 0.0
  %2965 = vmatpush1.xpose.msra.mxu0 0.0
  %2966 = vmatprep.subr.mxu0 0.0
  %2967 = vmatpush1.xpose.msra.mxu0 0.0
  %2968 = vmatprep.subr.mxu0 0.0
  %2969 = vmatpush1.xpose.msra.mxu0 0.0
  %2970 = vmatprep.subr.mxu0 0.0
  %2971 = vmatpush1.xpose.msra.mxu0 0.0
  %2972 = vmatprep.subr.mxu0 0.0
  %2973 = vmatpush1.xpose.msra.mxu0 0.0
  %2974 = vmatprep.subr.mxu0 0.0
  %2975 = vmatpush1.xpose.msra.mxu0 0.0
  %2976 = vmatprep.subr.mxu0 0.0
  %2977 = vmatpush1.xpose.msra.mxu0 0.0
  %2978 = vmatprep.subr.mxu0 0.0
  %2979 = vmatpush1.xpose.msra.mxu0 0.0
  %2980 = vmatprep.subr.mxu0 0.0
  %2981 = vmatpush1.xpose.msra.mxu0 0.0
  %2982 = vmatprep.subr.mxu0 0.0
  %2983 = vmatpush1.xpose.msra.mxu0 0.0
  %2984 = vmatprep.subr.mxu0 0.0
  %2985 = vmatpush1.xpose.msra.mxu0 0.0
  %2986 = vmatprep.subr.mxu0 0.0
  %2987 = vmatpush1.xpose.msra.mxu0 0.0
  %2988 = vmatprep.subr.mxu0 0.0
  %2989 = vmatpush1.xpose.msra.mxu0 0.0
  %2990 = vmatprep.subr.mxu0 0.0
  %2991 = vmatpush1.xpose.msra.mxu0 0.0
  %2992 = vmatprep.subr.mxu0 0.0
  %2993 = vmatpush1.xpose.msra.mxu0 0.0
  %2994 = vmatprep.subr.mxu0 0.0
  %2995 = vmatpush1.xpose.msra.mxu0 0.0
  %2996 = vmatprep.subr.mxu0 0.0
  %2997 = vmatpush1.xpose.msra.mxu0 0.0
  %2998 = vmatprep.subr.mxu0 0.0
  %2999 = vmatpush1.xpose.msra.mxu0 0.0
  %3000 = vmatprep.subr.mxu0 0.0
  %3001 = vmatpush1.xpose.msra.mxu0 0.0
  %3002 = vmatprep.subr.mxu0 0.0
  %3003 = vmatpush1.xpose.msra.mxu0 0.0
  %3004 = vmatprep.mubr.f32.mxu0 0.0
  %3005 = vmatmul.mubr.f32.gmra.mrb[0].mxu0 %v2936
  %v3006 = vpop.f32.mrb[0].mxu0
  %v3007 = vadd.f32 0.0, %v3006
  %v3008 = vpop.f32.mrb[0].mxu0
  %3009 = vdwg.mxu0
  %3010 = vrot.lane.b32.xlu0 %v2020, 112
  %v3011 = vpop.permute.xlu0 %3010
  %3012 = vrot.lane.b32.xlu0 %v2107, 112
  %v3013 = vpop.permute.xlu0 %3012
  %v3014 = vsel %vm223, %v3011, 0
  %v3016 = vsel %vm223, %v3013, 0
  %3018 = vmatprep.subr.mxu0 0.0
  %3019 = vmatpush1.xpose.msra.mxu0 %v3016
  %3020 = vmatprep.subr.mxu0 0.0
  %3021 = vmatpush1.xpose.msra.mxu0 0.0
  %3022 = vmatprep.subr.mxu0 0.0
  %3023 = vmatpush1.xpose.msra.mxu0 0.0
  %3024 = vmatprep.subr.mxu0 0.0
  %3025 = vmatpush1.xpose.msra.mxu0 0.0
  %3026 = vmatprep.subr.mxu0 0.0
  %3027 = vmatpush1.xpose.msra.mxu0 0.0
  %3028 = vmatprep.subr.mxu0 0.0
  %3029 = vmatpush1.xpose.msra.mxu0 0.0
  %3030 = vmatprep.subr.mxu0 0.0
  %3031 = vmatpush1.xpose.msra.mxu0 0.0
  %3032 = vmatprep.subr.mxu0 0.0
  %3033 = vmatpush1.xpose.msra.mxu0 0.0
  %3034 = vmatprep.subr.mxu0 0.0
  %3035 = vmatpush1.xpose.msra.mxu0 0.0
  %3036 = vmatprep.subr.mxu0 0.0
  %3037 = vmatpush1.xpose.msra.mxu0 0.0
  %3038 = vmatprep.subr.mxu0 0.0
  %3039 = vmatpush1.xpose.msra.mxu0 0.0
  %3040 = vmatprep.subr.mxu0 0.0
  %3041 = vmatpush1.xpose.msra.mxu0 0.0
  %3042 = vmatprep.subr.mxu0 0.0
  %3043 = vmatpush1.xpose.msra.mxu0 0.0
  %3044 = vmatprep.subr.mxu0 0.0
  %3045 = vmatpush1.xpose.msra.mxu0 0.0
  %3046 = vmatprep.subr.mxu0 0.0
  %3047 = vmatpush1.xpose.msra.mxu0 0.0
  %3048 = vmatprep.subr.mxu0 0.0
  %3049 = vmatpush1.xpose.msra.mxu0 0.0
  %3050 = vmatprep.subr.mxu0 0.0
  %3051 = vmatpush1.xpose.msra.mxu0 0.0
  %3052 = vmatprep.subr.mxu0 0.0
  %3053 = vmatpush1.xpose.msra.mxu0 0.0
  %3054 = vmatprep.subr.mxu0 0.0
  %3055 = vmatpush1.xpose.msra.mxu0 0.0
  %3056 = vmatprep.subr.mxu0 0.0
  %3057 = vmatpush1.xpose.msra.mxu0 0.0
  %3058 = vmatprep.subr.mxu0 0.0
  %3059 = vmatpush1.xpose.msra.mxu0 0.0
  %3060 = vmatprep.subr.mxu0 0.0
  %3061 = vmatpush1.xpose.msra.mxu0 0.0
  %3062 = vmatprep.subr.mxu0 0.0
  %3063 = vmatpush1.xpose.msra.mxu0 0.0
  %3064 = vmatprep.subr.mxu0 0.0
  %3065 = vmatpush1.xpose.msra.mxu0 0.0
  %3066 = vmatprep.subr.mxu0 0.0
  %3067 = vmatpush1.xpose.msra.mxu0 0.0
  %3068 = vmatprep.subr.mxu0 0.0
  %3069 = vmatpush1.xpose.msra.mxu0 0.0
  %3070 = vmatprep.subr.mxu0 0.0
  %3071 = vmatpush1.xpose.msra.mxu0 0.0
  %3072 = vmatprep.subr.mxu0 0.0
  %3073 = vmatpush1.xpose.msra.mxu0 0.0
  %3074 = vmatprep.subr.mxu0 0.0
  %3075 = vmatpush1.xpose.msra.mxu0 0.0
  %3076 = vmatprep.subr.mxu0 0.0
  %3077 = vmatpush1.xpose.msra.mxu0 0.0
  %3078 = vmatprep.subr.mxu0 0.0
  %3079 = vmatpush1.xpose.msra.mxu0 0.0
  %3080 = vmatprep.subr.mxu0 0.0
  %3081 = vmatpush1.xpose.msra.mxu0 0.0
  %3082 = vmatprep.mubr.f32.mxu0 0.0
  %3083 = vmatmul.mubr.f32.gmra.mrb[0].mxu0 %v3014
  %v3084 = vpop.f32.mrb[0].mxu0
  %v3085 = vadd.f32 0.0, %v3084
  %v3086 = vpop.f32.mrb[0].mxu0
  %3087 = vdwg.mxu0
  %v3088 = vmul.f32 %v3007, 0.35355338
  %v3089 = vmul.f32 %v3085, 0.35355338
  %v3090 = vsel %vm223, %v3088, -inf
  %3091 = vmax.xlane.f32.xlu0 %v3090
  %v3092 = vpop.xlane.xlu0 %3091
  %v3093 = vsel %vm223, %v3089, -inf
  %3094 = vmax.xlane.f32.xlu0 %v3093
  %v3095 = vpop.xlane.xlu0 %3094
  %v3096 = vsub.f32 %v3088, %v3092
  %v3097 = vsub.f32 %v3089, %v3095
  %v3098 = vmul.f32 %v3096, 1.442695
  %v3099 = vpow.pop %v3098
  %v3100 = vmul.f32 %v3097, 1.442695
  %v3101 = vpow.pop %v3100
  %v3102 = vsel %vm223, %v3099, 0.0
  %3103 = vadd.xlane.f32.xlu0 %v3102
  %v3104 = vpop.xlane.xlu0 %3103
  %v3105 = vsel %vm223, %v3101, 0.0
  %3106 = vadd.xlane.f32.xlu0 %v3105
  %v3107 = vpop.xlane.xlu0 %3106
  %3108 = vrot.lane.b32.xlu0 %v2102, 80
  %v3109 = vpop.permute.xlu0 %3108
  %v3112 = vsel %vm223, %v3099, 0
  %3114 = vmatprep.subr.mxu0 0.0
  %3115 = vmatpush1.msra.mxu0 %v3109
  %3116 = vmatprep.subr.mxu0 0.0
  %3117 = vmatpush1.msra.mxu0 0.0
  %3118 = vmatprep.subr.mxu0 0.0
  %3119 = vmatpush1.msra.mxu0 0.0
  %3120 = vmatprep.subr.mxu0 0.0
  %3121 = vmatpush1.msra.mxu0 0.0
  %3122 = vmatprep.subr.mxu0 0.0
  %3123 = vmatpush1.msra.mxu0 0.0
  %3124 = vmatprep.subr.mxu0 0.0
  %3125 = vmatpush1.msra.mxu0 0.0
  %3126 = vmatprep.subr.mxu0 0.0
  %3127 = vmatpush1.msra.mxu0 0.0
  %3128 = vmatprep.subr.mxu0 0.0
  %3129 = vmatpush1.msra.mxu0 0.0
  %3130 = vmatprep.subr.mxu0 0.0
  %3131 = vmatpush1.msra.mxu0 0.0
  %3132 = vmatprep.subr.mxu0 0.0
  %3133 = vmatpush1.msra.mxu0 0.0
  %3134 = vmatprep.subr.mxu0 0.0
  %3135 = vmatpush1.msra.mxu0 0.0
  %3136 = vmatprep.subr.mxu0 0.0
  %3137 = vmatpush1.msra.mxu0 0.0
  %3138 = vmatprep.subr.mxu0 0.0
  %3139 = vmatpush1.msra.mxu0 0.0
  %3140 = vmatprep.subr.mxu0 0.0
  %3141 = vmatpush1.msra.mxu0 0.0
  %3142 = vmatprep.subr.mxu0 0.0
  %3143 = vmatpush1.msra.mxu0 0.0
  %3144 = vmatprep.subr.mxu0 0.0
  %3145 = vmatpush1.msra.mxu0 0.0
  %3146 = vmatprep.subr.mxu0 0.0
  %3147 = vmatpush1.msra.mxu0 0.0
  %3148 = vmatprep.subr.mxu0 0.0
  %3149 = vmatpush1.msra.mxu0 0.0
  %3150 = vmatprep.subr.mxu0 0.0
  %3151 = vmatpush1.msra.mxu0 0.0
  %3152 = vmatprep.subr.mxu0 0.0
  %3153 = vmatpush1.msra.mxu0 0.0
  %3154 = vmatprep.subr.mxu0 0.0
  %3155 = vmatpush1.msra.mxu0 0.0
  %3156 = vmatprep.subr.mxu0 0.0
  %3157 = vmatpush1.msra.mxu0 0.0
  %3158 = vmatprep.subr.mxu0 0.0
  %3159 = vmatpush1.msra.mxu0 0.0
  %3160 = vmatprep.subr.mxu0 0.0
  %3161 = vmatpush1.msra.mxu0 0.0
  %3162 = vmatprep.subr.mxu0 0.0
  %3163 = vmatpush1.msra.mxu0 0.0
  %3164 = vmatprep.subr.mxu0 0.0
  %3165 = vmatpush1.msra.mxu0 0.0
  %3166 = vmatprep.subr.mxu0 0.0
  %3167 = vmatpush1.msra.mxu0 0.0
  %3168 = vmatprep.subr.mxu0 0.0
  %3169 = vmatpush1.msra.mxu0 0.0
  %3170 = vmatprep.subr.mxu0 0.0
  %3171 = vmatpush1.msra.mxu0 0.0
  %3172 = vmatprep.subr.mxu0 0.0
  %3173 = vmatpush1.msra.mxu0 0.0
  %3174 = vmatprep.subr.mxu0 0.0
  %3175 = vmatpush1.msra.mxu0 0.0
  %3176 = vmatprep.subr.mxu0 0.0
  %3177 = vmatpush1.msra.mxu0 0.0
  %3178 = vmatprep.mubr.f32.mxu0 0.0
  %3179 = vmatmul.mubr.f32.gmra.mrb[0].mxu0 %v3112
  %v3180 = vpop.f32.mrb[0].mxu0
  %v3181 = vadd.f32 0.0, %v3180
  %v3182 = vpop.f32.mrb[0].mxu0
  %3183 = vdwg.mxu0
  %3184 = vrot.lane.b32.xlu0 %v2107, 80
  %v3185 = vpop.permute.xlu0 %3184
  %v3188 = vsel %vm223, %v3101, 0
  %3190 = vmatprep.subr.mxu0 0.0
  %3191 = vmatpush1.msra.mxu0 %v3185
  %3192 = vmatprep.subr.mxu0 0.0
  %3193 = vmatpush1.msra.mxu0 0.0
  %3194 = vmatprep.subr.mxu0 0.0
  %3195 = vmatpush1.msra.mxu0 0.0
  %3196 = vmatprep.subr.mxu0 0.0
  %3197 = vmatpush1.msra.mxu0 0.0
  %3198 = vmatprep.subr.mxu0 0.0
  %3199 = vmatpush1.msra.mxu0 0.0
  %3200 = vmatprep.subr.mxu0 0.0
  %3201 = vmatpush1.msra.mxu0 0.0
  %3202 = vmatprep.subr.mxu0 0.0
  %3203 = vmatpush1.msra.mxu0 0.0
  %3204 = vmatprep.subr.mxu0 0.0
  %3205 = vmatpush1.msra.mxu0 0.0
  %3206 = vmatprep.subr.mxu0 0.0
  %3207 = vmatpush1.msra.mxu0 0.0
  %3208 = vmatprep.subr.mxu0 0.0
  %3209 = vmatpush1.msra.mxu0 0.0
  %3210 = vmatprep.subr.mxu0 0.0
  %3211 = vmatpush1.msra.mxu0 0.0
  %3212 = vmatprep.subr.mxu0 0.0
  %3213 = vmatpush1.msra.mxu0 0.0
  %3214 = vmatprep.subr.mxu0 0.0
  %3215 = vmatpush1.msra.mxu0 0.0
  %3216 = vmatprep.subr.mxu0 0.0
  %3217 = vmatpush1.msra.mxu0 0.0
  %3218 = vmatprep.subr.mxu0 0.0
  %3219 = vmatpush1.msra.mxu0 0.0
  %3220 = vmatprep.subr.mxu0 0.0
  %3221 = vmatpush1.msra.mxu0 0.0
  %3222 = vmatprep.subr.mxu0 0.0
  %3223 = vmatpush1.msra.mxu0 0.0
  %3224 = vmatprep.subr.mxu0 0.0
  %3225 = vmatpush1.msra.mxu0 0.0
  %3226 = vmatprep.subr.mxu0 0.0
  %3227 = vmatpush1.msra.mxu0 0.0
  %3228 = vmatprep.subr.mxu0 0.0
  %3229 = vmatpush1.msra.mxu0 0.0
  %3230 = vmatprep.subr.mxu0 0.0
  %3231 = vmatpush1.msra.mxu0 0.0
  %3232 = vmatprep.subr.mxu0 0.0
  %3233 = vmatpush1.msra.mxu0 0.0
  %3234 = vmatprep.subr.mxu0 0.0
  %3235 = vmatpush1.msra.mxu0 0.0
  %3236 = vmatprep.subr.mxu0 0.0
  %3237 = vmatpush1.msra.mxu0 0.0
  %3238 = vmatprep.subr.mxu0 0.0
  %3239 = vmatpush1.msra.mxu0 0.0
  %3240 = vmatprep.subr.mxu0 0.0
  %3241 = vmatpush1.msra.mxu0 0.0
  %3242 = vmatprep.subr.mxu0 0.0
  %3243 = vmatpush1.msra.mxu0 0.0
  %3244 = vmatprep.subr.mxu0 0.0
  %3245 = vmatpush1.msra.mxu0 0.0
  %3246 = vmatprep.subr.mxu0 0.0
  %3247 = vmatpush1.msra.mxu0 0.0
  %3248 = vmatprep.subr.mxu0 0.0
  %3249 = vmatpush1.msra.mxu0 0.0
  %3250 = vmatprep.subr.mxu0 0.0
  %3251 = vmatpush1.msra.mxu0 0.0
  %3252 = vmatprep.subr.mxu0 0.0
  %3253 = vmatpush1.msra.mxu0 0.0
  %3254 = vmatprep.mubr.f32.mxu0 0.0
  %3255 = vmatmul.mubr.f32.gmra.mrb[0].mxu0 %v3188
  %v3256 = vpop.f32.mrb[0].mxu0
  %v3257 = vadd.f32 0.0, %v3256
  %v3258 = vpop.f32.mrb[0].mxu0
  %3259 = vdwg.mxu0
  %v3260 = vrcp.pop %v3104
  %v3261 = vrcp.pop %v3107
  %v3262 = vmul.f32 %v3181, %v3260
  %v3263 = vmul.f32 %v3257, %v3261
  %v3265 = vsel %vm223, %v3262, 0
  %v3268 = vsel %vm223, %v3263, 0
  %3270 = vmatprep.subr.mxu0 0.0
  %3271 = vmatpush1.msra.mxu0 %v111
  %3272 = vmatprep.subr.mxu0 0.0
  %3273 = vmatpush1.msra.mxu0 0.0
  %3274 = vmatprep.subr.mxu0 0.0
  %3275 = vmatpush1.msra.mxu0 0.0
  %3276 = vmatprep.subr.mxu0 0.0
  %3277 = vmatpush1.msra.mxu0 0.0
  %3278 = vmatprep.subr.mxu0 0.0
  %3279 = vmatpush1.msra.mxu0 0.0
  %3280 = vmatprep.subr.mxu0 0.0
  %3281 = vmatpush1.msra.mxu0 0.0
  %3282 = vmatprep.subr.mxu0 0.0
  %3283 = vmatpush1.msra.mxu0 0.0
  %3284 = vmatprep.subr.mxu0 0.0
  %3285 = vmatpush1.msra.mxu0 0.0
  %3286 = vmatprep.subr.mxu0 0.0
  %3287 = vmatpush1.msra.mxu0 0.0
  %3288 = vmatprep.subr.mxu0 0.0
  %3289 = vmatpush1.msra.mxu0 0.0
  %3290 = vmatprep.subr.mxu0 0.0
  %3291 = vmatpush1.msra.mxu0 0.0
  %3292 = vmatprep.subr.mxu0 0.0
  %3293 = vmatpush1.msra.mxu0 0.0
  %3294 = vmatprep.subr.mxu0 0.0
  %3295 = vmatpush1.msra.mxu0 0.0
  %3296 = vmatprep.subr.mxu0 0.0
  %3297 = vmatpush1.msra.mxu0 0.0
  %3298 = vmatprep.subr.mxu0 0.0
  %3299 = vmatpush1.msra.mxu0 0.0
  %3300 = vmatprep.subr.mxu0 0.0
  %3301 = vmatpush1.msra.mxu0 0.0
  %3302 = vmatprep.subr.mxu0 0.0
  %3303 = vmatpush1.msra.mxu0 0.0
  %3304 = vmatprep.subr.mxu0 0.0
  %3305 = vmatpush1.msra.mxu0 0.0
  %3306 = vmatprep.subr.mxu0 0.0
  %3307 = vmatpush1.msra.mxu0 0.0
  %3308 = vmatprep.subr.mxu0 0.0
  %3309 = vmatpush1.msra.mxu0 0.0
  %3310 = vmatprep.subr.mxu0 0.0
  %3311 = vmatpush1.msra.mxu0 0.0
  %3312 = vmatprep.subr.mxu0 0.0
  %3313 = vmatpush1.msra.mxu0 0.0
  %3314 = vmatprep.subr.mxu0 0.0
  %3315 = vmatpush1.msra.mxu0 0.0
  %3316 = vmatprep.subr.mxu0 0.0
  %3317 = vmatpush1.msra.mxu0 0.0
  %3318 = vmatprep.subr.mxu0 0.0
  %3319 = vmatpush1.msra.mxu0 0.0
  %3320 = vmatprep.subr.mxu0 0.0
  %3321 = vmatpush1.msra.mxu0 0.0
  %3322 = vmatprep.subr.mxu0 0.0
  %3323 = vmatpush1.msra.mxu0 0.0
  %3324 = vmatprep.subr.mxu0 0.0
  %3325 = vmatpush1.msra.mxu0 0.0
  %3326 = vmatprep.subr.mxu0 0.0
  %3327 = vmatpush1.msra.mxu0 0.0
  %3328 = vmatprep.subr.mxu0 0.0
  %3329 = vmatpush1.msra.mxu0 0.0
  %3330 = vmatprep.subr.mxu0 0.0
  %3331 = vmatpush1.msra.mxu0 0.0
  %3332 = vmatprep.subr.mxu0 0.0
  %3333 = vmatpush1.msra.mxu0 0.0
  %3334 = vmatprep.mubr.f32.mxu0 0.0
  %3335 = vmatmul.mubr.f32.gmra.mrb[0].mxu0 %v3265
  %v3336 = vpop.f32.mrb[0].mxu0
  %v3337 = vadd.f32 0.0, %v3336
  %v3338 = vpop.f32.mrb[0].mxu0
  %3339 = vmatprep.mubr.f32.mxu0 0.0
  %3340 = vmatmul.mubr.f32.gmra.mrb[0].mxu0 %v3268
  %v3341 = vpop.f32.mrb[0].mxu0
  %v3342 = vadd.f32 0.0, %v3341
  %v3343 = vpop.f32.mrb[0].mxu0
  %3344 = vdwg.mxu0
  %v3345 = vadd.f32 %v2924, %v3337
  %v3346 = vadd.f32 %v2929, %v3342
  %3347 = vrot.lane.b32.xlu0 %v2015, 104
  %v3348 = vpop.permute.xlu0 %3347
  %3349 = vrot.lane.b32.xlu0 %v2102, 104
  %v3350 = vpop.permute.xlu0 %3349
  %v3351 = vsel %vm223, %v3348, 0
  %v3353 = vsel %vm223, %v3350, 0
  %3355 = vmatprep.subr.mxu0 0.0
  %3356 = vmatpush1.xpose.msra.mxu0 %v3353
  %3357 = vmatprep.subr.mxu0 0.0
  %3358 = vmatpush1.xpose.msra.mxu0 0.0
  %3359 = vmatprep.subr.mxu0 0.0
  %3360 = vmatpush1.xpose.msra.mxu0 0.0
  %3361 = vmatprep.subr.mxu0 0.0
  %3362 = vmatpush1.xpose.msra.mxu0 0.0
  %3363 = vmatprep.subr.mxu0 0.0
  %3364 = vmatpush1.xpose.msra.mxu0 0.0
  %3365 = vmatprep.subr.mxu0 0.0
  %3366 = vmatpush1.xpose.msra.mxu0 0.0
  %3367 = vmatprep.subr.mxu0 0.0
  %3368 = vmatpush1.xpose.msra.mxu0 0.0
  %3369 = vmatprep.subr.mxu0 0.0
  %3370 = vmatpush1.xpose.msra.mxu0 0.0
  %3371 = vmatprep.subr.mxu0 0.0
  %3372 = vmatpush1.xpose.msra.mxu0 0.0
  %3373 = vmatprep.subr.mxu0 0.0
  %3374 = vmatpush1.xpose.msra.mxu0 0.0
  %3375 = vmatprep.subr.mxu0 0.0
  %3376 = vmatpush1.xpose.msra.mxu0 0.0
  %3377 = vmatprep.subr.mxu0 0.0
  %3378 = vmatpush1.xpose.msra.mxu0 0.0
  %3379 = vmatprep.subr.mxu0 0.0
  %3380 = vmatpush1.xpose.msra.mxu0 0.0
  %3381 = vmatprep.subr.mxu0 0.0
  %3382 = vmatpush1.xpose.msra.mxu0 0.0
  %3383 = vmatprep.subr.mxu0 0.0
  %3384 = vmatpush1.xpose.msra.mxu0 0.0
  %3385 = vmatprep.subr.mxu0 0.0
  %3386 = vmatpush1.xpose.msra.mxu0 0.0
  %3387 = vmatprep.subr.mxu0 0.0
  %3388 = vmatpush1.xpose.msra.mxu0 0.0
  %3389 = vmatprep.subr.mxu0 0.0
  %3390 = vmatpush1.xpose.msra.mxu0 0.0
  %3391 = vmatprep.subr.mxu0 0.0
  %3392 = vmatpush1.xpose.msra.mxu0 0.0
  %3393 = vmatprep.subr.mxu0 0.0
  %3394 = vmatpush1.xpose.msra.mxu0 0.0
  %3395 = vmatprep.subr.mxu0 0.0
  %3396 = vmatpush1.xpose.msra.mxu0 0.0
  %3397 = vmatprep.subr.mxu0 0.0
  %3398 = vmatpush1.xpose.msra.mxu0 0.0
  %3399 = vmatprep.subr.mxu0 0.0
  %3400 = vmatpush1.xpose.msra.mxu0 0.0
  %3401 = vmatprep.subr.mxu0 0.0
  %3402 = vmatpush1.xpose.msra.mxu0 0.0
  %3403 = vmatprep.subr.mxu0 0.0
  %3404 = vmatpush1.xpose.msra.mxu0 0.0
  %3405 = vmatprep.subr.mxu0 0.0
  %3406 = vmatpush1.xpose.msra.mxu0 0.0
  %3407 = vmatprep.subr.mxu0 0.0
  %3408 = vmatpush1.xpose.msra.mxu0 0.0
  %3409 = vmatprep.subr.mxu0 0.0
  %3410 = vmatpush1.xpose.msra.mxu0 0.0
  %3411 = vmatprep.subr.mxu0 0.0
  %3412 = vmatpush1.xpose.msra.mxu0 0.0
  %3413 = vmatprep.subr.mxu0 0.0
  %3414 = vmatpush1.xpose.msra.mxu0 0.0
  %3415 = vmatprep.subr.mxu0 0.0
  %3416 = vmatpush1.xpose.msra.mxu0 0.0
  %3417 = vmatprep.subr.mxu0 0.0
  %3418 = vmatpush1.xpose.msra.mxu0 0.0
  %3419 = vmatprep.mubr.f32.mxu0 0.0
  %3420 = vmatmul.mubr.f32.gmra.mrb[0].mxu0 %v3351
  %v3421 = vpop.f32.mrb[0].mxu0
  %v3422 = vadd.f32 0.0, %v3421
  %v3423 = vpop.f32.mrb[0].mxu0
  %3424 = vdwg.mxu0
  %3425 = vrot.lane.b32.xlu0 %v2020, 104
  %v3426 = vpop.permute.xlu0 %3425
  %3427 = vrot.lane.b32.xlu0 %v2107, 104
  %v3428 = vpop.permute.xlu0 %3427
  %v3429 = vsel %vm223, %v3426, 0
  %v3431 = vsel %vm223, %v3428, 0
  %3433 = vmatprep.subr.mxu0 0.0
  %3434 = vmatpush1.xpose.msra.mxu0 %v3431
  %3435 = vmatprep.subr.mxu0 0.0
  %3436 = vmatpush1.xpose.msra.mxu0 0.0
  %3437 = vmatprep.subr.mxu0 0.0
  %3438 = vmatpush1.xpose.msra.mxu0 0.0
  %3439 = vmatprep.subr.mxu0 0.0
  %3440 = vmatpush1.xpose.msra.mxu0 0.0
  %3441 = vmatprep.subr.mxu0 0.0
  %3442 = vmatpush1.xpose.msra.mxu0 0.0
  %3443 = vmatprep.subr.mxu0 0.0
  %3444 = vmatpush1.xpose.msra.mxu0 0.0
  %3445 = vmatprep.subr.mxu0 0.0
  %3446 = vmatpush1.xpose.msra.mxu0 0.0
  %3447 = vmatprep.subr.mxu0 0.0
  %3448 = vmatpush1.xpose.msra.mxu0 0.0
  %3449 = vmatprep.subr.mxu0 0.0
  %3450 = vmatpush1.xpose.msra.mxu0 0.0
  %3451 = vmatprep.subr.mxu0 0.0
  %3452 = vmatpush1.xpose.msra.mxu0 0.0
  %3453 = vmatprep.subr.mxu0 0.0
  %3454 = vmatpush1.xpose.msra.mxu0 0.0
  %3455 = vmatprep.subr.mxu0 0.0
  %3456 = vmatpush1.xpose.msra.mxu0 0.0
  %3457 = vmatprep.subr.mxu0 0.0
  %3458 = vmatpush1.xpose.msra.mxu0 0.0
  %3459 = vmatprep.subr.mxu0 0.0
  %3460 = vmatpush1.xpose.msra.mxu0 0.0
  %3461 = vmatprep.subr.mxu0 0.0
  %3462 = vmatpush1.xpose.msra.mxu0 0.0
  %3463 = vmatprep.subr.mxu0 0.0
  %3464 = vmatpush1.xpose.msra.mxu0 0.0
  %3465 = vmatprep.subr.mxu0 0.0
  %3466 = vmatpush1.xpose.msra.mxu0 0.0
  %3467 = vmatprep.subr.mxu0 0.0
  %3468 = vmatpush1.xpose.msra.mxu0 0.0
  %3469 = vmatprep.subr.mxu0 0.0
  %3470 = vmatpush1.xpose.msra.mxu0 0.0
  %3471 = vmatprep.subr.mxu0 0.0
  %3472 = vmatpush1.xpose.msra.mxu0 0.0
  %3473 = vmatprep.subr.mxu0 0.0
  %3474 = vmatpush1.xpose.msra.mxu0 0.0
  %3475 = vmatprep.subr.mxu0 0.0
  %3476 = vmatpush1.xpose.msra.mxu0 0.0
  %3477 = vmatprep.subr.mxu0 0.0
  %3478 = vmatpush1.xpose.msra.mxu0 0.0
  %3479 = vmatprep.subr.mxu0 0.0
  %3480 = vmatpush1.xpose.msra.mxu0 0.0
  %3481 = vmatprep.subr.mxu0 0.0
  %3482 = vmatpush1.xpose.msra.mxu0 0.0
  %3483 = vmatprep.subr.mxu0 0.0
  %3484 = vmatpush1.xpose.msra.mxu0 0.0
  %3485 = vmatprep.subr.mxu0 0.0
  %3486 = vmatpush1.xpose.msra.mxu0 0.0
  %3487 = vmatprep.subr.mxu0 0.0
  %3488 = vmatpush1.xpose.msra.mxu0 0.0
  %3489 = vmatprep.subr.mxu0 0.0
  %3490 = vmatpush1.xpose.msra.mxu0 0.0
  %3491 = vmatprep.subr.mxu0 0.0
  %3492 = vmatpush1.xpose.msra.mxu0 0.0
  %3493 = vmatprep.subr.mxu0 0.0
  %3494 = vmatpush1.xpose.msra.mxu0 0.0
  %3495 = vmatprep.subr.mxu0 0.0
  %3496 = vmatpush1.xpose.msra.mxu0 0.0
  %3497 = vmatprep.mubr.f32.mxu0 0.0
  %3498 = vmatmul.mubr.f32.gmra.mrb[0].mxu0 %v3429
  %v3499 = vpop.f32.mrb[0].mxu0
  %v3500 = vadd.f32 0.0, %v3499
  %v3501 = vpop.f32.mrb[0].mxu0
  %3502 = vdwg.mxu0
  %v3503 = vmul.f32 %v3422, 0.35355338
  %v3504 = vmul.f32 %v3500, 0.35355338
  %v3505 = vsel %vm223, %v3503, -inf
  %3506 = vmax.xlane.f32.xlu0 %v3505
  %v3507 = vpop.xlane.xlu0 %3506
  %v3508 = vsel %vm223, %v3504, -inf
  %3509 = vmax.xlane.f32.xlu0 %v3508
  %v3510 = vpop.xlane.xlu0 %3509
  %v3511 = vsub.f32 %v3503, %v3507
  %v3512 = vsub.f32 %v3504, %v3510
  %v3513 = vmul.f32 %v3511, 1.442695
  %v3514 = vpow.pop %v3513
  %v3515 = vmul.f32 %v3512, 1.442695
  %v3516 = vpow.pop %v3515
  %v3517 = vsel %vm223, %v3514, 0.0
  %3518 = vadd.xlane.f32.xlu0 %v3517
  %v3519 = vpop.xlane.xlu0 %3518
  %v3520 = vsel %vm223, %v3516, 0.0
  %3521 = vadd.xlane.f32.xlu0 %v3520
  %v3522 = vpop.xlane.xlu0 %3521
  %3523 = vrot.lane.b32.xlu0 %v2102, 72
  %v3524 = vpop.permute.xlu0 %3523
  %v3527 = vsel %vm223, %v3514, 0
  %3529 = vmatprep.subr.mxu0 0.0
  %3530 = vmatpush1.msra.mxu0 %v3524
  %3531 = vmatprep.subr.mxu0 0.0
  %3532 = vmatpush1.msra.mxu0 0.0
  %3533 = vmatprep.subr.mxu0 0.0
  %3534 = vmatpush1.msra.mxu0 0.0
  %3535 = vmatprep.subr.mxu0 0.0
  %3536 = vmatpush1.msra.mxu0 0.0
  %3537 = vmatprep.subr.mxu0 0.0
  %3538 = vmatpush1.msra.mxu0 0.0
  %3539 = vmatprep.subr.mxu0 0.0
  %3540 = vmatpush1.msra.mxu0 0.0
  %3541 = vmatprep.subr.mxu0 0.0
  %3542 = vmatpush1.msra.mxu0 0.0
  %3543 = vmatprep.subr.mxu0 0.0
  %3544 = vmatpush1.msra.mxu0 0.0
  %3545 = vmatprep.subr.mxu0 0.0
  %3546 = vmatpush1.msra.mxu0 0.0
  %3547 = vmatprep.subr.mxu0 0.0
  %3548 = vmatpush1.msra.mxu0 0.0
  %3549 = vmatprep.subr.mxu0 0.0
  %3550 = vmatpush1.msra.mxu0 0.0
  %3551 = vmatprep.subr.mxu0 0.0
  %3552 = vmatpush1.msra.mxu0 0.0
  %3553 = vmatprep.subr.mxu0 0.0
  %3554 = vmatpush1.msra.mxu0 0.0
  %3555 = vmatprep.subr.mxu0 0.0
  %3556 = vmatpush1.msra.mxu0 0.0
  %3557 = vmatprep.subr.mxu0 0.0
  %3558 = vmatpush1.msra.mxu0 0.0
  %3559 = vmatprep.subr.mxu0 0.0
  %3560 = vmatpush1.msra.mxu0 0.0
  %3561 = vmatprep.subr.mxu0 0.0
  %3562 = vmatpush1.msra.mxu0 0.0
  %3563 = vmatprep.subr.mxu0 0.0
  %3564 = vmatpush1.msra.mxu0 0.0
  %3565 = vmatprep.subr.mxu0 0.0
  %3566 = vmatpush1.msra.mxu0 0.0
  %3567 = vmatprep.subr.mxu0 0.0
  %3568 = vmatpush1.msra.mxu0 0.0
  %3569 = vmatprep.subr.mxu0 0.0
  %3570 = vmatpush1.msra.mxu0 0.0
  %3571 = vmatprep.subr.mxu0 0.0
  %3572 = vmatpush1.msra.mxu0 0.0
  %3573 = vmatprep.subr.mxu0 0.0
  %3574 = vmatpush1.msra.mxu0 0.0
  %3575 = vmatprep.subr.mxu0 0.0
  %3576 = vmatpush1.msra.mxu0 0.0
  %3577 = vmatprep.subr.mxu0 0.0
  %3578 = vmatpush1.msra.mxu0 0.0
  %3579 = vmatprep.subr.mxu0 0.0
  %3580 = vmatpush1.msra.mxu0 0.0
  %3581 = vmatprep.subr.mxu0 0.0
  %3582 = vmatpush1.msra.mxu0 0.0
  %3583 = vmatprep.subr.mxu0 0.0
  %3584 = vmatpush1.msra.mxu0 0.0
  %3585 = vmatprep.subr.mxu0 0.0
  %3586 = vmatpush1.msra.mxu0 0.0
  %3587 = vmatprep.subr.mxu0 0.0
  %3588 = vmatpush1.msra.mxu0 0.0
  %3589 = vmatprep.subr.mxu0 0.0
  %3590 = vmatpush1.msra.mxu0 0.0
  %3591 = vmatprep.subr.mxu0 0.0
  %3592 = vmatpush1.msra.mxu0 0.0
  %3593 = vmatprep.mubr.f32.mxu0 0.0
  %3594 = vmatmul.mubr.f32.gmra.mrb[0].mxu0 %v3527
  %v3595 = vpop.f32.mrb[0].mxu0
  %v3596 = vadd.f32 0.0, %v3595
  %v3597 = vpop.f32.mrb[0].mxu0
  %3598 = vdwg.mxu0
  %3599 = vrot.lane.b32.xlu0 %v2107, 72
  %v3600 = vpop.permute.xlu0 %3599
  %v3603 = vsel %vm223, %v3516, 0
  %3605 = vmatprep.subr.mxu0 0.0
  %3606 = vmatpush1.msra.mxu0 %v3600
  %3607 = vmatprep.subr.mxu0 0.0
  %3608 = vmatpush1.msra.mxu0 0.0
  %3609 = vmatprep.subr.mxu0 0.0
  %3610 = vmatpush1.msra.mxu0 0.0
  %3611 = vmatprep.subr.mxu0 0.0
  %3612 = vmatpush1.msra.mxu0 0.0
  %3613 = vmatprep.subr.mxu0 0.0
  %3614 = vmatpush1.msra.mxu0 0.0
  %3615 = vmatprep.subr.mxu0 0.0
  %3616 = vmatpush1.msra.mxu0 0.0
  %3617 = vmatprep.subr.mxu0 0.0
  %3618 = vmatpush1.msra.mxu0 0.0
  %3619 = vmatprep.subr.mxu0 0.0
  %3620 = vmatpush1.msra.mxu0 0.0
  %3621 = vmatprep.subr.mxu0 0.0
  %3622 = vmatpush1.msra.mxu0 0.0
  %3623 = vmatprep.subr.mxu0 0.0
  %3624 = vmatpush1.msra.mxu0 0.0
  %3625 = vmatprep.subr.mxu0 0.0
  %3626 = vmatpush1.msra.mxu0 0.0
  %3627 = vmatprep.subr.mxu0 0.0
  %3628 = vmatpush1.msra.mxu0 0.0
  %3629 = vmatprep.subr.mxu0 0.0
  %3630 = vmatpush1.msra.mxu0 0.0
  %3631 = vmatprep.subr.mxu0 0.0
  %3632 = vmatpush1.msra.mxu0 0.0
  %3633 = vmatprep.subr.mxu0 0.0
  %3634 = vmatpush1.msra.mxu0 0.0
  %3635 = vmatprep.subr.mxu0 0.0
  %3636 = vmatpush1.msra.mxu0 0.0
  %3637 = vmatprep.subr.mxu0 0.0
  %3638 = vmatpush1.msra.mxu0 0.0
  %3639 = vmatprep.subr.mxu0 0.0
  %3640 = vmatpush1.msra.mxu0 0.0
  %3641 = vmatprep.subr.mxu0 0.0
  %3642 = vmatpush1.msra.mxu0 0.0
  %3643 = vmatprep.subr.mxu0 0.0
  %3644 = vmatpush1.msra.mxu0 0.0
  %3645 = vmatprep.subr.mxu0 0.0
  %3646 = vmatpush1.msra.mxu0 0.0
  %3647 = vmatprep.subr.mxu0 0.0
  %3648 = vmatpush1.msra.mxu0 0.0
  %3649 = vmatprep.subr.mxu0 0.0
  %3650 = vmatpush1.msra.mxu0 0.0
  %3651 = vmatprep.subr.mxu0 0.0
  %3652 = vmatpush1.msra.mxu0 0.0
  %3653 = vmatprep.subr.mxu0 0.0
  %3654 = vmatpush1.msra.mxu0 0.0
  %3655 = vmatprep.subr.mxu0 0.0
  %3656 = vmatpush1.msra.mxu0 0.0
  %3657 = vmatprep.subr.mxu0 0.0
  %3658 = vmatpush1.msra.mxu0 0.0
  %3659 = vmatprep.subr.mxu0 0.0
  %3660 = vmatpush1.msra.mxu0 0.0
  %3661 = vmatprep.subr.mxu0 0.0
  %3662 = vmatpush1.msra.mxu0 0.0
  %3663 = vmatprep.subr.mxu0 0.0
  %3664 = vmatpush1.msra.mxu0 0.0
  %3665 = vmatprep.subr.mxu0 0.0
  %3666 = vmatpush1.msra.mxu0 0.0
  %3667 = vmatprep.subr.mxu0 0.0
  %3668 = vmatpush1.msra.mxu0 0.0
  %3669 = vmatprep.mubr.f32.mxu0 0.0
  %3670 = vmatmul.mubr.f32.gmra.mrb[0].mxu0 %v3603
  %v3671 = vpop.f32.mrb[0].mxu0
  %v3672 = vadd.f32 0.0, %v3671
  %v3673 = vpop.f32.mrb[0].mxu0
  %3674 = vdwg.mxu0
  %v3675 = vrcp.pop %v3519
  %v3676 = vrcp.pop %v3522
  %v3677 = vmul.f32 %v3596, %v3675
  %v3678 = vmul.f32 %v3672, %v3676
  %v3680 = vsel %vm223, %v3677, 0
  %v3683 = vsel %vm223, %v3678, 0
  %3685 = vmatprep.subr.mxu0 0.0
  %3686 = vmatpush1.msra.mxu0 %v112
  %3687 = vmatprep.subr.mxu0 0.0
  %3688 = vmatpush1.msra.mxu0 0.0
  %3689 = vmatprep.subr.mxu0 0.0
  %3690 = vmatpush1.msra.mxu0 0.0
  %3691 = vmatprep.subr.mxu0 0.0
  %3692 = vmatpush1.msra.mxu0 0.0
  %3693 = vmatprep.subr.mxu0 0.0
  %3694 = vmatpush1.msra.mxu0 0.0
  %3695 = vmatprep.subr.mxu0 0.0
  %3696 = vmatpush1.msra.mxu0 0.0
  %3697 = vmatprep.subr.mxu0 0.0
  %3698 = vmatpush1.msra.mxu0 0.0
  %3699 = vmatprep.subr.mxu0 0.0
  %3700 = vmatpush1.msra.mxu0 0.0
  %3701 = vmatprep.subr.mxu0 0.0
  %3702 = vmatpush1.msra.mxu0 0.0
  %3703 = vmatprep.subr.mxu0 0.0
  %3704 = vmatpush1.msra.mxu0 0.0
  %3705 = vmatprep.subr.mxu0 0.0
  %3706 = vmatpush1.msra.mxu0 0.0
  %3707 = vmatprep.subr.mxu0 0.0
  %3708 = vmatpush1.msra.mxu0 0.0
  %3709 = vmatprep.subr.mxu0 0.0
  %3710 = vmatpush1.msra.mxu0 0.0
  %3711 = vmatprep.subr.mxu0 0.0
  %3712 = vmatpush1.msra.mxu0 0.0
  %3713 = vmatprep.subr.mxu0 0.0
  %3714 = vmatpush1.msra.mxu0 0.0
  %3715 = vmatprep.subr.mxu0 0.0
  %3716 = vmatpush1.msra.mxu0 0.0
  %3717 = vmatprep.subr.mxu0 0.0
  %3718 = vmatpush1.msra.mxu0 0.0
  %3719 = vmatprep.subr.mxu0 0.0
  %3720 = vmatpush1.msra.mxu0 0.0
  %3721 = vmatprep.subr.mxu0 0.0
  %3722 = vmatpush1.msra.mxu0 0.0
  %3723 = vmatprep.subr.mxu0 0.0
  %3724 = vmatpush1.msra.mxu0 0.0
  %3725 = vmatprep.subr.mxu0 0.0
  %3726 = vmatpush1.msra.mxu0 0.0
  %3727 = vmatprep.subr.mxu0 0.0
  %3728 = vmatpush1.msra.mxu0 0.0
  %3729 = vmatprep.subr.mxu0 0.0
  %3730 = vmatpush1.msra.mxu0 0.0
  %3731 = vmatprep.subr.mxu0 0.0
  %3732 = vmatpush1.msra.mxu0 0.0
  %3733 = vmatprep.subr.mxu0 0.0
  %3734 = vmatpush1.msra.mxu0 0.0
  %3735 = vmatprep.subr.mxu0 0.0
  %3736 = vmatpush1.msra.mxu0 0.0
  %3737 = vmatprep.subr.mxu0 0.0
  %3738 = vmatpush1.msra.mxu0 0.0
  %3739 = vmatprep.subr.mxu0 0.0
  %3740 = vmatpush1.msra.mxu0 0.0
  %3741 = vmatprep.subr.mxu0 0.0
  %3742 = vmatpush1.msra.mxu0 0.0
  %3743 = vmatprep.subr.mxu0 0.0
  %3744 = vmatpush1.msra.mxu0 0.0
  %3745 = vmatprep.subr.mxu0 0.0
  %3746 = vmatpush1.msra.mxu0 0.0
  %3747 = vmatprep.subr.mxu0 0.0
  %3748 = vmatpush1.msra.mxu0 0.0
  %3749 = vmatprep.mubr.f32.mxu0 0.0
  %3750 = vmatmul.mubr.f32.gmra.mrb[0].mxu0 %v3680
  %v3751 = vpop.f32.mrb[0].mxu0
  %v3752 = vadd.f32 0.0, %v3751
  %v3753 = vpop.f32.mrb[0].mxu0
  %3754 = vmatprep.mubr.f32.mxu0 0.0
  %3755 = vmatmul.mubr.f32.gmra.mrb[0].mxu0 %v3683
  %v3756 = vpop.f32.mrb[0].mxu0
  %v3757 = vadd.f32 0.0, %v3756
  %v3758 = vpop.f32.mrb[0].mxu0
  %3759 = vdwg.mxu0
  %v3760 = vadd.f32 %v3345, %v3752
  %v3761 = vadd.f32 %v3346, %v3757
  %v3763 = vlaneseq
  %v3764 = vshrl.u32 %v3763, 7
  %v3765 = vsub.s32 0, %v3764
  %v3766 = vrot.slane %v113, %v3765
  %v3768 = vadd.f32 %v3760, %v3766
  %v3769 = vadd.f32 %v3761, %v3766
  %v3770 = vadd.f32 %v1934, %v3768
  %v3771 = vadd.f32 %v1935, %v3769
  %v3772 = vsel %vm138, %v3770, 0.0
  %3773 = vadd.xlane.f32.xlu0 %v3772
  %v3774 = vpop.xlane.xlu0 %3773
  %v3775 = vsel %vm138, %v3771, 0.0
  %3776 = vadd.xlane.f32.xlu0 %v3775
  %v3777 = vpop.xlane.xlu0 %3776
  %v3778 = vmul.f32 %v3774, %v1899
  %v3779 = vmul.f32 %v3777, %v1899
  %v3780 = vsub.f32 %v3770, %v3778
  %v3781 = vsub.f32 %v3771, %v3779
  %v3782 = vmul.f32 %v3780, %v3780
  %v3783 = vmul.f32 %v3781, %v3781
  %v3784 = vsel %vm138, %v3782, 0.0
  %3785 = vadd.xlane.f32.xlu0 %v3784
  %v3786 = vpop.xlane.xlu0 %3785
  %v3787 = vsel %vm138, %v3783, 0.0
  %3788 = vadd.xlane.f32.xlu0 %v3787
  %v3789 = vpop.xlane.xlu0 %3788
  %v3790 = vmul.f32 %v3786, %v1899
  %v3791 = vmul.f32 %v3789, %v1899
  %v3792 = vadd.f32 %v3790, 1e-05
  %v3793 = vadd.f32 %v3791, 1e-05
  %v3794 = vrsqrt.pop %v3792
  %v3795 = vrsqrt.pop %v3793
  %v3796 = vmul.f32 %v3780, %v3794
  %v3797 = vmul.f32 %v3781, %v3795
  %v3799 = vlaneseq
  %v3800 = vshrl.u32 %v3799, 7
  %v3801 = vsub.s32 0, %v3800
  %v3802 = vrot.slane %v114, %v3801
  %v3804 = vmul.f32 %v3796, %v3802
  %v3805 = vmul.f32 %v3797, %v3802
  %v3807 = vlaneseq
  %v3808 = vshrl.u32 %v3807, 7
  %v3809 = vsub.s32 0, %v3808
  %v3810 = vrot.slane %v115, %v3809
  %v3812 = vadd.f32 %v3804, %v3810
  %v3813 = vadd.f32 %v3805, %v3810
  %v3815 = vlaneseq
  %v3816 = vshrl.u32 %v3815, 7
  %v3817 = vsub.s32 0, %v3816
  %v3818 = vrot.slane %v120, %v3817
  %v3821 = vsel %vm138, %v3812, 0
  %v3824 = vsel %vm138, %v3813, 0
  %3826 = vmatprep.subr.mxu0 0.0
  %3827 = vmatpush1.msra.mxu0 %v116
  %3828 = vmatprep.subr.mxu0 0.0
  %3829 = vmatpush1.msra.mxu0 %v117
  %3830 = vmatprep.subr.mxu0 0.0
  %3831 = vmatpush1.msra.mxu0 %v118
  %3832 = vmatprep.subr.mxu0 0.0
  %3833 = vmatpush1.msra.mxu0 %v119
  %3834 = vmatprep.subr.mxu0 0.0
  %3835 = vmatpush1.msra.mxu0 0.0
  %3836 = vmatprep.subr.mxu0 0.0
  %3837 = vmatpush1.msra.mxu0 0.0
  %3838 = vmatprep.subr.mxu0 0.0
  %3839 = vmatpush1.msra.mxu0 0.0
  %3840 = vmatprep.subr.mxu0 0.0
  %3841 = vmatpush1.msra.mxu0 0.0
  %3842 = vmatprep.subr.mxu0 0.0
  %3843 = vmatpush1.msra.mxu0 0.0
  %3844 = vmatprep.subr.mxu0 0.0
  %3845 = vmatpush1.msra.mxu0 0.0
  %3846 = vmatprep.subr.mxu0 0.0
  %3847 = vmatpush1.msra.mxu0 0.0
  %3848 = vmatprep.subr.mxu0 0.0
  %3849 = vmatpush1.msra.mxu0 0.0
  %3850 = vmatprep.subr.mxu0 0.0
  %3851 = vmatpush1.msra.mxu0 0.0
  %3852 = vmatprep.subr.mxu0 0.0
  %3853 = vmatpush1.msra.mxu0 0.0
  %3854 = vmatprep.subr.mxu0 0.0
  %3855 = vmatpush1.msra.mxu0 0.0
  %3856 = vmatprep.subr.mxu0 0.0
  %3857 = vmatpush1.msra.mxu0 0.0
  %3858 = vmatprep.subr.mxu0 0.0
  %3859 = vmatpush1.msra.mxu0 0.0
  %3860 = vmatprep.subr.mxu0 0.0
  %3861 = vmatpush1.msra.mxu0 0.0
  %3862 = vmatprep.subr.mxu0 0.0
  %3863 = vmatpush1.msra.mxu0 0.0
  %3864 = vmatprep.subr.mxu0 0.0
  %3865 = vmatpush1.msra.mxu0 0.0
  %3866 = vmatprep.subr.mxu0 0.0
  %3867 = vmatpush1.msra.mxu0 0.0
  %3868 = vmatprep.subr.mxu0 0.0
  %3869 = vmatpush1.msra.mxu0 0.0
  %3870 = vmatprep.subr.mxu0 0.0
  %3871 = vmatpush1.msra.mxu0 0.0
  %3872 = vmatprep.subr.mxu0 0.0
  %3873 = vmatpush1.msra.mxu0 0.0
  %3874 = vmatprep.subr.mxu0 0.0
  %3875 = vmatpush1.msra.mxu0 0.0
  %3876 = vmatprep.subr.mxu0 0.0
  %3877 = vmatpush1.msra.mxu0 0.0
  %3878 = vmatprep.subr.mxu0 0.0
  %3879 = vmatpush1.msra.mxu0 0.0
  %3880 = vmatprep.subr.mxu0 0.0
  %3881 = vmatpush1.msra.mxu0 0.0
  %3882 = vmatprep.subr.mxu0 0.0
  %3883 = vmatpush1.msra.mxu0 0.0
  %3884 = vmatprep.subr.mxu0 0.0
  %3885 = vmatpush1.msra.mxu0 0.0
  %3886 = vmatprep.subr.mxu0 0.0
  %3887 = vmatpush1.msra.mxu0 0.0
  %3888 = vmatprep.subr.mxu0 0.0
  %3889 = vmatpush1.msra.mxu0 0.0
  %3890 = vmatprep.mubr.f32.mxu0 0.0
  %3891 = vmatmul.mubr.f32.gmra.mrb[0].mxu0 %v3821
  %v3892 = vpop.f32.mrb[0].mxu0
  %v3893 = vadd.f32 %v3818, %v3892
  %v3894 = vpop.f32.mrb[0].mxu0
  %3895 = vmatprep.mubr.f32.mxu0 0.0
  %3896 = vmatmul.mubr.f32.gmra.mrb[0].mxu0 %v3824
  %v3897 = vpop.f32.mrb[0].mxu0
  %v3898 = vadd.f32 %v3818, %v3897
  %v3899 = vpop.f32.mrb[0].mxu0
  %3900 = vdwg.mxu0
  %v3901 = vmax.f32 %v3893, 0.0
  %v3902 = vmax.f32 %v3898, 0.0
  %v3904 = vlaneseq
  %v3905 = vshrl.u32 %v3904, 7
  %v3906 = vsub.s32 0, %v3905
  %v3907 = vrot.slane %v129, %v3906
  %vm3909 = vcmask 523264
  %v3911 = vsel %vm3909, %v3901, 0
  %v3914 = vsel %vm3909, %v3902, 0
  %3916 = vmatprep.subr.mxu0 0.0
  %3917 = vmatpush1.msra.mxu0 %v121
  %3918 = vmatprep.subr.mxu0 0.0
  %3919 = vmatpush1.msra.mxu0 %v122
  %3920 = vmatprep.subr.mxu0 0.0
  %3921 = vmatpush1.msra.mxu0 %v123
  %3922 = vmatprep.subr.mxu0 0.0
  %3923 = vmatpush1.msra.mxu0 %v124
  %3924 = vmatprep.subr.mxu0 0.0
  %3925 = vmatpush1.msra.mxu0 %v125
  %3926 = vmatprep.subr.mxu0 0.0
  %3927 = vmatpush1.msra.mxu0 %v126
  %3928 = vmatprep.subr.mxu0 0.0
  %3929 = vmatpush1.msra.mxu0 %v127
  %3930 = vmatprep.subr.mxu0 0.0
  %3931 = vmatpush1.msra.mxu0 %v128
  %3932 = vmatprep.subr.mxu0 0.0
  %3933 = vmatpush1.msra.mxu0 0.0
  %3934 = vmatprep.subr.mxu0 0.0
  %3935 = vmatpush1.msra.mxu0 0.0
  %3936 = vmatprep.subr.mxu0 0.0
  %3937 = vmatpush1.msra.mxu0 0.0
  %3938 = vmatprep.subr.mxu0 0.0
  %3939 = vmatpush1.msra.mxu0 0.0
  %3940 = vmatprep.subr.mxu0 0.0
  %3941 = vmatpush1.msra.mxu0 0.0
  %3942 = vmatprep.subr.mxu0 0.0
  %3943 = vmatpush1.msra.mxu0 0.0
  %3944 = vmatprep.subr.mxu0 0.0
  %3945 = vmatpush1.msra.mxu0 0.0
  %3946 = vmatprep.subr.mxu0 0.0
  %3947 = vmatpush1.msra.mxu0 0.0
  %3948 = vmatprep.subr.mxu0 0.0
  %3949 = vmatpush1.msra.mxu0 0.0
  %3950 = vmatprep.subr.mxu0 0.0
  %3951 = vmatpush1.msra.mxu0 0.0
  %3952 = vmatprep.subr.mxu0 0.0
  %3953 = vmatpush1.msra.mxu0 0.0
  %3954 = vmatprep.subr.mxu0 0.0
  %3955 = vmatpush1.msra.mxu0 0.0
  %3956 = vmatprep.subr.mxu0 0.0
  %3957 = vmatpush1.msra.mxu0 0.0
  %3958 = vmatprep.subr.mxu0 0.0
  %3959 = vmatpush1.msra.mxu0 0.0
  %3960 = vmatprep.subr.mxu0 0.0
  %3961 = vmatpush1.msra.mxu0 0.0
  %3962 = vmatprep.subr.mxu0 0.0
  %3963 = vmatpush1.msra.mxu0 0.0
  %3964 = vmatprep.subr.mxu0 0.0
  %3965 = vmatpush1.msra.mxu0 0.0
  %3966 = vmatprep.subr.mxu0 0.0
  %3967 = vmatpush1.msra.mxu0 0.0
  %3968 = vmatprep.subr.mxu0 0.0
  %3969 = vmatpush1.msra.mxu0 0.0
  %3970 = vmatprep.subr.mxu0 0.0
  %3971 = vmatpush1.msra.mxu0 0.0
  %3972 = vmatprep.subr.mxu0 0.0
  %3973 = vmatpush1.msra.mxu0 0.0
  %3974 = vmatprep.subr.mxu0 0.0
  %3975 = vmatpush1.msra.mxu0 0.0
  %3976 = vmatprep.subr.mxu0 0.0
  %3977 = vmatpush1.msra.mxu0 0.0
  %3978 = vmatprep.subr.mxu0 0.0
  %3979 = vmatpush1.msra.mxu0 0.0
  %3980 = vmatprep.mubr.f32.mxu0 0.0
  %3981 = vmatmul.mubr.f32.gmra.mrb[0].mxu0 %v3911
  %v3982 = vpop.f32.mrb[0].mxu0
  %v3983 = vadd.f32 %v3907, %v3982
  %v3984 = vpop.f32.mrb[0].mxu0
  %3985 = vmatprep.mubr.f32.mxu0 0.0
  %3986 = vmatmul.mubr.f32.gmra.mrb[0].mxu0 %v3914
  %v3987 = vpop.f32.mrb[0].mxu0
  %v3988 = vadd.f32 %v3907, %v3987
  %v3989 = vpop.f32.mrb[0].mxu0
  %3990 = vdwg.mxu0
  %v3991 = vadd.f32 %v3812, %v3983
  %v3992 = vadd.f32 %v3813, %v3988
  %v3993 = vsel %vm138, %v3991, 0.0
  %3994 = vadd.xlane.f32.xlu0 %v3993
  %v3995 = vpop.xlane.xlu0 %3994
  %v3996 = vsel %vm138, %v3992, 0.0
  %3997 = vadd.xlane.f32.xlu0 %v3996
  %v3998 = vpop.xlane.xlu0 %3997
  %v3999 = vmul.f32 %v3995, %v1899
  %v4000 = vmul.f32 %v3998, %v1899
  %v4001 = vsub.f32 %v3991, %v3999
  %v4002 = vsub.f32 %v3992, %v4000
  %v4003 = vmul.f32 %v4001, %v4001
  %v4004 = vmul.f32 %v4002, %v4002
  %v4005 = vsel %vm138, %v4003, 0.0
  %4006 = vadd.xlane.f32.xlu0 %v4005
  %v4007 = vpop.xlane.xlu0 %4006
  %v4008 = vsel %vm138, %v4004, 0.0
  %4009 = vadd.xlane.f32.xlu0 %v4008
  %v4010 = vpop.xlane.xlu0 %4009
  %v4011 = vmul.f32 %v4007, %v1899
  %v4012 = vmul.f32 %v4010, %v1899
  %v4013 = vadd.f32 %v4011, 1e-05
  %v4014 = vadd.f32 %v4012, 1e-05
  %v4015 = vrsqrt.pop %v4013
  %v4016 = vrsqrt.pop %v4014
  %v4017 = vmul.f32 %v4001, %v4015
  %v4018 = vmul.f32 %v4002, %v4016
  %v4020 = vlaneseq
  %v4021 = vshrl.u32 %v4020, 7
  %v4022 = vsub.s32 0, %v4021
  %v4023 = vrot.slane %v130, %v4022
  %v4025 = vmul.f32 %v4017, %v4023
  %v4026 = vmul.f32 %v4018, %v4023
  %v4028 = vlaneseq
  %v4029 = vshrl.u32 %v4028, 7
  %v4030 = vsub.s32 0, %v4029
  %v4031 = vrot.slane %v131, %v4030
  %v4033 = vadd.f32 %v4025, %v4031
  %v4034 = vadd.f32 %v4026, %v4031
  %s4035 = scalar_lea.vmem %s2, 32
  %v4036 = vld [vmem:[%s4035] sm:$0xff]
  %v4037 = vld [vmem:[%s4035 + $0x8] sm:$0xff]
  %v4038 = vld [vmem:[%s4035 + $0x10] sm:$0xff]
  %v4039 = vld [vmem:[%s4035 + $0x18] sm:$0xff]
  %s4040 = scalar_lea.vmem %s3, 1
  %v4041 = vld [vmem:[%s4040] sm:$0x1]
  %s4042 = scalar_lea.vmem %s4, 32
  %v4043 = vld [vmem:[%s4042] sm:$0xff]
  %v4044 = vld [vmem:[%s4042 + $0x8] sm:$0xff]
  %v4045 = vld [vmem:[%s4042 + $0x10] sm:$0xff]
  %v4046 = vld [vmem:[%s4042 + $0x18] sm:$0xff]
  %s4047 = scalar_lea.vmem %s5, 1
  %v4048 = vld [vmem:[%s4047] sm:$0x1]
  %s4049 = scalar_lea.vmem %s6, 1
  %v4050 = vld [vmem:[%s4049] sm:$0x1]
  %s4051 = scalar_lea.vmem %s7, 1
  %v4052 = vld [vmem:[%s4051] sm:$0x1]
  %s4053 = scalar_lea.vmem %s8, 32
  %v4054 = vld [vmem:[%s4053] sm:$0xff]
  %v4055 = vld [vmem:[%s4053 + $0x8] sm:$0xff]
  %v4056 = vld [vmem:[%s4053 + $0x10] sm:$0xff]
  %v4057 = vld [vmem:[%s4053 + $0x18] sm:$0xff]
  %s4058 = scalar_lea.vmem %s9, 1
  %v4059 = vld [vmem:[%s4058] sm:$0x1]
  %s4060 = scalar_lea.vmem %s10, 32
  %v4061 = vld [vmem:[%s4060] sm:$0xff]
  %v4062 = vld [vmem:[%s4060 + $0x8] sm:$0xff]
  %v4063 = vld [vmem:[%s4060 + $0x10] sm:$0xff]
  %v4064 = vld [vmem:[%s4060 + $0x18] sm:$0xff]
  %s4065 = scalar_lea.vmem %s11, 1
  %v4066 = vld [vmem:[%s4065] sm:$0x1]
  %s4067 = scalar_lea.vmem %s12, 32
  %v4068 = vld [vmem:[%s4067] sm:$0xff]
  %v4069 = vld [vmem:[%s4067 + $0x8] sm:$0xff]
  %v4070 = vld [vmem:[%s4067 + $0x10] sm:$0xff]
  %v4071 = vld [vmem:[%s4067 + $0x18] sm:$0xff]
  %s4072 = scalar_lea.vmem %s13, 1
  %v4073 = vld [vmem:[%s4072] sm:$0x1]
  %s4074 = scalar_lea.vmem %s14, 1
  %v4075 = vld [vmem:[%s4074] sm:$0x1]
  %s4076 = scalar_lea.vmem %s15, 1
  %v4077 = vld [vmem:[%s4076] sm:$0x1]
  %s4078 = scalar_lea.vmem %s16, 32
  %v4079 = vld [vmem:[%s4078] sm:$0xff]
  %v4080 = vld [vmem:[%s4078 + $0x8] sm:$0xff]
  %v4081 = vld [vmem:[%s4078 + $0x10] sm:$0xff]
  %v4082 = vld [vmem:[%s4078 + $0x18] sm:$0xff]
  %s4083 = scalar_lea.vmem %s17, 1
  %v4084 = vld [vmem:[%s4083] sm:$0x1]
  %s4085 = scalar_lea.vmem %s18, 64
  %v4086 = vld [vmem:[%s4085] sm:$0xff]
  %v4087 = vld [vmem:[%s4085 + $0x8] sm:$0xff]
  %v4088 = vld [vmem:[%s4085 + $0x10] sm:$0xff]
  %v4089 = vld [vmem:[%s4085 + $0x18] sm:$0xff]
  %v4090 = vld [vmem:[%s4085 + $0x20] sm:$0xff]
  %v4091 = vld [vmem:[%s4085 + $0x28] sm:$0xff]
  %v4092 = vld [vmem:[%s4085 + $0x30] sm:$0xff]
  %v4093 = vld [vmem:[%s4085 + $0x38] sm:$0xff]
  %s4094 = scalar_lea.vmem %s19, 1
  %v4095 = vld [vmem:[%s4094] sm:$0x1]
  %s4096 = scalar_lea.vmem %s20, 1
  %v4097 = vld [vmem:[%s4096] sm:$0x1]
  %s4098 = scalar_lea.vmem %s21, 1
  %v4099 = vld [vmem:[%s4098] sm:$0x1]
  %v4101 = vlaneseq
  %v4102 = vshrl.u32 %v4101, 7
  %v4103 = vsub.s32 0, %v4102
  %v4104 = vrot.slane %v4041, %v4103
  %v4107 = vsel %vm138, %v4033, 0
  %v4110 = vsel %vm138, %v4034, 0
  %4112 = vmatprep.subr.mxu0 0.0
  %4113 = vmatpush1.msra.mxu0 %v4036
  %4114 = vmatprep.subr.mxu0 0.0
  %4115 = vmatpush1.msra.mxu0 %v4037
  %4116 = vmatprep.subr.mxu0 0.0
  %4117 = vmatpush1.msra.mxu0 %v4038
  %4118 = vmatprep.subr.mxu0 0.0
  %4119 = vmatpush1.msra.mxu0 %v4039
  %4120 = vmatprep.subr.mxu0 0.0
  %4121 = vmatpush1.msra.mxu0 0.0
  %4122 = vmatprep.subr.mxu0 0.0
  %4123 = vmatpush1.msra.mxu0 0.0
  %4124 = vmatprep.subr.mxu0 0.0
  %4125 = vmatpush1.msra.mxu0 0.0
  %4126 = vmatprep.subr.mxu0 0.0
  %4127 = vmatpush1.msra.mxu0 0.0
  %4128 = vmatprep.subr.mxu0 0.0
  %4129 = vmatpush1.msra.mxu0 0.0
  %4130 = vmatprep.subr.mxu0 0.0
  %4131 = vmatpush1.msra.mxu0 0.0
  %4132 = vmatprep.subr.mxu0 0.0
  %4133 = vmatpush1.msra.mxu0 0.0
  %4134 = vmatprep.subr.mxu0 0.0
  %4135 = vmatpush1.msra.mxu0 0.0
  %4136 = vmatprep.subr.mxu0 0.0
  %4137 = vmatpush1.msra.mxu0 0.0
  %4138 = vmatprep.subr.mxu0 0.0
  %4139 = vmatpush1.msra.mxu0 0.0
  %4140 = vmatprep.subr.mxu0 0.0
  %4141 = vmatpush1.msra.mxu0 0.0
  %4142 = vmatprep.subr.mxu0 0.0
  %4143 = vmatpush1.msra.mxu0 0.0
  %4144 = vmatprep.subr.mxu0 0.0
  %4145 = vmatpush1.msra.mxu0 0.0
  %4146 = vmatprep.subr.mxu0 0.0
  %4147 = vmatpush1.msra.mxu0 0.0
  %4148 = vmatprep.subr.mxu0 0.0
  %4149 = vmatpush1.msra.mxu0 0.0
  %4150 = vmatprep.subr.mxu0 0.0
  %4151 = vmatpush1.msra.mxu0 0.0
  %4152 = vmatprep.subr.mxu0 0.0
  %4153 = vmatpush1.msra.mxu0 0.0
  %4154 = vmatprep.subr.mxu0 0.0
  %4155 = vmatpush1.msra.mxu0 0.0
  %4156 = vmatprep.subr.mxu0 0.0
  %4157 = vmatpush1.msra.mxu0 0.0
  %4158 = vmatprep.subr.mxu0 0.0
  %4159 = vmatpush1.msra.mxu0 0.0
  %4160 = vmatprep.subr.mxu0 0.0
  %4161 = vmatpush1.msra.mxu0 0.0
  %4162 = vmatprep.subr.mxu0 0.0
  %4163 = vmatpush1.msra.mxu0 0.0
  %4164 = vmatprep.subr.mxu0 0.0
  %4165 = vmatpush1.msra.mxu0 0.0
  %4166 = vmatprep.subr.mxu0 0.0
  %4167 = vmatpush1.msra.mxu0 0.0
  %4168 = vmatprep.subr.mxu0 0.0
  %4169 = vmatpush1.msra.mxu0 0.0
  %4170 = vmatprep.subr.mxu0 0.0
  %4171 = vmatpush1.msra.mxu0 0.0
  %4172 = vmatprep.subr.mxu0 0.0
  %4173 = vmatpush1.msra.mxu0 0.0
  %4174 = vmatprep.subr.mxu0 0.0
  %4175 = vmatpush1.msra.mxu0 0.0
  %4176 = vmatprep.mubr.f32.mxu0 0.0
  %4177 = vmatmul.mubr.f32.gmra.mrb[0].mxu0 %v4107
  %v4178 = vpop.f32.mrb[0].mxu0
  %v4179 = vadd.f32 %v4104, %v4178
  %v4180 = vpop.f32.mrb[0].mxu0
  %4181 = vmatprep.mubr.f32.mxu0 0.0
  %4182 = vmatmul.mubr.f32.gmra.mrb[0].mxu0 %v4110
  %v4183 = vpop.f32.mrb[0].mxu0
  %v4184 = vadd.f32 %v4104, %v4183
  %v4185 = vpop.f32.mrb[0].mxu0
  %4186 = vdwg.mxu0
  %4188 = vrot.lane.b32.xlu0 %v4179, 96
  %v4189 = vpop.permute.xlu0 %4188
  %v4190 = vsel %vm223, %v4179, 0
  %v4192 = vsel %vm223, %v4189, 0
  %4194 = vmatprep.subr.mxu0 0.0
  %4195 = vmatpush1.xpose.msra.mxu0 %v4192
  %4196 = vmatprep.subr.mxu0 0.0
  %4197 = vmatpush1.xpose.msra.mxu0 0.0
  %4198 = vmatprep.subr.mxu0 0.0
  %4199 = vmatpush1.xpose.msra.mxu0 0.0
  %4200 = vmatprep.subr.mxu0 0.0
  %4201 = vmatpush1.xpose.msra.mxu0 0.0
  %4202 = vmatprep.subr.mxu0 0.0
  %4203 = vmatpush1.xpose.msra.mxu0 0.0
  %4204 = vmatprep.subr.mxu0 0.0
  %4205 = vmatpush1.xpose.msra.mxu0 0.0
  %4206 = vmatprep.subr.mxu0 0.0
  %4207 = vmatpush1.xpose.msra.mxu0 0.0
  %4208 = vmatprep.subr.mxu0 0.0
  %4209 = vmatpush1.xpose.msra.mxu0 0.0
  %4210 = vmatprep.subr.mxu0 0.0
  %4211 = vmatpush1.xpose.msra.mxu0 0.0
  %4212 = vmatprep.subr.mxu0 0.0
  %4213 = vmatpush1.xpose.msra.mxu0 0.0
  %4214 = vmatprep.subr.mxu0 0.0
  %4215 = vmatpush1.xpose.msra.mxu0 0.0
  %4216 = vmatprep.subr.mxu0 0.0
  %4217 = vmatpush1.xpose.msra.mxu0 0.0
  %4218 = vmatprep.subr.mxu0 0.0
  %4219 = vmatpush1.xpose.msra.mxu0 0.0
  %4220 = vmatprep.subr.mxu0 0.0
  %4221 = vmatpush1.xpose.msra.mxu0 0.0
  %4222 = vmatprep.subr.mxu0 0.0
  %4223 = vmatpush1.xpose.msra.mxu0 0.0
  %4224 = vmatprep.subr.mxu0 0.0
  %4225 = vmatpush1.xpose.msra.mxu0 0.0
  %4226 = vmatprep.subr.mxu0 0.0
  %4227 = vmatpush1.xpose.msra.mxu0 0.0
  %4228 = vmatprep.subr.mxu0 0.0
  %4229 = vmatpush1.xpose.msra.mxu0 0.0
  %4230 = vmatprep.subr.mxu0 0.0
  %4231 = vmatpush1.xpose.msra.mxu0 0.0
  %4232 = vmatprep.subr.mxu0 0.0
  %4233 = vmatpush1.xpose.msra.mxu0 0.0
  %4234 = vmatprep.subr.mxu0 0.0
  %4235 = vmatpush1.xpose.msra.mxu0 0.0
  %4236 = vmatprep.subr.mxu0 0.0
  %4237 = vmatpush1.xpose.msra.mxu0 0.0
  %4238 = vmatprep.subr.mxu0 0.0
  %4239 = vmatpush1.xpose.msra.mxu0 0.0
  %4240 = vmatprep.subr.mxu0 0.0
  %4241 = vmatpush1.xpose.msra.mxu0 0.0
  %4242 = vmatprep.subr.mxu0 0.0
  %4243 = vmatpush1.xpose.msra.mxu0 0.0
  %4244 = vmatprep.subr.mxu0 0.0
  %4245 = vmatpush1.xpose.msra.mxu0 0.0
  %4246 = vmatprep.subr.mxu0 0.0
  %4247 = vmatpush1.xpose.msra.mxu0 0.0
  %4248 = vmatprep.subr.mxu0 0.0
  %4249 = vmatpush1.xpose.msra.mxu0 0.0
  %4250 = vmatprep.subr.mxu0 0.0
  %4251 = vmatpush1.xpose.msra.mxu0 0.0
  %4252 = vmatprep.subr.mxu0 0.0
  %4253 = vmatpush1.xpose.msra.mxu0 0.0
  %4254 = vmatprep.subr.mxu0 0.0
  %4255 = vmatpush1.xpose.msra.mxu0 0.0
  %4256 = vmatprep.subr.mxu0 0.0
  %4257 = vmatpush1.xpose.msra.mxu0 0.0
  %4258 = vmatprep.mubr.f32.mxu0 0.0
  %4259 = vmatmul.mubr.f32.gmra.mrb[0].mxu0 %v4190
  %v4260 = vpop.f32.mrb[0].mxu0
  %v4261 = vadd.f32 0.0, %v4260
  %v4262 = vpop.f32.mrb[0].mxu0
  %4263 = vdwg.mxu0
  %4265 = vrot.lane.b32.xlu0 %v4184, 96
  %v4266 = vpop.permute.xlu0 %4265
  %v4267 = vsel %vm223, %v4184, 0
  %v4269 = vsel %vm223, %v4266, 0
  %4271 = vmatprep.subr.mxu0 0.0
  %4272 = vmatpush1.xpose.msra.mxu0 %v4269
  %4273 = vmatprep.subr.mxu0 0.0
  %4274 = vmatpush1.xpose.msra.mxu0 0.0
  %4275 = vmatprep.subr.mxu0 0.0
  %4276 = vmatpush1.xpose.msra.mxu0 0.0
  %4277 = vmatprep.subr.mxu0 0.0
  %4278 = vmatpush1.xpose.msra.mxu0 0.0
  %4279 = vmatprep.subr.mxu0 0.0
  %4280 = vmatpush1.xpose.msra.mxu0 0.0
  %4281 = vmatprep.subr.mxu0 0.0
  %4282 = vmatpush1.xpose.msra.mxu0 0.0
  %4283 = vmatprep.subr.mxu0 0.0
  %4284 = vmatpush1.xpose.msra.mxu0 0.0
  %4285 = vmatprep.subr.mxu0 0.0
  %4286 = vmatpush1.xpose.msra.mxu0 0.0
  %4287 = vmatprep.subr.mxu0 0.0
  %4288 = vmatpush1.xpose.msra.mxu0 0.0
  %4289 = vmatprep.subr.mxu0 0.0
  %4290 = vmatpush1.xpose.msra.mxu0 0.0
  %4291 = vmatprep.subr.mxu0 0.0
  %4292 = vmatpush1.xpose.msra.mxu0 0.0
  %4293 = vmatprep.subr.mxu0 0.0
  %4294 = vmatpush1.xpose.msra.mxu0 0.0
  %4295 = vmatprep.subr.mxu0 0.0
  %4296 = vmatpush1.xpose.msra.mxu0 0.0
  %4297 = vmatprep.subr.mxu0 0.0
  %4298 = vmatpush1.xpose.msra.mxu0 0.0
  %4299 = vmatprep.subr.mxu0 0.0
  %4300 = vmatpush1.xpose.msra.mxu0 0.0
  %4301 = vmatprep.subr.mxu0 0.0
  %4302 = vmatpush1.xpose.msra.mxu0 0.0
  %4303 = vmatprep.subr.mxu0 0.0
  %4304 = vmatpush1.xpose.msra.mxu0 0.0
  %4305 = vmatprep.subr.mxu0 0.0
  %4306 = vmatpush1.xpose.msra.mxu0 0.0
  %4307 = vmatprep.subr.mxu0 0.0
  %4308 = vmatpush1.xpose.msra.mxu0 0.0
  %4309 = vmatprep.subr.mxu0 0.0
  %4310 = vmatpush1.xpose.msra.mxu0 0.0
  %4311 = vmatprep.subr.mxu0 0.0
  %4312 = vmatpush1.xpose.msra.mxu0 0.0
  %4313 = vmatprep.subr.mxu0 0.0
  %4314 = vmatpush1.xpose.msra.mxu0 0.0
  %4315 = vmatprep.subr.mxu0 0.0
  %4316 = vmatpush1.xpose.msra.mxu0 0.0
  %4317 = vmatprep.subr.mxu0 0.0
  %4318 = vmatpush1.xpose.msra.mxu0 0.0
  %4319 = vmatprep.subr.mxu0 0.0
  %4320 = vmatpush1.xpose.msra.mxu0 0.0
  %4321 = vmatprep.subr.mxu0 0.0
  %4322 = vmatpush1.xpose.msra.mxu0 0.0
  %4323 = vmatprep.subr.mxu0 0.0
  %4324 = vmatpush1.xpose.msra.mxu0 0.0
  %4325 = vmatprep.subr.mxu0 0.0
  %4326 = vmatpush1.xpose.msra.mxu0 0.0
  %4327 = vmatprep.subr.mxu0 0.0
  %4328 = vmatpush1.xpose.msra.mxu0 0.0
  %4329 = vmatprep.subr.mxu0 0.0
  %4330 = vmatpush1.xpose.msra.mxu0 0.0
  %4331 = vmatprep.subr.mxu0 0.0
  %4332 = vmatpush1.xpose.msra.mxu0 0.0
  %4333 = vmatprep.subr.mxu0 0.0
  %4334 = vmatpush1.xpose.msra.mxu0 0.0
  %4335 = vmatprep.mubr.f32.mxu0 0.0
  %4336 = vmatmul.mubr.f32.gmra.mrb[0].mxu0 %v4267
  %v4337 = vpop.f32.mrb[0].mxu0
  %v4338 = vadd.f32 0.0, %v4337
  %v4339 = vpop.f32.mrb[0].mxu0
  %4340 = vdwg.mxu0
  %v4341 = vmul.f32 %v4261, 0.35355338
  %v4342 = vmul.f32 %v4338, 0.35355338
  %v4343 = vadd.f32 %v4341, %v86
  %v4344 = vadd.f32 %v4342, %v86
  %v4345 = vsel %vm223, %v4343, -inf
  %4346 = vmax.xlane.f32.xlu0 %v4345
  %v4347 = vpop.xlane.xlu0 %4346
  %v4348 = vsel %vm223, %v4344, -inf
  %4349 = vmax.xlane.f32.xlu0 %v4348
  %v4350 = vpop.xlane.xlu0 %4349
  %v4351 = vsub.f32 %v4343, %v4347
  %v4352 = vsub.f32 %v4344, %v4350
  %v4353 = vmul.f32 %v4351, 1.442695
  %v4354 = vpow.pop %v4353
  %v4355 = vmul.f32 %v4352, 1.442695
  %v4356 = vpow.pop %v4355
  %v4357 = vsel %vm223, %v4354, 0.0
  %4358 = vadd.xlane.f32.xlu0 %v4357
  %v4359 = vpop.xlane.xlu0 %4358
  %v4360 = vsel %vm223, %v4356, 0.0
  %4361 = vadd.xlane.f32.xlu0 %v4360
  %v4362 = vpop.xlane.xlu0 %4361
  %4363 = vrot.lane.b32.xlu0 %v4179, 64
  %v4364 = vpop.permute.xlu0 %4363
  %v4367 = vsel %vm223, %v4354, 0
  %4369 = vmatprep.subr.mxu0 0.0
  %4370 = vmatpush1.msra.mxu0 %v4364
  %4371 = vmatprep.subr.mxu0 0.0
  %4372 = vmatpush1.msra.mxu0 0.0
  %4373 = vmatprep.subr.mxu0 0.0
  %4374 = vmatpush1.msra.mxu0 0.0
  %4375 = vmatprep.subr.mxu0 0.0
  %4376 = vmatpush1.msra.mxu0 0.0
  %4377 = vmatprep.subr.mxu0 0.0
  %4378 = vmatpush1.msra.mxu0 0.0
  %4379 = vmatprep.subr.mxu0 0.0
  %4380 = vmatpush1.msra.mxu0 0.0
  %4381 = vmatprep.subr.mxu0 0.0
  %4382 = vmatpush1.msra.mxu0 0.0
  %4383 = vmatprep.subr.mxu0 0.0
  %4384 = vmatpush1.msra.mxu0 0.0
  %4385 = vmatprep.subr.mxu0 0.0
  %4386 = vmatpush1.msra.mxu0 0.0
  %4387 = vmatprep.subr.mxu0 0.0
  %4388 = vmatpush1.msra.mxu0 0.0
  %4389 = vmatprep.subr.mxu0 0.0
  %4390 = vmatpush1.msra.mxu0 0.0
  %4391 = vmatprep.subr.mxu0 0.0
  %4392 = vmatpush1.msra.mxu0 0.0
  %4393 = vmatprep.subr.mxu0 0.0
  %4394 = vmatpush1.msra.mxu0 0.0
  %4395 = vmatprep.subr.mxu0 0.0
  %4396 = vmatpush1.msra.mxu0 0.0
  %4397 = vmatprep.subr.mxu0 0.0
  %4398 = vmatpush1.msra.mxu0 0.0
  %4399 = vmatprep.subr.mxu0 0.0
  %4400 = vmatpush1.msra.mxu0 0.0
  %4401 = vmatprep.subr.mxu0 0.0
  %4402 = vmatpush1.msra.mxu0 0.0
  %4403 = vmatprep.subr.mxu0 0.0
  %4404 = vmatpush1.msra.mxu0 0.0
  %4405 = vmatprep.subr.mxu0 0.0
  %4406 = vmatpush1.msra.mxu0 0.0
  %4407 = vmatprep.subr.mxu0 0.0
  %4408 = vmatpush1.msra.mxu0 0.0
  %4409 = vmatprep.subr.mxu0 0.0
  %4410 = vmatpush1.msra.mxu0 0.0
  %4411 = vmatprep.subr.mxu0 0.0
  %4412 = vmatpush1.msra.mxu0 0.0
  %4413 = vmatprep.subr.mxu0 0.0
  %4414 = vmatpush1.msra.mxu0 0.0
  %4415 = vmatprep.subr.mxu0 0.0
  %4416 = vmatpush1.msra.mxu0 0.0
  %4417 = vmatprep.subr.mxu0 0.0
  %4418 = vmatpush1.msra.mxu0 0.0
  %4419 = vmatprep.subr.mxu0 0.0
  %4420 = vmatpush1.msra.mxu0 0.0
  %4421 = vmatprep.subr.mxu0 0.0
  %4422 = vmatpush1.msra.mxu0 0.0
  %4423 = vmatprep.subr.mxu0 0.0
  %4424 = vmatpush1.msra.mxu0 0.0
  %4425 = vmatprep.subr.mxu0 0.0
  %4426 = vmatpush1.msra.mxu0 0.0
  %4427 = vmatprep.subr.mxu0 0.0
  %4428 = vmatpush1.msra.mxu0 0.0
  %4429 = vmatprep.subr.mxu0 0.0
  %4430 = vmatpush1.msra.mxu0 0.0
  %4431 = vmatprep.subr.mxu0 0.0
  %4432 = vmatpush1.msra.mxu0 0.0
  %4433 = vmatprep.mubr.f32.mxu0 0.0
  %4434 = vmatmul.mubr.f32.gmra.mrb[0].mxu0 %v4367
  %v4435 = vpop.f32.mrb[0].mxu0
  %v4436 = vadd.f32 0.0, %v4435
  %v4437 = vpop.f32.mrb[0].mxu0
  %4438 = vdwg.mxu0
  %4439 = vrot.lane.b32.xlu0 %v4184, 64
  %v4440 = vpop.permute.xlu0 %4439
  %v4443 = vsel %vm223, %v4356, 0
  %4445 = vmatprep.subr.mxu0 0.0
  %4446 = vmatpush1.msra.mxu0 %v4440
  %4447 = vmatprep.subr.mxu0 0.0
  %4448 = vmatpush1.msra.mxu0 0.0
  %4449 = vmatprep.subr.mxu0 0.0
  %4450 = vmatpush1.msra.mxu0 0.0
  %4451 = vmatprep.subr.mxu0 0.0
  %4452 = vmatpush1.msra.mxu0 0.0
  %4453 = vmatprep.subr.mxu0 0.0
  %4454 = vmatpush1.msra.mxu0 0.0
  %4455 = vmatprep.subr.mxu0 0.0
  %4456 = vmatpush1.msra.mxu0 0.0
  %4457 = vmatprep.subr.mxu0 0.0
  %4458 = vmatpush1.msra.mxu0 0.0
  %4459 = vmatprep.subr.mxu0 0.0
  %4460 = vmatpush1.msra.mxu0 0.0
  %4461 = vmatprep.subr.mxu0 0.0
  %4462 = vmatpush1.msra.mxu0 0.0
  %4463 = vmatprep.subr.mxu0 0.0
  %4464 = vmatpush1.msra.mxu0 0.0
  %4465 = vmatprep.subr.mxu0 0.0
  %4466 = vmatpush1.msra.mxu0 0.0
  %4467 = vmatprep.subr.mxu0 0.0
  %4468 = vmatpush1.msra.mxu0 0.0
  %4469 = vmatprep.subr.mxu0 0.0
  %4470 = vmatpush1.msra.mxu0 0.0
  %4471 = vmatprep.subr.mxu0 0.0
  %4472 = vmatpush1.msra.mxu0 0.0
  %4473 = vmatprep.subr.mxu0 0.0
  %4474 = vmatpush1.msra.mxu0 0.0
  %4475 = vmatprep.subr.mxu0 0.0
  %4476 = vmatpush1.msra.mxu0 0.0
  %4477 = vmatprep.subr.mxu0 0.0
  %4478 = vmatpush1.msra.mxu0 0.0
  %4479 = vmatprep.subr.mxu0 0.0
  %4480 = vmatpush1.msra.mxu0 0.0
  %4481 = vmatprep.subr.mxu0 0.0
  %4482 = vmatpush1.msra.mxu0 0.0
  %4483 = vmatprep.subr.mxu0 0.0
  %4484 = vmatpush1.msra.mxu0 0.0
  %4485 = vmatprep.subr.mxu0 0.0
  %4486 = vmatpush1.msra.mxu0 0.0
  %4487 = vmatprep.subr.mxu0 0.0
  %4488 = vmatpush1.msra.mxu0 0.0
  %4489 = vmatprep.subr.mxu0 0.0
  %4490 = vmatpush1.msra.mxu0 0.0
  %4491 = vmatprep.subr.mxu0 0.0
  %4492 = vmatpush1.msra.mxu0 0.0
  %4493 = vmatprep.subr.mxu0 0.0
  %4494 = vmatpush1.msra.mxu0 0.0
  %4495 = vmatprep.subr.mxu0 0.0
  %4496 = vmatpush1.msra.mxu0 0.0
  %4497 = vmatprep.subr.mxu0 0.0
  %4498 = vmatpush1.msra.mxu0 0.0
  %4499 = vmatprep.subr.mxu0 0.0
  %4500 = vmatpush1.msra.mxu0 0.0
  %4501 = vmatprep.subr.mxu0 0.0
  %4502 = vmatpush1.msra.mxu0 0.0
  %4503 = vmatprep.subr.mxu0 0.0
  %4504 = vmatpush1.msra.mxu0 0.0
  %4505 = vmatprep.subr.mxu0 0.0
  %4506 = vmatpush1.msra.mxu0 0.0
  %4507 = vmatprep.subr.mxu0 0.0
  %4508 = vmatpush1.msra.mxu0 0.0
  %4509 = vmatprep.mubr.f32.mxu0 0.0
  %4510 = vmatmul.mubr.f32.gmra.mrb[0].mxu0 %v4443
  %v4511 = vpop.f32.mrb[0].mxu0
  %v4512 = vadd.f32 0.0, %v4511
  %v4513 = vpop.f32.mrb[0].mxu0
  %4514 = vdwg.mxu0
  %v4515 = vrcp.pop %v4359
  %v4516 = vrcp.pop %v4362
  %v4517 = vmul.f32 %v4436, %v4515
  %v4518 = vmul.f32 %v4512, %v4516
  %4519 = vrot.lane.b32.xlu0 %v4179, 120
  %v4520 = vpop.permute.xlu0 %4519
  %4521 = vrot.lane.b32.xlu0 %v4179, 88
  %v4522 = vpop.permute.xlu0 %4521
  %v4523 = vsel %vm223, %v4520, 0
  %v4525 = vsel %vm223, %v4522, 0
  %4527 = vmatprep.subr.mxu0 0.0
  %4528 = vmatpush1.xpose.msra.mxu0 %v4525
  %4529 = vmatprep.subr.mxu0 0.0
  %4530 = vmatpush1.xpose.msra.mxu0 0.0
  %4531 = vmatprep.subr.mxu0 0.0
  %4532 = vmatpush1.xpose.msra.mxu0 0.0
  %4533 = vmatprep.subr.mxu0 0.0
  %4534 = vmatpush1.xpose.msra.mxu0 0.0
  %4535 = vmatprep.subr.mxu0 0.0
  %4536 = vmatpush1.xpose.msra.mxu0 0.0
  %4537 = vmatprep.subr.mxu0 0.0
  %4538 = vmatpush1.xpose.msra.mxu0 0.0
  %4539 = vmatprep.subr.mxu0 0.0
  %4540 = vmatpush1.xpose.msra.mxu0 0.0
  %4541 = vmatprep.subr.mxu0 0.0
  %4542 = vmatpush1.xpose.msra.mxu0 0.0
  %4543 = vmatprep.subr.mxu0 0.0
  %4544 = vmatpush1.xpose.msra.mxu0 0.0
  %4545 = vmatprep.subr.mxu0 0.0
  %4546 = vmatpush1.xpose.msra.mxu0 0.0
  %4547 = vmatprep.subr.mxu0 0.0
  %4548 = vmatpush1.xpose.msra.mxu0 0.0
  %4549 = vmatprep.subr.mxu0 0.0
  %4550 = vmatpush1.xpose.msra.mxu0 0.0
  %4551 = vmatprep.subr.mxu0 0.0
  %4552 = vmatpush1.xpose.msra.mxu0 0.0
  %4553 = vmatprep.subr.mxu0 0.0
  %4554 = vmatpush1.xpose.msra.mxu0 0.0
  %4555 = vmatprep.subr.mxu0 0.0
  %4556 = vmatpush1.xpose.msra.mxu0 0.0
  %4557 = vmatprep.subr.mxu0 0.0
  %4558 = vmatpush1.xpose.msra.mxu0 0.0
  %4559 = vmatprep.subr.mxu0 0.0
  %4560 = vmatpush1.xpose.msra.mxu0 0.0
  %4561 = vmatprep.subr.mxu0 0.0
  %4562 = vmatpush1.xpose.msra.mxu0 0.0
  %4563 = vmatprep.subr.mxu0 0.0
  %4564 = vmatpush1.xpose.msra.mxu0 0.0
  %4565 = vmatprep.subr.mxu0 0.0
  %4566 = vmatpush1.xpose.msra.mxu0 0.0
  %4567 = vmatprep.subr.mxu0 0.0
  %4568 = vmatpush1.xpose.msra.mxu0 0.0
  %4569 = vmatprep.subr.mxu0 0.0
  %4570 = vmatpush1.xpose.msra.mxu0 0.0
  %4571 = vmatprep.subr.mxu0 0.0
  %4572 = vmatpush1.xpose.msra.mxu0 0.0
  %4573 = vmatprep.subr.mxu0 0.0
  %4574 = vmatpush1.xpose.msra.mxu0 0.0
  %4575 = vmatprep.subr.mxu0 0.0
  %4576 = vmatpush1.xpose.msra.mxu0 0.0
  %4577 = vmatprep.subr.mxu0 0.0
  %4578 = vmatpush1.xpose.msra.mxu0 0.0
  %4579 = vmatprep.subr.mxu0 0.0
  %4580 = vmatpush1.xpose.msra.mxu0 0.0
  %4581 = vmatprep.subr.mxu0 0.0
  %4582 = vmatpush1.xpose.msra.mxu0 0.0
  %4583 = vmatprep.subr.mxu0 0.0
  %4584 = vmatpush1.xpose.msra.mxu0 0.0
  %4585 = vmatprep.subr.mxu0 0.0
  %4586 = vmatpush1.xpose.msra.mxu0 0.0
  %4587 = vmatprep.subr.mxu0 0.0
  %4588 = vmatpush1.xpose.msra.mxu0 0.0
  %4589 = vmatprep.subr.mxu0 0.0
  %4590 = vmatpush1.xpose.msra.mxu0 0.0
  %4591 = vmatprep.mubr.f32.mxu0 0.0
  %4592 = vmatmul.mubr.f32.gmra.mrb[0].mxu0 %v4523
  %v4593 = vpop.f32.mrb[0].mxu0
  %v4594 = vadd.f32 0.0, %v4593
  %v4595 = vpop.f32.mrb[0].mxu0
  %4596 = vdwg.mxu0
  %4597 = vrot.lane.b32.xlu0 %v4184, 120
  %v4598 = vpop.permute.xlu0 %4597
  %4599 = vrot.lane.b32.xlu0 %v4184, 88
  %v4600 = vpop.permute.xlu0 %4599
  %v4601 = vsel %vm223, %v4598, 0
  %v4603 = vsel %vm223, %v4600, 0
  %4605 = vmatprep.subr.mxu0 0.0
  %4606 = vmatpush1.xpose.msra.mxu0 %v4603
  %4607 = vmatprep.subr.mxu0 0.0
  %4608 = vmatpush1.xpose.msra.mxu0 0.0
  %4609 = vmatprep.subr.mxu0 0.0
  %4610 = vmatpush1.xpose.msra.mxu0 0.0
  %4611 = vmatprep.subr.mxu0 0.0
  %4612 = vmatpush1.xpose.msra.mxu0 0.0
  %4613 = vmatprep.subr.mxu0 0.0
  %4614 = vmatpush1.xpose.msra.mxu0 0.0
  %4615 = vmatprep.subr.mxu0 0.0
  %4616 = vmatpush1.xpose.msra.mxu0 0.0
  %4617 = vmatprep.subr.mxu0 0.0
  %4618 = vmatpush1.xpose.msra.mxu0 0.0
  %4619 = vmatprep.subr.mxu0 0.0
  %4620 = vmatpush1.xpose.msra.mxu0 0.0
  %4621 = vmatprep.subr.mxu0 0.0
  %4622 = vmatpush1.xpose.msra.mxu0 0.0
  %4623 = vmatprep.subr.mxu0 0.0
  %4624 = vmatpush1.xpose.msra.mxu0 0.0
  %4625 = vmatprep.subr.mxu0 0.0
  %4626 = vmatpush1.xpose.msra.mxu0 0.0
  %4627 = vmatprep.subr.mxu0 0.0
  %4628 = vmatpush1.xpose.msra.mxu0 0.0
  %4629 = vmatprep.subr.mxu0 0.0
  %4630 = vmatpush1.xpose.msra.mxu0 0.0
  %4631 = vmatprep.subr.mxu0 0.0
  %4632 = vmatpush1.xpose.msra.mxu0 0.0
  %4633 = vmatprep.subr.mxu0 0.0
  %4634 = vmatpush1.xpose.msra.mxu0 0.0
  %4635 = vmatprep.subr.mxu0 0.0
  %4636 = vmatpush1.xpose.msra.mxu0 0.0
  %4637 = vmatprep.subr.mxu0 0.0
  %4638 = vmatpush1.xpose.msra.mxu0 0.0
  %4639 = vmatprep.subr.mxu0 0.0
  %4640 = vmatpush1.xpose.msra.mxu0 0.0
  %4641 = vmatprep.subr.mxu0 0.0
  %4642 = vmatpush1.xpose.msra.mxu0 0.0
  %4643 = vmatprep.subr.mxu0 0.0
  %4644 = vmatpush1.xpose.msra.mxu0 0.0
  %4645 = vmatprep.subr.mxu0 0.0
  %4646 = vmatpush1.xpose.msra.mxu0 0.0
  %4647 = vmatprep.subr.mxu0 0.0
  %4648 = vmatpush1.xpose.msra.mxu0 0.0
  %4649 = vmatprep.subr.mxu0 0.0
  %4650 = vmatpush1.xpose.msra.mxu0 0.0
  %4651 = vmatprep.subr.mxu0 0.0
  %4652 = vmatpush1.xpose.msra.mxu0 0.0
  %4653 = vmatprep.subr.mxu0 0.0
  %4654 = vmatpush1.xpose.msra.mxu0 0.0
  %4655 = vmatprep.subr.mxu0 0.0
  %4656 = vmatpush1.xpose.msra.mxu0 0.0
  %4657 = vmatprep.subr.mxu0 0.0
  %4658 = vmatpush1.xpose.msra.mxu0 0.0
  %4659 = vmatprep.subr.mxu0 0.0
  %4660 = vmatpush1.xpose.msra.mxu0 0.0
  %4661 = vmatprep.subr.mxu0 0.0
  %4662 = vmatpush1.xpose.msra.mxu0 0.0
  %4663 = vmatprep.subr.mxu0 0.0
  %4664 = vmatpush1.xpose.msra.mxu0 0.0
  %4665 = vmatprep.subr.mxu0 0.0
  %4666 = vmatpush1.xpose.msra.mxu0 0.0
  %4667 = vmatprep.subr.mxu0 0.0
  %4668 = vmatpush1.xpose.msra.mxu0 0.0
  %4669 = vmatprep.mubr.f32.mxu0 0.0
  %4670 = vmatmul.mubr.f32.gmra.mrb[0].mxu0 %v4601
  %v4671 = vpop.f32.mrb[0].mxu0
  %v4672 = vadd.f32 0.0, %v4671
  %v4673 = vpop.f32.mrb[0].mxu0
  %4674 = vdwg.mxu0
  %v4675 = vmul.f32 %v4594, 0.35355338
  %v4676 = vmul.f32 %v4672, 0.35355338
  %v4677 = vadd.f32 %v4675, %v86
  %v4678 = vadd.f32 %v4676, %v86
  %v4679 = vsel %vm223, %v4677, -inf
  %4680 = vmax.xlane.f32.xlu0 %v4679
  %v4681 = vpop.xlane.xlu0 %4680
  %v4682 = vsel %vm223, %v4678, -inf
  %4683 = vmax.xlane.f32.xlu0 %v4682
  %v4684 = vpop.xlane.xlu0 %4683
  %v4685 = vsub.f32 %v4677, %v4681
  %v4686 = vsub.f32 %v4678, %v4684
  %v4687 = vmul.f32 %v4685, 1.442695
  %v4688 = vpow.pop %v4687
  %v4689 = vmul.f32 %v4686, 1.442695
  %v4690 = vpow.pop %v4689
  %v4691 = vsel %vm223, %v4688, 0.0
  %4692 = vadd.xlane.f32.xlu0 %v4691
  %v4693 = vpop.xlane.xlu0 %4692
  %v4694 = vsel %vm223, %v4690, 0.0
  %4695 = vadd.xlane.f32.xlu0 %v4694
  %v4696 = vpop.xlane.xlu0 %4695
  %4697 = vrot.lane.b32.xlu0 %v4179, 56
  %v4698 = vpop.permute.xlu0 %4697
  %v4701 = vsel %vm223, %v4688, 0
  %4703 = vmatprep.subr.mxu0 0.0
  %4704 = vmatpush1.msra.mxu0 %v4698
  %4705 = vmatprep.subr.mxu0 0.0
  %4706 = vmatpush1.msra.mxu0 0.0
  %4707 = vmatprep.subr.mxu0 0.0
  %4708 = vmatpush1.msra.mxu0 0.0
  %4709 = vmatprep.subr.mxu0 0.0
  %4710 = vmatpush1.msra.mxu0 0.0
  %4711 = vmatprep.subr.mxu0 0.0
  %4712 = vmatpush1.msra.mxu0 0.0
  %4713 = vmatprep.subr.mxu0 0.0
  %4714 = vmatpush1.msra.mxu0 0.0
  %4715 = vmatprep.subr.mxu0 0.0
  %4716 = vmatpush1.msra.mxu0 0.0
  %4717 = vmatprep.subr.mxu0 0.0
  %4718 = vmatpush1.msra.mxu0 0.0
  %4719 = vmatprep.subr.mxu0 0.0
  %4720 = vmatpush1.msra.mxu0 0.0
  %4721 = vmatprep.subr.mxu0 0.0
  %4722 = vmatpush1.msra.mxu0 0.0
  %4723 = vmatprep.subr.mxu0 0.0
  %4724 = vmatpush1.msra.mxu0 0.0
  %4725 = vmatprep.subr.mxu0 0.0
  %4726 = vmatpush1.msra.mxu0 0.0
  %4727 = vmatprep.subr.mxu0 0.0
  %4728 = vmatpush1.msra.mxu0 0.0
  %4729 = vmatprep.subr.mxu0 0.0
  %4730 = vmatpush1.msra.mxu0 0.0
  %4731 = vmatprep.subr.mxu0 0.0
  %4732 = vmatpush1.msra.mxu0 0.0
  %4733 = vmatprep.subr.mxu0 0.0
  %4734 = vmatpush1.msra.mxu0 0.0
  %4735 = vmatprep.subr.mxu0 0.0
  %4736 = vmatpush1.msra.mxu0 0.0
  %4737 = vmatprep.subr.mxu0 0.0
  %4738 = vmatpush1.msra.mxu0 0.0
  %4739 = vmatprep.subr.mxu0 0.0
  %4740 = vmatpush1.msra.mxu0 0.0
  %4741 = vmatprep.subr.mxu0 0.0
  %4742 = vmatpush1.msra.mxu0 0.0
  %4743 = vmatprep.subr.mxu0 0.0
  %4744 = vmatpush1.msra.mxu0 0.0
  %4745 = vmatprep.subr.mxu0 0.0
  %4746 = vmatpush1.msra.mxu0 0.0
  %4747 = vmatprep.subr.mxu0 0.0
  %4748 = vmatpush1.msra.mxu0 0.0
  %4749 = vmatprep.subr.mxu0 0.0
  %4750 = vmatpush1.msra.mxu0 0.0
  %4751 = vmatprep.subr.mxu0 0.0
  %4752 = vmatpush1.msra.mxu0 0.0
  %4753 = vmatprep.subr.mxu0 0.0
  %4754 = vmatpush1.msra.mxu0 0.0
  %4755 = vmatprep.subr.mxu0 0.0
  %4756 = vmatpush1.msra.mxu0 0.0
  %4757 = vmatprep.subr.mxu0 0.0
  %4758 = vmatpush1.msra.mxu0 0.0
  %4759 = vmatprep.subr.mxu0 0.0
  %4760 = vmatpush1.msra.mxu0 0.0
  %4761 = vmatprep.subr.mxu0 0.0
  %4762 = vmatpush1.msra.mxu0 0.0
  %4763 = vmatprep.subr.mxu0 0.0
  %4764 = vmatpush1.msra.mxu0 0.0
  %4765 = vmatprep.subr.mxu0 0.0
  %4766 = vmatpush1.msra.mxu0 0.0
  %4767 = vmatprep.mubr.f32.mxu0 0.0
  %4768 = vmatmul.mubr.f32.gmra.mrb[0].mxu0 %v4701
  %v4769 = vpop.f32.mrb[0].mxu0
  %v4770 = vadd.f32 0.0, %v4769
  %v4771 = vpop.f32.mrb[0].mxu0
  %4772 = vdwg.mxu0
  %4773 = vrot.lane.b32.xlu0 %v4184, 56
  %v4774 = vpop.permute.xlu0 %4773
  %v4777 = vsel %vm223, %v4690, 0
  %4779 = vmatprep.subr.mxu0 0.0
  %4780 = vmatpush1.msra.mxu0 %v4774
  %4781 = vmatprep.subr.mxu0 0.0
  %4782 = vmatpush1.msra.mxu0 0.0
  %4783 = vmatprep.subr.mxu0 0.0
  %4784 = vmatpush1.msra.mxu0 0.0
  %4785 = vmatprep.subr.mxu0 0.0
  %4786 = vmatpush1.msra.mxu0 0.0
  %4787 = vmatprep.subr.mxu0 0.0
  %4788 = vmatpush1.msra.mxu0 0.0
  %4789 = vmatprep.subr.mxu0 0.0
  %4790 = vmatpush1.msra.mxu0 0.0
  %4791 = vmatprep.subr.mxu0 0.0
  %4792 = vmatpush1.msra.mxu0 0.0
  %4793 = vmatprep.subr.mxu0 0.0
  %4794 = vmatpush1.msra.mxu0 0.0
  %4795 = vmatprep.subr.mxu0 0.0
  %4796 = vmatpush1.msra.mxu0 0.0
  %4797 = vmatprep.subr.mxu0 0.0
  %4798 = vmatpush1.msra.mxu0 0.0
  %4799 = vmatprep.subr.mxu0 0.0
  %4800 = vmatpush1.msra.mxu0 0.0
  %4801 = vmatprep.subr.mxu0 0.0
  %4802 = vmatpush1.msra.mxu0 0.0
  %4803 = vmatprep.subr.mxu0 0.0
  %4804 = vmatpush1.msra.mxu0 0.0
  %4805 = vmatprep.subr.mxu0 0.0
  %4806 = vmatpush1.msra.mxu0 0.0
  %4807 = vmatprep.subr.mxu0 0.0
  %4808 = vmatpush1.msra.mxu0 0.0
  %4809 = vmatprep.subr.mxu0 0.0
  %4810 = vmatpush1.msra.mxu0 0.0
  %4811 = vmatprep.subr.mxu0 0.0
  %4812 = vmatpush1.msra.mxu0 0.0
  %4813 = vmatprep.subr.mxu0 0.0
  %4814 = vmatpush1.msra.mxu0 0.0
  %4815 = vmatprep.subr.mxu0 0.0
  %4816 = vmatpush1.msra.mxu0 0.0
  %4817 = vmatprep.subr.mxu0 0.0
  %4818 = vmatpush1.msra.mxu0 0.0
  %4819 = vmatprep.subr.mxu0 0.0
  %4820 = vmatpush1.msra.mxu0 0.0
  %4821 = vmatprep.subr.mxu0 0.0
  %4822 = vmatpush1.msra.mxu0 0.0
  %4823 = vmatprep.subr.mxu0 0.0
  %4824 = vmatpush1.msra.mxu0 0.0
  %4825 = vmatprep.subr.mxu0 0.0
  %4826 = vmatpush1.msra.mxu0 0.0
  %4827 = vmatprep.subr.mxu0 0.0
  %4828 = vmatpush1.msra.mxu0 0.0
  %4829 = vmatprep.subr.mxu0 0.0
  %4830 = vmatpush1.msra.mxu0 0.0
  %4831 = vmatprep.subr.mxu0 0.0
  %4832 = vmatpush1.msra.mxu0 0.0
  %4833 = vmatprep.subr.mxu0 0.0
  %4834 = vmatpush1.msra.mxu0 0.0
  %4835 = vmatprep.subr.mxu0 0.0
  %4836 = vmatpush1.msra.mxu0 0.0
  %4837 = vmatprep.subr.mxu0 0.0
  %4838 = vmatpush1.msra.mxu0 0.0
  %4839 = vmatprep.subr.mxu0 0.0
  %4840 = vmatpush1.msra.mxu0 0.0
  %4841 = vmatprep.subr.mxu0 0.0
  %4842 = vmatpush1.msra.mxu0 0.0
  %4843 = vmatprep.mubr.f32.mxu0 0.0
  %4844 = vmatmul.mubr.f32.gmra.mrb[0].mxu0 %v4777
  %v4845 = vpop.f32.mrb[0].mxu0
  %v4846 = vadd.f32 0.0, %v4845
  %v4847 = vpop.f32.mrb[0].mxu0
  %4848 = vdwg.mxu0
  %v4849 = vrcp.pop %v4693
  %v4850 = vrcp.pop %v4696
  %v4851 = vmul.f32 %v4770, %v4849
  %v4852 = vmul.f32 %v4846, %v4850
  %v4854 = vsel %vm223, %v4851, 0
  %v4857 = vsel %vm223, %v4852, 0
  %4859 = vmatprep.subr.mxu0 0.0
  %4860 = vmatpush1.msra.mxu0 %v4044
  %4861 = vmatprep.subr.mxu0 0.0
  %4862 = vmatpush1.msra.mxu0 0.0
  %4863 = vmatprep.subr.mxu0 0.0
  %4864 = vmatpush1.msra.mxu0 0.0
  %4865 = vmatprep.subr.mxu0 0.0
  %4866 = vmatpush1.msra.mxu0 0.0
  %4867 = vmatprep.subr.mxu0 0.0
  %4868 = vmatpush1.msra.mxu0 0.0
  %4869 = vmatprep.subr.mxu0 0.0
  %4870 = vmatpush1.msra.mxu0 0.0
  %4871 = vmatprep.subr.mxu0 0.0
  %4872 = vmatpush1.msra.mxu0 0.0
  %4873 = vmatprep.subr.mxu0 0.0
  %4874 = vmatpush1.msra.mxu0 0.0
  %4875 = vmatprep.subr.mxu0 0.0
  %4876 = vmatpush1.msra.mxu0 0.0
  %4877 = vmatprep.subr.mxu0 0.0
  %4878 = vmatpush1.msra.mxu0 0.0
  %4879 = vmatprep.subr.mxu0 0.0
  %4880 = vmatpush1.msra.mxu0 0.0
  %4881 = vmatprep.subr.mxu0 0.0
  %4882 = vmatpush1.msra.mxu0 0.0
  %4883 = vmatprep.subr.mxu0 0.0
  %4884 = vmatpush1.msra.mxu0 0.0
  %4885 = vmatprep.subr.mxu0 0.0
  %4886 = vmatpush1.msra.mxu0 0.0
  %4887 = vmatprep.subr.mxu0 0.0
  %4888 = vmatpush1.msra.mxu0 0.0
  %4889 = vmatprep.subr.mxu0 0.0
  %4890 = vmatpush1.msra.mxu0 0.0
  %4891 = vmatprep.subr.mxu0 0.0
  %4892 = vmatpush1.msra.mxu0 0.0
  %4893 = vmatprep.subr.mxu0 0.0
  %4894 = vmatpush1.msra.mxu0 0.0
  %4895 = vmatprep.subr.mxu0 0.0
  %4896 = vmatpush1.msra.mxu0 0.0
  %4897 = vmatprep.subr.mxu0 0.0
  %4898 = vmatpush1.msra.mxu0 0.0
  %4899 = vmatprep.subr.mxu0 0.0
  %4900 = vmatpush1.msra.mxu0 0.0
  %4901 = vmatprep.subr.mxu0 0.0
  %4902 = vmatpush1.msra.mxu0 0.0
  %4903 = vmatprep.subr.mxu0 0.0
  %4904 = vmatpush1.msra.mxu0 0.0
  %4905 = vmatprep.subr.mxu0 0.0
  %4906 = vmatpush1.msra.mxu0 0.0
  %4907 = vmatprep.subr.mxu0 0.0
  %4908 = vmatpush1.msra.mxu0 0.0
  %4909 = vmatprep.subr.mxu0 0.0
  %4910 = vmatpush1.msra.mxu0 0.0
  %4911 = vmatprep.subr.mxu0 0.0
  %4912 = vmatpush1.msra.mxu0 0.0
  %4913 = vmatprep.subr.mxu0 0.0
  %4914 = vmatpush1.msra.mxu0 0.0
  %4915 = vmatprep.subr.mxu0 0.0
  %4916 = vmatpush1.msra.mxu0 0.0
  %4917 = vmatprep.subr.mxu0 0.0
  %4918 = vmatpush1.msra.mxu0 0.0
  %4919 = vmatprep.subr.mxu0 0.0
  %4920 = vmatpush1.msra.mxu0 0.0
  %4921 = vmatprep.subr.mxu0 0.0
  %4922 = vmatpush1.msra.mxu0 0.0
  %4923 = vmatprep.mubr.f32.mxu0 0.0
  %4924 = vmatmul.mubr.f32.gmra.mrb[0].mxu0 %v4854
  %v4925 = vpop.f32.mrb[0].mxu0
  %v4926 = vadd.f32 0.0, %v4925
  %v4927 = vpop.f32.mrb[0].mxu0
  %4928 = vmatprep.mubr.f32.mxu0 0.0
  %4929 = vmatmul.mubr.f32.gmra.mrb[0].mxu0 %v4857
  %v4930 = vpop.f32.mrb[0].mxu0
  %v4931 = vadd.f32 0.0, %v4930
  %v4932 = vpop.f32.mrb[0].mxu0
  %4933 = vdwg.mxu0
  %v4935 = vsel %vm223, %v4517, 0
  %v4938 = vsel %vm223, %v4518, 0
  %4940 = vmatprep.subr.mxu0 0.0
  %4941 = vmatpush1.msra.mxu0 %v4043
  %4942 = vmatprep.subr.mxu0 0.0
  %4943 = vmatpush1.msra.mxu0 0.0
  %4944 = vmatprep.subr.mxu0 0.0
  %4945 = vmatpush1.msra.mxu0 0.0
  %4946 = vmatprep.subr.mxu0 0.0
  %4947 = vmatpush1.msra.mxu0 0.0
  %4948 = vmatprep.subr.mxu0 0.0
  %4949 = vmatpush1.msra.mxu0 0.0
  %4950 = vmatprep.subr.mxu0 0.0
  %4951 = vmatpush1.msra.mxu0 0.0
  %4952 = vmatprep.subr.mxu0 0.0
  %4953 = vmatpush1.msra.mxu0 0.0
  %4954 = vmatprep.subr.mxu0 0.0
  %4955 = vmatpush1.msra.mxu0 0.0
  %4956 = vmatprep.subr.mxu0 0.0
  %4957 = vmatpush1.msra.mxu0 0.0
  %4958 = vmatprep.subr.mxu0 0.0
  %4959 = vmatpush1.msra.mxu0 0.0
  %4960 = vmatprep.subr.mxu0 0.0
  %4961 = vmatpush1.msra.mxu0 0.0
  %4962 = vmatprep.subr.mxu0 0.0
  %4963 = vmatpush1.msra.mxu0 0.0
  %4964 = vmatprep.subr.mxu0 0.0
  %4965 = vmatpush1.msra.mxu0 0.0
  %4966 = vmatprep.subr.mxu0 0.0
  %4967 = vmatpush1.msra.mxu0 0.0
  %4968 = vmatprep.subr.mxu0 0.0
  %4969 = vmatpush1.msra.mxu0 0.0
  %4970 = vmatprep.subr.mxu0 0.0
  %4971 = vmatpush1.msra.mxu0 0.0
  %4972 = vmatprep.subr.mxu0 0.0
  %4973 = vmatpush1.msra.mxu0 0.0
  %4974 = vmatprep.subr.mxu0 0.0
  %4975 = vmatpush1.msra.mxu0 0.0
  %4976 = vmatprep.subr.mxu0 0.0
  %4977 = vmatpush1.msra.mxu0 0.0
  %4978 = vmatprep.subr.mxu0 0.0
  %4979 = vmatpush1.msra.mxu0 0.0
  %4980 = vmatprep.subr.mxu0 0.0
  %4981 = vmatpush1.msra.mxu0 0.0
  %4982 = vmatprep.subr.mxu0 0.0
  %4983 = vmatpush1.msra.mxu0 0.0
  %4984 = vmatprep.subr.mxu0 0.0
  %4985 = vmatpush1.msra.mxu0 0.0
  %4986 = vmatprep.subr.mxu0 0.0
  %4987 = vmatpush1.msra.mxu0 0.0
  %4988 = vmatprep.subr.mxu0 0.0
  %4989 = vmatpush1.msra.mxu0 0.0
  %4990 = vmatprep.subr.mxu0 0.0
  %4991 = vmatpush1.msra.mxu0 0.0
  %4992 = vmatprep.subr.mxu0 0.0
  %4993 = vmatpush1.msra.mxu0 0.0
  %4994 = vmatprep.subr.mxu0 0.0
  %4995 = vmatpush1.msra.mxu0 0.0
  %4996 = vmatprep.subr.mxu0 0.0
  %4997 = vmatpush1.msra.mxu0 0.0
  %4998 = vmatprep.subr.mxu0 0.0
  %4999 = vmatpush1.msra.mxu0 0.0
  %5000 = vmatprep.subr.mxu0 0.0
  %5001 = vmatpush1.msra.mxu0 0.0
  %5002 = vmatprep.subr.mxu0 0.0
  %5003 = vmatpush1.msra.mxu0 0.0
  %5004 = vmatprep.mubr.f32.mxu0 0.0
  %5005 = vmatmul.mubr.f32.gmra.mrb[0].mxu0 %v4935
  %v5006 = vpop.f32.mrb[0].mxu0
  %v5007 = vadd.f32 %v4926, %v5006
  %v5008 = vpop.f32.mrb[0].mxu0
  %5009 = vmatprep.mubr.f32.mxu0 0.0
  %5010 = vmatmul.mubr.f32.gmra.mrb[0].mxu0 %v4938
  %v5011 = vpop.f32.mrb[0].mxu0
  %v5012 = vadd.f32 %v4931, %v5011
  %v5013 = vpop.f32.mrb[0].mxu0
  %5014 = vdwg.mxu0
  %5015 = vrot.lane.b32.xlu0 %v4179, 112
  %v5016 = vpop.permute.xlu0 %5015
  %5017 = vrot.lane.b32.xlu0 %v4179, 80
  %v5018 = vpop.permute.xlu0 %5017
  %v5019 = vsel %vm223, %v5016, 0
  %v5021 = vsel %vm223, %v5018, 0
  %5023 = vmatprep.subr.mxu0 0.0
  %5024 = vmatpush1.xpose.msra.mxu0 %v5021
  %5025 = vmatprep.subr.mxu0 0.0
  %5026 = vmatpush1.xpose.msra.mxu0 0.0
  %5027 = vmatprep.subr.mxu0 0.0
  %5028 = vmatpush1.xpose.msra.mxu0 0.0
  %5029 = vmatprep.subr.mxu0 0.0
  %5030 = vmatpush1.xpose.msra.mxu0 0.0
  %5031 = vmatprep.subr.mxu0 0.0
  %5032 = vmatpush1.xpose.msra.mxu0 0.0
  %5033 = vmatprep.subr.mxu0 0.0
  %5034 = vmatpush1.xpose.msra.mxu0 0.0
  %5035 = vmatprep.subr.mxu0 0.0
  %5036 = vmatpush1.xpose.msra.mxu0 0.0
  %5037 = vmatprep.subr.mxu0 0.0
  %5038 = vmatpush1.xpose.msra.mxu0 0.0
  %5039 = vmatprep.subr.mxu0 0.0
  %5040 = vmatpush1.xpose.msra.mxu0 0.0
  %5041 = vmatprep.subr.mxu0 0.0
  %5042 = vmatpush1.xpose.msra.mxu0 0.0
  %5043 = vmatprep.subr.mxu0 0.0
  %5044 = vmatpush1.xpose.msra.mxu0 0.0
  %5045 = vmatprep.subr.mxu0 0.0
  %5046 = vmatpush1.xpose.msra.mxu0 0.0
  %5047 = vmatprep.subr.mxu0 0.0
  %5048 = vmatpush1.xpose.msra.mxu0 0.0
  %5049 = vmatprep.subr.mxu0 0.0
  %5050 = vmatpush1.xpose.msra.mxu0 0.0
  %5051 = vmatprep.subr.mxu0 0.0
  %5052 = vmatpush1.xpose.msra.mxu0 0.0
  %5053 = vmatprep.subr.mxu0 0.0
  %5054 = vmatpush1.xpose.msra.mxu0 0.0
  %5055 = vmatprep.subr.mxu0 0.0
  %5056 = vmatpush1.xpose.msra.mxu0 0.0
  %5057 = vmatprep.subr.mxu0 0.0
  %5058 = vmatpush1.xpose.msra.mxu0 0.0
  %5059 = vmatprep.subr.mxu0 0.0
  %5060 = vmatpush1.xpose.msra.mxu0 0.0
  %5061 = vmatprep.subr.mxu0 0.0
  %5062 = vmatpush1.xpose.msra.mxu0 0.0
  %5063 = vmatprep.subr.mxu0 0.0
  %5064 = vmatpush1.xpose.msra.mxu0 0.0
  %5065 = vmatprep.subr.mxu0 0.0
  %5066 = vmatpush1.xpose.msra.mxu0 0.0
  %5067 = vmatprep.subr.mxu0 0.0
  %5068 = vmatpush1.xpose.msra.mxu0 0.0
  %5069 = vmatprep.subr.mxu0 0.0
  %5070 = vmatpush1.xpose.msra.mxu0 0.0
  %5071 = vmatprep.subr.mxu0 0.0
  %5072 = vmatpush1.xpose.msra.mxu0 0.0
  %5073 = vmatprep.subr.mxu0 0.0
  %5074 = vmatpush1.xpose.msra.mxu0 0.0
  %5075 = vmatprep.subr.mxu0 0.0
  %5076 = vmatpush1.xpose.msra.mxu0 0.0
  %5077 = vmatprep.subr.mxu0 0.0
  %5078 = vmatpush1.xpose.msra.mxu0 0.0
  %5079 = vmatprep.subr.mxu0 0.0
  %5080 = vmatpush1.xpose.msra.mxu0 0.0
  %5081 = vmatprep.subr.mxu0 0.0
  %5082 = vmatpush1.xpose.msra.mxu0 0.0
  %5083 = vmatprep.subr.mxu0 0.0
  %5084 = vmatpush1.xpose.msra.mxu0 0.0
  %5085 = vmatprep.subr.mxu0 0.0
  %5086 = vmatpush1.xpose.msra.mxu0 0.0
  %5087 = vmatprep.mubr.f32.mxu0 0.0
  %5088 = vmatmul.mubr.f32.gmra.mrb[0].mxu0 %v5019
  %v5089 = vpop.f32.mrb[0].mxu0
  %v5090 = vadd.f32 0.0, %v5089
  %v5091 = vpop.f32.mrb[0].mxu0
  %5092 = vdwg.mxu0
  %5093 = vrot.lane.b32.xlu0 %v4184, 112
  %v5094 = vpop.permute.xlu0 %5093
  %5095 = vrot.lane.b32.xlu0 %v4184, 80
  %v5096 = vpop.permute.xlu0 %5095
  %v5097 = vsel %vm223, %v5094, 0
  %v5099 = vsel %vm223, %v5096, 0
  %5101 = vmatprep.subr.mxu0 0.0
  %5102 = vmatpush1.xpose.msra.mxu0 %v5099
  %5103 = vmatprep.subr.mxu0 0.0
  %5104 = vmatpush1.xpose.msra.mxu0 0.0
  %5105 = vmatprep.subr.mxu0 0.0
  %5106 = vmatpush1.xpose.msra.mxu0 0.0
  %5107 = vmatprep.subr.mxu0 0.0
  %5108 = vmatpush1.xpose.msra.mxu0 0.0
  %5109 = vmatprep.subr.mxu0 0.0
  %5110 = vmatpush1.xpose.msra.mxu0 0.0
  %5111 = vmatprep.subr.mxu0 0.0
  %5112 = vmatpush1.xpose.msra.mxu0 0.0
  %5113 = vmatprep.subr.mxu0 0.0
  %5114 = vmatpush1.xpose.msra.mxu0 0.0
  %5115 = vmatprep.subr.mxu0 0.0
  %5116 = vmatpush1.xpose.msra.mxu0 0.0
  %5117 = vmatprep.subr.mxu0 0.0
  %5118 = vmatpush1.xpose.msra.mxu0 0.0
  %5119 = vmatprep.subr.mxu0 0.0
  %5120 = vmatpush1.xpose.msra.mxu0 0.0
  %5121 = vmatprep.subr.mxu0 0.0
  %5122 = vmatpush1.xpose.msra.mxu0 0.0
  %5123 = vmatprep.subr.mxu0 0.0
  %5124 = vmatpush1.xpose.msra.mxu0 0.0
  %5125 = vmatprep.subr.mxu0 0.0
  %5126 = vmatpush1.xpose.msra.mxu0 0.0
  %5127 = vmatprep.subr.mxu0 0.0
  %5128 = vmatpush1.xpose.msra.mxu0 0.0
  %5129 = vmatprep.subr.mxu0 0.0
  %5130 = vmatpush1.xpose.msra.mxu0 0.0
  %5131 = vmatprep.subr.mxu0 0.0
  %5132 = vmatpush1.xpose.msra.mxu0 0.0
  %5133 = vmatprep.subr.mxu0 0.0
  %5134 = vmatpush1.xpose.msra.mxu0 0.0
  %5135 = vmatprep.subr.mxu0 0.0
  %5136 = vmatpush1.xpose.msra.mxu0 0.0
  %5137 = vmatprep.subr.mxu0 0.0
  %5138 = vmatpush1.xpose.msra.mxu0 0.0
  %5139 = vmatprep.subr.mxu0 0.0
  %5140 = vmatpush1.xpose.msra.mxu0 0.0
  %5141 = vmatprep.subr.mxu0 0.0
  %5142 = vmatpush1.xpose.msra.mxu0 0.0
  %5143 = vmatprep.subr.mxu0 0.0
  %5144 = vmatpush1.xpose.msra.mxu0 0.0
  %5145 = vmatprep.subr.mxu0 0.0
  %5146 = vmatpush1.xpose.msra.mxu0 0.0
  %5147 = vmatprep.subr.mxu0 0.0
  %5148 = vmatpush1.xpose.msra.mxu0 0.0
  %5149 = vmatprep.subr.mxu0 0.0
  %5150 = vmatpush1.xpose.msra.mxu0 0.0
  %5151 = vmatprep.subr.mxu0 0.0
  %5152 = vmatpush1.xpose.msra.mxu0 0.0
  %5153 = vmatprep.subr.mxu0 0.0
  %5154 = vmatpush1.xpose.msra.mxu0 0.0
  %5155 = vmatprep.subr.mxu0 0.0
  %5156 = vmatpush1.xpose.msra.mxu0 0.0
  %5157 = vmatprep.subr.mxu0 0.0
  %5158 = vmatpush1.xpose.msra.mxu0 0.0
  %5159 = vmatprep.subr.mxu0 0.0
  %5160 = vmatpush1.xpose.msra.mxu0 0.0
  %5161 = vmatprep.subr.mxu0 0.0
  %5162 = vmatpush1.xpose.msra.mxu0 0.0
  %5163 = vmatprep.subr.mxu0 0.0
  %5164 = vmatpush1.xpose.msra.mxu0 0.0
  %5165 = vmatprep.mubr.f32.mxu0 0.0
  %5166 = vmatmul.mubr.f32.gmra.mrb[0].mxu0 %v5097
  %v5167 = vpop.f32.mrb[0].mxu0
  %v5168 = vadd.f32 0.0, %v5167
  %v5169 = vpop.f32.mrb[0].mxu0
  %5170 = vdwg.mxu0
  %v5171 = vmul.f32 %v5090, 0.35355338
  %v5172 = vmul.f32 %v5168, 0.35355338
  %v5173 = vadd.f32 %v5171, %v86
  %v5174 = vadd.f32 %v5172, %v86
  %v5175 = vsel %vm223, %v5173, -inf
  %5176 = vmax.xlane.f32.xlu0 %v5175
  %v5177 = vpop.xlane.xlu0 %5176
  %v5178 = vsel %vm223, %v5174, -inf
  %5179 = vmax.xlane.f32.xlu0 %v5178
  %v5180 = vpop.xlane.xlu0 %5179
  %v5181 = vsub.f32 %v5173, %v5177
  %v5182 = vsub.f32 %v5174, %v5180
  %v5183 = vmul.f32 %v5181, 1.442695
  %v5184 = vpow.pop %v5183
  %v5185 = vmul.f32 %v5182, 1.442695
  %v5186 = vpow.pop %v5185
  %v5187 = vsel %vm223, %v5184, 0.0
  %5188 = vadd.xlane.f32.xlu0 %v5187
  %v5189 = vpop.xlane.xlu0 %5188
  %v5190 = vsel %vm223, %v5186, 0.0
  %5191 = vadd.xlane.f32.xlu0 %v5190
  %v5192 = vpop.xlane.xlu0 %5191
  %5193 = vrot.lane.b32.xlu0 %v4179, 48
  %v5194 = vpop.permute.xlu0 %5193
  %v5197 = vsel %vm223, %v5184, 0
  %5199 = vmatprep.subr.mxu0 0.0
  %5200 = vmatpush1.msra.mxu0 %v5194
  %5201 = vmatprep.subr.mxu0 0.0
  %5202 = vmatpush1.msra.mxu0 0.0
  %5203 = vmatprep.subr.mxu0 0.0
  %5204 = vmatpush1.msra.mxu0 0.0
  %5205 = vmatprep.subr.mxu0 0.0
  %5206 = vmatpush1.msra.mxu0 0.0
  %5207 = vmatprep.subr.mxu0 0.0
  %5208 = vmatpush1.msra.mxu0 0.0
  %5209 = vmatprep.subr.mxu0 0.0
  %5210 = vmatpush1.msra.mxu0 0.0
  %5211 = vmatprep.subr.mxu0 0.0
  %5212 = vmatpush1.msra.mxu0 0.0
  %5213 = vmatprep.subr.mxu0 0.0
  %5214 = vmatpush1.msra.mxu0 0.0
  %5215 = vmatprep.subr.mxu0 0.0
  %5216 = vmatpush1.msra.mxu0 0.0
  %5217 = vmatprep.subr.mxu0 0.0
  %5218 = vmatpush1.msra.mxu0 0.0
  %5219 = vmatprep.subr.mxu0 0.0
  %5220 = vmatpush1.msra.mxu0 0.0
  %5221 = vmatprep.subr.mxu0 0.0
  %5222 = vmatpush1.msra.mxu0 0.0
  %5223 = vmatprep.subr.mxu0 0.0
  %5224 = vmatpush1.msra.mxu0 0.0
  %5225 = vmatprep.subr.mxu0 0.0
  %5226 = vmatpush1.msra.mxu0 0.0
  %5227 = vmatprep.subr.mxu0 0.0
  %5228 = vmatpush1.msra.mxu0 0.0
  %5229 = vmatprep.subr.mxu0 0.0
  %5230 = vmatpush1.msra.mxu0 0.0
  %5231 = vmatprep.subr.mxu0 0.0
  %5232 = vmatpush1.msra.mxu0 0.0
  %5233 = vmatprep.subr.mxu0 0.0
  %5234 = vmatpush1.msra.mxu0 0.0
  %5235 = vmatprep.subr.mxu0 0.0
  %5236 = vmatpush1.msra.mxu0 0.0
  %5237 = vmatprep.subr.mxu0 0.0
  %5238 = vmatpush1.msra.mxu0 0.0
  %5239 = vmatprep.subr.mxu0 0.0
  %5240 = vmatpush1.msra.mxu0 0.0
  %5241 = vmatprep.subr.mxu0 0.0
  %5242 = vmatpush1.msra.mxu0 0.0
  %5243 = vmatprep.subr.mxu0 0.0
  %5244 = vmatpush1.msra.mxu0 0.0
  %5245 = vmatprep.subr.mxu0 0.0
  %5246 = vmatpush1.msra.mxu0 0.0
  %5247 = vmatprep.subr.mxu0 0.0
  %5248 = vmatpush1.msra.mxu0 0.0
  %5249 = vmatprep.subr.mxu0 0.0
  %5250 = vmatpush1.msra.mxu0 0.0
  %5251 = vmatprep.subr.mxu0 0.0
  %5252 = vmatpush1.msra.mxu0 0.0
  %5253 = vmatprep.subr.mxu0 0.0
  %5254 = vmatpush1.msra.mxu0 0.0
  %5255 = vmatprep.subr.mxu0 0.0
  %5256 = vmatpush1.msra.mxu0 0.0
  %5257 = vmatprep.subr.mxu0 0.0
  %5258 = vmatpush1.msra.mxu0 0.0
  %5259 = vmatprep.subr.mxu0 0.0
  %5260 = vmatpush1.msra.mxu0 0.0
  %5261 = vmatprep.subr.mxu0 0.0
  %5262 = vmatpush1.msra.mxu0 0.0
  %5263 = vmatprep.mubr.f32.mxu0 0.0
  %5264 = vmatmul.mubr.f32.gmra.mrb[0].mxu0 %v5197
  %v5265 = vpop.f32.mrb[0].mxu0
  %v5266 = vadd.f32 0.0, %v5265
  %v5267 = vpop.f32.mrb[0].mxu0
  %5268 = vdwg.mxu0
  %5269 = vrot.lane.b32.xlu0 %v4184, 48
  %v5270 = vpop.permute.xlu0 %5269
  %v5273 = vsel %vm223, %v5186, 0
  %5275 = vmatprep.subr.mxu0 0.0
  %5276 = vmatpush1.msra.mxu0 %v5270
  %5277 = vmatprep.subr.mxu0 0.0
  %5278 = vmatpush1.msra.mxu0 0.0
  %5279 = vmatprep.subr.mxu0 0.0
  %5280 = vmatpush1.msra.mxu0 0.0
  %5281 = vmatprep.subr.mxu0 0.0
  %5282 = vmatpush1.msra.mxu0 0.0
  %5283 = vmatprep.subr.mxu0 0.0
  %5284 = vmatpush1.msra.mxu0 0.0
  %5285 = vmatprep.subr.mxu0 0.0
  %5286 = vmatpush1.msra.mxu0 0.0
  %5287 = vmatprep.subr.mxu0 0.0
  %5288 = vmatpush1.msra.mxu0 0.0
  %5289 = vmatprep.subr.mxu0 0.0
  %5290 = vmatpush1.msra.mxu0 0.0
  %5291 = vmatprep.subr.mxu0 0.0
  %5292 = vmatpush1.msra.mxu0 0.0
  %5293 = vmatprep.subr.mxu0 0.0
  %5294 = vmatpush1.msra.mxu0 0.0
  %5295 = vmatprep.subr.mxu0 0.0
  %5296 = vmatpush1.msra.mxu0 0.0
  %5297 = vmatprep.subr.mxu0 0.0
  %5298 = vmatpush1.msra.mxu0 0.0
  %5299 = vmatprep.subr.mxu0 0.0
  %5300 = vmatpush1.msra.mxu0 0.0
  %5301 = vmatprep.subr.mxu0 0.0
  %5302 = vmatpush1.msra.mxu0 0.0
  %5303 = vmatprep.subr.mxu0 0.0
  %5304 = vmatpush1.msra.mxu0 0.0
  %5305 = vmatprep.subr.mxu0 0.0
  %5306 = vmatpush1.msra.mxu0 0.0
  %5307 = vmatprep.subr.mxu0 0.0
  %5308 = vmatpush1.msra.mxu0 0.0
  %5309 = vmatprep.subr.mxu0 0.0
  %5310 = vmatpush1.msra.mxu0 0.0
  %5311 = vmatprep.subr.mxu0 0.0
  %5312 = vmatpush1.msra.mxu0 0.0
  %5313 = vmatprep.subr.mxu0 0.0
  %5314 = vmatpush1.msra.mxu0 0.0
  %5315 = vmatprep.subr.mxu0 0.0
  %5316 = vmatpush1.msra.mxu0 0.0
  %5317 = vmatprep.subr.mxu0 0.0
  %5318 = vmatpush1.msra.mxu0 0.0
  %5319 = vmatprep.subr.mxu0 0.0
  %5320 = vmatpush1.msra.mxu0 0.0
  %5321 = vmatprep.subr.mxu0 0.0
  %5322 = vmatpush1.msra.mxu0 0.0
  %5323 = vmatprep.subr.mxu0 0.0
  %5324 = vmatpush1.msra.mxu0 0.0
  %5325 = vmatprep.subr.mxu0 0.0
  %5326 = vmatpush1.msra.mxu0 0.0
  %5327 = vmatprep.subr.mxu0 0.0
  %5328 = vmatpush1.msra.mxu0 0.0
  %5329 = vmatprep.subr.mxu0 0.0
  %5330 = vmatpush1.msra.mxu0 0.0
  %5331 = vmatprep.subr.mxu0 0.0
  %5332 = vmatpush1.msra.mxu0 0.0
  %5333 = vmatprep.subr.mxu0 0.0
  %5334 = vmatpush1.msra.mxu0 0.0
  %5335 = vmatprep.subr.mxu0 0.0
  %5336 = vmatpush1.msra.mxu0 0.0
  %5337 = vmatprep.subr.mxu0 0.0
  %5338 = vmatpush1.msra.mxu0 0.0
  %5339 = vmatprep.mubr.f32.mxu0 0.0
  %5340 = vmatmul.mubr.f32.gmra.mrb[0].mxu0 %v5273
  %v5341 = vpop.f32.mrb[0].mxu0
  %v5342 = vadd.f32 0.0, %v5341
  %v5343 = vpop.f32.mrb[0].mxu0
  %5344 = vdwg.mxu0
  %v5345 = vrcp.pop %v5189
  %v5346 = vrcp.pop %v5192
  %v5347 = vmul.f32 %v5266, %v5345
  %v5348 = vmul.f32 %v5342, %v5346
  %v5350 = vsel %vm223, %v5347, 0
  %v5353 = vsel %vm223, %v5348, 0
  %5355 = vmatprep.subr.mxu0 0.0
  %5356 = vmatpush1.msra.mxu0 %v4045
  %5357 = vmatprep.subr.mxu0 0.0
  %5358 = vmatpush1.msra.mxu0 0.0
  %5359 = vmatprep.subr.mxu0 0.0
  %5360 = vmatpush1.msra.mxu0 0.0
  %5361 = vmatprep.subr.mxu0 0.0
  %5362 = vmatpush1.msra.mxu0 0.0
  %5363 = vmatprep.subr.mxu0 0.0
  %5364 = vmatpush1.msra.mxu0 0.0
  %5365 = vmatprep.subr.mxu0 0.0
  %5366 = vmatpush1.msra.mxu0 0.0
  %5367 = vmatprep.subr.mxu0 0.0
  %5368 = vmatpush1.msra.mxu0 0.0
  %5369 = vmatprep.subr.mxu0 0.0
  %5370 = vmatpush1.msra.mxu0 0.0
  %5371 = vmatprep.subr.mxu0 0.0
  %5372 = vmatpush1.msra.mxu0 0.0
  %5373 = vmatprep.subr.mxu0 0.0
  %5374 = vmatpush1.msra.mxu0 0.0
  %5375 = vmatprep.subr.mxu0 0.0
  %5376 = vmatpush1.msra.mxu0 0.0
  %5377 = vmatprep.subr.mxu0 0.0
  %5378 = vmatpush1.msra.mxu0 0.0
  %5379 = vmatprep.subr.mxu0 0.0
  %5380 = vmatpush1.msra.mxu0 0.0
  %5381 = vmatprep.subr.mxu0 0.0
  %5382 = vmatpush1.msra.mxu0 0.0
  %5383 = vmatprep.subr.mxu0 0.0
  %5384 = vmatpush1.msra.mxu0 0.0
  %5385 = vmatprep.subr.mxu0 0.0
  %5386 = vmatpush1.msra.mxu0 0.0
  %5387 = vmatprep.subr.mxu0 0.0
  %5388 = vmatpush1.msra.mxu0 0.0
  %5389 = vmatprep.subr.mxu0 0.0
  %5390 = vmatpush1.msra.mxu0 0.0
  %5391 = vmatprep.subr.mxu0 0.0
  %5392 = vmatpush1.msra.mxu0 0.0
  %5393 = vmatprep.subr.mxu0 0.0
  %5394 = vmatpush1.msra.mxu0 0.0
  %5395 = vmatprep.subr.mxu0 0.0
  %5396 = vmatpush1.msra.mxu0 0.0
  %5397 = vmatprep.subr.mxu0 0.0
  %5398 = vmatpush1.msra.mxu0 0.0
  %5399 = vmatprep.subr.mxu0 0.0
  %5400 = vmatpush1.msra.mxu0 0.0
  %5401 = vmatprep.subr.mxu0 0.0
  %5402 = vmatpush1.msra.mxu0 0.0
  %5403 = vmatprep.subr.mxu0 0.0
  %5404 = vmatpush1.msra.mxu0 0.0
  %5405 = vmatprep.subr.mxu0 0.0
  %5406 = vmatpush1.msra.mxu0 0.0
  %5407 = vmatprep.subr.mxu0 0.0
  %5408 = vmatpush1.msra.mxu0 0.0
  %5409 = vmatprep.subr.mxu0 0.0
  %5410 = vmatpush1.msra.mxu0 0.0
  %5411 = vmatprep.subr.mxu0 0.0
  %5412 = vmatpush1.msra.mxu0 0.0
  %5413 = vmatprep.subr.mxu0 0.0
  %5414 = vmatpush1.msra.mxu0 0.0
  %5415 = vmatprep.subr.mxu0 0.0
  %5416 = vmatpush1.msra.mxu0 0.0
  %5417 = vmatprep.subr.mxu0 0.0
  %5418 = vmatpush1.msra.mxu0 0.0
  %5419 = vmatprep.mubr.f32.mxu0 0.0
  %5420 = vmatmul.mubr.f32.gmra.mrb[0].mxu0 %v5350
  %v5421 = vpop.f32.mrb[0].mxu0
  %v5422 = vadd.f32 0.0, %v5421
  %v5423 = vpop.f32.mrb[0].mxu0
  %5424 = vmatprep.mubr.f32.mxu0 0.0
  %5425 = vmatmul.mubr.f32.gmra.mrb[0].mxu0 %v5353
  %v5426 = vpop.f32.mrb[0].mxu0
  %v5427 = vadd.f32 0.0, %v5426
  %v5428 = vpop.f32.mrb[0].mxu0
  %5429 = vdwg.mxu0
  %v5430 = vadd.f32 %v5007, %v5422
  %v5431 = vadd.f32 %v5012, %v5427
  %5432 = vrot.lane.b32.xlu0 %v4179, 104
  %v5433 = vpop.permute.xlu0 %5432
  %5434 = vrot.lane.b32.xlu0 %v4179, 72
  %v5435 = vpop.permute.xlu0 %5434
  %v5436 = vsel %vm223, %v5433, 0
  %v5438 = vsel %vm223, %v5435, 0
  %5440 = vmatprep.subr.mxu0 0.0
  %5441 = vmatpush1.xpose.msra.mxu0 %v5438
  %5442 = vmatprep.subr.mxu0 0.0
  %5443 = vmatpush1.xpose.msra.mxu0 0.0
  %5444 = vmatprep.subr.mxu0 0.0
  %5445 = vmatpush1.xpose.msra.mxu0 0.0
  %5446 = vmatprep.subr.mxu0 0.0
  %5447 = vmatpush1.xpose.msra.mxu0 0.0
  %5448 = vmatprep.subr.mxu0 0.0
  %5449 = vmatpush1.xpose.msra.mxu0 0.0
  %5450 = vmatprep.subr.mxu0 0.0
  %5451 = vmatpush1.xpose.msra.mxu0 0.0
  %5452 = vmatprep.subr.mxu0 0.0
  %5453 = vmatpush1.xpose.msra.mxu0 0.0
  %5454 = vmatprep.subr.mxu0 0.0
  %5455 = vmatpush1.xpose.msra.mxu0 0.0
  %5456 = vmatprep.subr.mxu0 0.0
  %5457 = vmatpush1.xpose.msra.mxu0 0.0
  %5458 = vmatprep.subr.mxu0 0.0
  %5459 = vmatpush1.xpose.msra.mxu0 0.0
  %5460 = vmatprep.subr.mxu0 0.0
  %5461 = vmatpush1.xpose.msra.mxu0 0.0
  %5462 = vmatprep.subr.mxu0 0.0
  %5463 = vmatpush1.xpose.msra.mxu0 0.0
  %5464 = vmatprep.subr.mxu0 0.0
  %5465 = vmatpush1.xpose.msra.mxu0 0.0
  %5466 = vmatprep.subr.mxu0 0.0
  %5467 = vmatpush1.xpose.msra.mxu0 0.0
  %5468 = vmatprep.subr.mxu0 0.0
  %5469 = vmatpush1.xpose.msra.mxu0 0.0
  %5470 = vmatprep.subr.mxu0 0.0
  %5471 = vmatpush1.xpose.msra.mxu0 0.0
  %5472 = vmatprep.subr.mxu0 0.0
  %5473 = vmatpush1.xpose.msra.mxu0 0.0
  %5474 = vmatprep.subr.mxu0 0.0
  %5475 = vmatpush1.xpose.msra.mxu0 0.0
  %5476 = vmatprep.subr.mxu0 0.0
  %5477 = vmatpush1.xpose.msra.mxu0 0.0
  %5478 = vmatprep.subr.mxu0 0.0
  %5479 = vmatpush1.xpose.msra.mxu0 0.0
  %5480 = vmatprep.subr.mxu0 0.0
  %5481 = vmatpush1.xpose.msra.mxu0 0.0
  %5482 = vmatprep.subr.mxu0 0.0
  %5483 = vmatpush1.xpose.msra.mxu0 0.0
  %5484 = vmatprep.subr.mxu0 0.0
  %5485 = vmatpush1.xpose.msra.mxu0 0.0
  %5486 = vmatprep.subr.mxu0 0.0
  %5487 = vmatpush1.xpose.msra.mxu0 0.0
  %5488 = vmatprep.subr.mxu0 0.0
  %5489 = vmatpush1.xpose.msra.mxu0 0.0
  %5490 = vmatprep.subr.mxu0 0.0
  %5491 = vmatpush1.xpose.msra.mxu0 0.0
  %5492 = vmatprep.subr.mxu0 0.0
  %5493 = vmatpush1.xpose.msra.mxu0 0.0
  %5494 = vmatprep.subr.mxu0 0.0
  %5495 = vmatpush1.xpose.msra.mxu0 0.0
  %5496 = vmatprep.subr.mxu0 0.0
  %5497 = vmatpush1.xpose.msra.mxu0 0.0
  %5498 = vmatprep.subr.mxu0 0.0
  %5499 = vmatpush1.xpose.msra.mxu0 0.0
  %5500 = vmatprep.subr.mxu0 0.0
  %5501 = vmatpush1.xpose.msra.mxu0 0.0
  %5502 = vmatprep.subr.mxu0 0.0
  %5503 = vmatpush1.xpose.msra.mxu0 0.0
  %5504 = vmatprep.mubr.f32.mxu0 0.0
  %5505 = vmatmul.mubr.f32.gmra.mrb[0].mxu0 %v5436
  %v5506 = vpop.f32.mrb[0].mxu0
  %v5507 = vadd.f32 0.0, %v5506
  %v5508 = vpop.f32.mrb[0].mxu0
  %5509 = vdwg.mxu0
  %5510 = vrot.lane.b32.xlu0 %v4184, 104
  %v5511 = vpop.permute.xlu0 %5510
  %5512 = vrot.lane.b32.xlu0 %v4184, 72
  %v5513 = vpop.permute.xlu0 %5512
  %v5514 = vsel %vm223, %v5511, 0
  %v5516 = vsel %vm223, %v5513, 0
  %5518 = vmatprep.subr.mxu0 0.0
  %5519 = vmatpush1.xpose.msra.mxu0 %v5516
  %5520 = vmatprep.subr.mxu0 0.0
  %5521 = vmatpush1.xpose.msra.mxu0 0.0
  %5522 = vmatprep.subr.mxu0 0.0
  %5523 = vmatpush1.xpose.msra.mxu0 0.0
  %5524 = vmatprep.subr.mxu0 0.0
  %5525 = vmatpush1.xpose.msra.mxu0 0.0
  %5526 = vmatprep.subr.mxu0 0.0
  %5527 = vmatpush1.xpose.msra.mxu0 0.0
  %5528 = vmatprep.subr.mxu0 0.0
  %5529 = vmatpush1.xpose.msra.mxu0 0.0
  %5530 = vmatprep.subr.mxu0 0.0
  %5531 = vmatpush1.xpose.msra.mxu0 0.0
  %5532 = vmatprep.subr.mxu0 0.0
  %5533 = vmatpush1.xpose.msra.mxu0 0.0
  %5534 = vmatprep.subr.mxu0 0.0
  %5535 = vmatpush1.xpose.msra.mxu0 0.0
  %5536 = vmatprep.subr.mxu0 0.0
  %5537 = vmatpush1.xpose.msra.mxu0 0.0
  %5538 = vmatprep.subr.mxu0 0.0
  %5539 = vmatpush1.xpose.msra.mxu0 0.0
  %5540 = vmatprep.subr.mxu0 0.0
  %5541 = vmatpush1.xpose.msra.mxu0 0.0
  %5542 = vmatprep.subr.mxu0 0.0
  %5543 = vmatpush1.xpose.msra.mxu0 0.0
  %5544 = vmatprep.subr.mxu0 0.0
  %5545 = vmatpush1.xpose.msra.mxu0 0.0
  %5546 = vmatprep.subr.mxu0 0.0
  %5547 = vmatpush1.xpose.msra.mxu0 0.0
  %5548 = vmatprep.subr.mxu0 0.0
  %5549 = vmatpush1.xpose.msra.mxu0 0.0
  %5550 = vmatprep.subr.mxu0 0.0
  %5551 = vmatpush1.xpose.msra.mxu0 0.0
  %5552 = vmatprep.subr.mxu0 0.0
  %5553 = vmatpush1.xpose.msra.mxu0 0.0
  %5554 = vmatprep.subr.mxu0 0.0
  %5555 = vmatpush1.xpose.msra.mxu0 0.0
  %5556 = vmatprep.subr.mxu0 0.0
  %5557 = vmatpush1.xpose.msra.mxu0 0.0
  %5558 = vmatprep.subr.mxu0 0.0
  %5559 = vmatpush1.xpose.msra.mxu0 0.0
  %5560 = vmatprep.subr.mxu0 0.0
  %5561 = vmatpush1.xpose.msra.mxu0 0.0
  %5562 = vmatprep.subr.mxu0 0.0
  %5563 = vmatpush1.xpose.msra.mxu0 0.0
  %5564 = vmatprep.subr.mxu0 0.0
  %5565 = vmatpush1.xpose.msra.mxu0 0.0
  %5566 = vmatprep.subr.mxu0 0.0
  %5567 = vmatpush1.xpose.msra.mxu0 0.0
  %5568 = vmatprep.subr.mxu0 0.0
  %5569 = vmatpush1.xpose.msra.mxu0 0.0
  %5570 = vmatprep.subr.mxu0 0.0
  %5571 = vmatpush1.xpose.msra.mxu0 0.0
  %5572 = vmatprep.subr.mxu0 0.0
  %5573 = vmatpush1.xpose.msra.mxu0 0.0
  %5574 = vmatprep.subr.mxu0 0.0
  %5575 = vmatpush1.xpose.msra.mxu0 0.0
  %5576 = vmatprep.subr.mxu0 0.0
  %5577 = vmatpush1.xpose.msra.mxu0 0.0
  %5578 = vmatprep.subr.mxu0 0.0
  %5579 = vmatpush1.xpose.msra.mxu0 0.0
  %5580 = vmatprep.subr.mxu0 0.0
  %5581 = vmatpush1.xpose.msra.mxu0 0.0
  %5582 = vmatprep.mubr.f32.mxu0 0.0
  %5583 = vmatmul.mubr.f32.gmra.mrb[0].mxu0 %v5514
  %v5584 = vpop.f32.mrb[0].mxu0
  %v5585 = vadd.f32 0.0, %v5584
  %v5586 = vpop.f32.mrb[0].mxu0
  %5587 = vdwg.mxu0
  %v5588 = vmul.f32 %v5507, 0.35355338
  %v5589 = vmul.f32 %v5585, 0.35355338
  %v5590 = vadd.f32 %v5588, %v86
  %v5591 = vadd.f32 %v5589, %v86
  %v5592 = vsel %vm223, %v5590, -inf
  %5593 = vmax.xlane.f32.xlu0 %v5592
  %v5594 = vpop.xlane.xlu0 %5593
  %v5595 = vsel %vm223, %v5591, -inf
  %5596 = vmax.xlane.f32.xlu0 %v5595
  %v5597 = vpop.xlane.xlu0 %5596
  %v5598 = vsub.f32 %v5590, %v5594
  %v5599 = vsub.f32 %v5591, %v5597
  %v5600 = vmul.f32 %v5598, 1.442695
  %v5601 = vpow.pop %v5600
  %v5602 = vmul.f32 %v5599, 1.442695
  %v5603 = vpow.pop %v5602
  %v5604 = vsel %vm223, %v5601, 0.0
  %5605 = vadd.xlane.f32.xlu0 %v5604
  %v5606 = vpop.xlane.xlu0 %5605
  %v5607 = vsel %vm223, %v5603, 0.0
  %5608 = vadd.xlane.f32.xlu0 %v5607
  %v5609 = vpop.xlane.xlu0 %5608
  %5610 = vrot.lane.b32.xlu0 %v4179, 40
  %v5611 = vpop.permute.xlu0 %5610
  %v5614 = vsel %vm223, %v5601, 0
  %5616 = vmatprep.subr.mxu0 0.0
  %5617 = vmatpush1.msra.mxu0 %v5611
  %5618 = vmatprep.subr.mxu0 0.0
  %5619 = vmatpush1.msra.mxu0 0.0
  %5620 = vmatprep.subr.mxu0 0.0
  %5621 = vmatpush1.msra.mxu0 0.0
  %5622 = vmatprep.subr.mxu0 0.0
  %5623 = vmatpush1.msra.mxu0 0.0
  %5624 = vmatprep.subr.mxu0 0.0
  %5625 = vmatpush1.msra.mxu0 0.0
  %5626 = vmatprep.subr.mxu0 0.0
  %5627 = vmatpush1.msra.mxu0 0.0
  %5628 = vmatprep.subr.mxu0 0.0
  %5629 = vmatpush1.msra.mxu0 0.0
  %5630 = vmatprep.subr.mxu0 0.0
  %5631 = vmatpush1.msra.mxu0 0.0
  %5632 = vmatprep.subr.mxu0 0.0
  %5633 = vmatpush1.msra.mxu0 0.0
  %5634 = vmatprep.subr.mxu0 0.0
  %5635 = vmatpush1.msra.mxu0 0.0
  %5636 = vmatprep.subr.mxu0 0.0
  %5637 = vmatpush1.msra.mxu0 0.0
  %5638 = vmatprep.subr.mxu0 0.0
  %5639 = vmatpush1.msra.mxu0 0.0
  %5640 = vmatprep.subr.mxu0 0.0
  %5641 = vmatpush1.msra.mxu0 0.0
  %5642 = vmatprep.subr.mxu0 0.0
  %5643 = vmatpush1.msra.mxu0 0.0
  %5644 = vmatprep.subr.mxu0 0.0
  %5645 = vmatpush1.msra.mxu0 0.0
  %5646 = vmatprep.subr.mxu0 0.0
  %5647 = vmatpush1.msra.mxu0 0.0
  %5648 = vmatprep.subr.mxu0 0.0
  %5649 = vmatpush1.msra.mxu0 0.0
  %5650 = vmatprep.subr.mxu0 0.0
  %5651 = vmatpush1.msra.mxu0 0.0
  %5652 = vmatprep.subr.mxu0 0.0
  %5653 = vmatpush1.msra.mxu0 0.0
  %5654 = vmatprep.subr.mxu0 0.0
  %5655 = vmatpush1.msra.mxu0 0.0
  %5656 = vmatprep.subr.mxu0 0.0
  %5657 = vmatpush1.msra.mxu0 0.0
  %5658 = vmatprep.subr.mxu0 0.0
  %5659 = vmatpush1.msra.mxu0 0.0
  %5660 = vmatprep.subr.mxu0 0.0
  %5661 = vmatpush1.msra.mxu0 0.0
  %5662 = vmatprep.subr.mxu0 0.0
  %5663 = vmatpush1.msra.mxu0 0.0
  %5664 = vmatprep.subr.mxu0 0.0
  %5665 = vmatpush1.msra.mxu0 0.0
  %5666 = vmatprep.subr.mxu0 0.0
  %5667 = vmatpush1.msra.mxu0 0.0
  %5668 = vmatprep.subr.mxu0 0.0
  %5669 = vmatpush1.msra.mxu0 0.0
  %5670 = vmatprep.subr.mxu0 0.0
  %5671 = vmatpush1.msra.mxu0 0.0
  %5672 = vmatprep.subr.mxu0 0.0
  %5673 = vmatpush1.msra.mxu0 0.0
  %5674 = vmatprep.subr.mxu0 0.0
  %5675 = vmatpush1.msra.mxu0 0.0
  %5676 = vmatprep.subr.mxu0 0.0
  %5677 = vmatpush1.msra.mxu0 0.0
  %5678 = vmatprep.subr.mxu0 0.0
  %5679 = vmatpush1.msra.mxu0 0.0
  %5680 = vmatprep.mubr.f32.mxu0 0.0
  %5681 = vmatmul.mubr.f32.gmra.mrb[0].mxu0 %v5614
  %v5682 = vpop.f32.mrb[0].mxu0
  %v5683 = vadd.f32 0.0, %v5682
  %v5684 = vpop.f32.mrb[0].mxu0
  %5685 = vdwg.mxu0
  %5686 = vrot.lane.b32.xlu0 %v4184, 40
  %v5687 = vpop.permute.xlu0 %5686
  %v5690 = vsel %vm223, %v5603, 0
  %5692 = vmatprep.subr.mxu0 0.0
  %5693 = vmatpush1.msra.mxu0 %v5687
  %5694 = vmatprep.subr.mxu0 0.0
  %5695 = vmatpush1.msra.mxu0 0.0
  %5696 = vmatprep.subr.mxu0 0.0
  %5697 = vmatpush1.msra.mxu0 0.0
  %5698 = vmatprep.subr.mxu0 0.0
  %5699 = vmatpush1.msra.mxu0 0.0
  %5700 = vmatprep.subr.mxu0 0.0
  %5701 = vmatpush1.msra.mxu0 0.0
  %5702 = vmatprep.subr.mxu0 0.0
  %5703 = vmatpush1.msra.mxu0 0.0
  %5704 = vmatprep.subr.mxu0 0.0
  %5705 = vmatpush1.msra.mxu0 0.0
  %5706 = vmatprep.subr.mxu0 0.0
  %5707 = vmatpush1.msra.mxu0 0.0
  %5708 = vmatprep.subr.mxu0 0.0
  %5709 = vmatpush1.msra.mxu0 0.0
  %5710 = vmatprep.subr.mxu0 0.0
  %5711 = vmatpush1.msra.mxu0 0.0
  %5712 = vmatprep.subr.mxu0 0.0
  %5713 = vmatpush1.msra.mxu0 0.0
  %5714 = vmatprep.subr.mxu0 0.0
  %5715 = vmatpush1.msra.mxu0 0.0
  %5716 = vmatprep.subr.mxu0 0.0
  %5717 = vmatpush1.msra.mxu0 0.0
  %5718 = vmatprep.subr.mxu0 0.0
  %5719 = vmatpush1.msra.mxu0 0.0
  %5720 = vmatprep.subr.mxu0 0.0
  %5721 = vmatpush1.msra.mxu0 0.0
  %5722 = vmatprep.subr.mxu0 0.0
  %5723 = vmatpush1.msra.mxu0 0.0
  %5724 = vmatprep.subr.mxu0 0.0
  %5725 = vmatpush1.msra.mxu0 0.0
  %5726 = vmatprep.subr.mxu0 0.0
  %5727 = vmatpush1.msra.mxu0 0.0
  %5728 = vmatprep.subr.mxu0 0.0
  %5729 = vmatpush1.msra.mxu0 0.0
  %5730 = vmatprep.subr.mxu0 0.0
  %5731 = vmatpush1.msra.mxu0 0.0
  %5732 = vmatprep.subr.mxu0 0.0
  %5733 = vmatpush1.msra.mxu0 0.0
  %5734 = vmatprep.subr.mxu0 0.0
  %5735 = vmatpush1.msra.mxu0 0.0
  %5736 = vmatprep.subr.mxu0 0.0
  %5737 = vmatpush1.msra.mxu0 0.0
  %5738 = vmatprep.subr.mxu0 0.0
  %5739 = vmatpush1.msra.mxu0 0.0
  %5740 = vmatprep.subr.mxu0 0.0
  %5741 = vmatpush1.msra.mxu0 0.0
  %5742 = vmatprep.subr.mxu0 0.0
  %5743 = vmatpush1.msra.mxu0 0.0
  %5744 = vmatprep.subr.mxu0 0.0
  %5745 = vmatpush1.msra.mxu0 0.0
  %5746 = vmatprep.subr.mxu0 0.0
  %5747 = vmatpush1.msra.mxu0 0.0
  %5748 = vmatprep.subr.mxu0 0.0
  %5749 = vmatpush1.msra.mxu0 0.0
  %5750 = vmatprep.subr.mxu0 0.0
  %5751 = vmatpush1.msra.mxu0 0.0
  %5752 = vmatprep.subr.mxu0 0.0
  %5753 = vmatpush1.msra.mxu0 0.0
  %5754 = vmatprep.subr.mxu0 0.0
  %5755 = vmatpush1.msra.mxu0 0.0
  %5756 = vmatprep.mubr.f32.mxu0 0.0
  %5757 = vmatmul.mubr.f32.gmra.mrb[0].mxu0 %v5690
  %v5758 = vpop.f32.mrb[0].mxu0
  %v5759 = vadd.f32 0.0, %v5758
  %v5760 = vpop.f32.mrb[0].mxu0
  %5761 = vdwg.mxu0
  %v5762 = vrcp.pop %v5606
  %v5763 = vrcp.pop %v5609
  %v5764 = vmul.f32 %v5683, %v5762
  %v5765 = vmul.f32 %v5759, %v5763
  %v5767 = vsel %vm223, %v5764, 0
  %v5770 = vsel %vm223, %v5765, 0
  %5772 = vmatprep.subr.mxu0 0.0
  %5773 = vmatpush1.msra.mxu0 %v4046
  %5774 = vmatprep.subr.mxu0 0.0
  %5775 = vmatpush1.msra.mxu0 0.0
  %5776 = vmatprep.subr.mxu0 0.0
  %5777 = vmatpush1.msra.mxu0 0.0
  %5778 = vmatprep.subr.mxu0 0.0
  %5779 = vmatpush1.msra.mxu0 0.0
  %5780 = vmatprep.subr.mxu0 0.0
  %5781 = vmatpush1.msra.mxu0 0.0
  %5782 = vmatprep.subr.mxu0 0.0
  %5783 = vmatpush1.msra.mxu0 0.0
  %5784 = vmatprep.subr.mxu0 0.0
  %5785 = vmatpush1.msra.mxu0 0.0
  %5786 = vmatprep.subr.mxu0 0.0
  %5787 = vmatpush1.msra.mxu0 0.0
  %5788 = vmatprep.subr.mxu0 0.0
  %5789 = vmatpush1.msra.mxu0 0.0
  %5790 = vmatprep.subr.mxu0 0.0
  %5791 = vmatpush1.msra.mxu0 0.0
  %5792 = vmatprep.subr.mxu0 0.0
  %5793 = vmatpush1.msra.mxu0 0.0
  %5794 = vmatprep.subr.mxu0 0.0
  %5795 = vmatpush1.msra.mxu0 0.0
  %5796 = vmatprep.subr.mxu0 0.0
  %5797 = vmatpush1.msra.mxu0 0.0
  %5798 = vmatprep.subr.mxu0 0.0
  %5799 = vmatpush1.msra.mxu0 0.0
  %5800 = vmatprep.subr.mxu0 0.0
  %5801 = vmatpush1.msra.mxu0 0.0
  %5802 = vmatprep.subr.mxu0 0.0
  %5803 = vmatpush1.msra.mxu0 0.0
  %5804 = vmatprep.subr.mxu0 0.0
  %5805 = vmatpush1.msra.mxu0 0.0
  %5806 = vmatprep.subr.mxu0 0.0
  %5807 = vmatpush1.msra.mxu0 0.0
  %5808 = vmatprep.subr.mxu0 0.0
  %5809 = vmatpush1.msra.mxu0 0.0
  %5810 = vmatprep.subr.mxu0 0.0
  %5811 = vmatpush1.msra.mxu0 0.0
  %5812 = vmatprep.subr.mxu0 0.0
  %5813 = vmatpush1.msra.mxu0 0.0
  %5814 = vmatprep.subr.mxu0 0.0
  %5815 = vmatpush1.msra.mxu0 0.0
  %5816 = vmatprep.subr.mxu0 0.0
  %5817 = vmatpush1.msra.mxu0 0.0
  %5818 = vmatprep.subr.mxu0 0.0
  %5819 = vmatpush1.msra.mxu0 0.0
  %5820 = vmatprep.subr.mxu0 0.0
  %5821 = vmatpush1.msra.mxu0 0.0
  %5822 = vmatprep.subr.mxu0 0.0
  %5823 = vmatpush1.msra.mxu0 0.0
  %5824 = vmatprep.subr.mxu0 0.0
  %5825 = vmatpush1.msra.mxu0 0.0
  %5826 = vmatprep.subr.mxu0 0.0
  %5827 = vmatpush1.msra.mxu0 0.0
  %5828 = vmatprep.subr.mxu0 0.0
  %5829 = vmatpush1.msra.mxu0 0.0
  %5830 = vmatprep.subr.mxu0 0.0
  %5831 = vmatpush1.msra.mxu0 0.0
  %5832 = vmatprep.subr.mxu0 0.0
  %5833 = vmatpush1.msra.mxu0 0.0
  %5834 = vmatprep.subr.mxu0 0.0
  %5835 = vmatpush1.msra.mxu0 0.0
  %5836 = vmatprep.mubr.f32.mxu0 0.0
  %5837 = vmatmul.mubr.f32.gmra.mrb[0].mxu0 %v5767
  %v5838 = vpop.f32.mrb[0].mxu0
  %v5839 = vadd.f32 0.0, %v5838
  %v5840 = vpop.f32.mrb[0].mxu0
  %5841 = vmatprep.mubr.f32.mxu0 0.0
  %5842 = vmatmul.mubr.f32.gmra.mrb[0].mxu0 %v5770
  %v5843 = vpop.f32.mrb[0].mxu0
  %v5844 = vadd.f32 0.0, %v5843
  %v5845 = vpop.f32.mrb[0].mxu0
  %5846 = vdwg.mxu0
  %v5847 = vadd.f32 %v5430, %v5839
  %v5848 = vadd.f32 %v5431, %v5844
  %v5850 = vlaneseq
  %v5851 = vshrl.u32 %v5850, 7
  %v5852 = vsub.s32 0, %v5851
  %v5853 = vrot.slane %v4048, %v5852
  %v5855 = vadd.f32 %v5847, %v5853
  %v5856 = vadd.f32 %v5848, %v5853
  %v5857 = vadd.f32 %v4033, %v5855
  %v5858 = vadd.f32 %v4034, %v5856
  %v5859 = vsel %vm138, %v5857, 0.0
  %5860 = vadd.xlane.f32.xlu0 %v5859
  %v5861 = vpop.xlane.xlu0 %5860
  %v5862 = vsel %vm138, %v5858, 0.0
  %5863 = vadd.xlane.f32.xlu0 %v5862
  %v5864 = vpop.xlane.xlu0 %5863
  %v5865 = vmul.f32 %v5861, %v1899
  %v5866 = vmul.f32 %v5864, %v1899
  %v5867 = vsub.f32 %v5857, %v5865
  %v5868 = vsub.f32 %v5858, %v5866
  %v5869 = vmul.f32 %v5867, %v5867
  %v5870 = vmul.f32 %v5868, %v5868
  %v5871 = vsel %vm138, %v5869, 0.0
  %5872 = vadd.xlane.f32.xlu0 %v5871
  %v5873 = vpop.xlane.xlu0 %5872
  %v5874 = vsel %vm138, %v5870, 0.0
  %5875 = vadd.xlane.f32.xlu0 %v5874
  %v5876 = vpop.xlane.xlu0 %5875
  %v5877 = vmul.f32 %v5873, %v1899
  %v5878 = vmul.f32 %v5876, %v1899
  %v5879 = vadd.f32 %v5877, 1e-05
  %v5880 = vadd.f32 %v5878, 1e-05
  %v5881 = vrsqrt.pop %v5879
  %v5882 = vrsqrt.pop %v5880
  %v5883 = vmul.f32 %v5867, %v5881
  %v5884 = vmul.f32 %v5868, %v5882
  %v5886 = vlaneseq
  %v5887 = vshrl.u32 %v5886, 7
  %v5888 = vsub.s32 0, %v5887
  %v5889 = vrot.slane %v4050, %v5888
  %v5891 = vmul.f32 %v5883, %v5889
  %v5892 = vmul.f32 %v5884, %v5889
  %v5894 = vlaneseq
  %v5895 = vshrl.u32 %v5894, 7
  %v5896 = vsub.s32 0, %v5895
  %v5897 = vrot.slane %v4052, %v5896
  %v5899 = vadd.f32 %v5891, %v5897
  %v5900 = vadd.f32 %v5892, %v5897
  %v5902 = vlaneseq
  %v5903 = vshrl.u32 %v5902, 7
  %v5904 = vsub.s32 0, %v5903
  %v5905 = vrot.slane %v4059, %v5904
  %v5908 = vsel %vm138, %v5899, 0
  %v5911 = vsel %vm138, %v5900, 0
  %5913 = vmatprep.subr.mxu0 0.0
  %5914 = vmatpush1.msra.mxu0 %v4054
  %5915 = vmatprep.subr.mxu0 0.0
  %5916 = vmatpush1.msra.mxu0 %v4055
  %5917 = vmatprep.subr.mxu0 0.0
  %5918 = vmatpush1.msra.mxu0 %v4056
  %5919 = vmatprep.subr.mxu0 0.0
  %5920 = vmatpush1.msra.mxu0 %v4057
  %5921 = vmatprep.subr.mxu0 0.0
  %5922 = vmatpush1.msra.mxu0 0.0
  %5923 = vmatprep.subr.mxu0 0.0
  %5924 = vmatpush1.msra.mxu0 0.0
  %5925 = vmatprep.subr.mxu0 0.0
  %5926 = vmatpush1.msra.mxu0 0.0
  %5927 = vmatprep.subr.mxu0 0.0
  %5928 = vmatpush1.msra.mxu0 0.0
  %5929 = vmatprep.subr.mxu0 0.0
  %5930 = vmatpush1.msra.mxu0 0.0
  %5931 = vmatprep.subr.mxu0 0.0
  %5932 = vmatpush1.msra.mxu0 0.0
  %5933 = vmatprep.subr.mxu0 0.0
  %5934 = vmatpush1.msra.mxu0 0.0
  %5935 = vmatprep.subr.mxu0 0.0
  %5936 = vmatpush1.msra.mxu0 0.0
  %5937 = vmatprep.subr.mxu0 0.0
  %5938 = vmatpush1.msra.mxu0 0.0
  %5939 = vmatprep.subr.mxu0 0.0
  %5940 = vmatpush1.msra.mxu0 0.0
  %5941 = vmatprep.subr.mxu0 0.0
  %5942 = vmatpush1.msra.mxu0 0.0
  %5943 = vmatprep.subr.mxu0 0.0
  %5944 = vmatpush1.msra.mxu0 0.0
  %5945 = vmatprep.subr.mxu0 0.0
  %5946 = vmatpush1.msra.mxu0 0.0
  %5947 = vmatprep.subr.mxu0 0.0
  %5948 = vmatpush1.msra.mxu0 0.0
  %5949 = vmatprep.subr.mxu0 0.0
  %5950 = vmatpush1.msra.mxu0 0.0
  %5951 = vmatprep.subr.mxu0 0.0
  %5952 = vmatpush1.msra.mxu0 0.0
  %5953 = vmatprep.subr.mxu0 0.0
  %5954 = vmatpush1.msra.mxu0 0.0
  %5955 = vmatprep.subr.mxu0 0.0
  %5956 = vmatpush1.msra.mxu0 0.0
  %5957 = vmatprep.subr.mxu0 0.0
  %5958 = vmatpush1.msra.mxu0 0.0
  %5959 = vmatprep.subr.mxu0 0.0
  %5960 = vmatpush1.msra.mxu0 0.0
  %5961 = vmatprep.subr.mxu0 0.0
  %5962 = vmatpush1.msra.mxu0 0.0
  %5963 = vmatprep.subr.mxu0 0.0
  %5964 = vmatpush1.msra.mxu0 0.0
  %5965 = vmatprep.subr.mxu0 0.0
  %5966 = vmatpush1.msra.mxu0 0.0
  %5967 = vmatprep.subr.mxu0 0.0
  %5968 = vmatpush1.msra.mxu0 0.0
  %5969 = vmatprep.subr.mxu0 0.0
  %5970 = vmatpush1.msra.mxu0 0.0
  %5971 = vmatprep.subr.mxu0 0.0
  %5972 = vmatpush1.msra.mxu0 0.0
  %5973 = vmatprep.subr.mxu0 0.0
  %5974 = vmatpush1.msra.mxu0 0.0
  %5975 = vmatprep.subr.mxu0 0.0
  %5976 = vmatpush1.msra.mxu0 0.0
  %5977 = vmatprep.mubr.f32.mxu0 0.0
  %5978 = vmatmul.mubr.f32.gmra.mrb[0].mxu0 %v5908
  %v5979 = vpop.f32.mrb[0].mxu0
  %v5980 = vadd.f32 %v5905, %v5979
  %v5981 = vpop.f32.mrb[0].mxu0
  %5982 = vmatprep.mubr.f32.mxu0 0.0
  %5983 = vmatmul.mubr.f32.gmra.mrb[0].mxu0 %v5911
  %v5984 = vpop.f32.mrb[0].mxu0
  %v5985 = vadd.f32 %v5905, %v5984
  %v5986 = vpop.f32.mrb[0].mxu0
  %5987 = vdwg.mxu0
  %v5989 = vlaneseq
  %v5990 = vshrl.u32 %v5989, 7
  %v5991 = vsub.s32 0, %v5990
  %v5992 = vrot.slane %v4066, %v5991
  %5994 = vmatprep.subr.mxu0 0.0
  %5995 = vmatpush1.msra.mxu0 %v4061
  %5996 = vmatprep.subr.mxu0 0.0
  %5997 = vmatpush1.msra.mxu0 %v4062
  %5998 = vmatprep.subr.mxu0 0.0
  %5999 = vmatpush1.msra.mxu0 %v4063
  %6000 = vmatprep.subr.mxu0 0.0
  %6001 = vmatpush1.msra.mxu0 %v4064
  %6002 = vmatprep.subr.mxu0 0.0
  %6003 = vmatpush1.msra.mxu0 0.0
  %6004 = vmatprep.subr.mxu0 0.0
  %6005 = vmatpush1.msra.mxu0 0.0
  %6006 = vmatprep.subr.mxu0 0.0
  %6007 = vmatpush1.msra.mxu0 0.0
  %6008 = vmatprep.subr.mxu0 0.0
  %6009 = vmatpush1.msra.mxu0 0.0
  %6010 = vmatprep.subr.mxu0 0.0
  %6011 = vmatpush1.msra.mxu0 0.0
  %6012 = vmatprep.subr.mxu0 0.0
  %6013 = vmatpush1.msra.mxu0 0.0
  %6014 = vmatprep.subr.mxu0 0.0
  %6015 = vmatpush1.msra.mxu0 0.0
  %6016 = vmatprep.subr.mxu0 0.0
  %6017 = vmatpush1.msra.mxu0 0.0
  %6018 = vmatprep.subr.mxu0 0.0
  %6019 = vmatpush1.msra.mxu0 0.0
  %6020 = vmatprep.subr.mxu0 0.0
  %6021 = vmatpush1.msra.mxu0 0.0
  %6022 = vmatprep.subr.mxu0 0.0
  %6023 = vmatpush1.msra.mxu0 0.0
  %6024 = vmatprep.subr.mxu0 0.0
  %6025 = vmatpush1.msra.mxu0 0.0
  %6026 = vmatprep.subr.mxu0 0.0
  %6027 = vmatpush1.msra.mxu0 0.0
  %6028 = vmatprep.subr.mxu0 0.0
  %6029 = vmatpush1.msra.mxu0 0.0
  %6030 = vmatprep.subr.mxu0 0.0
  %6031 = vmatpush1.msra.mxu0 0.0
  %6032 = vmatprep.subr.mxu0 0.0
  %6033 = vmatpush1.msra.mxu0 0.0
  %6034 = vmatprep.subr.mxu0 0.0
  %6035 = vmatpush1.msra.mxu0 0.0
  %6036 = vmatprep.subr.mxu0 0.0
  %6037 = vmatpush1.msra.mxu0 0.0
  %6038 = vmatprep.subr.mxu0 0.0
  %6039 = vmatpush1.msra.mxu0 0.0
  %6040 = vmatprep.subr.mxu0 0.0
  %6041 = vmatpush1.msra.mxu0 0.0
  %6042 = vmatprep.subr.mxu0 0.0
  %6043 = vmatpush1.msra.mxu0 0.0
  %6044 = vmatprep.subr.mxu0 0.0
  %6045 = vmatpush1.msra.mxu0 0.0
  %6046 = vmatprep.subr.mxu0 0.0
  %6047 = vmatpush1.msra.mxu0 0.0
  %6048 = vmatprep.subr.mxu0 0.0
  %6049 = vmatpush1.msra.mxu0 0.0
  %6050 = vmatprep.subr.mxu0 0.0
  %6051 = vmatpush1.msra.mxu0 0.0
  %6052 = vmatprep.subr.mxu0 0.0
  %6053 = vmatpush1.msra.mxu0 0.0
  %6054 = vmatprep.subr.mxu0 0.0
  %6055 = vmatpush1.msra.mxu0 0.0
  %6056 = vmatprep.subr.mxu0 0.0
  %6057 = vmatpush1.msra.mxu0 0.0
  %6058 = vmatprep.mubr.f32.mxu0 0.0
  %6059 = vmatmul.mubr.f32.gmra.mrb[0].mxu0 %v2030
  %v6060 = vpop.f32.mrb[0].mxu0
  %v6061 = vadd.f32 %v5992, %v6060
  %v6062 = vpop.f32.mrb[0].mxu0
  %6063 = vmatprep.mubr.f32.mxu0 0.0
  %6064 = vmatmul.mubr.f32.gmra.mrb[0].mxu0 %v2033
  %v6065 = vpop.f32.mrb[0].mxu0
  %v6066 = vadd.f32 %v5992, %v6065
  %v6067 = vpop.f32.mrb[0].mxu0
  %6068 = vdwg.mxu0
  %v6070 = vsel %vm223, %v5980, 0
  %v6073 = vsel %vm223, %v6061, 0
  %6075 = vmatprep.subr.mxu0 0.0
  %6076 = vmatpush1.xpose.msra.mxu0 %v6073
  %6077 = vmatprep.subr.mxu0 0.0
  %6078 = vmatpush1.xpose.msra.mxu0 0.0
  %6079 = vmatprep.subr.mxu0 0.0
  %6080 = vmatpush1.xpose.msra.mxu0 0.0
  %6081 = vmatprep.subr.mxu0 0.0
  %6082 = vmatpush1.xpose.msra.mxu0 0.0
  %6083 = vmatprep.subr.mxu0 0.0
  %6084 = vmatpush1.xpose.msra.mxu0 0.0
  %6085 = vmatprep.subr.mxu0 0.0
  %6086 = vmatpush1.xpose.msra.mxu0 0.0
  %6087 = vmatprep.subr.mxu0 0.0
  %6088 = vmatpush1.xpose.msra.mxu0 0.0
  %6089 = vmatprep.subr.mxu0 0.0
  %6090 = vmatpush1.xpose.msra.mxu0 0.0
  %6091 = vmatprep.subr.mxu0 0.0
  %6092 = vmatpush1.xpose.msra.mxu0 0.0
  %6093 = vmatprep.subr.mxu0 0.0
  %6094 = vmatpush1.xpose.msra.mxu0 0.0
  %6095 = vmatprep.subr.mxu0 0.0
  %6096 = vmatpush1.xpose.msra.mxu0 0.0
  %6097 = vmatprep.subr.mxu0 0.0
  %6098 = vmatpush1.xpose.msra.mxu0 0.0
  %6099 = vmatprep.subr.mxu0 0.0
  %6100 = vmatpush1.xpose.msra.mxu0 0.0
  %6101 = vmatprep.subr.mxu0 0.0
  %6102 = vmatpush1.xpose.msra.mxu0 0.0
  %6103 = vmatprep.subr.mxu0 0.0
  %6104 = vmatpush1.xpose.msra.mxu0 0.0
  %6105 = vmatprep.subr.mxu0 0.0
  %6106 = vmatpush1.xpose.msra.mxu0 0.0
  %6107 = vmatprep.subr.mxu0 0.0
  %6108 = vmatpush1.xpose.msra.mxu0 0.0
  %6109 = vmatprep.subr.mxu0 0.0
  %6110 = vmatpush1.xpose.msra.mxu0 0.0
  %6111 = vmatprep.subr.mxu0 0.0
  %6112 = vmatpush1.xpose.msra.mxu0 0.0
  %6113 = vmatprep.subr.mxu0 0.0
  %6114 = vmatpush1.xpose.msra.mxu0 0.0
  %6115 = vmatprep.subr.mxu0 0.0
  %6116 = vmatpush1.xpose.msra.mxu0 0.0
  %6117 = vmatprep.subr.mxu0 0.0
  %6118 = vmatpush1.xpose.msra.mxu0 0.0
  %6119 = vmatprep.subr.mxu0 0.0
  %6120 = vmatpush1.xpose.msra.mxu0 0.0
  %6121 = vmatprep.subr.mxu0 0.0
  %6122 = vmatpush1.xpose.msra.mxu0 0.0
  %6123 = vmatprep.subr.mxu0 0.0
  %6124 = vmatpush1.xpose.msra.mxu0 0.0
  %6125 = vmatprep.subr.mxu0 0.0
  %6126 = vmatpush1.xpose.msra.mxu0 0.0
  %6127 = vmatprep.subr.mxu0 0.0
  %6128 = vmatpush1.xpose.msra.mxu0 0.0
  %6129 = vmatprep.subr.mxu0 0.0
  %6130 = vmatpush1.xpose.msra.mxu0 0.0
  %6131 = vmatprep.subr.mxu0 0.0
  %6132 = vmatpush1.xpose.msra.mxu0 0.0
  %6133 = vmatprep.subr.mxu0 0.0
  %6134 = vmatpush1.xpose.msra.mxu0 0.0
  %6135 = vmatprep.subr.mxu0 0.0
  %6136 = vmatpush1.xpose.msra.mxu0 0.0
  %6137 = vmatprep.subr.mxu0 0.0
  %6138 = vmatpush1.xpose.msra.mxu0 0.0
  %6139 = vmatprep.mubr.f32.mxu0 0.0
  %6140 = vmatmul.mubr.f32.gmra.mrb[0].mxu0 %v6070
  %v6141 = vpop.f32.mrb[0].mxu0
  %v6142 = vadd.f32 0.0, %v6141
  %v6143 = vpop.f32.mrb[0].mxu0
  %6144 = vdwg.mxu0
  %v6146 = vsel %vm223, %v5985, 0
  %v6149 = vsel %vm223, %v6066, 0
  %6151 = vmatprep.subr.mxu0 0.0
  %6152 = vmatpush1.xpose.msra.mxu0 %v6149
  %6153 = vmatprep.subr.mxu0 0.0
  %6154 = vmatpush1.xpose.msra.mxu0 0.0
  %6155 = vmatprep.subr.mxu0 0.0
  %6156 = vmatpush1.xpose.msra.mxu0 0.0
  %6157 = vmatprep.subr.mxu0 0.0
  %6158 = vmatpush1.xpose.msra.mxu0 0.0
  %6159 = vmatprep.subr.mxu0 0.0
  %6160 = vmatpush1.xpose.msra.mxu0 0.0
  %6161 = vmatprep.subr.mxu0 0.0
  %6162 = vmatpush1.xpose.msra.mxu0 0.0
  %6163 = vmatprep.subr.mxu0 0.0
  %6164 = vmatpush1.xpose.msra.mxu0 0.0
  %6165 = vmatprep.subr.mxu0 0.0
  %6166 = vmatpush1.xpose.msra.mxu0 0.0
  %6167 = vmatprep.subr.mxu0 0.0
  %6168 = vmatpush1.xpose.msra.mxu0 0.0
  %6169 = vmatprep.subr.mxu0 0.0
  %6170 = vmatpush1.xpose.msra.mxu0 0.0
  %6171 = vmatprep.subr.mxu0 0.0
  %6172 = vmatpush1.xpose.msra.mxu0 0.0
  %6173 = vmatprep.subr.mxu0 0.0
  %6174 = vmatpush1.xpose.msra.mxu0 0.0
  %6175 = vmatprep.subr.mxu0 0.0
  %6176 = vmatpush1.xpose.msra.mxu0 0.0
  %6177 = vmatprep.subr.mxu0 0.0
  %6178 = vmatpush1.xpose.msra.mxu0 0.0
  %6179 = vmatprep.subr.mxu0 0.0
  %6180 = vmatpush1.xpose.msra.mxu0 0.0
  %6181 = vmatprep.subr.mxu0 0.0
  %6182 = vmatpush1.xpose.msra.mxu0 0.0
  %6183 = vmatprep.subr.mxu0 0.0
  %6184 = vmatpush1.xpose.msra.mxu0 0.0
  %6185 = vmatprep.subr.mxu0 0.0
  %6186 = vmatpush1.xpose.msra.mxu0 0.0
  %6187 = vmatprep.subr.mxu0 0.0
  %6188 = vmatpush1.xpose.msra.mxu0 0.0
  %6189 = vmatprep.subr.mxu0 0.0
  %6190 = vmatpush1.xpose.msra.mxu0 0.0
  %6191 = vmatprep.subr.mxu0 0.0
  %6192 = vmatpush1.xpose.msra.mxu0 0.0
  %6193 = vmatprep.subr.mxu0 0.0
  %6194 = vmatpush1.xpose.msra.mxu0 0.0
  %6195 = vmatprep.subr.mxu0 0.0
  %6196 = vmatpush1.xpose.msra.mxu0 0.0
  %6197 = vmatprep.subr.mxu0 0.0
  %6198 = vmatpush1.xpose.msra.mxu0 0.0
  %6199 = vmatprep.subr.mxu0 0.0
  %6200 = vmatpush1.xpose.msra.mxu0 0.0
  %6201 = vmatprep.subr.mxu0 0.0
  %6202 = vmatpush1.xpose.msra.mxu0 0.0
  %6203 = vmatprep.subr.mxu0 0.0
  %6204 = vmatpush1.xpose.msra.mxu0 0.0
  %6205 = vmatprep.subr.mxu0 0.0
  %6206 = vmatpush1.xpose.msra.mxu0 0.0
  %6207 = vmatprep.subr.mxu0 0.0
  %6208 = vmatpush1.xpose.msra.mxu0 0.0
  %6209 = vmatprep.subr.mxu0 0.0
  %6210 = vmatpush1.xpose.msra.mxu0 0.0
  %6211 = vmatprep.subr.mxu0 0.0
  %6212 = vmatpush1.xpose.msra.mxu0 0.0
  %6213 = vmatprep.subr.mxu0 0.0
  %6214 = vmatpush1.xpose.msra.mxu0 0.0
  %6215 = vmatprep.mubr.f32.mxu0 0.0
  %6216 = vmatmul.mubr.f32.gmra.mrb[0].mxu0 %v6146
  %v6217 = vpop.f32.mrb[0].mxu0
  %v6218 = vadd.f32 0.0, %v6217
  %v6219 = vpop.f32.mrb[0].mxu0
  %6220 = vdwg.mxu0
  %v6221 = vmul.f32 %v6142, 0.35355338
  %v6222 = vmul.f32 %v6218, 0.35355338
  %v6223 = vsel %vm223, %v6221, -inf
  %6224 = vmax.xlane.f32.xlu0 %v6223
  %v6225 = vpop.xlane.xlu0 %6224
  %v6226 = vsel %vm223, %v6222, -inf
  %6227 = vmax.xlane.f32.xlu0 %v6226
  %v6228 = vpop.xlane.xlu0 %6227
  %v6229 = vsub.f32 %v6221, %v6225
  %v6230 = vsub.f32 %v6222, %v6228
  %v6231 = vmul.f32 %v6229, 1.442695
  %v6232 = vpow.pop %v6231
  %v6233 = vmul.f32 %v6230, 1.442695
  %v6234 = vpow.pop %v6233
  %v6235 = vsel %vm223, %v6232, 0.0
  %6236 = vadd.xlane.f32.xlu0 %v6235
  %v6237 = vpop.xlane.xlu0 %6236
  %v6238 = vsel %vm223, %v6234, 0.0
  %6239 = vadd.xlane.f32.xlu0 %v6238
  %v6240 = vpop.xlane.xlu0 %6239
  %6241 = vrot.lane.b32.xlu0 %v6061, 96
  %v6242 = vpop.permute.xlu0 %6241
  %v6245 = vsel %vm223, %v6232, 0
  %6247 = vmatprep.subr.mxu0 0.0
  %6248 = vmatpush1.msra.mxu0 %v6242
  %6249 = vmatprep.subr.mxu0 0.0
  %6250 = vmatpush1.msra.mxu0 0.0
  %6251 = vmatprep.subr.mxu0 0.0
  %6252 = vmatpush1.msra.mxu0 0.0
  %6253 = vmatprep.subr.mxu0 0.0
  %6254 = vmatpush1.msra.mxu0 0.0
  %6255 = vmatprep.subr.mxu0 0.0
  %6256 = vmatpush1.msra.mxu0 0.0
  %6257 = vmatprep.subr.mxu0 0.0
  %6258 = vmatpush1.msra.mxu0 0.0
  %6259 = vmatprep.subr.mxu0 0.0
  %6260 = vmatpush1.msra.mxu0 0.0
  %6261 = vmatprep.subr.mxu0 0.0
  %6262 = vmatpush1.msra.mxu0 0.0
  %6263 = vmatprep.subr.mxu0 0.0
  %6264 = vmatpush1.msra.mxu0 0.0
  %6265 = vmatprep.subr.mxu0 0.0
  %6266 = vmatpush1.msra.mxu0 0.0
  %6267 = vmatprep.subr.mxu0 0.0
  %6268 = vmatpush1.msra.mxu0 0.0
  %6269 = vmatprep.subr.mxu0 0.0
  %6270 = vmatpush1.msra.mxu0 0.0
  %6271 = vmatprep.subr.mxu0 0.0
  %6272 = vmatpush1.msra.mxu0 0.0
  %6273 = vmatprep.subr.mxu0 0.0
  %6274 = vmatpush1.msra.mxu0 0.0
  %6275 = vmatprep.subr.mxu0 0.0
  %6276 = vmatpush1.msra.mxu0 0.0
  %6277 = vmatprep.subr.mxu0 0.0
  %6278 = vmatpush1.msra.mxu0 0.0
  %6279 = vmatprep.subr.mxu0 0.0
  %6280 = vmatpush1.msra.mxu0 0.0
  %6281 = vmatprep.subr.mxu0 0.0
  %6282 = vmatpush1.msra.mxu0 0.0
  %6283 = vmatprep.subr.mxu0 0.0
  %6284 = vmatpush1.msra.mxu0 0.0
  %6285 = vmatprep.subr.mxu0 0.0
  %6286 = vmatpush1.msra.mxu0 0.0
  %6287 = vmatprep.subr.mxu0 0.0
  %6288 = vmatpush1.msra.mxu0 0.0
  %6289 = vmatprep.subr.mxu0 0.0
  %6290 = vmatpush1.msra.mxu0 0.0
  %6291 = vmatprep.subr.mxu0 0.0
  %6292 = vmatpush1.msra.mxu0 0.0
  %6293 = vmatprep.subr.mxu0 0.0
  %6294 = vmatpush1.msra.mxu0 0.0
  %6295 = vmatprep.subr.mxu0 0.0
  %6296 = vmatpush1.msra.mxu0 0.0
  %6297 = vmatprep.subr.mxu0 0.0
  %6298 = vmatpush1.msra.mxu0 0.0
  %6299 = vmatprep.subr.mxu0 0.0
  %6300 = vmatpush1.msra.mxu0 0.0
  %6301 = vmatprep.subr.mxu0 0.0
  %6302 = vmatpush1.msra.mxu0 0.0
  %6303 = vmatprep.subr.mxu0 0.0
  %6304 = vmatpush1.msra.mxu0 0.0
  %6305 = vmatprep.subr.mxu0 0.0
  %6306 = vmatpush1.msra.mxu0 0.0
  %6307 = vmatprep.subr.mxu0 0.0
  %6308 = vmatpush1.msra.mxu0 0.0
  %6309 = vmatprep.subr.mxu0 0.0
  %6310 = vmatpush1.msra.mxu0 0.0
  %6311 = vmatprep.mubr.f32.mxu0 0.0
  %6312 = vmatmul.mubr.f32.gmra.mrb[0].mxu0 %v6245
  %v6313 = vpop.f32.mrb[0].mxu0
  %v6314 = vadd.f32 0.0, %v6313
  %v6315 = vpop.f32.mrb[0].mxu0
  %6316 = vdwg.mxu0
  %6317 = vrot.lane.b32.xlu0 %v6066, 96
  %v6318 = vpop.permute.xlu0 %6317
  %v6321 = vsel %vm223, %v6234, 0
  %6323 = vmatprep.subr.mxu0 0.0
  %6324 = vmatpush1.msra.mxu0 %v6318
  %6325 = vmatprep.subr.mxu0 0.0
  %6326 = vmatpush1.msra.mxu0 0.0
  %6327 = vmatprep.subr.mxu0 0.0
  %6328 = vmatpush1.msra.mxu0 0.0
  %6329 = vmatprep.subr.mxu0 0.0
  %6330 = vmatpush1.msra.mxu0 0.0
  %6331 = vmatprep.subr.mxu0 0.0
  %6332 = vmatpush1.msra.mxu0 0.0
  %6333 = vmatprep.subr.mxu0 0.0
  %6334 = vmatpush1.msra.mxu0 0.0
  %6335 = vmatprep.subr.mxu0 0.0
  %6336 = vmatpush1.msra.mxu0 0.0
  %6337 = vmatprep.subr.mxu0 0.0
  %6338 = vmatpush1.msra.mxu0 0.0
  %6339 = vmatprep.subr.mxu0 0.0
  %6340 = vmatpush1.msra.mxu0 0.0
  %6341 = vmatprep.subr.mxu0 0.0
  %6342 = vmatpush1.msra.mxu0 0.0
  %6343 = vmatprep.subr.mxu0 0.0
  %6344 = vmatpush1.msra.mxu0 0.0
  %6345 = vmatprep.subr.mxu0 0.0
  %6346 = vmatpush1.msra.mxu0 0.0
  %6347 = vmatprep.subr.mxu0 0.0
  %6348 = vmatpush1.msra.mxu0 0.0
  %6349 = vmatprep.subr.mxu0 0.0
  %6350 = vmatpush1.msra.mxu0 0.0
  %6351 = vmatprep.subr.mxu0 0.0
  %6352 = vmatpush1.msra.mxu0 0.0
  %6353 = vmatprep.subr.mxu0 0.0
  %6354 = vmatpush1.msra.mxu0 0.0
  %6355 = vmatprep.subr.mxu0 0.0
  %6356 = vmatpush1.msra.mxu0 0.0
  %6357 = vmatprep.subr.mxu0 0.0
  %6358 = vmatpush1.msra.mxu0 0.0
  %6359 = vmatprep.subr.mxu0 0.0
  %6360 = vmatpush1.msra.mxu0 0.0
  %6361 = vmatprep.subr.mxu0 0.0
  %6362 = vmatpush1.msra.mxu0 0.0
  %6363 = vmatprep.subr.mxu0 0.0
  %6364 = vmatpush1.msra.mxu0 0.0
  %6365 = vmatprep.subr.mxu0 0.0
  %6366 = vmatpush1.msra.mxu0 0.0
  %6367 = vmatprep.subr.mxu0 0.0
  %6368 = vmatpush1.msra.mxu0 0.0
  %6369 = vmatprep.subr.mxu0 0.0
  %6370 = vmatpush1.msra.mxu0 0.0
  %6371 = vmatprep.subr.mxu0 0.0
  %6372 = vmatpush1.msra.mxu0 0.0
  %6373 = vmatprep.subr.mxu0 0.0
  %6374 = vmatpush1.msra.mxu0 0.0
  %6375 = vmatprep.subr.mxu0 0.0
  %6376 = vmatpush1.msra.mxu0 0.0
  %6377 = vmatprep.subr.mxu0 0.0
  %6378 = vmatpush1.msra.mxu0 0.0
  %6379 = vmatprep.subr.mxu0 0.0
  %6380 = vmatpush1.msra.mxu0 0.0
  %6381 = vmatprep.subr.mxu0 0.0
  %6382 = vmatpush1.msra.mxu0 0.0
  %6383 = vmatprep.subr.mxu0 0.0
  %6384 = vmatpush1.msra.mxu0 0.0
  %6385 = vmatprep.subr.mxu0 0.0
  %6386 = vmatpush1.msra.mxu0 0.0
  %6387 = vmatprep.mubr.f32.mxu0 0.0
  %6388 = vmatmul.mubr.f32.gmra.mrb[0].mxu0 %v6321
  %v6389 = vpop.f32.mrb[0].mxu0
  %v6390 = vadd.f32 0.0, %v6389
  %v6391 = vpop.f32.mrb[0].mxu0
  %6392 = vdwg.mxu0
  %v6393 = vrcp.pop %v6237
  %v6394 = vrcp.pop %v6240
  %v6395 = vmul.f32 %v6314, %v6393
  %v6396 = vmul.f32 %v6390, %v6394
  %6397 = vrot.lane.b32.xlu0 %v5980, 120
  %v6398 = vpop.permute.xlu0 %6397
  %6399 = vrot.lane.b32.xlu0 %v6061, 120
  %v6400 = vpop.permute.xlu0 %6399
  %v6401 = vsel %vm223, %v6398, 0
  %v6403 = vsel %vm223, %v6400, 0
  %6405 = vmatprep.subr.mxu0 0.0
  %6406 = vmatpush1.xpose.msra.mxu0 %v6403
  %6407 = vmatprep.subr.mxu0 0.0
  %6408 = vmatpush1.xpose.msra.mxu0 0.0
  %6409 = vmatprep.subr.mxu0 0.0
  %6410 = vmatpush1.xpose.msra.mxu0 0.0
  %6411 = vmatprep.subr.mxu0 0.0
  %6412 = vmatpush1.xpose.msra.mxu0 0.0
  %6413 = vmatprep.subr.mxu0 0.0
  %6414 = vmatpush1.xpose.msra.mxu0 0.0
  %6415 = vmatprep.subr.mxu0 0.0
  %6416 = vmatpush1.xpose.msra.mxu0 0.0
  %6417 = vmatprep.subr.mxu0 0.0
  %6418 = vmatpush1.xpose.msra.mxu0 0.0
  %6419 = vmatprep.subr.mxu0 0.0
  %6420 = vmatpush1.xpose.msra.mxu0 0.0
  %6421 = vmatprep.subr.mxu0 0.0
  %6422 = vmatpush1.xpose.msra.mxu0 0.0
  %6423 = vmatprep.subr.mxu0 0.0
  %6424 = vmatpush1.xpose.msra.mxu0 0.0
  %6425 = vmatprep.subr.mxu0 0.0
  %6426 = vmatpush1.xpose.msra.mxu0 0.0
  %6427 = vmatprep.subr.mxu0 0.0
  %6428 = vmatpush1.xpose.msra.mxu0 0.0
  %6429 = vmatprep.subr.mxu0 0.0
  %6430 = vmatpush1.xpose.msra.mxu0 0.0
  %6431 = vmatprep.subr.mxu0 0.0
  %6432 = vmatpush1.xpose.msra.mxu0 0.0
  %6433 = vmatprep.subr.mxu0 0.0
  %6434 = vmatpush1.xpose.msra.mxu0 0.0
  %6435 = vmatprep.subr.mxu0 0.0
  %6436 = vmatpush1.xpose.msra.mxu0 0.0
  %6437 = vmatprep.subr.mxu0 0.0
  %6438 = vmatpush1.xpose.msra.mxu0 0.0
  %6439 = vmatprep.subr.mxu0 0.0
  %6440 = vmatpush1.xpose.msra.mxu0 0.0
  %6441 = vmatprep.subr.mxu0 0.0
  %6442 = vmatpush1.xpose.msra.mxu0 0.0
  %6443 = vmatprep.subr.mxu0 0.0
  %6444 = vmatpush1.xpose.msra.mxu0 0.0
  %6445 = vmatprep.subr.mxu0 0.0
  %6446 = vmatpush1.xpose.msra.mxu0 0.0
  %6447 = vmatprep.subr.mxu0 0.0
  %6448 = vmatpush1.xpose.msra.mxu0 0.0
  %6449 = vmatprep.subr.mxu0 0.0
  %6450 = vmatpush1.xpose.msra.mxu0 0.0
  %6451 = vmatprep.subr.mxu0 0.0
  %6452 = vmatpush1.xpose.msra.mxu0 0.0
  %6453 = vmatprep.subr.mxu0 0.0
  %6454 = vmatpush1.xpose.msra.mxu0 0.0
  %6455 = vmatprep.subr.mxu0 0.0
  %6456 = vmatpush1.xpose.msra.mxu0 0.0
  %6457 = vmatprep.subr.mxu0 0.0
  %6458 = vmatpush1.xpose.msra.mxu0 0.0
  %6459 = vmatprep.subr.mxu0 0.0
  %6460 = vmatpush1.xpose.msra.mxu0 0.0
  %6461 = vmatprep.subr.mxu0 0.0
  %6462 = vmatpush1.xpose.msra.mxu0 0.0
  %6463 = vmatprep.subr.mxu0 0.0
  %6464 = vmatpush1.xpose.msra.mxu0 0.0
  %6465 = vmatprep.subr.mxu0 0.0
  %6466 = vmatpush1.xpose.msra.mxu0 0.0
  %6467 = vmatprep.subr.mxu0 0.0
  %6468 = vmatpush1.xpose.msra.mxu0 0.0
  %6469 = vmatprep.mubr.f32.mxu0 0.0
  %6470 = vmatmul.mubr.f32.gmra.mrb[0].mxu0 %v6401
  %v6471 = vpop.f32.mrb[0].mxu0
  %v6472 = vadd.f32 0.0, %v6471
  %v6473 = vpop.f32.mrb[0].mxu0
  %6474 = vdwg.mxu0
  %6475 = vrot.lane.b32.xlu0 %v5985, 120
  %v6476 = vpop.permute.xlu0 %6475
  %6477 = vrot.lane.b32.xlu0 %v6066, 120
  %v6478 = vpop.permute.xlu0 %6477
  %v6479 = vsel %vm223, %v6476, 0
  %v6481 = vsel %vm223, %v6478, 0
  %6483 = vmatprep.subr.mxu0 0.0
  %6484 = vmatpush1.xpose.msra.mxu0 %v6481
  %6485 = vmatprep.subr.mxu0 0.0
  %6486 = vmatpush1.xpose.msra.mxu0 0.0
  %6487 = vmatprep.subr.mxu0 0.0
  %6488 = vmatpush1.xpose.msra.mxu0 0.0
  %6489 = vmatprep.subr.mxu0 0.0
  %6490 = vmatpush1.xpose.msra.mxu0 0.0
  %6491 = vmatprep.subr.mxu0 0.0
  %6492 = vmatpush1.xpose.msra.mxu0 0.0
  %6493 = vmatprep.subr.mxu0 0.0
  %6494 = vmatpush1.xpose.msra.mxu0 0.0
  %6495 = vmatprep.subr.mxu0 0.0
  %6496 = vmatpush1.xpose.msra.mxu0 0.0
  %6497 = vmatprep.subr.mxu0 0.0
  %6498 = vmatpush1.xpose.msra.mxu0 0.0
  %6499 = vmatprep.subr.mxu0 0.0
  %6500 = vmatpush1.xpose.msra.mxu0 0.0
  %6501 = vmatprep.subr.mxu0 0.0
  %6502 = vmatpush1.xpose.msra.mxu0 0.0
  %6503 = vmatprep.subr.mxu0 0.0
  %6504 = vmatpush1.xpose.msra.mxu0 0.0
  %6505 = vmatprep.subr.mxu0 0.0
  %6506 = vmatpush1.xpose.msra.mxu0 0.0
  %6507 = vmatprep.subr.mxu0 0.0
  %6508 = vmatpush1.xpose.msra.mxu0 0.0
  %6509 = vmatprep.subr.mxu0 0.0
  %6510 = vmatpush1.xpose.msra.mxu0 0.0
  %6511 = vmatprep.subr.mxu0 0.0
  %6512 = vmatpush1.xpose.msra.mxu0 0.0
  %6513 = vmatprep.subr.mxu0 0.0
  %6514 = vmatpush1.xpose.msra.mxu0 0.0
  %6515 = vmatprep.subr.mxu0 0.0
  %6516 = vmatpush1.xpose.msra.mxu0 0.0
  %6517 = vmatprep.subr.mxu0 0.0
  %6518 = vmatpush1.xpose.msra.mxu0 0.0
  %6519 = vmatprep.subr.mxu0 0.0
  %6520 = vmatpush1.xpose.msra.mxu0 0.0
  %6521 = vmatprep.subr.mxu0 0.0
  %6522 = vmatpush1.xpose.msra.mxu0 0.0
  %6523 = vmatprep.subr.mxu0 0.0
  %6524 = vmatpush1.xpose.msra.mxu0 0.0
  %6525 = vmatprep.subr.mxu0 0.0
  %6526 = vmatpush1.xpose.msra.mxu0 0.0
  %6527 = vmatprep.subr.mxu0 0.0
  %6528 = vmatpush1.xpose.msra.mxu0 0.0
  %6529 = vmatprep.subr.mxu0 0.0
  %6530 = vmatpush1.xpose.msra.mxu0 0.0
  %6531 = vmatprep.subr.mxu0 0.0
  %6532 = vmatpush1.xpose.msra.mxu0 0.0
  %6533 = vmatprep.subr.mxu0 0.0
  %6534 = vmatpush1.xpose.msra.mxu0 0.0
  %6535 = vmatprep.subr.mxu0 0.0
  %6536 = vmatpush1.xpose.msra.mxu0 0.0
  %6537 = vmatprep.subr.mxu0 0.0
  %6538 = vmatpush1.xpose.msra.mxu0 0.0
  %6539 = vmatprep.subr.mxu0 0.0
  %6540 = vmatpush1.xpose.msra.mxu0 0.0
  %6541 = vmatprep.subr.mxu0 0.0
  %6542 = vmatpush1.xpose.msra.mxu0 0.0
  %6543 = vmatprep.subr.mxu0 0.0
  %6544 = vmatpush1.xpose.msra.mxu0 0.0
  %6545 = vmatprep.subr.mxu0 0.0
  %6546 = vmatpush1.xpose.msra.mxu0 0.0
  %6547 = vmatprep.mubr.f32.mxu0 0.0
  %6548 = vmatmul.mubr.f32.gmra.mrb[0].mxu0 %v6479
  %v6549 = vpop.f32.mrb[0].mxu0
  %v6550 = vadd.f32 0.0, %v6549
  %v6551 = vpop.f32.mrb[0].mxu0
  %6552 = vdwg.mxu0
  %v6553 = vmul.f32 %v6472, 0.35355338
  %v6554 = vmul.f32 %v6550, 0.35355338
  %v6555 = vsel %vm223, %v6553, -inf
  %6556 = vmax.xlane.f32.xlu0 %v6555
  %v6557 = vpop.xlane.xlu0 %6556
  %v6558 = vsel %vm223, %v6554, -inf
  %6559 = vmax.xlane.f32.xlu0 %v6558
  %v6560 = vpop.xlane.xlu0 %6559
  %v6561 = vsub.f32 %v6553, %v6557
  %v6562 = vsub.f32 %v6554, %v6560
  %v6563 = vmul.f32 %v6561, 1.442695
  %v6564 = vpow.pop %v6563
  %v6565 = vmul.f32 %v6562, 1.442695
  %v6566 = vpow.pop %v6565
  %v6567 = vsel %vm223, %v6564, 0.0
  %6568 = vadd.xlane.f32.xlu0 %v6567
  %v6569 = vpop.xlane.xlu0 %6568
  %v6570 = vsel %vm223, %v6566, 0.0
  %6571 = vadd.xlane.f32.xlu0 %v6570
  %v6572 = vpop.xlane.xlu0 %6571
  %6573 = vrot.lane.b32.xlu0 %v6061, 88
  %v6574 = vpop.permute.xlu0 %6573
  %v6577 = vsel %vm223, %v6564, 0
  %6579 = vmatprep.subr.mxu0 0.0
  %6580 = vmatpush1.msra.mxu0 %v6574
  %6581 = vmatprep.subr.mxu0 0.0
  %6582 = vmatpush1.msra.mxu0 0.0
  %6583 = vmatprep.subr.mxu0 0.0
  %6584 = vmatpush1.msra.mxu0 0.0
  %6585 = vmatprep.subr.mxu0 0.0
  %6586 = vmatpush1.msra.mxu0 0.0
  %6587 = vmatprep.subr.mxu0 0.0
  %6588 = vmatpush1.msra.mxu0 0.0
  %6589 = vmatprep.subr.mxu0 0.0
  %6590 = vmatpush1.msra.mxu0 0.0
  %6591 = vmatprep.subr.mxu0 0.0
  %6592 = vmatpush1.msra.mxu0 0.0
  %6593 = vmatprep.subr.mxu0 0.0
  %6594 = vmatpush1.msra.mxu0 0.0
  %6595 = vmatprep.subr.mxu0 0.0
  %6596 = vmatpush1.msra.mxu0 0.0
  %6597 = vmatprep.subr.mxu0 0.0
  %6598 = vmatpush1.msra.mxu0 0.0
  %6599 = vmatprep.subr.mxu0 0.0
  %6600 = vmatpush1.msra.mxu0 0.0
  %6601 = vmatprep.subr.mxu0 0.0
  %6602 = vmatpush1.msra.mxu0 0.0
  %6603 = vmatprep.subr.mxu0 0.0
  %6604 = vmatpush1.msra.mxu0 0.0
  %6605 = vmatprep.subr.mxu0 0.0
  %6606 = vmatpush1.msra.mxu0 0.0
  %6607 = vmatprep.subr.mxu0 0.0
  %6608 = vmatpush1.msra.mxu0 0.0
  %6609 = vmatprep.subr.mxu0 0.0
  %6610 = vmatpush1.msra.mxu0 0.0
  %6611 = vmatprep.subr.mxu0 0.0
  %6612 = vmatpush1.msra.mxu0 0.0
  %6613 = vmatprep.subr.mxu0 0.0
  %6614 = vmatpush1.msra.mxu0 0.0
  %6615 = vmatprep.subr.mxu0 0.0
  %6616 = vmatpush1.msra.mxu0 0.0
  %6617 = vmatprep.subr.mxu0 0.0
  %6618 = vmatpush1.msra.mxu0 0.0
  %6619 = vmatprep.subr.mxu0 0.0
  %6620 = vmatpush1.msra.mxu0 0.0
  %6621 = vmatprep.subr.mxu0 0.0
  %6622 = vmatpush1.msra.mxu0 0.0
  %6623 = vmatprep.subr.mxu0 0.0
  %6624 = vmatpush1.msra.mxu0 0.0
  %6625 = vmatprep.subr.mxu0 0.0
  %6626 = vmatpush1.msra.mxu0 0.0
  %6627 = vmatprep.subr.mxu0 0.0
  %6628 = vmatpush1.msra.mxu0 0.0
  %6629 = vmatprep.subr.mxu0 0.0
  %6630 = vmatpush1.msra.mxu0 0.0
  %6631 = vmatprep.subr.mxu0 0.0
  %6632 = vmatpush1.msra.mxu0 0.0
  %6633 = vmatprep.subr.mxu0 0.0
  %6634 = vmatpush1.msra.mxu0 0.0
  %6635 = vmatprep.subr.mxu0 0.0
  %6636 = vmatpush1.msra.mxu0 0.0
  %6637 = vmatprep.subr.mxu0 0.0
  %6638 = vmatpush1.msra.mxu0 0.0
  %6639 = vmatprep.subr.mxu0 0.0
  %6640 = vmatpush1.msra.mxu0 0.0
  %6641 = vmatprep.subr.mxu0 0.0
  %6642 = vmatpush1.msra.mxu0 0.0
  %6643 = vmatprep.mubr.f32.mxu0 0.0
  %6644 = vmatmul.mubr.f32.gmra.mrb[0].mxu0 %v6577
  %v6645 = vpop.f32.mrb[0].mxu0
  %v6646 = vadd.f32 0.0, %v6645
  %v6647 = vpop.f32.mrb[0].mxu0
  %6648 = vdwg.mxu0
  %6649 = vrot.lane.b32.xlu0 %v6066, 88
  %v6650 = vpop.permute.xlu0 %6649
  %v6653 = vsel %vm223, %v6566, 0
  %6655 = vmatprep.subr.mxu0 0.0
  %6656 = vmatpush1.msra.mxu0 %v6650
  %6657 = vmatprep.subr.mxu0 0.0
  %6658 = vmatpush1.msra.mxu0 0.0
  %6659 = vmatprep.subr.mxu0 0.0
  %6660 = vmatpush1.msra.mxu0 0.0
  %6661 = vmatprep.subr.mxu0 0.0
  %6662 = vmatpush1.msra.mxu0 0.0
  %6663 = vmatprep.subr.mxu0 0.0
  %6664 = vmatpush1.msra.mxu0 0.0
  %6665 = vmatprep.subr.mxu0 0.0
  %6666 = vmatpush1.msra.mxu0 0.0
  %6667 = vmatprep.subr.mxu0 0.0
  %6668 = vmatpush1.msra.mxu0 0.0
  %6669 = vmatprep.subr.mxu0 0.0
  %6670 = vmatpush1.msra.mxu0 0.0
  %6671 = vmatprep.subr.mxu0 0.0
  %6672 = vmatpush1.msra.mxu0 0.0
  %6673 = vmatprep.subr.mxu0 0.0
  %6674 = vmatpush1.msra.mxu0 0.0
  %6675 = vmatprep.subr.mxu0 0.0
  %6676 = vmatpush1.msra.mxu0 0.0
  %6677 = vmatprep.subr.mxu0 0.0
  %6678 = vmatpush1.msra.mxu0 0.0
  %6679 = vmatprep.subr.mxu0 0.0
  %6680 = vmatpush1.msra.mxu0 0.0
  %6681 = vmatprep.subr.mxu0 0.0
  %6682 = vmatpush1.msra.mxu0 0.0
  %6683 = vmatprep.subr.mxu0 0.0
  %6684 = vmatpush1.msra.mxu0 0.0
  %6685 = vmatprep.subr.mxu0 0.0
  %6686 = vmatpush1.msra.mxu0 0.0
  %6687 = vmatprep.subr.mxu0 0.0
  %6688 = vmatpush1.msra.mxu0 0.0
  %6689 = vmatprep.subr.mxu0 0.0
  %6690 = vmatpush1.msra.mxu0 0.0
  %6691 = vmatprep.subr.mxu0 0.0
  %6692 = vmatpush1.msra.mxu0 0.0
  %6693 = vmatprep.subr.mxu0 0.0
  %6694 = vmatpush1.msra.mxu0 0.0
  %6695 = vmatprep.subr.mxu0 0.0
  %6696 = vmatpush1.msra.mxu0 0.0
  %6697 = vmatprep.subr.mxu0 0.0
  %6698 = vmatpush1.msra.mxu0 0.0
  %6699 = vmatprep.subr.mxu0 0.0
  %6700 = vmatpush1.msra.mxu0 0.0
  %6701 = vmatprep.subr.mxu0 0.0
  %6702 = vmatpush1.msra.mxu0 0.0
  %6703 = vmatprep.subr.mxu0 0.0
  %6704 = vmatpush1.msra.mxu0 0.0
  %6705 = vmatprep.subr.mxu0 0.0
  %6706 = vmatpush1.msra.mxu0 0.0
  %6707 = vmatprep.subr.mxu0 0.0
  %6708 = vmatpush1.msra.mxu0 0.0
  %6709 = vmatprep.subr.mxu0 0.0
  %6710 = vmatpush1.msra.mxu0 0.0
  %6711 = vmatprep.subr.mxu0 0.0
  %6712 = vmatpush1.msra.mxu0 0.0
  %6713 = vmatprep.subr.mxu0 0.0
  %6714 = vmatpush1.msra.mxu0 0.0
  %6715 = vmatprep.subr.mxu0 0.0
  %6716 = vmatpush1.msra.mxu0 0.0
  %6717 = vmatprep.subr.mxu0 0.0
  %6718 = vmatpush1.msra.mxu0 0.0
  %6719 = vmatprep.mubr.f32.mxu0 0.0
  %6720 = vmatmul.mubr.f32.gmra.mrb[0].mxu0 %v6653
  %v6721 = vpop.f32.mrb[0].mxu0
  %v6722 = vadd.f32 0.0, %v6721
  %v6723 = vpop.f32.mrb[0].mxu0
  %6724 = vdwg.mxu0
  %v6725 = vrcp.pop %v6569
  %v6726 = vrcp.pop %v6572
  %v6727 = vmul.f32 %v6646, %v6725
  %v6728 = vmul.f32 %v6722, %v6726
  %v6730 = vsel %vm223, %v6727, 0
  %v6733 = vsel %vm223, %v6728, 0
  %6735 = vmatprep.subr.mxu0 0.0
  %6736 = vmatpush1.msra.mxu0 %v4069
  %6737 = vmatprep.subr.mxu0 0.0
  %6738 = vmatpush1.msra.mxu0 0.0
  %6739 = vmatprep.subr.mxu0 0.0
  %6740 = vmatpush1.msra.mxu0 0.0
  %6741 = vmatprep.subr.mxu0 0.0
  %6742 = vmatpush1.msra.mxu0 0.0
  %6743 = vmatprep.subr.mxu0 0.0
  %6744 = vmatpush1.msra.mxu0 0.0
  %6745 = vmatprep.subr.mxu0 0.0
  %6746 = vmatpush1.msra.mxu0 0.0
  %6747 = vmatprep.subr.mxu0 0.0
  %6748 = vmatpush1.msra.mxu0 0.0
  %6749 = vmatprep.subr.mxu0 0.0
  %6750 = vmatpush1.msra.mxu0 0.0
  %6751 = vmatprep.subr.mxu0 0.0
  %6752 = vmatpush1.msra.mxu0 0.0
  %6753 = vmatprep.subr.mxu0 0.0
  %6754 = vmatpush1.msra.mxu0 0.0
  %6755 = vmatprep.subr.mxu0 0.0
  %6756 = vmatpush1.msra.mxu0 0.0
  %6757 = vmatprep.subr.mxu0 0.0
  %6758 = vmatpush1.msra.mxu0 0.0
  %6759 = vmatprep.subr.mxu0 0.0
  %6760 = vmatpush1.msra.mxu0 0.0
  %6761 = vmatprep.subr.mxu0 0.0
  %6762 = vmatpush1.msra.mxu0 0.0
  %6763 = vmatprep.subr.mxu0 0.0
  %6764 = vmatpush1.msra.mxu0 0.0
  %6765 = vmatprep.subr.mxu0 0.0
  %6766 = vmatpush1.msra.mxu0 0.0
  %6767 = vmatprep.subr.mxu0 0.0
  %6768 = vmatpush1.msra.mxu0 0.0
  %6769 = vmatprep.subr.mxu0 0.0
  %6770 = vmatpush1.msra.mxu0 0.0
  %6771 = vmatprep.subr.mxu0 0.0
  %6772 = vmatpush1.msra.mxu0 0.0
  %6773 = vmatprep.subr.mxu0 0.0
  %6774 = vmatpush1.msra.mxu0 0.0
  %6775 = vmatprep.subr.mxu0 0.0
  %6776 = vmatpush1.msra.mxu0 0.0
  %6777 = vmatprep.subr.mxu0 0.0
  %6778 = vmatpush1.msra.mxu0 0.0
  %6779 = vmatprep.subr.mxu0 0.0
  %6780 = vmatpush1.msra.mxu0 0.0
  %6781 = vmatprep.subr.mxu0 0.0
  %6782 = vmatpush1.msra.mxu0 0.0
  %6783 = vmatprep.subr.mxu0 0.0
  %6784 = vmatpush1.msra.mxu0 0.0
  %6785 = vmatprep.subr.mxu0 0.0
  %6786 = vmatpush1.msra.mxu0 0.0
  %6787 = vmatprep.subr.mxu0 0.0
  %6788 = vmatpush1.msra.mxu0 0.0
  %6789 = vmatprep.subr.mxu0 0.0
  %6790 = vmatpush1.msra.mxu0 0.0
  %6791 = vmatprep.subr.mxu0 0.0
  %6792 = vmatpush1.msra.mxu0 0.0
  %6793 = vmatprep.subr.mxu0 0.0
  %6794 = vmatpush1.msra.mxu0 0.0
  %6795 = vmatprep.subr.mxu0 0.0
  %6796 = vmatpush1.msra.mxu0 0.0
  %6797 = vmatprep.subr.mxu0 0.0
  %6798 = vmatpush1.msra.mxu0 0.0
  %6799 = vmatprep.mubr.f32.mxu0 0.0
  %6800 = vmatmul.mubr.f32.gmra.mrb[0].mxu0 %v6730
  %v6801 = vpop.f32.mrb[0].mxu0
  %v6802 = vadd.f32 0.0, %v6801
  %v6803 = vpop.f32.mrb[0].mxu0
  %6804 = vmatprep.mubr.f32.mxu0 0.0
  %6805 = vmatmul.mubr.f32.gmra.mrb[0].mxu0 %v6733
  %v6806 = vpop.f32.mrb[0].mxu0
  %v6807 = vadd.f32 0.0, %v6806
  %v6808 = vpop.f32.mrb[0].mxu0
  %6809 = vdwg.mxu0
  %v6811 = vsel %vm223, %v6395, 0
  %v6814 = vsel %vm223, %v6396, 0
  %6816 = vmatprep.subr.mxu0 0.0
  %6817 = vmatpush1.msra.mxu0 %v4068
  %6818 = vmatprep.subr.mxu0 0.0
  %6819 = vmatpush1.msra.mxu0 0.0
  %6820 = vmatprep.subr.mxu0 0.0
  %6821 = vmatpush1.msra.mxu0 0.0
  %6822 = vmatprep.subr.mxu0 0.0
  %6823 = vmatpush1.msra.mxu0 0.0
  %6824 = vmatprep.subr.mxu0 0.0
  %6825 = vmatpush1.msra.mxu0 0.0
  %6826 = vmatprep.subr.mxu0 0.0
  %6827 = vmatpush1.msra.mxu0 0.0
  %6828 = vmatprep.subr.mxu0 0.0
  %6829 = vmatpush1.msra.mxu0 0.0
  %6830 = vmatprep.subr.mxu0 0.0
  %6831 = vmatpush1.msra.mxu0 0.0
  %6832 = vmatprep.subr.mxu0 0.0
  %6833 = vmatpush1.msra.mxu0 0.0
  %6834 = vmatprep.subr.mxu0 0.0
  %6835 = vmatpush1.msra.mxu0 0.0
  %6836 = vmatprep.subr.mxu0 0.0
  %6837 = vmatpush1.msra.mxu0 0.0
  %6838 = vmatprep.subr.mxu0 0.0
  %6839 = vmatpush1.msra.mxu0 0.0
  %6840 = vmatprep.subr.mxu0 0.0
  %6841 = vmatpush1.msra.mxu0 0.0
  %6842 = vmatprep.subr.mxu0 0.0
  %6843 = vmatpush1.msra.mxu0 0.0
  %6844 = vmatprep.subr.mxu0 0.0
  %6845 = vmatpush1.msra.mxu0 0.0
  %6846 = vmatprep.subr.mxu0 0.0
  %6847 = vmatpush1.msra.mxu0 0.0
  %6848 = vmatprep.subr.mxu0 0.0
  %6849 = vmatpush1.msra.mxu0 0.0
  %6850 = vmatprep.subr.mxu0 0.0
  %6851 = vmatpush1.msra.mxu0 0.0
  %6852 = vmatprep.subr.mxu0 0.0
  %6853 = vmatpush1.msra.mxu0 0.0
  %6854 = vmatprep.subr.mxu0 0.0
  %6855 = vmatpush1.msra.mxu0 0.0
  %6856 = vmatprep.subr.mxu0 0.0
  %6857 = vmatpush1.msra.mxu0 0.0
  %6858 = vmatprep.subr.mxu0 0.0
  %6859 = vmatpush1.msra.mxu0 0.0
  %6860 = vmatprep.subr.mxu0 0.0
  %6861 = vmatpush1.msra.mxu0 0.0
  %6862 = vmatprep.subr.mxu0 0.0
  %6863 = vmatpush1.msra.mxu0 0.0
  %6864 = vmatprep.subr.mxu0 0.0
  %6865 = vmatpush1.msra.mxu0 0.0
  %6866 = vmatprep.subr.mxu0 0.0
  %6867 = vmatpush1.msra.mxu0 0.0
  %6868 = vmatprep.subr.mxu0 0.0
  %6869 = vmatpush1.msra.mxu0 0.0
  %6870 = vmatprep.subr.mxu0 0.0
  %6871 = vmatpush1.msra.mxu0 0.0
  %6872 = vmatprep.subr.mxu0 0.0
  %6873 = vmatpush1.msra.mxu0 0.0
  %6874 = vmatprep.subr.mxu0 0.0
  %6875 = vmatpush1.msra.mxu0 0.0
  %6876 = vmatprep.subr.mxu0 0.0
  %6877 = vmatpush1.msra.mxu0 0.0
  %6878 = vmatprep.subr.mxu0 0.0
  %6879 = vmatpush1.msra.mxu0 0.0
  %6880 = vmatprep.mubr.f32.mxu0 0.0
  %6881 = vmatmul.mubr.f32.gmra.mrb[0].mxu0 %v6811
  %v6882 = vpop.f32.mrb[0].mxu0
  %v6883 = vadd.f32 %v6802, %v6882
  %v6884 = vpop.f32.mrb[0].mxu0
  %6885 = vmatprep.mubr.f32.mxu0 0.0
  %6886 = vmatmul.mubr.f32.gmra.mrb[0].mxu0 %v6814
  %v6887 = vpop.f32.mrb[0].mxu0
  %v6888 = vadd.f32 %v6807, %v6887
  %v6889 = vpop.f32.mrb[0].mxu0
  %6890 = vdwg.mxu0
  %6891 = vrot.lane.b32.xlu0 %v5980, 112
  %v6892 = vpop.permute.xlu0 %6891
  %6893 = vrot.lane.b32.xlu0 %v6061, 112
  %v6894 = vpop.permute.xlu0 %6893
  %v6895 = vsel %vm223, %v6892, 0
  %v6897 = vsel %vm223, %v6894, 0
  %6899 = vmatprep.subr.mxu0 0.0
  %6900 = vmatpush1.xpose.msra.mxu0 %v6897
  %6901 = vmatprep.subr.mxu0 0.0
  %6902 = vmatpush1.xpose.msra.mxu0 0.0
  %6903 = vmatprep.subr.mxu0 0.0
  %6904 = vmatpush1.xpose.msra.mxu0 0.0
  %6905 = vmatprep.subr.mxu0 0.0
  %6906 = vmatpush1.xpose.msra.mxu0 0.0
  %6907 = vmatprep.subr.mxu0 0.0
  %6908 = vmatpush1.xpose.msra.mxu0 0.0
  %6909 = vmatprep.subr.mxu0 0.0
  %6910 = vmatpush1.xpose.msra.mxu0 0.0
  %6911 = vmatprep.subr.mxu0 0.0
  %6912 = vmatpush1.xpose.msra.mxu0 0.0
  %6913 = vmatprep.subr.mxu0 0.0
  %6914 = vmatpush1.xpose.msra.mxu0 0.0
  %6915 = vmatprep.subr.mxu0 0.0
  %6916 = vmatpush1.xpose.msra.mxu0 0.0
  %6917 = vmatprep.subr.mxu0 0.0
  %6918 = vmatpush1.xpose.msra.mxu0 0.0
  %6919 = vmatprep.subr.mxu0 0.0
  %6920 = vmatpush1.xpose.msra.mxu0 0.0
  %6921 = vmatprep.subr.mxu0 0.0
  %6922 = vmatpush1.xpose.msra.mxu0 0.0
  %6923 = vmatprep.subr.mxu0 0.0
  %6924 = vmatpush1.xpose.msra.mxu0 0.0
  %6925 = vmatprep.subr.mxu0 0.0
  %6926 = vmatpush1.xpose.msra.mxu0 0.0
  %6927 = vmatprep.subr.mxu0 0.0
  %6928 = vmatpush1.xpose.msra.mxu0 0.0
  %6929 = vmatprep.subr.mxu0 0.0
  %6930 = vmatpush1.xpose.msra.mxu0 0.0
  %6931 = vmatprep.subr.mxu0 0.0
  %6932 = vmatpush1.xpose.msra.mxu0 0.0
  %6933 = vmatprep.subr.mxu0 0.0
  %6934 = vmatpush1.xpose.msra.mxu0 0.0
  %6935 = vmatprep.subr.mxu0 0.0
  %6936 = vmatpush1.xpose.msra.mxu0 0.0
  %6937 = vmatprep.subr.mxu0 0.0
  %6938 = vmatpush1.xpose.msra.mxu0 0.0
  %6939 = vmatprep.subr.mxu0 0.0
  %6940 = vmatpush1.xpose.msra.mxu0 0.0
  %6941 = vmatprep.subr.mxu0 0.0
  %6942 = vmatpush1.xpose.msra.mxu0 0.0
  %6943 = vmatprep.subr.mxu0 0.0
  %6944 = vmatpush1.xpose.msra.mxu0 0.0
  %6945 = vmatprep.subr.mxu0 0.0
  %6946 = vmatpush1.xpose.msra.mxu0 0.0
  %6947 = vmatprep.subr.mxu0 0.0
  %6948 = vmatpush1.xpose.msra.mxu0 0.0
  %6949 = vmatprep.subr.mxu0 0.0
  %6950 = vmatpush1.xpose.msra.mxu0 0.0
  %6951 = vmatprep.subr.mxu0 0.0
  %6952 = vmatpush1.xpose.msra.mxu0 0.0
  %6953 = vmatprep.subr.mxu0 0.0
  %6954 = vmatpush1.xpose.msra.mxu0 0.0
  %6955 = vmatprep.subr.mxu0 0.0
  %6956 = vmatpush1.xpose.msra.mxu0 0.0
  %6957 = vmatprep.subr.mxu0 0.0
  %6958 = vmatpush1.xpose.msra.mxu0 0.0
  %6959 = vmatprep.subr.mxu0 0.0
  %6960 = vmatpush1.xpose.msra.mxu0 0.0
  %6961 = vmatprep.subr.mxu0 0.0
  %6962 = vmatpush1.xpose.msra.mxu0 0.0
  %6963 = vmatprep.mubr.f32.mxu0 0.0
  %6964 = vmatmul.mubr.f32.gmra.mrb[0].mxu0 %v6895
  %v6965 = vpop.f32.mrb[0].mxu0
  %v6966 = vadd.f32 0.0, %v6965
  %v6967 = vpop.f32.mrb[0].mxu0
  %6968 = vdwg.mxu0
  %6969 = vrot.lane.b32.xlu0 %v5985, 112
  %v6970 = vpop.permute.xlu0 %6969
  %6971 = vrot.lane.b32.xlu0 %v6066, 112
  %v6972 = vpop.permute.xlu0 %6971
  %v6973 = vsel %vm223, %v6970, 0
  %v6975 = vsel %vm223, %v6972, 0
  %6977 = vmatprep.subr.mxu0 0.0
  %6978 = vmatpush1.xpose.msra.mxu0 %v6975
  %6979 = vmatprep.subr.mxu0 0.0
  %6980 = vmatpush1.xpose.msra.mxu0 0.0
  %6981 = vmatprep.subr.mxu0 0.0
  %6982 = vmatpush1.xpose.msra.mxu0 0.0
  %6983 = vmatprep.subr.mxu0 0.0
  %6984 = vmatpush1.xpose.msra.mxu0 0.0
  %6985 = vmatprep.subr.mxu0 0.0
  %6986 = vmatpush1.xpose.msra.mxu0 0.0
  %6987 = vmatprep.subr.mxu0 0.0
  %6988 = vmatpush1.xpose.msra.mxu0 0.0
  %6989 = vmatprep.subr.mxu0 0.0
  %6990 = vmatpush1.xpose.msra.mxu0 0.0
  %6991 = vmatprep.subr.mxu0 0.0
  %6992 = vmatpush1.xpose.msra.mxu0 0.0
  %6993 = vmatprep.subr.mxu0 0.0
  %6994 = vmatpush1.xpose.msra.mxu0 0.0
  %6995 = vmatprep.subr.mxu0 0.0
  %6996 = vmatpush1.xpose.msra.mxu0 0.0
  %6997 = vmatprep.subr.mxu0 0.0
  %6998 = vmatpush1.xpose.msra.mxu0 0.0
  %6999 = vmatprep.subr.mxu0 0.0
  %7000 = vmatpush1.xpose.msra.mxu0 0.0
  %7001 = vmatprep.subr.mxu0 0.0
  %7002 = vmatpush1.xpose.msra.mxu0 0.0
  %7003 = vmatprep.subr.mxu0 0.0
  %7004 = vmatpush1.xpose.msra.mxu0 0.0
  %7005 = vmatprep.subr.mxu0 0.0
  %7006 = vmatpush1.xpose.msra.mxu0 0.0
  %7007 = vmatprep.subr.mxu0 0.0
  %7008 = vmatpush1.xpose.msra.mxu0 0.0
  %7009 = vmatprep.subr.mxu0 0.0
  %7010 = vmatpush1.xpose.msra.mxu0 0.0
  %7011 = vmatprep.subr.mxu0 0.0
  %7012 = vmatpush1.xpose.msra.mxu0 0.0
  %7013 = vmatprep.subr.mxu0 0.0
  %7014 = vmatpush1.xpose.msra.mxu0 0.0
  %7015 = vmatprep.subr.mxu0 0.0
  %7016 = vmatpush1.xpose.msra.mxu0 0.0
  %7017 = vmatprep.subr.mxu0 0.0
  %7018 = vmatpush1.xpose.msra.mxu0 0.0
  %7019 = vmatprep.subr.mxu0 0.0
  %7020 = vmatpush1.xpose.msra.mxu0 0.0
  %7021 = vmatprep.subr.mxu0 0.0
  %7022 = vmatpush1.xpose.msra.mxu0 0.0
  %7023 = vmatprep.subr.mxu0 0.0
  %7024 = vmatpush1.xpose.msra.mxu0 0.0
  %7025 = vmatprep.subr.mxu0 0.0
  %7026 = vmatpush1.xpose.msra.mxu0 0.0
  %7027 = vmatprep.subr.mxu0 0.0
  %7028 = vmatpush1.xpose.msra.mxu0 0.0
  %7029 = vmatprep.subr.mxu0 0.0
  %7030 = vmatpush1.xpose.msra.mxu0 0.0
  %7031 = vmatprep.subr.mxu0 0.0
  %7032 = vmatpush1.xpose.msra.mxu0 0.0
  %7033 = vmatprep.subr.mxu0 0.0
  %7034 = vmatpush1.xpose.msra.mxu0 0.0
  %7035 = vmatprep.subr.mxu0 0.0
  %7036 = vmatpush1.xpose.msra.mxu0 0.0
  %7037 = vmatprep.subr.mxu0 0.0
  %7038 = vmatpush1.xpose.msra.mxu0 0.0
  %7039 = vmatprep.subr.mxu0 0.0
  %7040 = vmatpush1.xpose.msra.mxu0 0.0
  %7041 = vmatprep.mubr.f32.mxu0 0.0
  %7042 = vmatmul.mubr.f32.gmra.mrb[0].mxu0 %v6973
  %v7043 = vpop.f32.mrb[0].mxu0
  %v7044 = vadd.f32 0.0, %v7043
  %v7045 = vpop.f32.mrb[0].mxu0
  %7046 = vdwg.mxu0
  %v7047 = vmul.f32 %v6966, 0.35355338
  %v7048 = vmul.f32 %v7044, 0.35355338
  %v7049 = vsel %vm223, %v7047, -inf
  %7050 = vmax.xlane.f32.xlu0 %v7049
  %v7051 = vpop.xlane.xlu0 %7050
  %v7052 = vsel %vm223, %v7048, -inf
  %7053 = vmax.xlane.f32.xlu0 %v7052
  %v7054 = vpop.xlane.xlu0 %7053
  %v7055 = vsub.f32 %v7047, %v7051
  %v7056 = vsub.f32 %v7048, %v7054
  %v7057 = vmul.f32 %v7055, 1.442695
  %v7058 = vpow.pop %v7057
  %v7059 = vmul.f32 %v7056, 1.442695
  %v7060 = vpow.pop %v7059
  %v7061 = vsel %vm223, %v7058, 0.0
  %7062 = vadd.xlane.f32.xlu0 %v7061
  %v7063 = vpop.xlane.xlu0 %7062
  %v7064 = vsel %vm223, %v7060, 0.0
  %7065 = vadd.xlane.f32.xlu0 %v7064
  %v7066 = vpop.xlane.xlu0 %7065
  %7067 = vrot.lane.b32.xlu0 %v6061, 80
  %v7068 = vpop.permute.xlu0 %7067
  %v7071 = vsel %vm223, %v7058, 0
  %7073 = vmatprep.subr.mxu0 0.0
  %7074 = vmatpush1.msra.mxu0 %v7068
  %7075 = vmatprep.subr.mxu0 0.0
  %7076 = vmatpush1.msra.mxu0 0.0
  %7077 = vmatprep.subr.mxu0 0.0
  %7078 = vmatpush1.msra.mxu0 0.0
  %7079 = vmatprep.subr.mxu0 0.0
  %7080 = vmatpush1.msra.mxu0 0.0
  %7081 = vmatprep.subr.mxu0 0.0
  %7082 = vmatpush1.msra.mxu0 0.0
  %7083 = vmatprep.subr.mxu0 0.0
  %7084 = vmatpush1.msra.mxu0 0.0
  %7085 = vmatprep.subr.mxu0 0.0
  %7086 = vmatpush1.msra.mxu0 0.0
  %7087 = vmatprep.subr.mxu0 0.0
  %7088 = vmatpush1.msra.mxu0 0.0
  %7089 = vmatprep.subr.mxu0 0.0
  %7090 = vmatpush1.msra.mxu0 0.0
  %7091 = vmatprep.subr.mxu0 0.0
  %7092 = vmatpush1.msra.mxu0 0.0
  %7093 = vmatprep.subr.mxu0 0.0
  %7094 = vmatpush1.msra.mxu0 0.0
  %7095 = vmatprep.subr.mxu0 0.0
  %7096 = vmatpush1.msra.mxu0 0.0
  %7097 = vmatprep.subr.mxu0 0.0
  %7098 = vmatpush1.msra.mxu0 0.0
  %7099 = vmatprep.subr.mxu0 0.0
  %7100 = vmatpush1.msra.mxu0 0.0
  %7101 = vmatprep.subr.mxu0 0.0
  %7102 = vmatpush1.msra.mxu0 0.0
  %7103 = vmatprep.subr.mxu0 0.0
  %7104 = vmatpush1.msra.mxu0 0.0
  %7105 = vmatprep.subr.mxu0 0.0
  %7106 = vmatpush1.msra.mxu0 0.0
  %7107 = vmatprep.subr.mxu0 0.0
  %7108 = vmatpush1.msra.mxu0 0.0
  %7109 = vmatprep.subr.mxu0 0.0
  %7110 = vmatpush1.msra.mxu0 0.0
  %7111 = vmatprep.subr.mxu0 0.0
  %7112 = vmatpush1.msra.mxu0 0.0
  %7113 = vmatprep.subr.mxu0 0.0
  %7114 = vmatpush1.msra.mxu0 0.0
  %7115 = vmatprep.subr.mxu0 0.0
  %7116 = vmatpush1.msra.mxu0 0.0
  %7117 = vmatprep.subr.mxu0 0.0
  %7118 = vmatpush1.msra.mxu0 0.0
  %7119 = vmatprep.subr.mxu0 0.0
  %7120 = vmatpush1.msra.mxu0 0.0
  %7121 = vmatprep.subr.mxu0 0.0
  %7122 = vmatpush1.msra.mxu0 0.0
  %7123 = vmatprep.subr.mxu0 0.0
  %7124 = vmatpush1.msra.mxu0 0.0
  %7125 = vmatprep.subr.mxu0 0.0
  %7126 = vmatpush1.msra.mxu0 0.0
  %7127 = vmatprep.subr.mxu0 0.0
  %7128 = vmatpush1.msra.mxu0 0.0
  %7129 = vmatprep.subr.mxu0 0.0
  %7130 = vmatpush1.msra.mxu0 0.0
  %7131 = vmatprep.subr.mxu0 0.0
  %7132 = vmatpush1.msra.mxu0 0.0
  %7133 = vmatprep.subr.mxu0 0.0
  %7134 = vmatpush1.msra.mxu0 0.0
  %7135 = vmatprep.subr.mxu0 0.0
  %7136 = vmatpush1.msra.mxu0 0.0
  %7137 = vmatprep.mubr.f32.mxu0 0.0
  %7138 = vmatmul.mubr.f32.gmra.mrb[0].mxu0 %v7071
  %v7139 = vpop.f32.mrb[0].mxu0
  %v7140 = vadd.f32 0.0, %v7139
  %v7141 = vpop.f32.mrb[0].mxu0
  %7142 = vdwg.mxu0
  %7143 = vrot.lane.b32.xlu0 %v6066, 80
  %v7144 = vpop.permute.xlu0 %7143
  %v7147 = vsel %vm223, %v7060, 0
  %7149 = vmatprep.subr.mxu0 0.0
  %7150 = vmatpush1.msra.mxu0 %v7144
  %7151 = vmatprep.subr.mxu0 0.0
  %7152 = vmatpush1.msra.mxu0 0.0
  %7153 = vmatprep.subr.mxu0 0.0
  %7154 = vmatpush1.msra.mxu0 0.0
  %7155 = vmatprep.subr.mxu0 0.0
  %7156 = vmatpush1.msra.mxu0 0.0
  %7157 = vmatprep.subr.mxu0 0.0
  %7158 = vmatpush1.msra.mxu0 0.0
  %7159 = vmatprep.subr.mxu0 0.0
  %7160 = vmatpush1.msra.mxu0 0.0
  %7161 = vmatprep.subr.mxu0 0.0
  %7162 = vmatpush1.msra.mxu0 0.0
  %7163 = vmatprep.subr.mxu0 0.0
  %7164 = vmatpush1.msra.mxu0 0.0
  %7165 = vmatprep.subr.mxu0 0.0
  %7166 = vmatpush1.msra.mxu0 0.0
  %7167 = vmatprep.subr.mxu0 0.0
  %7168 = vmatpush1.msra.mxu0 0.0
  %7169 = vmatprep.subr.mxu0 0.0
  %7170 = vmatpush1.msra.mxu0 0.0
  %7171 = vmatprep.subr.mxu0 0.0
  %7172 = vmatpush1.msra.mxu0 0.0
  %7173 = vmatprep.subr.mxu0 0.0
  %7174 = vmatpush1.msra.mxu0 0.0
  %7175 = vmatprep.subr.mxu0 0.0
  %7176 = vmatpush1.msra.mxu0 0.0
  %7177 = vmatprep.subr.mxu0 0.0
  %7178 = vmatpush1.msra.mxu0 0.0
  %7179 = vmatprep.subr.mxu0 0.0
  %7180 = vmatpush1.msra.mxu0 0.0
  %7181 = vmatprep.subr.mxu0 0.0
  %7182 = vmatpush1.msra.mxu0 0.0
  %7183 = vmatprep.subr.mxu0 0.0
  %7184 = vmatpush1.msra.mxu0 0.0
  %7185 = vmatprep.subr.mxu0 0.0
  %7186 = vmatpush1.msra.mxu0 0.0
  %7187 = vmatprep.subr.mxu0 0.0
  %7188 = vmatpush1.msra.mxu0 0.0
  %7189 = vmatprep.subr.mxu0 0.0
  %7190 = vmatpush1.msra.mxu0 0.0
  %7191 = vmatprep.subr.mxu0 0.0
  %7192 = vmatpush1.msra.mxu0 0.0
  %7193 = vmatprep.subr.mxu0 0.0
  %7194 = vmatpush1.msra.mxu0 0.0
  %7195 = vmatprep.subr.mxu0 0.0
  %7196 = vmatpush1.msra.mxu0 0.0
  %7197 = vmatprep.subr.mxu0 0.0
  %7198 = vmatpush1.msra.mxu0 0.0
  %7199 = vmatprep.subr.mxu0 0.0
  %7200 = vmatpush1.msra.mxu0 0.0
  %7201 = vmatprep.subr.mxu0 0.0
  %7202 = vmatpush1.msra.mxu0 0.0
  %7203 = vmatprep.subr.mxu0 0.0
  %7204 = vmatpush1.msra.mxu0 0.0
  %7205 = vmatprep.subr.mxu0 0.0
  %7206 = vmatpush1.msra.mxu0 0.0
  %7207 = vmatprep.subr.mxu0 0.0
  %7208 = vmatpush1.msra.mxu0 0.0
  %7209 = vmatprep.subr.mxu0 0.0
  %7210 = vmatpush1.msra.mxu0 0.0
  %7211 = vmatprep.subr.mxu0 0.0
  %7212 = vmatpush1.msra.mxu0 0.0
  %7213 = vmatprep.mubr.f32.mxu0 0.0
  %7214 = vmatmul.mubr.f32.gmra.mrb[0].mxu0 %v7147
  %v7215 = vpop.f32.mrb[0].mxu0
  %v7216 = vadd.f32 0.0, %v7215
  %v7217 = vpop.f32.mrb[0].mxu0
  %7218 = vdwg.mxu0
  %v7219 = vrcp.pop %v7063
  %v7220 = vrcp.pop %v7066
  %v7221 = vmul.f32 %v7140, %v7219
  %v7222 = vmul.f32 %v7216, %v7220
  %v7224 = vsel %vm223, %v7221, 0
  %v7227 = vsel %vm223, %v7222, 0
  %7229 = vmatprep.subr.mxu0 0.0
  %7230 = vmatpush1.msra.mxu0 %v4070
  %7231 = vmatprep.subr.mxu0 0.0
  %7232 = vmatpush1.msra.mxu0 0.0
  %7233 = vmatprep.subr.mxu0 0.0
  %7234 = vmatpush1.msra.mxu0 0.0
  %7235 = vmatprep.subr.mxu0 0.0
  %7236 = vmatpush1.msra.mxu0 0.0
  %7237 = vmatprep.subr.mxu0 0.0
  %7238 = vmatpush1.msra.mxu0 0.0
  %7239 = vmatprep.subr.mxu0 0.0
  %7240 = vmatpush1.msra.mxu0 0.0
  %7241 = vmatprep.subr.mxu0 0.0
  %7242 = vmatpush1.msra.mxu0 0.0
  %7243 = vmatprep.subr.mxu0 0.0
  %7244 = vmatpush1.msra.mxu0 0.0
  %7245 = vmatprep.subr.mxu0 0.0
  %7246 = vmatpush1.msra.mxu0 0.0
  %7247 = vmatprep.subr.mxu0 0.0
  %7248 = vmatpush1.msra.mxu0 0.0
  %7249 = vmatprep.subr.mxu0 0.0
  %7250 = vmatpush1.msra.mxu0 0.0
  %7251 = vmatprep.subr.mxu0 0.0
  %7252 = vmatpush1.msra.mxu0 0.0
  %7253 = vmatprep.subr.mxu0 0.0
  %7254 = vmatpush1.msra.mxu0 0.0
  %7255 = vmatprep.subr.mxu0 0.0
  %7256 = vmatpush1.msra.mxu0 0.0
  %7257 = vmatprep.subr.mxu0 0.0
  %7258 = vmatpush1.msra.mxu0 0.0
  %7259 = vmatprep.subr.mxu0 0.0
  %7260 = vmatpush1.msra.mxu0 0.0
  %7261 = vmatprep.subr.mxu0 0.0
  %7262 = vmatpush1.msra.mxu0 0.0
  %7263 = vmatprep.subr.mxu0 0.0
  %7264 = vmatpush1.msra.mxu0 0.0
  %7265 = vmatprep.subr.mxu0 0.0
  %7266 = vmatpush1.msra.mxu0 0.0
  %7267 = vmatprep.subr.mxu0 0.0
  %7268 = vmatpush1.msra.mxu0 0.0
  %7269 = vmatprep.subr.mxu0 0.0
  %7270 = vmatpush1.msra.mxu0 0.0
  %7271 = vmatprep.subr.mxu0 0.0
  %7272 = vmatpush1.msra.mxu0 0.0
  %7273 = vmatprep.subr.mxu0 0.0
  %7274 = vmatpush1.msra.mxu0 0.0
  %7275 = vmatprep.subr.mxu0 0.0
  %7276 = vmatpush1.msra.mxu0 0.0
  %7277 = vmatprep.subr.mxu0 0.0
  %7278 = vmatpush1.msra.mxu0 0.0
  %7279 = vmatprep.subr.mxu0 0.0
  %7280 = vmatpush1.msra.mxu0 0.0
  %7281 = vmatprep.subr.mxu0 0.0
  %7282 = vmatpush1.msra.mxu0 0.0
  %7283 = vmatprep.subr.mxu0 0.0
  %7284 = vmatpush1.msra.mxu0 0.0
  %7285 = vmatprep.subr.mxu0 0.0
  %7286 = vmatpush1.msra.mxu0 0.0
  %7287 = vmatprep.subr.mxu0 0.0
  %7288 = vmatpush1.msra.mxu0 0.0
  %7289 = vmatprep.subr.mxu0 0.0
  %7290 = vmatpush1.msra.mxu0 0.0
  %7291 = vmatprep.subr.mxu0 0.0
  %7292 = vmatpush1.msra.mxu0 0.0
  %7293 = vmatprep.mubr.f32.mxu0 0.0
  %7294 = vmatmul.mubr.f32.gmra.mrb[0].mxu0 %v7224
  %v7295 = vpop.f32.mrb[0].mxu0
  %v7296 = vadd.f32 0.0, %v7295
  %v7297 = vpop.f32.mrb[0].mxu0
  %7298 = vmatprep.mubr.f32.mxu0 0.0
  %7299 = vmatmul.mubr.f32.gmra.mrb[0].mxu0 %v7227
  %v7300 = vpop.f32.mrb[0].mxu0
  %v7301 = vadd.f32 0.0, %v7300
  %v7302 = vpop.f32.mrb[0].mxu0
  %7303 = vdwg.mxu0
  %v7304 = vadd.f32 %v6883, %v7296
  %v7305 = vadd.f32 %v6888, %v7301
  %7306 = vrot.lane.b32.xlu0 %v5980, 104
  %v7307 = vpop.permute.xlu0 %7306
  %7308 = vrot.lane.b32.xlu0 %v6061, 104
  %v7309 = vpop.permute.xlu0 %7308
  %v7310 = vsel %vm223, %v7307, 0
  %v7312 = vsel %vm223, %v7309, 0
  %7314 = vmatprep.subr.mxu0 0.0
  %7315 = vmatpush1.xpose.msra.mxu0 %v7312
  %7316 = vmatprep.subr.mxu0 0.0
  %7317 = vmatpush1.xpose.msra.mxu0 0.0
  %7318 = vmatprep.subr.mxu0 0.0
  %7319 = vmatpush1.xpose.msra.mxu0 0.0
  %7320 = vmatprep.subr.mxu0 0.0
  %7321 = vmatpush1.xpose.msra.mxu0 0.0
  %7322 = vmatprep.subr.mxu0 0.0
  %7323 = vmatpush1.xpose.msra.mxu0 0.0
  %7324 = vmatprep.subr.mxu0 0.0
  %7325 = vmatpush1.xpose.msra.mxu0 0.0
  %7326 = vmatprep.subr.mxu0 0.0
  %7327 = vmatpush1.xpose.msra.mxu0 0.0
  %7328 = vmatprep.subr.mxu0 0.0
  %7329 = vmatpush1.xpose.msra.mxu0 0.0
  %7330 = vmatprep.subr.mxu0 0.0
  %7331 = vmatpush1.xpose.msra.mxu0 0.0
  %7332 = vmatprep.subr.mxu0 0.0
  %7333 = vmatpush1.xpose.msra.mxu0 0.0
  %7334 = vmatprep.subr.mxu0 0.0
  %7335 = vmatpush1.xpose.msra.mxu0 0.0
  %7336 = vmatprep.subr.mxu0 0.0
  %7337 = vmatpush1.xpose.msra.mxu0 0.0
  %7338 = vmatprep.subr.mxu0 0.0
  %7339 = vmatpush1.xpose.msra.mxu0 0.0
  %7340 = vmatprep.subr.mxu0 0.0
  %7341 = vmatpush1.xpose.msra.mxu0 0.0
  %7342 = vmatprep.subr.mxu0 0.0
  %7343 = vmatpush1.xpose.msra.mxu0 0.0
  %7344 = vmatprep.subr.mxu0 0.0
  %7345 = vmatpush1.xpose.msra.mxu0 0.0
  %7346 = vmatprep.subr.mxu0 0.0
  %7347 = vmatpush1.xpose.msra.mxu0 0.0
  %7348 = vmatprep.subr.mxu0 0.0
  %7349 = vmatpush1.xpose.msra.mxu0 0.0
  %7350 = vmatprep.subr.mxu0 0.0
  %7351 = vmatpush1.xpose.msra.mxu0 0.0
  %7352 = vmatprep.subr.mxu0 0.0
  %7353 = vmatpush1.xpose.msra.mxu0 0.0
  %7354 = vmatprep.subr.mxu0 0.0
  %7355 = vmatpush1.xpose.msra.mxu0 0.0
  %7356 = vmatprep.subr.mxu0 0.0
  %7357 = vmatpush1.xpose.msra.mxu0 0.0
  %7358 = vmatprep.subr.mxu0 0.0
  %7359 = vmatpush1.xpose.msra.mxu0 0.0
  %7360 = vmatprep.subr.mxu0 0.0
  %7361 = vmatpush1.xpose.msra.mxu0 0.0
  %7362 = vmatprep.subr.mxu0 0.0
  %7363 = vmatpush1.xpose.msra.mxu0 0.0
  %7364 = vmatprep.subr.mxu0 0.0
  %7365 = vmatpush1.xpose.msra.mxu0 0.0
  %7366 = vmatprep.subr.mxu0 0.0
  %7367 = vmatpush1.xpose.msra.mxu0 0.0
  %7368 = vmatprep.subr.mxu0 0.0
  %7369 = vmatpush1.xpose.msra.mxu0 0.0
  %7370 = vmatprep.subr.mxu0 0.0
  %7371 = vmatpush1.xpose.msra.mxu0 0.0
  %7372 = vmatprep.subr.mxu0 0.0
  %7373 = vmatpush1.xpose.msra.mxu0 0.0
  %7374 = vmatprep.subr.mxu0 0.0
  %7375 = vmatpush1.xpose.msra.mxu0 0.0
  %7376 = vmatprep.subr.mxu0 0.0
  %7377 = vmatpush1.xpose.msra.mxu0 0.0
  %7378 = vmatprep.mubr.f32.mxu0 0.0
  %7379 = vmatmul.mubr.f32.gmra.mrb[0].mxu0 %v7310
  %v7380 = vpop.f32.mrb[0].mxu0
  %v7381 = vadd.f32 0.0, %v7380
  %v7382 = vpop.f32.mrb[0].mxu0
  %7383 = vdwg.mxu0
  %7384 = vrot.lane.b32.xlu0 %v5985, 104
  %v7385 = vpop.permute.xlu0 %7384
  %7386 = vrot.lane.b32.xlu0 %v6066, 104
  %v7387 = vpop.permute.xlu0 %7386
  %v7388 = vsel %vm223, %v7385, 0
  %v7390 = vsel %vm223, %v7387, 0
  %7392 = vmatprep.subr.mxu0 0.0
  %7393 = vmatpush1.xpose.msra.mxu0 %v7390
  %7394 = vmatprep.subr.mxu0 0.0
  %7395 = vmatpush1.xpose.msra.mxu0 0.0
  %7396 = vmatprep.subr.mxu0 0.0
  %7397 = vmatpush1.xpose.msra.mxu0 0.0
  %7398 = vmatprep.subr.mxu0 0.0
  %7399 = vmatpush1.xpose.msra.mxu0 0.0
  %7400 = vmatprep.subr.mxu0 0.0
  %7401 = vmatpush1.xpose.msra.mxu0 0.0
  %7402 = vmatprep.subr.mxu0 0.0
  %7403 = vmatpush1.xpose.msra.mxu0 0.0
  %7404 = vmatprep.subr.mxu0 0.0
  %7405 = vmatpush1.xpose.msra.mxu0 0.0
  %7406 = vmatprep.subr.mxu0 0.0
  %7407 = vmatpush1.xpose.msra.mxu0 0.0
  %7408 = vmatprep.subr.mxu0 0.0
  %7409 = vmatpush1.xpose.msra.mxu0 0.0
  %7410 = vmatprep.subr.mxu0 0.0
  %7411 = vmatpush1.xpose.msra.mxu0 0.0
  %7412 = vmatprep.subr.mxu0 0.0
  %7413 = vmatpush1.xpose.msra.mxu0 0.0
  %7414 = vmatprep.subr.mxu0 0.0
  %7415 = vmatpush1.xpose.msra.mxu0 0.0
  %7416 = vmatprep.subr.mxu0 0.0
  %7417 = vmatpush1.xpose.msra.mxu0 0.0
  %7418 = vmatprep.subr.mxu0 0.0
  %7419 = vmatpush1.xpose.msra.mxu0 0.0
  %7420 = vmatprep.subr.mxu0 0.0
  %7421 = vmatpush1.xpose.msra.mxu0 0.0
  %7422 = vmatprep.subr.mxu0 0.0
  %7423 = vmatpush1.xpose.msra.mxu0 0.0
  %7424 = vmatprep.subr.mxu0 0.0
  %7425 = vmatpush1.xpose.msra.mxu0 0.0
  %7426 = vmatprep.subr.mxu0 0.0
  %7427 = vmatpush1.xpose.msra.mxu0 0.0
  %7428 = vmatprep.subr.mxu0 0.0
  %7429 = vmatpush1.xpose.msra.mxu0 0.0
  %7430 = vmatprep.subr.mxu0 0.0
  %7431 = vmatpush1.xpose.msra.mxu0 0.0
  %7432 = vmatprep.subr.mxu0 0.0
  %7433 = vmatpush1.xpose.msra.mxu0 0.0
  %7434 = vmatprep.subr.mxu0 0.0
  %7435 = vmatpush1.xpose.msra.mxu0 0.0
  %7436 = vmatprep.subr.mxu0 0.0
  %7437 = vmatpush1.xpose.msra.mxu0 0.0
  %7438 = vmatprep.subr.mxu0 0.0
  %7439 = vmatpush1.xpose.msra.mxu0 0.0
  %7440 = vmatprep.subr.mxu0 0.0
  %7441 = vmatpush1.xpose.msra.mxu0 0.0
  %7442 = vmatprep.subr.mxu0 0.0
  %7443 = vmatpush1.xpose.msra.mxu0 0.0
  %7444 = vmatprep.subr.mxu0 0.0
  %7445 = vmatpush1.xpose.msra.mxu0 0.0
  %7446 = vmatprep.subr.mxu0 0.0
  %7447 = vmatpush1.xpose.msra.mxu0 0.0
  %7448 = vmatprep.subr.mxu0 0.0
  %7449 = vmatpush1.xpose.msra.mxu0 0.0
  %7450 = vmatprep.subr.mxu0 0.0
  %7451 = vmatpush1.xpose.msra.mxu0 0.0
  %7452 = vmatprep.subr.mxu0 0.0
  %7453 = vmatpush1.xpose.msra.mxu0 0.0
  %7454 = vmatprep.subr.mxu0 0.0
  %7455 = vmatpush1.xpose.msra.mxu0 0.0
  %7456 = vmatprep.mubr.f32.mxu0 0.0
  %7457 = vmatmul.mubr.f32.gmra.mrb[0].mxu0 %v7388
  %v7458 = vpop.f32.mrb[0].mxu0
  %v7459 = vadd.f32 0.0, %v7458
  %v7460 = vpop.f32.mrb[0].mxu0
  %7461 = vdwg.mxu0
  %v7462 = vmul.f32 %v7381, 0.35355338
  %v7463 = vmul.f32 %v7459, 0.35355338
  %v7464 = vsel %vm223, %v7462, -inf
  %7465 = vmax.xlane.f32.xlu0 %v7464
  %v7466 = vpop.xlane.xlu0 %7465
  %v7467 = vsel %vm223, %v7463, -inf
  %7468 = vmax.xlane.f32.xlu0 %v7467
  %v7469 = vpop.xlane.xlu0 %7468
  %v7470 = vsub.f32 %v7462, %v7466
  %v7471 = vsub.f32 %v7463, %v7469
  %v7472 = vmul.f32 %v7470, 1.442695
  %v7473 = vpow.pop %v7472
  %v7474 = vmul.f32 %v7471, 1.442695
  %v7475 = vpow.pop %v7474
  %v7476 = vsel %vm223, %v7473, 0.0
  %7477 = vadd.xlane.f32.xlu0 %v7476
  %v7478 = vpop.xlane.xlu0 %7477
  %v7479 = vsel %vm223, %v7475, 0.0
  %7480 = vadd.xlane.f32.xlu0 %v7479
  %v7481 = vpop.xlane.xlu0 %7480
  %7482 = vrot.lane.b32.xlu0 %v6061, 72
  %v7483 = vpop.permute.xlu0 %7482
  %v7486 = vsel %vm223, %v7473, 0
  %7488 = vmatprep.subr.mxu0 0.0
  %7489 = vmatpush1.msra.mxu0 %v7483
  %7490 = vmatprep.subr.mxu0 0.0
  %7491 = vmatpush1.msra.mxu0 0.0
  %7492 = vmatprep.subr.mxu0 0.0
  %7493 = vmatpush1.msra.mxu0 0.0
  %7494 = vmatprep.subr.mxu0 0.0
  %7495 = vmatpush1.msra.mxu0 0.0
  %7496 = vmatprep.subr.mxu0 0.0
  %7497 = vmatpush1.msra.mxu0 0.0
  %7498 = vmatprep.subr.mxu0 0.0
  %7499 = vmatpush1.msra.mxu0 0.0
  %7500 = vmatprep.subr.mxu0 0.0
  %7501 = vmatpush1.msra.mxu0 0.0
  %7502 = vmatprep.subr.mxu0 0.0
  %7503 = vmatpush1.msra.mxu0 0.0
  %7504 = vmatprep.subr.mxu0 0.0
  %7505 = vmatpush1.msra.mxu0 0.0
  %7506 = vmatprep.subr.mxu0 0.0
  %7507 = vmatpush1.msra.mxu0 0.0
  %7508 = vmatprep.subr.mxu0 0.0
  %7509 = vmatpush1.msra.mxu0 0.0
  %7510 = vmatprep.subr.mxu0 0.0
  %7511 = vmatpush1.msra.mxu0 0.0
  %7512 = vmatprep.subr.mxu0 0.0
  %7513 = vmatpush1.msra.mxu0 0.0
  %7514 = vmatprep.subr.mxu0 0.0
  %7515 = vmatpush1.msra.mxu0 0.0
  %7516 = vmatprep.subr.mxu0 0.0
  %7517 = vmatpush1.msra.mxu0 0.0
  %7518 = vmatprep.subr.mxu0 0.0
  %7519 = vmatpush1.msra.mxu0 0.0
  %7520 = vmatprep.subr.mxu0 0.0
  %7521 = vmatpush1.msra.mxu0 0.0
  %7522 = vmatprep.subr.mxu0 0.0
  %7523 = vmatpush1.msra.mxu0 0.0
  %7524 = vmatprep.subr.mxu0 0.0
  %7525 = vmatpush1.msra.mxu0 0.0
  %7526 = vmatprep.subr.mxu0 0.0
  %7527 = vmatpush1.msra.mxu0 0.0
  %7528 = vmatprep.subr.mxu0 0.0
  %7529 = vmatpush1.msra.mxu0 0.0
  %7530 = vmatprep.subr.mxu0 0.0
  %7531 = vmatpush1.msra.mxu0 0.0
  %7532 = vmatprep.subr.mxu0 0.0
  %7533 = vmatpush1.msra.mxu0 0.0
  %7534 = vmatprep.subr.mxu0 0.0
  %7535 = vmatpush1.msra.mxu0 0.0
  %7536 = vmatprep.subr.mxu0 0.0
  %7537 = vmatpush1.msra.mxu0 0.0
  %7538 = vmatprep.subr.mxu0 0.0
  %7539 = vmatpush1.msra.mxu0 0.0
  %7540 = vmatprep.subr.mxu0 0.0
  %7541 = vmatpush1.msra.mxu0 0.0
  %7542 = vmatprep.subr.mxu0 0.0
  %7543 = vmatpush1.msra.mxu0 0.0
  %7544 = vmatprep.subr.mxu0 0.0
  %7545 = vmatpush1.msra.mxu0 0.0
  %7546 = vmatprep.subr.mxu0 0.0
  %7547 = vmatpush1.msra.mxu0 0.0
  %7548 = vmatprep.subr.mxu0 0.0
  %7549 = vmatpush1.msra.mxu0 0.0
  %7550 = vmatprep.subr.mxu0 0.0
  %7551 = vmatpush1.msra.mxu0 0.0
  %7552 = vmatprep.mubr.f32.mxu0 0.0
  %7553 = vmatmul.mubr.f32.gmra.mrb[0].mxu0 %v7486
  %v7554 = vpop.f32.mrb[0].mxu0
  %v7555 = vadd.f32 0.0, %v7554
  %v7556 = vpop.f32.mrb[0].mxu0
  %7557 = vdwg.mxu0
  %7558 = vrot.lane.b32.xlu0 %v6066, 72
  %v7559 = vpop.permute.xlu0 %7558
  %v7562 = vsel %vm223, %v7475, 0
  %7564 = vmatprep.subr.mxu0 0.0
  %7565 = vmatpush1.msra.mxu0 %v7559
  %7566 = vmatprep.subr.mxu0 0.0
  %7567 = vmatpush1.msra.mxu0 0.0
  %7568 = vmatprep.subr.mxu0 0.0
  %7569 = vmatpush1.msra.mxu0 0.0
  %7570 = vmatprep.subr.mxu0 0.0
  %7571 = vmatpush1.msra.mxu0 0.0
  %7572 = vmatprep.subr.mxu0 0.0
  %7573 = vmatpush1.msra.mxu0 0.0
  %7574 = vmatprep.subr.mxu0 0.0
  %7575 = vmatpush1.msra.mxu0 0.0
  %7576 = vmatprep.subr.mxu0 0.0
  %7577 = vmatpush1.msra.mxu0 0.0
  %7578 = vmatprep.subr.mxu0 0.0
  %7579 = vmatpush1.msra.mxu0 0.0
  %7580 = vmatprep.subr.mxu0 0.0
  %7581 = vmatpush1.msra.mxu0 0.0
  %7582 = vmatprep.subr.mxu0 0.0
  %7583 = vmatpush1.msra.mxu0 0.0
  %7584 = vmatprep.subr.mxu0 0.0
  %7585 = vmatpush1.msra.mxu0 0.0
  %7586 = vmatprep.subr.mxu0 0.0
  %7587 = vmatpush1.msra.mxu0 0.0
  %7588 = vmatprep.subr.mxu0 0.0
  %7589 = vmatpush1.msra.mxu0 0.0
  %7590 = vmatprep.subr.mxu0 0.0
  %7591 = vmatpush1.msra.mxu0 0.0
  %7592 = vmatprep.subr.mxu0 0.0
  %7593 = vmatpush1.msra.mxu0 0.0
  %7594 = vmatprep.subr.mxu0 0.0
  %7595 = vmatpush1.msra.mxu0 0.0
  %7596 = vmatprep.subr.mxu0 0.0
  %7597 = vmatpush1.msra.mxu0 0.0
  %7598 = vmatprep.subr.mxu0 0.0
  %7599 = vmatpush1.msra.mxu0 0.0
  %7600 = vmatprep.subr.mxu0 0.0
  %7601 = vmatpush1.msra.mxu0 0.0
  %7602 = vmatprep.subr.mxu0 0.0
  %7603 = vmatpush1.msra.mxu0 0.0
  %7604 = vmatprep.subr.mxu0 0.0
  %7605 = vmatpush1.msra.mxu0 0.0
  %7606 = vmatprep.subr.mxu0 0.0
  %7607 = vmatpush1.msra.mxu0 0.0
  %7608 = vmatprep.subr.mxu0 0.0
  %7609 = vmatpush1.msra.mxu0 0.0
  %7610 = vmatprep.subr.mxu0 0.0
  %7611 = vmatpush1.msra.mxu0 0.0
  %7612 = vmatprep.subr.mxu0 0.0
  %7613 = vmatpush1.msra.mxu0 0.0
  %7614 = vmatprep.subr.mxu0 0.0
  %7615 = vmatpush1.msra.mxu0 0.0
  %7616 = vmatprep.subr.mxu0 0.0
  %7617 = vmatpush1.msra.mxu0 0.0
  %7618 = vmatprep.subr.mxu0 0.0
  %7619 = vmatpush1.msra.mxu0 0.0
  %7620 = vmatprep.subr.mxu0 0.0
  %7621 = vmatpush1.msra.mxu0 0.0
  %7622 = vmatprep.subr.mxu0 0.0
  %7623 = vmatpush1.msra.mxu0 0.0
  %7624 = vmatprep.subr.mxu0 0.0
  %7625 = vmatpush1.msra.mxu0 0.0
  %7626 = vmatprep.subr.mxu0 0.0
  %7627 = vmatpush1.msra.mxu0 0.0
  %7628 = vmatprep.mubr.f32.mxu0 0.0
  %7629 = vmatmul.mubr.f32.gmra.mrb[0].mxu0 %v7562
  %v7630 = vpop.f32.mrb[0].mxu0
  %v7631 = vadd.f32 0.0, %v7630
  %v7632 = vpop.f32.mrb[0].mxu0
  %7633 = vdwg.mxu0
  %v7634 = vrcp.pop %v7478
  %v7635 = vrcp.pop %v7481
  %v7636 = vmul.f32 %v7555, %v7634
  %v7637 = vmul.f32 %v7631, %v7635
  %v7639 = vsel %vm223, %v7636, 0
  %v7642 = vsel %vm223, %v7637, 0
  %7644 = vmatprep.subr.mxu0 0.0
  %7645 = vmatpush1.msra.mxu0 %v4071
  %7646 = vmatprep.subr.mxu0 0.0
  %7647 = vmatpush1.msra.mxu0 0.0
  %7648 = vmatprep.subr.mxu0 0.0
  %7649 = vmatpush1.msra.mxu0 0.0
  %7650 = vmatprep.subr.mxu0 0.0
  %7651 = vmatpush1.msra.mxu0 0.0
  %7652 = vmatprep.subr.mxu0 0.0
  %7653 = vmatpush1.msra.mxu0 0.0
  %7654 = vmatprep.subr.mxu0 0.0
  %7655 = vmatpush1.msra.mxu0 0.0
  %7656 = vmatprep.subr.mxu0 0.0
  %7657 = vmatpush1.msra.mxu0 0.0
  %7658 = vmatprep.subr.mxu0 0.0
  %7659 = vmatpush1.msra.mxu0 0.0
  %7660 = vmatprep.subr.mxu0 0.0
  %7661 = vmatpush1.msra.mxu0 0.0
  %7662 = vmatprep.subr.mxu0 0.0
  %7663 = vmatpush1.msra.mxu0 0.0
  %7664 = vmatprep.subr.mxu0 0.0
  %7665 = vmatpush1.msra.mxu0 0.0
  %7666 = vmatprep.subr.mxu0 0.0
  %7667 = vmatpush1.msra.mxu0 0.0
  %7668 = vmatprep.subr.mxu0 0.0
  %7669 = vmatpush1.msra.mxu0 0.0
  %7670 = vmatprep.subr.mxu0 0.0
  %7671 = vmatpush1.msra.mxu0 0.0
  %7672 = vmatprep.subr.mxu0 0.0
  %7673 = vmatpush1.msra.mxu0 0.0
  %7674 = vmatprep.subr.mxu0 0.0
  %7675 = vmatpush1.msra.mxu0 0.0
  %7676 = vmatprep.subr.mxu0 0.0
  %7677 = vmatpush1.msra.mxu0 0.0
  %7678 = vmatprep.subr.mxu0 0.0
  %7679 = vmatpush1.msra.mxu0 0.0
  %7680 = vmatprep.subr.mxu0 0.0
  %7681 = vmatpush1.msra.mxu0 0.0
  %7682 = vmatprep.subr.mxu0 0.0
  %7683 = vmatpush1.msra.mxu0 0.0
  %7684 = vmatprep.subr.mxu0 0.0
  %7685 = vmatpush1.msra.mxu0 0.0
  %7686 = vmatprep.subr.mxu0 0.0
  %7687 = vmatpush1.msra.mxu0 0.0
  %7688 = vmatprep.subr.mxu0 0.0
  %7689 = vmatpush1.msra.mxu0 0.0
  %7690 = vmatprep.subr.mxu0 0.0
  %7691 = vmatpush1.msra.mxu0 0.0
  %7692 = vmatprep.subr.mxu0 0.0
  %7693 = vmatpush1.msra.mxu0 0.0
  %7694 = vmatprep.subr.mxu0 0.0
  %7695 = vmatpush1.msra.mxu0 0.0
  %7696 = vmatprep.subr.mxu0 0.0
  %7697 = vmatpush1.msra.mxu0 0.0
  %7698 = vmatprep.subr.mxu0 0.0
  %7699 = vmatpush1.msra.mxu0 0.0
  %7700 = vmatprep.subr.mxu0 0.0
  %7701 = vmatpush1.msra.mxu0 0.0
  %7702 = vmatprep.subr.mxu0 0.0
  %7703 = vmatpush1.msra.mxu0 0.0
  %7704 = vmatprep.subr.mxu0 0.0
  %7705 = vmatpush1.msra.mxu0 0.0
  %7706 = vmatprep.subr.mxu0 0.0
  %7707 = vmatpush1.msra.mxu0 0.0
  %7708 = vmatprep.mubr.f32.mxu0 0.0
  %7709 = vmatmul.mubr.f32.gmra.mrb[0].mxu0 %v7639
  %v7710 = vpop.f32.mrb[0].mxu0
  %v7711 = vadd.f32 0.0, %v7710
  %v7712 = vpop.f32.mrb[0].mxu0
  %7713 = vmatprep.mubr.f32.mxu0 0.0
  %7714 = vmatmul.mubr.f32.gmra.mrb[0].mxu0 %v7642
  %v7715 = vpop.f32.mrb[0].mxu0
  %v7716 = vadd.f32 0.0, %v7715
  %v7717 = vpop.f32.mrb[0].mxu0
  %7718 = vdwg.mxu0
  %v7719 = vadd.f32 %v7304, %v7711
  %v7720 = vadd.f32 %v7305, %v7716
  %v7722 = vlaneseq
  %v7723 = vshrl.u32 %v7722, 7
  %v7724 = vsub.s32 0, %v7723
  %v7725 = vrot.slane %v4073, %v7724
  %v7727 = vadd.f32 %v7719, %v7725
  %v7728 = vadd.f32 %v7720, %v7725
  %v7729 = vadd.f32 %v5899, %v7727
  %v7730 = vadd.f32 %v5900, %v7728
  %v7731 = vsel %vm138, %v7729, 0.0
  %7732 = vadd.xlane.f32.xlu0 %v7731
  %v7733 = vpop.xlane.xlu0 %7732
  %v7734 = vsel %vm138, %v7730, 0.0
  %7735 = vadd.xlane.f32.xlu0 %v7734
  %v7736 = vpop.xlane.xlu0 %7735
  %v7737 = vmul.f32 %v7733, %v1899
  %v7738 = vmul.f32 %v7736, %v1899
  %v7739 = vsub.f32 %v7729, %v7737
  %v7740 = vsub.f32 %v7730, %v7738
  %v7741 = vmul.f32 %v7739, %v7739
  %v7742 = vmul.f32 %v7740, %v7740
  %v7743 = vsel %vm138, %v7741, 0.0
  %7744 = vadd.xlane.f32.xlu0 %v7743
  %v7745 = vpop.xlane.xlu0 %7744
  %v7746 = vsel %vm138, %v7742, 0.0
  %7747 = vadd.xlane.f32.xlu0 %v7746
  %v7748 = vpop.xlane.xlu0 %7747
  %v7749 = vmul.f32 %v7745, %v1899
  %v7750 = vmul.f32 %v7748, %v1899
  %v7751 = vadd.f32 %v7749, 1e-05
  %v7752 = vadd.f32 %v7750, 1e-05
  %v7753 = vrsqrt.pop %v7751
  %v7754 = vrsqrt.pop %v7752
  %v7755 = vmul.f32 %v7739, %v7753
  %v7756 = vmul.f32 %v7740, %v7754
  %v7758 = vlaneseq
  %v7759 = vshrl.u32 %v7758, 7
  %v7760 = vsub.s32 0, %v7759
  %v7761 = vrot.slane %v4075, %v7760
  %v7763 = vmul.f32 %v7755, %v7761
  %v7764 = vmul.f32 %v7756, %v7761
  %v7766 = vlaneseq
  %v7767 = vshrl.u32 %v7766, 7
  %v7768 = vsub.s32 0, %v7767
  %v7769 = vrot.slane %v4077, %v7768
  %v7771 = vadd.f32 %v7763, %v7769
  %v7772 = vadd.f32 %v7764, %v7769
  %v7774 = vlaneseq
  %v7775 = vshrl.u32 %v7774, 7
  %v7776 = vsub.s32 0, %v7775
  %v7777 = vrot.slane %v4084, %v7776
  %v7780 = vsel %vm138, %v7771, 0
  %v7783 = vsel %vm138, %v7772, 0
  %7785 = vmatprep.subr.mxu0 0.0
  %7786 = vmatpush1.msra.mxu0 %v4079
  %7787 = vmatprep.subr.mxu0 0.0
  %7788 = vmatpush1.msra.mxu0 %v4080
  %7789 = vmatprep.subr.mxu0 0.0
  %7790 = vmatpush1.msra.mxu0 %v4081
  %7791 = vmatprep.subr.mxu0 0.0
  %7792 = vmatpush1.msra.mxu0 %v4082
  %7793 = vmatprep.subr.mxu0 0.0
  %7794 = vmatpush1.msra.mxu0 0.0
  %7795 = vmatprep.subr.mxu0 0.0
  %7796 = vmatpush1.msra.mxu0 0.0
  %7797 = vmatprep.subr.mxu0 0.0
  %7798 = vmatpush1.msra.mxu0 0.0
  %7799 = vmatprep.subr.mxu0 0.0
  %7800 = vmatpush1.msra.mxu0 0.0
  %7801 = vmatprep.subr.mxu0 0.0
  %7802 = vmatpush1.msra.mxu0 0.0
  %7803 = vmatprep.subr.mxu0 0.0
  %7804 = vmatpush1.msra.mxu0 0.0
  %7805 = vmatprep.subr.mxu0 0.0
  %7806 = vmatpush1.msra.mxu0 0.0
  %7807 = vmatprep.subr.mxu0 0.0
  %7808 = vmatpush1.msra.mxu0 0.0
  %7809 = vmatprep.subr.mxu0 0.0
  %7810 = vmatpush1.msra.mxu0 0.0
  %7811 = vmatprep.subr.mxu0 0.0
  %7812 = vmatpush1.msra.mxu0 0.0
  %7813 = vmatprep.subr.mxu0 0.0
  %7814 = vmatpush1.msra.mxu0 0.0
  %7815 = vmatprep.subr.mxu0 0.0
  %7816 = vmatpush1.msra.mxu0 0.0
  %7817 = vmatprep.subr.mxu0 0.0
  %7818 = vmatpush1.msra.mxu0 0.0
  %7819 = vmatprep.subr.mxu0 0.0
  %7820 = vmatpush1.msra.mxu0 0.0
  %7821 = vmatprep.subr.mxu0 0.0
  %7822 = vmatpush1.msra.mxu0 0.0
  %7823 = vmatprep.subr.mxu0 0.0
  %7824 = vmatpush1.msra.mxu0 0.0
  %7825 = vmatprep.subr.mxu0 0.0
  %7826 = vmatpush1.msra.mxu0 0.0
  %7827 = vmatprep.subr.mxu0 0.0
  %7828 = vmatpush1.msra.mxu0 0.0
  %7829 = vmatprep.subr.mxu0 0.0
  %7830 = vmatpush1.msra.mxu0 0.0
  %7831 = vmatprep.subr.mxu0 0.0
  %7832 = vmatpush1.msra.mxu0 0.0
  %7833 = vmatprep.subr.mxu0 0.0
  %7834 = vmatpush1.msra.mxu0 0.0
  %7835 = vmatprep.subr.mxu0 0.0
  %7836 = vmatpush1.msra.mxu0 0.0
  %7837 = vmatprep.subr.mxu0 0.0
  %7838 = vmatpush1.msra.mxu0 0.0
  %7839 = vmatprep.subr.mxu0 0.0
  %7840 = vmatpush1.msra.mxu0 0.0
  %7841 = vmatprep.subr.mxu0 0.0
  %7842 = vmatpush1.msra.mxu0 0.0
  %7843 = vmatprep.subr.mxu0 0.0
  %7844 = vmatpush1.msra.mxu0 0.0
  %7845 = vmatprep.subr.mxu0 0.0
  %7846 = vmatpush1.msra.mxu0 0.0
  %7847 = vmatprep.subr.mxu0 0.0
  %7848 = vmatpush1.msra.mxu0 0.0
  %7849 = vmatprep.mubr.f32.mxu0 0.0
  %7850 = vmatmul.mubr.f32.gmra.mrb[0].mxu0 %v7780
  %v7851 = vpop.f32.mrb[0].mxu0
  %v7852 = vadd.f32 %v7777, %v7851
  %v7853 = vpop.f32.mrb[0].mxu0
  %7854 = vmatprep.mubr.f32.mxu0 0.0
  %7855 = vmatmul.mubr.f32.gmra.mrb[0].mxu0 %v7783
  %v7856 = vpop.f32.mrb[0].mxu0
  %v7857 = vadd.f32 %v7777, %v7856
  %v7858 = vpop.f32.mrb[0].mxu0
  %7859 = vdwg.mxu0
  %v7860 = vmax.f32 %v7852, 0.0
  %v7861 = vmax.f32 %v7857, 0.0
  %v7863 = vlaneseq
  %v7864 = vshrl.u32 %v7863, 7
  %v7865 = vsub.s32 0, %v7864
  %v7866 = vrot.slane %v4095, %v7865
  %v7869 = vsel %vm3909, %v7860, 0
  %v7872 = vsel %vm3909, %v7861, 0
  %7874 = vmatprep.subr.mxu0 0.0
  %7875 = vmatpush1.msra.mxu0 %v4086
  %7876 = vmatprep.subr.mxu0 0.0
  %7877 = vmatpush1.msra.mxu0 %v4087
  %7878 = vmatprep.subr.mxu0 0.0
  %7879 = vmatpush1.msra.mxu0 %v4088
  %7880 = vmatprep.subr.mxu0 0.0
  %7881 = vmatpush1.msra.mxu0 %v4089
  %7882 = vmatprep.subr.mxu0 0.0
  %7883 = vmatpush1.msra.mxu0 %v4090
  %7884 = vmatprep.subr.mxu0 0.0
  %7885 = vmatpush1.msra.mxu0 %v4091
  %7886 = vmatprep.subr.mxu0 0.0
  %7887 = vmatpush1.msra.mxu0 %v4092
  %7888 = vmatprep.subr.mxu0 0.0
  %7889 = vmatpush1.msra.mxu0 %v4093
  %7890 = vmatprep.subr.mxu0 0.0
  %7891 = vmatpush1.msra.mxu0 0.0
  %7892 = vmatprep.subr.mxu0 0.0
  %7893 = vmatpush1.msra.mxu0 0.0
  %7894 = vmatprep.subr.mxu0 0.0
  %7895 = vmatpush1.msra.mxu0 0.0
  %7896 = vmatprep.subr.mxu0 0.0
  %7897 = vmatpush1.msra.mxu0 0.0
  %7898 = vmatprep.subr.mxu0 0.0
  %7899 = vmatpush1.msra.mxu0 0.0
  %7900 = vmatprep.subr.mxu0 0.0
  %7901 = vmatpush1.msra.mxu0 0.0
  %7902 = vmatprep.subr.mxu0 0.0
  %7903 = vmatpush1.msra.mxu0 0.0
  %7904 = vmatprep.subr.mxu0 0.0
  %7905 = vmatpush1.msra.mxu0 0.0
  %7906 = vmatprep.subr.mxu0 0.0
  %7907 = vmatpush1.msra.mxu0 0.0
  %7908 = vmatprep.subr.mxu0 0.0
  %7909 = vmatpush1.msra.mxu0 0.0
  %7910 = vmatprep.subr.mxu0 0.0
  %7911 = vmatpush1.msra.mxu0 0.0
  %7912 = vmatprep.subr.mxu0 0.0
  %7913 = vmatpush1.msra.mxu0 0.0
  %7914 = vmatprep.subr.mxu0 0.0
  %7915 = vmatpush1.msra.mxu0 0.0
  %7916 = vmatprep.subr.mxu0 0.0
  %7917 = vmatpush1.msra.mxu0 0.0
  %7918 = vmatprep.subr.mxu0 0.0
  %7919 = vmatpush1.msra.mxu0 0.0
  %7920 = vmatprep.subr.mxu0 0.0
  %7921 = vmatpush1.msra.mxu0 0.0
  %7922 = vmatprep.subr.mxu0 0.0
  %7923 = vmatpush1.msra.mxu0 0.0
  %7924 = vmatprep.subr.mxu0 0.0
  %7925 = vmatpush1.msra.mxu0 0.0
  %7926 = vmatprep.subr.mxu0 0.0
  %7927 = vmatpush1.msra.mxu0 0.0
  %7928 = vmatprep.subr.mxu0 0.0
  %7929 = vmatpush1.msra.mxu0 0.0
  %7930 = vmatprep.subr.mxu0 0.0
  %7931 = vmatpush1.msra.mxu0 0.0
  %7932 = vmatprep.subr.mxu0 0.0
  %7933 = vmatpush1.msra.mxu0 0.0
  %7934 = vmatprep.subr.mxu0 0.0
  %7935 = vmatpush1.msra.mxu0 0.0
  %7936 = vmatprep.subr.mxu0 0.0
  %7937 = vmatpush1.msra.mxu0 0.0
  %7938 = vmatprep.mubr.f32.mxu0 0.0
  %7939 = vmatmul.mubr.f32.gmra.mrb[0].mxu0 %v7869
  %v7940 = vpop.f32.mrb[0].mxu0
  %v7941 = vadd.f32 %v7866, %v7940
  %v7942 = vpop.f32.mrb[0].mxu0
  %7943 = vmatprep.mubr.f32.mxu0 0.0
  %7944 = vmatmul.mubr.f32.gmra.mrb[0].mxu0 %v7872
  %v7945 = vpop.f32.mrb[0].mxu0
  %v7946 = vadd.f32 %v7866, %v7945
  %v7947 = vpop.f32.mrb[0].mxu0
  %7948 = vdwg.mxu0
  %v7949 = vadd.f32 %v7771, %v7941
  %v7950 = vadd.f32 %v7772, %v7946
  %v7951 = vsel %vm138, %v7949, 0.0
  %7952 = vadd.xlane.f32.xlu0 %v7951
  %v7953 = vpop.xlane.xlu0 %7952
  %v7954 = vsel %vm138, %v7950, 0.0
  %7955 = vadd.xlane.f32.xlu0 %v7954
  %v7956 = vpop.xlane.xlu0 %7955
  %v7957 = vmul.f32 %v7953, %v1899
  %v7958 = vmul.f32 %v7956, %v1899
  %v7959 = vsub.f32 %v7949, %v7957
  %v7960 = vsub.f32 %v7950, %v7958
  %v7961 = vmul.f32 %v7959, %v7959
  %v7962 = vmul.f32 %v7960, %v7960
  %v7963 = vsel %vm138, %v7961, 0.0
  %7964 = vadd.xlane.f32.xlu0 %v7963
  %v7965 = vpop.xlane.xlu0 %7964
  %v7966 = vsel %vm138, %v7962, 0.0
  %7967 = vadd.xlane.f32.xlu0 %v7966
  %v7968 = vpop.xlane.xlu0 %7967
  %v7969 = vmul.f32 %v7965, %v1899
  %v7970 = vmul.f32 %v7968, %v1899
  %v7971 = vadd.f32 %v7969, 1e-05
  %v7972 = vadd.f32 %v7970, 1e-05
  %v7973 = vrsqrt.pop %v7971
  %v7974 = vrsqrt.pop %v7972
  %v7975 = vmul.f32 %v7959, %v7973
  %v7976 = vmul.f32 %v7960, %v7974
  %v7978 = vlaneseq
  %v7979 = vshrl.u32 %v7978, 7
  %v7980 = vsub.s32 0, %v7979
  %v7981 = vrot.slane %v4097, %v7980
  %v7983 = vmul.f32 %v7975, %v7981
  %v7984 = vmul.f32 %v7976, %v7981
  %v7986 = vlaneseq
  %v7987 = vshrl.u32 %v7986, 7
  %v7988 = vsub.s32 0, %v7987
  %v7989 = vrot.slane %v4099, %v7988
  %v7991 = vadd.f32 %v7983, %v7989
  %v7992 = vadd.f32 %v7984, %v7989
  %v7993 = vld [vmem:[%s22] sm:$0xff]
  %v7994 = vld [vmem:[%s22 + $0x8] sm:$0xff]
  %v7995 = vld [vmem:[%s22 + $0x10] sm:$0xff]
  %v7996 = vld [vmem:[%s22 + $0x18] sm:$0xff]
  %v7997 = vld [vmem:[%s23] sm:$0x1]
  %v7999 = vlaneseq
  %v8000 = vshrl.u32 %v7999, 7
  %v8001 = vsub.s32 0, %v8000
  %v8002 = vrot.slane %v7997, %v8001
  %v8005 = vsel %vm138, %v7991, 0
  %v8008 = vsel %vm138, %v7992, 0
  %8010 = vmatprep.subr.mxu0 0.0
  %8011 = vmatpush1.msra.mxu0 %v7993
  %8012 = vmatprep.subr.mxu0 0.0
  %8013 = vmatpush1.msra.mxu0 %v7994
  %8014 = vmatprep.subr.mxu0 0.0
  %8015 = vmatpush1.msra.mxu0 %v7995
  %8016 = vmatprep.subr.mxu0 0.0
  %8017 = vmatpush1.msra.mxu0 %v7996
  %8018 = vmatprep.subr.mxu0 0.0
  %8019 = vmatpush1.msra.mxu0 0.0
  %8020 = vmatprep.subr.mxu0 0.0
  %8021 = vmatpush1.msra.mxu0 0.0
  %8022 = vmatprep.subr.mxu0 0.0
  %8023 = vmatpush1.msra.mxu0 0.0
  %8024 = vmatprep.subr.mxu0 0.0
  %8025 = vmatpush1.msra.mxu0 0.0
  %8026 = vmatprep.subr.mxu0 0.0
  %8027 = vmatpush1.msra.mxu0 0.0
  %8028 = vmatprep.subr.mxu0 0.0
  %8029 = vmatpush1.msra.mxu0 0.0
  %8030 = vmatprep.subr.mxu0 0.0
  %8031 = vmatpush1.msra.mxu0 0.0
  %8032 = vmatprep.subr.mxu0 0.0
  %8033 = vmatpush1.msra.mxu0 0.0
  %8034 = vmatprep.subr.mxu0 0.0
  %8035 = vmatpush1.msra.mxu0 0.0
  %8036 = vmatprep.subr.mxu0 0.0
  %8037 = vmatpush1.msra.mxu0 0.0
  %8038 = vmatprep.subr.mxu0 0.0
  %8039 = vmatpush1.msra.mxu0 0.0
  %8040 = vmatprep.subr.mxu0 0.0
  %8041 = vmatpush1.msra.mxu0 0.0
  %8042 = vmatprep.subr.mxu0 0.0
  %8043 = vmatpush1.msra.mxu0 0.0
  %8044 = vmatprep.subr.mxu0 0.0
  %8045 = vmatpush1.msra.mxu0 0.0
  %8046 = vmatprep.subr.mxu0 0.0
  %8047 = vmatpush1.msra.mxu0 0.0
  %8048 = vmatprep.subr.mxu0 0.0
  %8049 = vmatpush1.msra.mxu0 0.0
  %8050 = vmatprep.subr.mxu0 0.0
  %8051 = vmatpush1.msra.mxu0 0.0
  %8052 = vmatprep.subr.mxu0 0.0
  %8053 = vmatpush1.msra.mxu0 0.0
  %8054 = vmatprep.subr.mxu0 0.0
  %8055 = vmatpush1.msra.mxu0 0.0
  %8056 = vmatprep.subr.mxu0 0.0
  %8057 = vmatpush1.msra.mxu0 0.0
  %8058 = vmatprep.subr.mxu0 0.0
  %8059 = vmatpush1.msra.mxu0 0.0
  %8060 = vmatprep.subr.mxu0 0.0
  %8061 = vmatpush1.msra.mxu0 0.0
  %8062 = vmatprep.subr.mxu0 0.0
  %8063 = vmatpush1.msra.mxu0 0.0
  %8064 = vmatprep.subr.mxu0 0.0
  %8065 = vmatpush1.msra.mxu0 0.0
  %8066 = vmatprep.subr.mxu0 0.0
  %8067 = vmatpush1.msra.mxu0 0.0
  %8068 = vmatprep.subr.mxu0 0.0
  %8069 = vmatpush1.msra.mxu0 0.0
  %8070 = vmatprep.subr.mxu0 0.0
  %8071 = vmatpush1.msra.mxu0 0.0
  %8072 = vmatprep.subr.mxu0 0.0
  %8073 = vmatpush1.msra.mxu0 0.0
  %8074 = vmatprep.mubr.f32.mxu0 0.0
  %8075 = vmatmul.mubr.f32.gmra.mrb[0].mxu0 %v8005
  %v8076 = vpop.f32.mrb[0].mxu0
  %v8077 = vadd.f32 %v8002, %v8076
  %v8078 = vpop.f32.mrb[0].mxu0
  %8079 = vmatprep.mubr.f32.mxu0 0.0
  %8080 = vmatmul.mubr.f32.gmra.mrb[0].mxu0 %v8008
  %v8081 = vpop.f32.mrb[0].mxu0
  %v8082 = vadd.f32 %v8002, %v8081
  %v8083 = vpop.f32.mrb[0].mxu0
  %8084 = vdwg.mxu0
  %8085 = vst [vmem:[%s24] sm:$0xff] %v8077
  %8086 = vst [vmem:[%s24 + $0x8] sm:$0xff] %v8082
  // Predicated region
  $region98: #{story_transformer_forward.1} parent=0 // pred_check
    _
  $region99: #{story_transformer_forward.1} parent=0 // pred_check_branch
    %8088 = sbr.rel (0) target = $region101
  $region100: #{story_transformer_forward.1} parent=0 // pred_region
    _
  $region101: #{story_transformer_forward.1} parent=0 // pred_fallthru
    _
  // Predicated region
  $region102: #{story_transformer_forward.1} parent=0 // pred_check
    _
  $region103: #{story_transformer_forward.1} parent=0 // pred_check_branch
    %8090 = sbr.rel (0) target = $region105
  $region104: #{story_transformer_forward.1} parent=0 // pred_region
    _
  $region105: #{story_transformer_forward.1} parent=0 // pred_fallthru
    _

</llo_original>
